<compile_context>
chip_gen: v6e
topology: v6e:2x2x1
jax: 0.10.0
libtpu: 0.0.40
codegen_flags: <defaults>
</compile_context>

<pallas_src>
import math
from functools import partial

import numpy as np
import jax
import jax.numpy as jnp
from jax.experimental import pallas as pl
from jax.experimental.pallas import tpu as pltpu


# ----------------------------- helpers --------------------------------------

def _row_tile(M, cap=256):
    """Largest power-of-two row tile <= cap that still gives >=2 grid steps
    (keeps both v7x TensorCores busy and bounds VMEM)."""
    tm = cap
    while tm > 8 and tm >= M:
        tm //= 2
    return tm


def _pad_rows(x, tm):
    M = x.shape[0]
    Mp = -(-M // tm) * tm
    if Mp != M:
        x = jnp.pad(x, ((0, Mp - M), (0, 0)))
    return x, Mp


# ----------------------------- Pallas kernels ------------------------------

def _linear_kernel(x_ref, w_ref, b_ref, y_ref, *, activation):
    x = x_ref[...].astype(jnp.float32)
    if activation == "gelu":
        # exact erf-GELU in f32 (v5e VPU/EUP has no bf16 elementwise)
        x = 0.5 * x * (1.0 + jax.lax.erf(x * (1.0 / math.sqrt(2.0))))
    y = jnp.dot(x.astype(jnp.bfloat16), w_ref[...],
                preferred_element_type=jnp.float32) + b_ref[...].astype(jnp.float32)
    y_ref[...] = y.astype(y_ref.dtype)


def pallas_linear(x, w, b, activation=None):
    """y = Linear(act(x)); x:(M,K) f32, w:(K,N) (cast to bf16 for the MXU), b:(N,)."""
    M, K = x.shape
    N = w.shape[1]
    tm = _row_tile(M)
    xp, Mp = _pad_rows(x, tm)
    y = pl.pallas_call(
        partial(_linear_kernel, activation=activation),
        out_shape=jax.ShapeDtypeStruct((Mp, N), jnp.float32),
        grid_spec=pltpu.PrefetchScalarGridSpec(
            num_scalar_prefetch=0,
            grid=(Mp // tm,),
            in_specs=[
                pl.BlockSpec((tm, K), lambda i: (i, 0)),
                pl.BlockSpec((K, N), lambda i: (0, 0)),
                pl.BlockSpec((1, N), lambda i: (0, 0)),
            ],
            out_specs=pl.BlockSpec((tm, N), lambda i: (i, 0)),
        ),
        compiler_params=pltpu.CompilerParams(dimension_semantics=("parallel",)),
    )(xp, w.astype(jnp.bfloat16), b.reshape(1, N))
    return y[:M] if Mp != M else y


def _ln_linear_kernel(x_ref, g_ref, beta_ref, w_ref, b_ref, y_ref, xn_ref, *, eps):
    x = x_ref[...].astype(jnp.float32)
    mu = jnp.mean(x, axis=-1, keepdims=True)
    var = jnp.mean(jnp.square(x - mu), axis=-1, keepdims=True)
    xn = (x - mu) * jax.lax.rsqrt(var + eps)
    xn = xn * g_ref[...].astype(jnp.float32) + beta_ref[...].astype(jnp.float32)
    xn_ref[...] = xn.astype(xn_ref.dtype)
    y = jnp.dot(xn.astype(jnp.bfloat16), w_ref[...],
                preferred_element_type=jnp.float32) + b_ref[...].astype(jnp.float32)
    y_ref[...] = y.astype(y_ref.dtype)


def pallas_ln_linear(x, gamma, beta, w, b, eps=1e-5):
    """Fused LayerNorm(x) followed by Linear; returns (y, x_norm).
    Removes one full HBM round trip of the activation."""
    M, K = x.shape
    N = w.shape[1]
    tm = _row_tile(M)
    xp, Mp = _pad_rows(x, tm)
    y, xn = pl.pallas_call(
        partial(_ln_linear_kernel, eps=eps),
        out_shape=(jax.ShapeDtypeStruct((Mp, N), jnp.float32),
                   jax.ShapeDtypeStruct((Mp, K), jnp.float32)),
        grid_spec=pltpu.PrefetchScalarGridSpec(
            num_scalar_prefetch=0,
            grid=(Mp // tm,),
            in_specs=[
                pl.BlockSpec((tm, K), lambda i: (i, 0)),
                pl.BlockSpec((1, K), lambda i: (0, 0)),
                pl.BlockSpec((1, K), lambda i: (0, 0)),
                pl.BlockSpec((K, N), lambda i: (0, 0)),
                pl.BlockSpec((1, N), lambda i: (0, 0)),
            ],
            out_specs=[pl.BlockSpec((tm, N), lambda i: (i, 0)),
                       pl.BlockSpec((tm, K), lambda i: (i, 0))],
        ),
        compiler_params=pltpu.CompilerParams(dimension_semantics=("parallel",)),
    )(xp, gamma.reshape(1, K), beta.reshape(1, K),
      w.astype(jnp.bfloat16), b.reshape(1, N))
    if Mp != M:
        y, xn = y[:M], xn[:M]
    return y, xn


def _sparse_attn_kernel(mflag_ref, q_ref, kb_ref, vb_ref, kl_ref, vl_ref, o_ref):
    """One (batch, window) per grid step; all heads processed in-kernel.
    The scalar-prefetched mask flag selects exactly one branch (pl.when)."""
    g = pl.program_id(0)
    is_masked = mflag_ref[g] > 0
    n_head = q_ref.shape[1]
    t = q_ref.shape[2]
    ww = q_ref.shape[3]
    d = q_ref.shape[4]

    def _softmax(s):                        # f32 softmax, EUP reciprocal
        s = s - jnp.max(s, axis=-1, keepdims=True)
        p = jnp.exp(s)
        return p * pl.reciprocal(jnp.sum(p, axis=-1, keepdims=True), approx=True)

    @pl.when(is_masked)
    def _():
        heads = []
        for hh in range(n_head):
            qh = q_ref[0, hh].reshape(t * ww, d)          # bf16, scale pre-folded
            kh = kb_ref[0, hh]                            # (LK, d) bf16
            vh = vb_ref[0, hh]
            s = jax.lax.dot_general(qh, kh, (((1,), (1,)), ((), ())),
                                    preferred_element_type=jnp.float32)
            p = _softmax(s)
            y = jnp.dot(p.astype(jnp.bfloat16), vh,
                        preferred_element_type=jnp.float32)   # (t*ww, d)
            heads.append(y)
        o = jnp.concatenate(heads, axis=-1)               # lane-dense (t*ww, C)
        o_ref[0] = o.reshape(t, ww, n_head * d).astype(o_ref.dtype)

    @pl.when(jnp.logical_not(is_masked))
    def _():
        heads = []
        for hh in range(n_head):
            qh = q_ref[0, hh]                             # (t, ww, d) bf16
            kh = kl_ref[0, hh]
            vh = vl_ref[0, hh]
            s = jnp.einsum("tqd,tkd->tqk", qh, kh,
                           preferred_element_type=jnp.float32)
            p = _softmax(s)
            y = jnp.einsum("tqk,tkd->tqd", p.astype(jnp.bfloat16), vh,
                           preferred_element_type=jnp.float32)
            heads.append(y)
        o = jnp.concatenate(heads, axis=-1)               # (t, ww, C)
        o_ref[0] = o.astype(o_ref.dtype)


def pallas_sparse_window_attention(mask_flags, q, k_big, v_big, k_loc, v_loc):
    """q:(G,H,t,ww,d) k_big/v_big:(G,H,LK,d) k_loc/v_loc:(G,H,t,ww,d) (all bf16)
    -> (G,t,ww,H*d) f32, channels merged head-major (lane-dense output)."""
    G, H, t, ww_, d = q.shape
    LK = k_big.shape[2]
    C = H * d
    return pl.pallas_call(
        _sparse_attn_kernel,
        out_shape=jax.ShapeDtypeStruct((G, t, ww_, C), jnp.float32),
        grid_spec=pltpu.PrefetchScalarGridSpec(
            num_scalar_prefetch=1,
            grid=(G,),
            in_specs=[
                pl.BlockSpec((1, H, t, ww_, d), lambda g, m: (g, 0, 0, 0, 0)),
                pl.BlockSpec((1, H, LK, d), lambda g, m: (g, 0, 0, 0)),
                pl.BlockSpec((1, H, LK, d), lambda g, m: (g, 0, 0, 0)),
                pl.BlockSpec((1, H, t, ww_, d), lambda g, m: (g, 0, 0, 0, 0)),
                pl.BlockSpec((1, H, t, ww_, d), lambda g, m: (g, 0, 0, 0, 0)),
            ],
            out_specs=pl.BlockSpec((1, t, ww_, C), lambda g, m: (g, 0, 0, 0)),
        ),
        compiler_params=pltpu.CompilerParams(dimension_semantics=("parallel",)),
    )(mask_flags, q, k_big, v_big, k_loc, v_loc)


# ------------------------------ static index tables --------------------------

def _window_key_indices(new_h, new_w, window_size, expand_size):
    """Flat spatial source index for every (window, key-slot).  Key-slot order:
    [local window keys (wh*ww)] + [valid rolled keys (tl,tr,bl,br order)] — identical
    to the reference's 4x roll + window_partition + valid_ind_rolled gather."""
    wh, ww = window_size
    e0, e1 = expand_size
    n_wh, n_ww = new_h // wh, new_w // ww
    ay, ax = np.meshgrid(np.arange(wh), np.arange(ww), indexing="ij")
    local = list(zip(ay.reshape(-1).tolist(), ax.reshape(-1).tolist()))

    rolled_src = []
    if e0 > 0 or e1 > 0:
        shifts = [(-e0, -e1), (-e0, e1), (e0, -e1), (e0, e1)]
        masks = []
        m = np.ones((wh, ww)); m[:wh - e0, :ww - e1] = 0; masks.append(m)
        m = np.ones((wh, ww)); m[:wh - e0, e1:] = 0;      masks.append(m)
        m = np.ones((wh, ww)); m[e0:, :ww - e1] = 0;      masks.append(m)
        m = np.ones((wh, ww)); m[e0:, e1:] = 0;           masks.append(m)
        for (sh, sw), msk in zip(shifts, masks):
            for a in range(wh):
                for b_ in range(ww):
                    if msk[a, b_] > 0:
                        # roll(shift=(sh,sw)) then take in-window (a,b) ==
                        # source pixel ((a - sh) % H, (b - sw) % W) rel. to origin
                        rolled_src.append((a - sh, b_ - sw))

    cols = []
    for wi in range(n_wh):
        for wj in range(n_ww):
            wy, wx = wi * wh, wj * ww
            idx = [(wy + a) * new_w + (wx + b_) for a, b_ in local]
            idx += [((wy + dy) % new_h) * new_w + ((wx + dx) % new_w)
                    for dy, dx in rolled_src]
            cols.append(np.array(idx, np.int32))
    return np.stack(cols, axis=0)                 # (nw, wh*ww + n_roll)


def _fold_divisor_np(output_size, kernel_size, padding, stride):
    """Overlap counts produced by F.fold on a ones tensor — shape-static."""
    kh, kw = kernel_size
    ph, pw = padding
    sh, sw = stride
    H, W = output_size
    nH = (H + 2 * ph - kh) // sh + 1
    nW = (W + 2 * pw - kw) // sw + 1
    out = np.zeros((H + 2 * ph, W + 2 * pw), np.float32)
    for ki in range(kh):
        for kj in range(kw):
            out[ki:ki + sh * nH:sh, kj:kj + sw * nW:sw] += 1.0
    return out[ph:ph + H, pw:pw + W]


# ------------------------------ JAX glue ops --------------------------------

def _fold(patches, output_size, kernel_size, padding, stride):
    """torch.nn.functional.fold : (N, C*kh*kw, L) -> (N, C, H, W) (overlap-add)."""
    kh, kw = kernel_size
    ph, pw = padding
    sh, sw = stride
    H, W = output_size
    nH = (H + 2 * ph - kh) // sh + 1
    nW = (W + 2 * pw - kw) // sw + 1
    N = patches.shape[0]
    C = patches.shape[1] // (kh * kw)
    p = patches.reshape(N, C, kh, kw, nH, nW)
    out = jnp.zeros((N, C, H + 2 * ph, W + 2 * pw), patches.dtype)
    for ki in range(kh):
        for kj in range(kw):
            out = out.at[:, :, ki:ki + sh * nH:sh, kj:kj + sw * nW:sw].add(p[:, :, ki, kj])
    return out[:, :, ph:ph + H, pw:pw + W]


def _unfold(img, kernel_size, padding, stride):
    """torch.nn.functional.unfold : (N, C, H, W) -> (N, C*kh*kw, L)."""
    kh, kw = kernel_size
    ph, pw = padding
    sh, sw = stride
    N, C, H, W = img.shape
    nH = (H + 2 * ph - kh) // sh + 1
    nW = (W + 2 * pw - kw) // sw + 1
    padded = jnp.pad(img, ((0, 0), (0, 0), (ph, ph), (pw, pw)))
    cols = []
    for ki in range(kh):
        for kj in range(kw):
            cols.append(padded[:, :, ki:ki + sh * nH:sh, kj:kj + sw * nW:sw]
                        .reshape(N, C, nH * nW))
    out = jnp.stack(cols, axis=2)   # (N, C, kh*kw, L)
    return out.reshape(N, C * kh * kw, nH * nW)


# -------------------------- module forward passes ---------------------------

def sparse_window_attention(x, mask, T_ind, p, n_head, window_size, pool_size):
    """Includes norm1 (fused into the QKV projection)."""
    b, t, h, w, c = x.shape
    w_h, w_w = window_size
    d = c // n_head
    n_wh = math.ceil(h / w_h)
    n_ww = math.ceil(w / w_w)
    new_h, new_w = n_wh * w_h, n_ww * w_w
    pad_r, pad_btm = new_w - w, new_h - h
    nw = n_wh * n_ww
    ww_ = w_h * w_w

    # ---- fused LayerNorm1 + QKV projection (one pass over x, 3C-wide output) ----
    W_qkv = jnp.concatenate([p["Wq"], p["Wk"], p["Wv"]], axis=1)
    b_qkv = jnp.concatenate([p["bq"], p["bk"], p["bv"]], axis=0)
    qkv, xn = pallas_ln_linear(x.reshape(-1, c), p["ln1_g"], p["ln1_b"], W_qkv, b_qkv)
    qkv = qkv.reshape(b, t, h, w, 3 * c)
    xn = xn.reshape(b, t, h, w, c)

    if pad_r > 0 or pad_btm > 0:
        # reference zero-pads the normed input before the projection; a zero row
        # projects to the bias, so pad qkv with the bias values directly.
        valid = ((jnp.arange(new_h) < h)[:, None] & (jnp.arange(new_w) < w)[None, :])
        valid = valid[None, None, :, :, None]
        qkv = jnp.where(valid,
                        jnp.pad(qkv, ((0, 0), (0, 0), (0, pad_btm), (0, pad_r), (0, 0))),
                        b_qkv)
        xn = jnp.pad(xn, ((0, 0), (0, 0), (0, pad_btm), (0, pad_r), (0, 0)))
        mask = jnp.pad(mask, ((0, 0), (0, 0), (0, pad_btm), (0, pad_r), (0, 0)))

    q_, k_, v_ = qkv[..., :c], qkv[..., c:2 * c], qkv[..., 2 * c:]

    # ---- single gather builds local + rolled window keys (no jnp.roll copies) ----
    expand_size = ((w_h + 1) // 2, (w_w + 1) // 2)
    key_idx = jnp.asarray(_window_key_indices(new_h, new_w, window_size, expand_size))

    def gather_windows(a, idx):
        sp = a.reshape(b, t, new_h * new_w, n_head, d)
        g = jnp.take(sp, idx.reshape(-1), axis=2)
        g = g.reshape(b, t, nw, idx.shape[1], n_head, d)
        return jnp.transpose(g, (0, 2, 4, 1, 3, 5))        # (b, nw, head, t, Ni, d)

    q_win = gather_windows(q_, key_idx[:, :ww_])
    k_wr = gather_windows(k_, key_idx)
    v_wr = gather_windows(v_, key_idx)

    # ---- pooling tokens: depthwise conv with 1/(ph*pw) weights == avg-pool,
    #      followed by one fused K/V projection ----
    ps_h, ps_w = pool_size
    p_h, p_w = new_h // ps_h, new_w // ps_w
    pool_x = xn[:, :, :p_h * ps_h, :p_w * ps_w]
    pool_x = pool_x.reshape(b, t, p_h, ps_h, p_w, ps_w, c).mean(axis=(3, 5))
    W_kv = jnp.concatenate([p["Wk"], p["Wv"]], axis=1)
    b_kv = jnp.concatenate([p["bk"], p["bv"]], axis=0)
    pool_kv = pallas_linear(pool_x.reshape(-1, c), W_kv, b_kv)
    pool_kv = pool_kv.reshape(b, t, p_h * p_w, 2, n_head, d)

    def expand_pool(a):                                     # (b,t,np,head,d)
        a = jnp.transpose(a, (0, 3, 1, 2, 4))               # (b,head,t,np,d)
        return jnp.broadcast_to(a[:, None], (b, nw, n_head, t, p_h * p_w, d))

    k_all = jnp.concatenate([k_wr, expand_pool(pool_kv[:, :, :, 0])], axis=4)
    v_all = jnp.concatenate([v_wr, expand_pool(pool_kv[:, :, :, 1])], axis=4)

    # ---- per-window mask flags (max-pool over window, summed over time) ----
    l_t = mask.shape[1]
    m = mask.reshape(b * l_t, n_wh, w_h, n_ww, w_w).max(axis=(2, 4))
    m = m.reshape(b, l_t, nw).sum(axis=1)
    mask_flags = (m.reshape(-1) != 0).astype(jnp.int32)     # (b*nw,)

    # ---- attention (one pallas_call, scalar-prefetched mask picks the branch) ----
    T_flat = T_ind.reshape(-1)
    LT = T_flat.shape[0]
    Nk = k_all.shape[4]
    G = b * nw
    scale = 1.0 / math.sqrt(d)

    q_b = (q_win * scale).astype(jnp.bfloat16).reshape(G, n_head, t, ww_, d)
    kb = jnp.take(k_all, T_flat, axis=3).reshape(G, n_head, LT * Nk, d).astype(jnp.bfloat16)
    vb = jnp.take(v_all, T_flat, axis=3).reshape(G, n_head, LT * Nk, d).astype(jnp.bfloat16)
    kl = k_all[..., :ww_, :].reshape(G, n_head, t, ww_, d).astype(jnp.bfloat16)
    vl = v_all[..., :ww_, :].reshape(G, n_head, t, ww_, d).astype(jnp.bfloat16)

    out = pallas_sparse_window_attention(mask_flags, q_b, kb, vb, kl, vl)  # (G,t,ww,c)

    out = out.reshape(b, n_wh, n_ww, t, w_h, w_w, c)
    out = jnp.transpose(out, (0, 3, 1, 4, 2, 5, 6)).reshape(b, t, new_h, new_w, c)
    if pad_r > 0 or pad_btm > 0:
        out = out[:, :, :h, :w, :]
    out = pallas_linear(out.reshape(-1, c), p["Wproj"], p["bproj"]).reshape(b, t, h, w, c)
    return out


def fusion_feed_forward(x, output_size, p, t2t_params, hidden_dim):
    """Includes norm2 (fused into fc1)."""
    ks = t2t_params["kernel_size"]
    pad = t2t_params["padding"]
    st = t2t_params["stride"]
    n_vecs = 1
    for i, dd in enumerate(ks):
        n_vecs *= int((output_size[i] + 2 * pad[i] - (dd - 1) - 1) / st[i] + 1)

    b, n, c_in = x.shape
    # fused LayerNorm2 + fc1
    h, _ = pallas_ln_linear(x.reshape(-1, c_in), p["ln2_g"], p["ln2_b"],
                            p["Wfc1"], p["bfc1"])
    c = hidden_dim
    bt = (b * n) // n_vecs

    # overlap-add (fold) then re-extract (unfold); normalizer is shape-static.
    normalizer = jnp.asarray(_fold_divisor_np(output_size, ks, pad, st))    # (H, W)
    folded = _fold(jnp.transpose(h.reshape(bt, n_vecs, c), (0, 2, 1)),
                   output_size, ks, pad, st)
    smoothed = _unfold(folded / normalizer, ks, pad, st)
    h = jnp.transpose(smoothed, (0, 2, 1)).reshape(b * n, c)

    out = pallas_linear(h, p["Wfc2"], p["bfc2"], activation="gelu")
    return out.reshape(b, n, -1)


def temporal_sparse_transformer(x, fold_x_size, mask, T_ind, p, n_head, window_size,
                                pool_size, t2t_params, hidden_dim):
    B, T, H, W, C = x.shape
    shortcut = x
    # norm1 is fused into the QKV projection inside sparse_window_attention
    att_x = sparse_window_attention(x, mask, T_ind, p, n_head, window_size, pool_size)
    x = shortcut + att_x
    # norm2 is fused into fc1 inside fusion_feed_forward
    mlp = fusion_feed_forward(x.reshape(B, T * H * W, C), fold_x_size, p,
                              t2t_params, hidden_dim)
    return x + mlp.reshape(B, T, H, W, C)


# ------------------------------- parameters ---------------------------------

def init_params(key, dim, hidden_dim):
    keys = jax.random.split(key, 6)

    def lin(k, fan_in, fan_out):
        kw, kb = jax.random.split(k)
        w = jax.random.normal(kw, (fan_in, fan_out), jnp.float32) * 0.02
        b = jax.random.normal(kb, (fan_out,), jnp.float32) * 0.02
        return w, b

    p = {}
    p["Wq"], p["bq"] = lin(keys[0], dim, dim)
    p["Wk"], p["bk"] = lin(keys[1], dim, dim)
    p["Wv"], p["bv"] = lin(keys[2], dim, dim)
    p["Wproj"], p["bproj"] = lin(keys[3], dim, dim)
    p["Wfc1"], p["bfc1"] = lin(keys[4], dim, hidden_dim)
    p["Wfc2"], p["bfc2"] = lin(keys[5], hidden_dim, dim)
    p["ln1_g"] = jnp.ones((dim,), jnp.float32)
    p["ln1_b"] = jnp.zeros((dim,), jnp.float32)
    p["ln2_g"] = jnp.ones((dim,), jnp.float32)
    p["ln2_b"] = jnp.zeros((dim,), jnp.float32)
    return p


# ---------------------------------- main -------------------------------------

if __name__ == "__main__":
    dim = 32
    n_head = 4
    window_size = (4, 4)
    pool_size = (4, 4)
    t2t_params = {"kernel_size": (7, 7), "stride": (3, 3), "padding": (3, 3)}
    hidden_dim = 1960            # FusionFeedForward default (divisible by 7*7)
    B, T, H, W = 2, 2, 8, 8
    fold_x_size = (24, 24)       # -> n_vecs = 8*8 = H*W (consistent with token grid)

    key = jax.random.PRNGKey(0)
    kx, kp = jax.random.split(key)
    x = jax.random.normal(kx, (B, T, H, W, dim), jnp.float32)
    mask = jnp.zeros((B, T, H, W, 1), jnp.float32)
    mask = mask.at[:, :, 0:4, 0:4, :].set(1.0)   # window (0,0) is "masked", others not
    T_ind = jnp.arange(T, dtype=jnp.int32)
    params = init_params(kp, dim, hidden_dim)

    fwd = jax.jit(lambda xx, mm, tt, pp: temporal_sparse_transformer(
        xx, fold_x_size, mm, tt, pp, n_head, window_size, pool_size,
        t2t_params, hidden_dim))

    out = fwd(x, mask, T_ind, params)
    out = jax.block_until_ready(out)
    assert out.shape == (B, T, H, W, dim)
    assert bool(jnp.all(jnp.isfinite(out)))
    print("KERNEL_OK")
</pallas_src>

<mosaic_0001>
module attributes {stable_mosaic.version = 11 : i64} {
  func.func @_ln_linear_kernel(%arg0: i32, %arg1: memref<128x32xf32, #tpu.memory_space<vmem>>, %arg2: memref<1x32xf32, #tpu.memory_space<vmem>>, %arg3: memref<1x32xf32, #tpu.memory_space<vmem>>, %arg4: memref<32x96xbf16, #tpu.memory_space<vmem>>, %arg5: memref<1x96xf32, #tpu.memory_space<vmem>>, %arg6: memref<128x96xf32, #tpu.memory_space<vmem>>, %arg7: memref<128x32xf32, #tpu.memory_space<vmem>>) attributes {dimension_semantics = [#tpu.dimension_semantics<parallel>], iteration_bounds = array<i64: 2>, scalar_prefetch = 0 : i64, scratch_operands = 0 : i64, tpu.core_type = #tpu.core_type<tc>, window_params = [{transform_indices = @transform_0, window_bounds = array<i64: 128, 32>}, {pipeline_mode = #tpu.pipeline_mode<synchronous>, transform_indices = @transform_1, window_bounds = array<i64: 1, 32>}, {pipeline_mode = #tpu.pipeline_mode<synchronous>, transform_indices = @transform_2, window_bounds = array<i64: 1, 32>}, {pipeline_mode = #tpu.pipeline_mode<synchronous>, transform_indices = @transform_3, window_bounds = array<i64: 32, 96>}, {pipeline_mode = #tpu.pipeline_mode<synchronous>, transform_indices = @transform_4, window_bounds = array<i64: 1, 96>}, {transform_indices = @transform_5, window_bounds = array<i64: 128, 96>}, {transform_indices = @transform_6, window_bounds = array<i64: 128, 32>}]} {
    %c0 = arith.constant 0 : index
    %c0_0 = arith.constant 0 : index
    %0 = vector.load %arg1[%c0, %c0_0] : memref<128x32xf32, #tpu.memory_space<vmem>>, vector<128x32xf32>
    %cst = arith.constant dense<0.000000e+00> : vector<128xf32>
    %1 = vector.multi_reduction <add>, %0, %cst [1] : vector<128x32xf32> to vector<128xf32>
    %2 = vector.shape_cast %1 : vector<128xf32> to vector<128x1xf32>
    %cst_1 = arith.constant 3.200000e+01 : f32
    %3 = vector.broadcast %cst_1 : f32 to vector<128x1xf32>
    %4 = arith.divf %2, %3 : vector<128x1xf32>
    %5 = vector.broadcast %4 : vector<128x1xf32> to vector<128x32xf32>
    %6 = arith.subf %0, %5 : vector<128x32xf32>
    %7 = arith.mulf %6, %6 : vector<128x32xf32>
    %cst_2 = arith.constant dense<0.000000e+00> : vector<128xf32>
    %8 = vector.multi_reduction <add>, %7, %cst_2 [1] : vector<128x32xf32> to vector<128xf32>
    %9 = vector.shape_cast %8 : vector<128xf32> to vector<128x1xf32>
    %cst_3 = arith.constant 3.200000e+01 : f32
    %10 = vector.broadcast %cst_3 : f32 to vector<128x1xf32>
    %11 = arith.divf %9, %10 : vector<128x1xf32>
    %12 = vector.broadcast %4 : vector<128x1xf32> to vector<128x32xf32>
    %13 = arith.subf %0, %12 : vector<128x32xf32>
    %cst_4 = arith.constant 9.99999974E-6 : f32
    %14 = vector.broadcast %cst_4 : f32 to vector<128x1xf32>
    %15 = arith.addf %11, %14 : vector<128x1xf32>
    %16 = math.rsqrt %15 : vector<128x1xf32>
    %17 = vector.broadcast %16 : vector<128x1xf32> to vector<128x32xf32>
    %18 = arith.mulf %13, %17 : vector<128x32xf32>
    %c0_5 = arith.constant 0 : index
    %c0_6 = arith.constant 0 : index
    %19 = vector.load %arg2[%c0_5, %c0_6] : memref<1x32xf32, #tpu.memory_space<vmem>>, vector<1x32xf32>
    %20 = vector.broadcast %19 : vector<1x32xf32> to vector<128x32xf32>
    %21 = arith.mulf %18, %20 : vector<128x32xf32>
    %c0_7 = arith.constant 0 : index
    %c0_8 = arith.constant 0 : index
    %22 = vector.load %arg3[%c0_7, %c0_8] : memref<1x32xf32, #tpu.memory_space<vmem>>, vector<1x32xf32>
    %23 = vector.broadcast %22 : vector<1x32xf32> to vector<128x32xf32>
    %24 = arith.addf %21, %23 : vector<128x32xf32>
    %c0_9 = arith.constant 0 : index
    %c0_10 = arith.constant 0 : index
    %25 = vector.load %arg7[%c0_9, %c0_10] : memref<128x32xf32, #tpu.memory_space<vmem>>, vector<128x32xf32>
    tpu.vector_store %arg7[%c0_9, %c0_10], %24 {strides = array<i32>} : memref<128x32xf32, #tpu.memory_space<vmem>>, vector<128x32xf32>,
    %26 = arith.truncf %24 : vector<128x32xf32> to vector<128x32xbf16>
    %c0_11 = arith.constant 0 : index
    %c0_12 = arith.constant 0 : index
    %27 = vector.load %arg4[%c0_11, %c0_12] : memref<32x96xbf16, #tpu.memory_space<vmem>>, vector<32x96xbf16>
    %cst_13 = arith.constant dense<0.000000e+00> : vector<128x96xf32>
    %28 = tpu.matmul %26, %27, %cst_13 {dimension_numbers = #tpu.dot_dimension_numbers<[1], [0], [0], [1], [0, 0, 1, 1], [], []>} : vector<128x32xbf16>, vector<32x96xbf16>, vector<128x96xf32> -> vector<128x96xf32>
    %c0_14 = arith.constant 0 : index
    %c0_15 = arith.constant 0 : index
    %29 = vector.load %arg5[%c0_14, %c0_15] : memref<1x96xf32, #tpu.memory_space<vmem>>, vector<1x96xf32>
    %30 = vector.broadcast %29 : vector<1x96xf32> to vector<128x96xf32>
    %31 = arith.addf %28, %30 : vector<128x96xf32>
    %c0_16 = arith.constant 0 : index
    %c0_17 = arith.constant 0 : index
    %32 = vector.load %arg6[%c0_16, %c0_17] : memref<128x96xf32, #tpu.memory_space<vmem>>, vector<128x96xf32>
    tpu.vector_store %arg6[%c0_16, %c0_17], %31 {strides = array<i32>} : memref<128x96xf32, #tpu.memory_space<vmem>>, vector<128x96xf32>,
    return
  }
  func.func @transform_0(%arg0: i32) -> (i32, i32) {
    %c0_i32 = arith.constant 0 : i32
    %c0_i32_0 = arith.constant 0 : i32
    return %arg0, %c0_i32 : i32, i32
  }
  func.func @transform_1(%arg0: i32) -> (i32, i32) {
    %c0_i32 = arith.constant 0 : i32
    %c0_i32_0 = arith.constant 0 : i32
    %c0_i32_1 = arith.constant 0 : i32
    return %c0_i32, %c0_i32_0 : i32, i32
  }
  func.func @transform_2(%arg0: i32) -> (i32, i32) {
    %c0_i32 = arith.constant 0 : i32
    %c0_i32_0 = arith.constant 0 : i32
    %c0_i32_1 = arith.constant 0 : i32
    return %c0_i32, %c0_i32_0 : i32, i32
  }
  func.func @transform_3(%arg0: i32) -> (i32, i32) {
    %c0_i32 = arith.constant 0 : i32
    %c0_i32_0 = arith.constant 0 : i32
    %c0_i32_1 = arith.constant 0 : i32
    return %c0_i32, %c0_i32_0 : i32, i32
  }
  func.func @transform_4(%arg0: i32) -> (i32, i32) {
    %c0_i32 = arith.constant 0 : i32
    %c0_i32_0 = arith.constant 0 : i32
    %c0_i32_1 = arith.constant 0 : i32
    return %c0_i32, %c0_i32_0 : i32, i32
  }
  func.func @transform_5(%arg0: i32) -> (i32, i32) {
    %c0_i32 = arith.constant 0 : i32
    %c0_i32_0 = arith.constant 0 : i32
    return %arg0, %c0_i32 : i32, i32
  }
  func.func @transform_6(%arg0: i32) -> (i32, i32) {
    %c0_i32 = arith.constant 0 : i32
    %c0_i32_0 = arith.constant 0 : i32
    return %arg0, %c0_i32 : i32, i32
  }
}

module attributes {stable_mosaic.version = 11 : i64} {
  func.func @_linear_kernel(%arg0: i32, %arg1: memref<8x32xf32, #tpu.memory_space<vmem>>, %arg2: memref<32x64xbf16, #tpu.memory_space<vmem>>, %arg3: memref<1x64xf32, #tpu.memory_space<vmem>>, %arg4: memref<8x64xf32, #tpu.memory_space<vmem>>) attributes {dimension_semantics = [#tpu.dimension_semantics<parallel>], iteration_bounds = array<i64: 2>, scalar_prefetch = 0 : i64, scratch_operands = 0 : i64, tpu.core_type = #tpu.core_type<tc>, window_params = [{transform_indices = @transform_0, window_bounds = array<i64: 8, 32>}, {pipeline_mode = #tpu.pipeline_mode<synchronous>, transform_indices = @transform_1, window_bounds = array<i64: 32, 64>}, {pipeline_mode = #tpu.pipeline_mode<synchronous>, transform_indices = @transform_2, window_bounds = array<i64: 1, 64>}, {transform_indices = @transform_3, window_bounds = array<i64: 8, 64>}]} {
    %c0 = arith.constant 0 : index
    %c0_0 = arith.constant 0 : index
    %0 = vector.load %arg1[%c0, %c0_0] : memref<8x32xf32, #tpu.memory_space<vmem>>, vector<8x32xf32>
    %1 = arith.truncf %0 : vector<8x32xf32> to vector<8x32xbf16>
    %c0_1 = arith.constant 0 : index
    %c0_2 = arith.constant 0 : index
    %2 = vector.load %arg2[%c0_1, %c0_2] : memref<32x64xbf16, #tpu.memory_space<vmem>>, vector<32x64xbf16>
    %cst = arith.constant dense<0.000000e+00> : vector<8x64xf32>
    %3 = tpu.matmul %1, %2, %cst {dimension_numbers = #tpu.dot_dimension_numbers<[1], [0], [0], [1], [0, 0, 1, 1], [], []>} : vector<8x32xbf16>, vector<32x64xbf16>, vector<8x64xf32> -> vector<8x64xf32>
    %c0_3 = arith.constant 0 : index
    %c0_4 = arith.constant 0 : index
    %4 = vector.load %arg3[%c0_3, %c0_4] : memref<1x64xf32, #tpu.memory_space<vmem>>, vector<1x64xf32>
    %5 = vector.broadcast %4 : vector<1x64xf32> to vector<8x64xf32>
    %6 = arith.addf %3, %5 : vector<8x64xf32>
    %c0_5 = arith.constant 0 : index
    %c0_6 = arith.constant 0 : index
    %7 = vector.load %arg4[%c0_5, %c0_6] : memref<8x64xf32, #tpu.memory_space<vmem>>, vector<8x64xf32>
    tpu.vector_store %arg4[%c0_5, %c0_6], %6 {strides = array<i32>} : memref<8x64xf32, #tpu.memory_space<vmem>>, vector<8x64xf32>,
    return
  }
  func.func @transform_0(%arg0: i32) -> (i32, i32) {
    %c0_i32 = arith.constant 0 : i32
    %c0_i32_0 = arith.constant 0 : i32
    return %arg0, %c0_i32 : i32, i32
  }
  func.func @transform_1(%arg0: i32) -> (i32, i32) {
    %c0_i32 = arith.constant 0 : i32
    %c0_i32_0 = arith.constant 0 : i32
    %c0_i32_1 = arith.constant 0 : i32
    return %c0_i32, %c0_i32_0 : i32, i32
  }
  func.func @transform_2(%arg0: i32) -> (i32, i32) {
    %c0_i32 = arith.constant 0 : i32
    %c0_i32_0 = arith.constant 0 : i32
    %c0_i32_1 = arith.constant 0 : i32
    return %c0_i32, %c0_i32_0 : i32, i32
  }
  func.func @transform_3(%arg0: i32) -> (i32, i32) {
    %c0_i32 = arith.constant 0 : i32
    %c0_i32_0 = arith.constant 0 : i32
    return %arg0, %c0_i32 : i32, i32
  }
}

module attributes {stable_mosaic.version = 11 : i64} {
  func.func @_linear_kernel(%arg0: i32, %arg1: memref<128x32xf32, #tpu.memory_space<vmem>>, %arg2: memref<32x32xbf16, #tpu.memory_space<vmem>>, %arg3: memref<1x32xf32, #tpu.memory_space<vmem>>, %arg4: memref<128x32xf32, #tpu.memory_space<vmem>>) attributes {dimension_semantics = [#tpu.dimension_semantics<parallel>], iteration_bounds = array<i64: 2>, scalar_prefetch = 0 : i64, scratch_operands = 0 : i64, tpu.core_type = #tpu.core_type<tc>, window_params = [{transform_indices = @transform_0, window_bounds = array<i64: 128, 32>}, {pipeline_mode = #tpu.pipeline_mode<synchronous>, transform_indices = @transform_1, window_bounds = array<i64: 32, 32>}, {pipeline_mode = #tpu.pipeline_mode<synchronous>, transform_indices = @transform_2, window_bounds = array<i64: 1, 32>}, {transform_indices = @transform_3, window_bounds = array<i64: 128, 32>}]} {
    %c0 = arith.constant 0 : index
    %c0_0 = arith.constant 0 : index
    %0 = vector.load %arg1[%c0, %c0_0] : memref<128x32xf32, #tpu.memory_space<vmem>>, vector<128x32xf32>
    %1 = arith.truncf %0 : vector<128x32xf32> to vector<128x32xbf16>
    %c0_1 = arith.constant 0 : index
    %c0_2 = arith.constant 0 : index
    %2 = vector.load %arg2[%c0_1, %c0_2] : memref<32x32xbf16, #tpu.memory_space<vmem>>, vector<32x32xbf16>
    %cst = arith.constant dense<0.000000e+00> : vector<128x32xf32>
    %3 = tpu.matmul %1, %2, %cst {dimension_numbers = #tpu.dot_dimension_numbers<[1], [0], [0], [1], [0, 0, 1, 1], [], []>} : vector<128x32xbf16>, vector<32x32xbf16>, vector<128x32xf32> -> vector<128x32xf32>
    %c0_3 = arith.constant 0 : index
    %c0_4 = arith.constant 0 : index
    %4 = vector.load %arg3[%c0_3, %c0_4] : memref<1x32xf32, #tpu.memory_space<vmem>>, vector<1x32xf32>
    %5 = vector.broadcast %4 : vector<1x32xf32> to vector<128x32xf32>
    %6 = arith.addf %3, %5 : vector<128x32xf32>
    %c0_5 = arith.constant 0 : index
    %c0_6 = arith.constant 0 : index
    %7 = vector.load %arg4[%c0_5, %c0_6] : memref<128x32xf32, #tpu.memory_space<vmem>>, vector<128x32xf32>
    tpu.vector_store %arg4[%c0_5, %c0_6], %6 {strides = array<i32>} : memref<128x32xf32, #tpu.memory_space<vmem>>, vector<128x32xf32>,
    return
  }
  func.func @transform_0(%arg0: i32) -> (i32, i32) {
    %c0_i32 = arith.constant 0 : i32
    %c0_i32_0 = arith.constant 0 : i32
    return %arg0, %c0_i32 : i32, i32
  }
  func.func @transform_1(%arg0: i32) -> (i32, i32) {
    %c0_i32 = arith.constant 0 : i32
    %c0_i32_0 = arith.constant 0 : i32
    %c0_i32_1 = arith.constant 0 : i32
    return %c0_i32, %c0_i32_0 : i32, i32
  }
  func.func @transform_2(%arg0: i32) -> (i32, i32) {
    %c0_i32 = arith.constant 0 : i32
    %c0_i32_0 = arith.constant 0 : i32
    %c0_i32_1 = arith.constant 0 : i32
    return %c0_i32, %c0_i32_0 : i32, i32
  }
  func.func @transform_3(%arg0: i32) -> (i32, i32) {
    %c0_i32 = arith.constant 0 : i32
    %c0_i32_0 = arith.constant 0 : i32
    return %arg0, %c0_i32 : i32, i32
  }
}

module attributes {stable_mosaic.version = 11 : i64} {
  func.func @_ln_linear_kernel(%arg0: i32, %arg1: memref<128x32xf32, #tpu.memory_space<vmem>>, %arg2: memref<1x32xf32, #tpu.memory_space<vmem>>, %arg3: memref<1x32xf32, #tpu.memory_space<vmem>>, %arg4: memref<32x1960xbf16, #tpu.memory_space<vmem>>, %arg5: memref<1x1960xf32, #tpu.memory_space<vmem>>, %arg6: memref<128x1960xf32, #tpu.memory_space<vmem>>, %arg7: memref<128x32xf32, #tpu.memory_space<vmem>>) attributes {dimension_semantics = [#tpu.dimension_semantics<parallel>], iteration_bounds = array<i64: 2>, scalar_prefetch = 0 : i64, scratch_operands = 0 : i64, tpu.core_type = #tpu.core_type<tc>, window_params = [{transform_indices = @transform_0, window_bounds = array<i64: 128, 32>}, {pipeline_mode = #tpu.pipeline_mode<synchronous>, transform_indices = @transform_1, window_bounds = array<i64: 1, 32>}, {pipeline_mode = #tpu.pipeline_mode<synchronous>, transform_indices = @transform_2, window_bounds = array<i64: 1, 32>}, {pipeline_mode = #tpu.pipeline_mode<synchronous>, transform_indices = @transform_3, window_bounds = array<i64: 32, 1960>}, {pipeline_mode = #tpu.pipeline_mode<synchronous>, transform_indices = @transform_4, window_bounds = array<i64: 1, 1960>}, {transform_indices = @transform_5, window_bounds = array<i64: 128, 1960>}, {transform_indices = @transform_6, window_bounds = array<i64: 128, 32>}]} {
    %c0 = arith.constant 0 : index
    %c0_0 = arith.constant 0 : index
    %0 = vector.load %arg1[%c0, %c0_0] : memref<128x32xf32, #tpu.memory_space<vmem>>, vector<128x32xf32>
    %cst = arith.constant dense<0.000000e+00> : vector<128xf32>
    %1 = vector.multi_reduction <add>, %0, %cst [1] : vector<128x32xf32> to vector<128xf32>
    %2 = vector.shape_cast %1 : vector<128xf32> to vector<128x1xf32>
    %cst_1 = arith.constant 3.200000e+01 : f32
    %3 = vector.broadcast %cst_1 : f32 to vector<128x1xf32>
    %4 = arith.divf %2, %3 : vector<128x1xf32>
    %5 = vector.broadcast %4 : vector<128x1xf32> to vector<128x32xf32>
    %6 = arith.subf %0, %5 : vector<128x32xf32>
    %7 = arith.mulf %6, %6 : vector<128x32xf32>
    %cst_2 = arith.constant dense<0.000000e+00> : vector<128xf32>
    %8 = vector.multi_reduction <add>, %7, %cst_2 [1] : vector<128x32xf32> to vector<128xf32>
    %9 = vector.shape_cast %8 : vector<128xf32> to vector<128x1xf32>
    %cst_3 = arith.constant 3.200000e+01 : f32
    %10 = vector.broadcast %cst_3 : f32 to vector<128x1xf32>
    %11 = arith.divf %9, %10 : vector<128x1xf32>
    %12 = vector.broadcast %4 : vector<128x1xf32> to vector<128x32xf32>
    %13 = arith.subf %0, %12 : vector<128x32xf32>
    %cst_4 = arith.constant 9.99999974E-6 : f32
    %14 = vector.broadcast %cst_4 : f32 to vector<128x1xf32>
    %15 = arith.addf %11, %14 : vector<128x1xf32>
    %16 = math.rsqrt %15 : vector<128x1xf32>
    %17 = vector.broadcast %16 : vector<128x1xf32> to vector<128x32xf32>
    %18 = arith.mulf %13, %17 : vector<128x32xf32>
    %c0_5 = arith.constant 0 : index
    %c0_6 = arith.constant 0 : index
    %19 = vector.load %arg2[%c0_5, %c0_6] : memref<1x32xf32, #tpu.memory_space<vmem>>, vector<1x32xf32>
    %20 = vector.broadcast %19 : vector<1x32xf32> to vector<128x32xf32>
    %21 = arith.mulf %18, %20 : vector<128x32xf32>
    %c0_7 = arith.constant 0 : index
    %c0_8 = arith.constant 0 : index
    %22 = vector.load %arg3[%c0_7, %c0_8] : memref<1x32xf32, #tpu.memory_space<vmem>>, vector<1x32xf32>
    %23 = vector.broadcast %22 : vector<1x32xf32> to vector<128x32xf32>
    %24 = arith.addf %21, %23 : vector<128x32xf32>
    %c0_9 = arith.constant 0 : index
    %c0_10 = arith.constant 0 : index
    %25 = vector.load %arg7[%c0_9, %c0_10] : memref<128x32xf32, #tpu.memory_space<vmem>>, vector<128x32xf32>
    tpu.vector_store %arg7[%c0_9, %c0_10], %24 {strides = array<i32>} : memref<128x32xf32, #tpu.memory_space<vmem>>, vector<128x32xf32>,
    %26 = arith.truncf %24 : vector<128x32xf32> to vector<128x32xbf16>
    %c0_11 = arith.constant 0 : index
    %c0_12 = arith.constant 0 : index
    %27 = vector.load %arg4[%c0_11, %c0_12] : memref<32x1960xbf16, #tpu.memory_space<vmem>>, vector<32x1960xbf16>
    %cst_13 = arith.constant dense<0.000000e+00> : vector<128x1960xf32>
    %28 = tpu.matmul %26, %27, %cst_13 {dimension_numbers = #tpu.dot_dimension_numbers<[1], [0], [0], [1], [0, 0, 1, 1], [], []>} : vector<128x32xbf16>, vector<32x1960xbf16>, vector<128x1960xf32> -> vector<128x1960xf32>
    %c0_14 = arith.constant 0 : index
    %c0_15 = arith.constant 0 : index
    %29 = vector.load %arg5[%c0_14, %c0_15] : memref<1x1960xf32, #tpu.memory_space<vmem>>, vector<1x1960xf32>
    %30 = vector.broadcast %29 : vector<1x1960xf32> to vector<128x1960xf32>
    %31 = arith.addf %28, %30 : vector<128x1960xf32>
    %c0_16 = arith.constant 0 : index
    %c0_17 = arith.constant 0 : index
    %32 = vector.load %arg6[%c0_16, %c0_17] : memref<128x1960xf32, #tpu.memory_space<vmem>>, vector<128x1960xf32>
    tpu.vector_store %arg6[%c0_16, %c0_17], %31 {strides = array<i32>} : memref<128x1960xf32, #tpu.memory_space<vmem>>, vector<128x1960xf32>,
    return
  }
  func.func @transform_0(%arg0: i32) -> (i32, i32) {
    %c0_i32 = arith.constant 0 : i32
    %c0_i32_0 = arith.constant 0 : i32
    return %arg0, %c0_i32 : i32, i32
  }
  func.func @transform_1(%arg0: i32) -> (i32, i32) {
    %c0_i32 = arith.constant 0 : i32
    %c0_i32_0 = arith.constant 0 : i32
    %c0_i32_1 = arith.constant 0 : i32
    return %c0_i32, %c0_i32_0 : i32, i32
  }
  func.func @transform_2(%arg0: i32) -> (i32, i32) {
    %c0_i32 = arith.constant 0 : i32
    %c0_i32_0 = arith.constant 0 : i32
    %c0_i32_1 = arith.constant 0 : i32
    return %c0_i32, %c0_i32_0 : i32, i32
  }
  func.func @transform_3(%arg0: i32) -> (i32, i32) {
    %c0_i32 = arith.constant 0 : i32
    %c0_i32_0 = arith.constant 0 : i32
    %c0_i32_1 = arith.constant 0 : i32
    return %c0_i32, %c0_i32_0 : i32, i32
  }
  func.func @transform_4(%arg0: i32) -> (i32, i32) {
    %c0_i32 = arith.constant 0 : i32
    %c0_i32_0 = arith.constant 0 : i32
    %c0_i32_1 = arith.constant 0 : i32
    return %c0_i32, %c0_i32_0 : i32, i32
  }
  func.func @transform_5(%arg0: i32) -> (i32, i32) {
    %c0_i32 = arith.constant 0 : i32
    %c0_i32_0 = arith.constant 0 : i32
    return %arg0, %c0_i32 : i32, i32
  }
  func.func @transform_6(%arg0: i32) -> (i32, i32) {
    %c0_i32 = arith.constant 0 : i32
    %c0_i32_0 = arith.constant 0 : i32
    return %arg0, %c0_i32 : i32, i32
  }
}

module attributes {stable_mosaic.version = 11 : i64} {
  func.func @_sparse_attn_kernel(%arg0: i32, %arg1: memref<8xi32, #tpu.memory_space<smem>>, %arg2: memref<1x4x2x16x8xbf16, #tpu.memory_space<vmem>>, %arg3: memref<1x4x136x8xbf16, #tpu.memory_space<vmem>>, %arg4: memref<1x4x136x8xbf16, #tpu.memory_space<vmem>>, %arg5: memref<1x4x2x16x8xbf16, #tpu.memory_space<vmem>>, %arg6: memref<1x4x2x16x8xbf16, #tpu.memory_space<vmem>>, %arg7: memref<1x2x16x32xf32, #tpu.memory_space<vmem>>) attributes {dimension_semantics = [#tpu.dimension_semantics<parallel>], iteration_bounds = array<i64: 8>, scalar_prefetch = 1 : i64, scratch_operands = 0 : i64, tpu.core_type = #tpu.core_type<tc>, window_params = [{transform_indices = @transform_0, window_bounds = array<i64: 1, 4, 2, 16, 8>}, {transform_indices = @transform_1, window_bounds = array<i64: 1, 4, 136, 8>}, {transform_indices = @transform_2, window_bounds = array<i64: 1, 4, 136, 8>}, {transform_indices = @transform_3, window_bounds = array<i64: 1, 4, 2, 16, 8>}, {transform_indices = @transform_4, window_bounds = array<i64: 1, 4, 2, 16, 8>}, {transform_indices = @transform_5, window_bounds = array<i64: 1, 2, 16, 32>}]} {
    %0 = arith.index_cast %arg0 : i32 to index
    %1 = memref.load %arg1[%0] : memref<8xi32, #tpu.memory_space<smem>>
    %c0_i32 = arith.constant 0 : i32
    %2 = arith.cmpi sgt, %1, %c0_i32 : i32
    %3 = arith.extui %2 : i1 to i32
    %c0_i32_0 = arith.constant 0 : i32
    %4 = arith.cmpi ne, %3, %c0_i32_0 : i32
    scf.if %4 {
      %c0 = arith.constant 0 : index
      %c0_2 = arith.constant 0 : index
      %c0_3 = arith.constant 0 : index
      %c0_4 = arith.constant 0 : index
      %c0_5 = arith.constant 0 : index
      %8 = vector.load %arg2[%c0, %c0_2, %c0_3, %c0_4, %c0_5] : memref<1x4x2x16x8xbf16, #tpu.memory_space<vmem>>, vector<1x1x2x16x8xbf16>
      %9 = vector.shape_cast %8 : vector<1x1x2x16x8xbf16> to vector<2x16x8xbf16>
      %10 = vector.shape_cast %9 : vector<2x16x8xbf16> to vector<32x8xbf16>
      %c0_6 = arith.constant 0 : index
      %c0_7 = arith.constant 0 : index
      %c0_8 = arith.constant 0 : index
      %c0_9 = arith.constant 0 : index
      %11 = vector.load %arg3[%c0_6, %c0_7, %c0_8, %c0_9] : memref<1x4x136x8xbf16, #tpu.memory_space<vmem>>, vector<1x1x136x8xbf16>
      %12 = vector.shape_cast %11 : vector<1x1x136x8xbf16> to vector<136x8xbf16>
      %c0_10 = arith.constant 0 : index
      %c0_11 = arith.constant 0 : index
      %c0_12 = arith.constant 0 : index
      %c0_13 = arith.constant 0 : index
      %13 = vector.load %arg4[%c0_10, %c0_11, %c0_12, %c0_13] : memref<1x4x136x8xbf16, #tpu.memory_space<vmem>>, vector<1x1x136x8xbf16>
      %14 = vector.shape_cast %13 : vector<1x1x136x8xbf16> to vector<136x8xbf16>
      %cst = arith.constant dense<0.000000e+00> : vector<32x136xf32>
      %15 = tpu.matmul %10, %12, %cst {dimension_numbers = #tpu.dot_dimension_numbers<[1], [1], [0], [0], [0, 0, 1, 0], [], []>} : vector<32x8xbf16>, vector<136x8xbf16>, vector<32x136xf32> -> vector<32x136xf32>
      %cst_14 = arith.constant dense<0xFF800000> : vector<32xf32>
      %16 = vector.multi_reduction <maximumf>, %15, %cst_14 [1] : vector<32x136xf32> to vector<32xf32>
      %17 = vector.shape_cast %16 : vector<32xf32> to vector<32x1xf32>
      %18 = vector.broadcast %17 : vector<32x1xf32> to vector<32x136xf32>
      %19 = arith.subf %15, %18 : vector<32x136xf32>
      %20 = math.exp %19 : vector<32x136xf32>
      %cst_15 = arith.constant dense<0.000000e+00> : vector<32xf32>
      %21 = vector.multi_reduction <add>, %20, %cst_15 [1] : vector<32x136xf32> to vector<32xf32>
      %22 = vector.shape_cast %21 : vector<32xf32> to vector<32x1xf32>
      %23 = tpu.reciprocal %22 {approx = true} : vector<32x1xf32> -> vector<32x1xf32>
      %24 = vector.broadcast %23 : vector<32x1xf32> to vector<32x136xf32>
      %25 = arith.mulf %20, %24 : vector<32x136xf32>
      %26 = arith.truncf %25 : vector<32x136xf32> to vector<32x136xbf16>
      %cst_16 = arith.constant dense<0.000000e+00> : vector<32x8xf32>
      %27 = tpu.matmul %26, %14, %cst_16 {dimension_numbers = #tpu.dot_dimension_numbers<[1], [0], [0], [1], [0, 0, 1, 1], [], []>} : vector<32x136xbf16>, vector<136x8xbf16>, vector<32x8xf32> -> vector<32x8xf32>
      %c0_17 = arith.constant 0 : index
      %c1 = arith.constant 1 : index
      %c0_18 = arith.constant 0 : index
      %c0_19 = arith.constant 0 : index
      %c0_20 = arith.constant 0 : index
      %28 = vector.load %arg2[%c0_17, %c1, %c0_18, %c0_19, %c0_20] : memref<1x4x2x16x8xbf16, #tpu.memory_space<vmem>>, vector<1x1x2x16x8xbf16>
      %29 = vector.shape_cast %28 : vector<1x1x2x16x8xbf16> to vector<2x16x8xbf16>
      %30 = vector.shape_cast %29 : vector<2x16x8xbf16> to vector<32x8xbf16>
      %c0_21 = arith.constant 0 : index
      %c1_22 = arith.constant 1 : index
      %c0_23 = arith.constant 0 : index
      %c0_24 = arith.constant 0 : index
      %31 = vector.load %arg3[%c0_21, %c1_22, %c0_23, %c0_24] : memref<1x4x136x8xbf16, #tpu.memory_space<vmem>>, vector<1x1x136x8xbf16>
      %32 = vector.shape_cast %31 : vector<1x1x136x8xbf16> to vector<136x8xbf16>
      %c0_25 = arith.constant 0 : index
      %c1_26 = arith.constant 1 : index
      %c0_27 = arith.constant 0 : index
      %c0_28 = arith.constant 0 : index
      %33 = vector.load %arg4[%c0_25, %c1_26, %c0_27, %c0_28] : memref<1x4x136x8xbf16, #tpu.memory_space<vmem>>, vector<1x1x136x8xbf16>
      %34 = vector.shape_cast %33 : vector<1x1x136x8xbf16> to vector<136x8xbf16>
      %cst_29 = arith.constant dense<0.000000e+00> : vector<32x136xf32>
      %35 = tpu.matmul %30, %32, %cst_29 {dimension_numbers = #tpu.dot_dimension_numbers<[1], [1], [0], [0], [0, 0, 1, 0], [], []>} : vector<32x8xbf16>, vector<136x8xbf16>, vector<32x136xf32> -> vector<32x136xf32>
      %cst_30 = arith.constant dense<0xFF800000> : vector<32xf32>
      %36 = vector.multi_reduction <maximumf>, %35, %cst_30 [1] : vector<32x136xf32> to vector<32xf32>
      %37 = vector.shape_cast %36 : vector<32xf32> to vector<32x1xf32>
      %38 = vector.broadcast %37 : vector<32x1xf32> to vector<32x136xf32>
      %39 = arith.subf %35, %38 : vector<32x136xf32>
      %40 = math.exp %39 : vector<32x136xf32>
      %cst_31 = arith.constant dense<0.000000e+00> : vector<32xf32>
      %41 = vector.multi_reduction <add>, %40, %cst_31 [1] : vector<32x136xf32> to vector<32xf32>
      %42 = vector.shape_cast %41 : vector<32xf32> to vector<32x1xf32>
      %43 = tpu.reciprocal %42 {approx = true} : vector<32x1xf32> -> vector<32x1xf32>
      %44 = vector.broadcast %43 : vector<32x1xf32> to vector<32x136xf32>
      %45 = arith.mulf %40, %44 : vector<32x136xf32>
      %46 = arith.truncf %45 : vector<32x136xf32> to vector<32x136xbf16>
      %cst_32 = arith.constant dense<0.000000e+00> : vector<32x8xf32>
      %47 = tpu.matmul %46, %34, %cst_32 {dimension_numbers = #tpu.dot_dimension_numbers<[1], [0], [0], [1], [0, 0, 1, 1], [], []>} : vector<32x136xbf16>, vector<136x8xbf16>, vector<32x8xf32> -> vector<32x8xf32>
      %c0_33 = arith.constant 0 : index
      %c2 = arith.constant 2 : index
      %c0_34 = arith.constant 0 : index
      %c0_35 = arith.constant 0 : index
      %c0_36 = arith.constant 0 : index
      %48 = vector.load %arg2[%c0_33, %c2, %c0_34, %c0_35, %c0_36] : memref<1x4x2x16x8xbf16, #tpu.memory_space<vmem>>, vector<1x1x2x16x8xbf16>
      %49 = vector.shape_cast %48 : vector<1x1x2x16x8xbf16> to vector<2x16x8xbf16>
      %50 = vector.shape_cast %49 : vector<2x16x8xbf16> to vector<32x8xbf16>
      %c0_37 = arith.constant 0 : index
      %c2_38 = arith.constant 2 : index
      %c0_39 = arith.constant 0 : index
      %c0_40 = arith.constant 0 : index
      %51 = vector.load %arg3[%c0_37, %c2_38, %c0_39, %c0_40] : memref<1x4x136x8xbf16, #tpu.memory_space<vmem>>, vector<1x1x136x8xbf16>
      %52 = vector.shape_cast %51 : vector<1x1x136x8xbf16> to vector<136x8xbf16>
      %c0_41 = arith.constant 0 : index
      %c2_42 = arith.constant 2 : index
      %c0_43 = arith.constant 0 : index
      %c0_44 = arith.constant 0 : index
      %53 = vector.load %arg4[%c0_41, %c2_42, %c0_43, %c0_44] : memref<1x4x136x8xbf16, #tpu.memory_space<vmem>>, vector<1x1x136x8xbf16>
      %54 = vector.shape_cast %53 : vector<1x1x136x8xbf16> to vector<136x8xbf16>
      %cst_45 = arith.constant dense<0.000000e+00> : vector<32x136xf32>
      %55 = tpu.matmul %50, %52, %cst_45 {dimension_numbers = #tpu.dot_dimension_numbers<[1], [1], [0], [0], [0, 0, 1, 0], [], []>} : vector<32x8xbf16>, vector<136x8xbf16>, vector<32x136xf32> -> vector<32x136xf32>
      %cst_46 = arith.constant dense<0xFF800000> : vector<32xf32>
      %56 = vector.multi_reduction <maximumf>, %55, %cst_46 [1] : vector<32x136xf32> to vector<32xf32>
      %57 = vector.shape_cast %56 : vector<32xf32> to vector<32x1xf32>
      %58 = vector.broadcast %57 : vector<32x1xf32> to vector<32x136xf32>
      %59 = arith.subf %55, %58 : vector<32x136xf32>
      %60 = math.exp %59 : vector<32x136xf32>
      %cst_47 = arith.constant dense<0.000000e+00> : vector<32xf32>
      %61 = vector.multi_reduction <add>, %60, %cst_47 [1] : vector<32x136xf32> to vector<32xf32>
      %62 = vector.shape_cast %61 : vector<32xf32> to vector<32x1xf32>
      %63 = tpu.reciprocal %62 {approx = true} : vector<32x1xf32> -> vector<32x1xf32>
      %64 = vector.broadcast %63 : vector<32x1xf32> to vector<32x136xf32>
      %65 = arith.mulf %60, %64 : vector<32x136xf32>
      %66 = arith.truncf %65 : vector<32x136xf32> to vector<32x136xbf16>
      %cst_48 = arith.constant dense<0.000000e+00> : vector<32x8xf32>
      %67 = tpu.matmul %66, %54, %cst_48 {dimension_numbers = #tpu.dot_dimension_numbers<[1], [0], [0], [1], [0, 0, 1, 1], [], []>} : vector<32x136xbf16>, vector<136x8xbf16>, vector<32x8xf32> -> vector<32x8xf32>
      %c0_49 = arith.constant 0 : index
      %c3 = arith.constant 3 : index
      %c0_50 = arith.constant 0 : index
      %c0_51 = arith.constant 0 : index
      %c0_52 = arith.constant 0 : index
      %68 = vector.load %arg2[%c0_49, %c3, %c0_50, %c0_51, %c0_52] : memref<1x4x2x16x8xbf16, #tpu.memory_space<vmem>>, vector<1x1x2x16x8xbf16>
      %69 = vector.shape_cast %68 : vector<1x1x2x16x8xbf16> to vector<2x16x8xbf16>
      %70 = vector.shape_cast %69 : vector<2x16x8xbf16> to vector<32x8xbf16>
      %c0_53 = arith.constant 0 : index
      %c3_54 = arith.constant 3 : index
      %c0_55 = arith.constant 0 : index
      %c0_56 = arith.constant 0 : index
      %71 = vector.load %arg3[%c0_53, %c3_54, %c0_55, %c0_56] : memref<1x4x136x8xbf16, #tpu.memory_space<vmem>>, vector<1x1x136x8xbf16>
      %72 = vector.shape_cast %71 : vector<1x1x136x8xbf16> to vector<136x8xbf16>
      %c0_57 = arith.constant 0 : index
      %c3_58 = arith.constant 3 : index
      %c0_59 = arith.constant 0 : index
      %c0_60 = arith.constant 0 : index
      %73 = vector.load %arg4[%c0_57, %c3_58, %c0_59, %c0_60] : memref<1x4x136x8xbf16, #tpu.memory_space<vmem>>, vector<1x1x136x8xbf16>
      %74 = vector.shape_cast %73 : vector<1x1x136x8xbf16> to vector<136x8xbf16>
      %cst_61 = arith.constant dense<0.000000e+00> : vector<32x136xf32>
      %75 = tpu.matmul %70, %72, %cst_61 {dimension_numbers = #tpu.dot_dimension_numbers<[1], [1], [0], [0], [0, 0, 1, 0], [], []>} : vector<32x8xbf16>, vector<136x8xbf16>, vector<32x136xf32> -> vector<32x136xf32>
      %cst_62 = arith.constant dense<0xFF800000> : vector<32xf32>
      %76 = vector.multi_reduction <maximumf>, %75, %cst_62 [1] : vector<32x136xf32> to vector<32xf32>
      %77 = vector.shape_cast %76 : vector<32xf32> to vector<32x1xf32>
      %78 = vector.broadcast %77 : vector<32x1xf32> to vector<32x136xf32>
      %79 = arith.subf %75, %78 : vector<32x136xf32>
      %80 = math.exp %79 : vector<32x136xf32>
      %cst_63 = arith.constant dense<0.000000e+00> : vector<32xf32>
      %81 = vector.multi_reduction <add>, %80, %cst_63 [1] : vector<32x136xf32> to vector<32xf32>
      %82 = vector.shape_cast %81 : vector<32xf32> to vector<32x1xf32>
      %83 = tpu.reciprocal %82 {approx = true} : vector<32x1xf32> -> vector<32x1xf32>
      %84 = vector.broadcast %83 : vector<32x1xf32> to vector<32x136xf32>
      %85 = arith.mulf %80, %84 : vector<32x136xf32>
      %86 = arith.truncf %85 : vector<32x136xf32> to vector<32x136xbf16>
      %cst_64 = arith.constant dense<0.000000e+00> : vector<32x8xf32>
      %87 = tpu.matmul %86, %74, %cst_64 {dimension_numbers = #tpu.dot_dimension_numbers<[1], [0], [0], [1], [0, 0, 1, 1], [], []>} : vector<32x136xbf16>, vector<136x8xbf16>, vector<32x8xf32> -> vector<32x8xf32>
      %88 = tpu.concatenate %27, %47, %67, %87 in 1 : vector<32x8xf32>, vector<32x8xf32>, vector<32x8xf32>, vector<32x8xf32> -> vector<32x32xf32>
      %89 = vector.shape_cast %88 : vector<32x32xf32> to vector<2x16x32xf32>
      %c0_65 = arith.constant 0 : index
      %c0_66 = arith.constant 0 : index
      %c0_67 = arith.constant 0 : index
      %c0_68 = arith.constant 0 : index
      %90 = vector.load %arg7[%c0_65, %c0_66, %c0_67, %c0_68] : memref<1x2x16x32xf32, #tpu.memory_space<vmem>>, vector<1x2x16x32xf32>
      %91 = vector.shape_cast %90 : vector<1x2x16x32xf32> to vector<2x16x32xf32>
      %92 = vector.shape_cast %89 : vector<2x16x32xf32> to vector<1x2x16x32xf32>
      tpu.vector_store %arg7[%c0_65, %c0_66, %c0_67, %c0_68], %92 {strides = array<i32>} : memref<1x2x16x32xf32, #tpu.memory_space<vmem>>, vector<1x2x16x32xf32>,
    } else {
    }
    %true = arith.constant true
    %5 = arith.xori %2, %true : i1
    %6 = arith.extui %5 : i1 to i32
    %c0_i32_1 = arith.constant 0 : i32
    %7 = arith.cmpi ne, %6, %c0_i32_1 : i32
    scf.if %7 {
      %c0 = arith.constant 0 : index
      %c0_2 = arith.constant 0 : index
      %c0_3 = arith.constant 0 : index
      %c0_4 = arith.constant 0 : index
      %c0_5 = arith.constant 0 : index
      %8 = vector.load %arg2[%c0, %c0_2, %c0_3, %c0_4, %c0_5] : memref<1x4x2x16x8xbf16, #tpu.memory_space<vmem>>, vector<1x1x2x16x8xbf16>
      %9 = vector.shape_cast %8 : vector<1x1x2x16x8xbf16> to vector<2x16x8xbf16>
      %c0_6 = arith.constant 0 : index
      %c0_7 = arith.constant 0 : index
      %c0_8 = arith.constant 0 : index
      %c0_9 = arith.constant 0 : index
      %c0_10 = arith.constant 0 : index
      %10 = vector.load %arg5[%c0_6, %c0_7, %c0_8, %c0_9, %c0_10] : memref<1x4x2x16x8xbf16, #tpu.memory_space<vmem>>, vector<1x1x2x16x8xbf16>
      %11 = vector.shape_cast %10 : vector<1x1x2x16x8xbf16> to vector<2x16x8xbf16>
      %c0_11 = arith.constant 0 : index
      %c0_12 = arith.constant 0 : index
      %c0_13 = arith.constant 0 : index
      %c0_14 = arith.constant 0 : index
      %c0_15 = arith.constant 0 : index
      %12 = vector.load %arg6[%c0_11, %c0_12, %c0_13, %c0_14, %c0_15] : memref<1x4x2x16x8xbf16, #tpu.memory_space<vmem>>, vector<1x1x2x16x8xbf16>
      %13 = vector.shape_cast %12 : vector<1x1x2x16x8xbf16> to vector<2x16x8xbf16>
      "tpu.trace_start"() <{level = 10 : i32, message = "tqd,tkd->tqk"}> : () -> ()
      %cst = arith.constant dense<0.000000e+00> : vector<2x16x16xf32>
      %14 = tpu.matmul %9, %11, %cst {dimension_numbers = #tpu.dot_dimension_numbers<[2], [2], [1], [1], [0, 0, 0, 1, 1, 1], [0], [0]>} : vector<2x16x8xbf16>, vector<2x16x8xbf16>, vector<2x16x16xf32> -> vector<2x16x16xf32>
      "tpu.trace_stop"() : () -> ()
      %cst_16 = arith.constant dense<0xFF800000> : vector<2x16xf32>
      %15 = vector.multi_reduction <maximumf>, %14, %cst_16 [2] : vector<2x16x16xf32> to vector<2x16xf32>
      %16 = vector.shape_cast %15 : vector<2x16xf32> to vector<2x16x1xf32>
      %17 = vector.broadcast %16 : vector<2x16x1xf32> to vector<2x16x16xf32>
      %18 = arith.subf %14, %17 : vector<2x16x16xf32>
      %19 = math.exp %18 : vector<2x16x16xf32>
      %cst_17 = arith.constant dense<0.000000e+00> : vector<2x16xf32>
      %20 = vector.multi_reduction <add>, %19, %cst_17 [2] : vector<2x16x16xf32> to vector<2x16xf32>
      %21 = vector.shape_cast %20 : vector<2x16xf32> to vector<2x16x1xf32>
      %22 = tpu.reciprocal %21 {approx = true} : vector<2x16x1xf32> -> vector<2x16x1xf32>
      %23 = vector.broadcast %22 : vector<2x16x1xf32> to vector<2x16x16xf32>
      %24 = arith.mulf %19, %23 : vector<2x16x16xf32>
      %25 = arith.truncf %24 : vector<2x16x16xf32> to vector<2x16x16xbf16>
      "tpu.trace_start"() <{level = 10 : i32, message = "tqk,tkd->tqd"}> : () -> ()
      %cst_18 = arith.constant dense<0.000000e+00> : vector<2x16x8xf32>
      %26 = tpu.matmul %25, %13, %cst_18 {dimension_numbers = #tpu.dot_dimension_numbers<[2], [1], [1], [2], [0, 0, 0, 1, 1, 2], [0], [0]>} : vector<2x16x16xbf16>, vector<2x16x8xbf16>, vector<2x16x8xf32> -> vector<2x16x8xf32>
      "tpu.trace_stop"() : () -> ()
      %c0_19 = arith.constant 0 : index
      %c1 = arith.constant 1 : index
      %c0_20 = arith.constant 0 : index
      %c0_21 = arith.constant 0 : index
      %c0_22 = arith.constant 0 : index
      %27 = vector.load %arg2[%c0_19, %c1, %c0_20, %c0_21, %c0_22] : memref<1x4x2x16x8xbf16, #tpu.memory_space<vmem>>, vector<1x1x2x16x8xbf16>
      %28 = vector.shape_cast %27 : vector<1x1x2x16x8xbf16> to vector<2x16x8xbf16>
      %c0_23 = arith.constant 0 : index
      %c1_24 = arith.constant 1 : index
      %c0_25 = arith.constant 0 : index
      %c0_26 = arith.constant 0 : index
      %c0_27 = arith.constant 0 : index
      %29 = vector.load %arg5[%c0_23, %c1_24, %c0_25, %c0_26, %c0_27] : memref<1x4x2x16x8xbf16, #tpu.memory_space<vmem>>, vector<1x1x2x16x8xbf16>
      %30 = vector.shape_cast %29 : vector<1x1x2x16x8xbf16> to vector<2x16x8xbf16>
      %c0_28 = arith.constant 0 : index
      %c1_29 = arith.constant 1 : index
      %c0_30 = arith.constant 0 : index
      %c0_31 = arith.constant 0 : index
      %c0_32 = arith.constant 0 : index
      %31 = vector.load %arg6[%c0_28, %c1_29, %c0_30, %c0_31, %c0_32] : memref<1x4x2x16x8xbf16, #tpu.memory_space<vmem>>, vector<1x1x2x16x8xbf16>
      %32 = vector.shape_cast %31 : vector<1x1x2x16x8xbf16> to vector<2x16x8xbf16>
      "tpu.trace_start"() <{level = 10 : i32, message = "tqd,tkd->tqk"}> : () -> ()
      %cst_33 = arith.constant dense<0.000000e+00> : vector<2x16x16xf32>
      %33 = tpu.matmul %28, %30, %cst_33 {dimension_numbers = #tpu.dot_dimension_numbers<[2], [2], [1], [1], [0, 0, 0, 1, 1, 1], [0], [0]>} : vector<2x16x8xbf16>, vector<2x16x8xbf16>, vector<2x16x16xf32> -> vector<2x16x16xf32>
      "tpu.trace_stop"() : () -> ()
      %cst_34 = arith.constant dense<0xFF800000> : vector<2x16xf32>
      %34 = vector.multi_reduction <maximumf>, %33, %cst_34 [2] : vector<2x16x16xf32> to vector<2x16xf32>
      %35 = vector.shape_cast %34 : vector<2x16xf32> to vector<2x16x1xf32>
      %36 = vector.broadcast %35 : vector<2x16x1xf32> to vector<2x16x16xf32>
      %37 = arith.subf %33, %36 : vector<2x16x16xf32>
      %38 = math.exp %37 : vector<2x16x16xf32>
      %cst_35 = arith.constant dense<0.000000e+00> : vector<2x16xf32>
      %39 = vector.multi_reduction <add>, %38, %cst_35 [2] : vector<2x16x16xf32> to vector<2x16xf32>
      %40 = vector.shape_cast %39 : vector<2x16xf32> to vector<2x16x1xf32>
      %41 = tpu.reciprocal %40 {approx = true} : vector<2x16x1xf32> -> vector<2x16x1xf32>
      %42 = vector.broadcast %41 : vector<2x16x1xf32> to vector<2x16x16xf32>
      %43 = arith.mulf %38, %42 : vector<2x16x16xf32>
      %44 = arith.truncf %43 : vector<2x16x16xf32> to vector<2x16x16xbf16>
      "tpu.trace_start"() <{level = 10 : i32, message = "tqk,tkd->tqd"}> : () -> ()
      %cst_36 = arith.constant dense<0.000000e+00> : vector<2x16x8xf32>
      %45 = tpu.matmul %44, %32, %cst_36 {dimension_numbers = #tpu.dot_dimension_numbers<[2], [1], [1], [2], [0, 0, 0, 1, 1, 2], [0], [0]>} : vector<2x16x16xbf16>, vector<2x16x8xbf16>, vector<2x16x8xf32> -> vector<2x16x8xf32>
      "tpu.trace_stop"() : () -> ()
      %c0_37 = arith.constant 0 : index
      %c2 = arith.constant 2 : index
      %c0_38 = arith.constant 0 : index
      %c0_39 = arith.constant 0 : index
      %c0_40 = arith.constant 0 : index
      %46 = vector.load %arg2[%c0_37, %c2, %c0_38, %c0_39, %c0_40] : memref<1x4x2x16x8xbf16, #tpu.memory_space<vmem>>, vector<1x1x2x16x8xbf16>
      %47 = vector.shape_cast %46 : vector<1x1x2x16x8xbf16> to vector<2x16x8xbf16>
      %c0_41 = arith.constant 0 : index
      %c2_42 = arith.constant 2 : index
      %c0_43 = arith.constant 0 : index
      %c0_44 = arith.constant 0 : index
      %c0_45 = arith.constant 0 : index
      %48 = vector.load %arg5[%c0_41, %c2_42, %c0_43, %c0_44, %c0_45] : memref<1x4x2x16x8xbf16, #tpu.memory_space<vmem>>, vector<1x1x2x16x8xbf16>
      %49 = vector.shape_cast %48 : vector<1x1x2x16x8xbf16> to vector<2x16x8xbf16>
      %c0_46 = arith.constant 0 : index
      %c2_47 = arith.constant 2 : index
      %c0_48 = arith.constant 0 : index
      %c0_49 = arith.constant 0 : index
      %c0_50 = arith.constant 0 : index
      %50 = vector.load %arg6[%c0_46, %c2_47, %c0_48, %c0_49, %c0_50] : memref<1x4x2x16x8xbf16, #tpu.memory_space<vmem>>, vector<1x1x2x16x8xbf16>
      %51 = vector.shape_cast %50 : vector<1x1x2x16x8xbf16> to vector<2x16x8xbf16>
      "tpu.trace_start"() <{level = 10 : i32, message = "tqd,tkd->tqk"}> : () -> ()
      %cst_51 = arith.constant dense<0.000000e+00> : vector<2x16x16xf32>
      %52 = tpu.matmul %47, %49, %cst_51 {dimension_numbers = #tpu.dot_dimension_numbers<[2], [2], [1], [1], [0, 0, 0, 1, 1, 1], [0], [0]>} : vector<2x16x8xbf16>, vector<2x16x8xbf16>, vector<2x16x16xf32> -> vector<2x16x16xf32>
      "tpu.trace_stop"() : () -> ()
      %cst_52 = arith.constant dense<0xFF800000> : vector<2x16xf32>
      %53 = vector.multi_reduction <maximumf>, %52, %cst_52 [2] : vector<2x16x16xf32> to vector<2x16xf32>
      %54 = vector.shape_cast %53 : vector<2x16xf32> to vector<2x16x1xf32>
      %55 = vector.broadcast %54 : vector<2x16x1xf32> to vector<2x16x16xf32>
      %56 = arith.subf %52, %55 : vector<2x16x16xf32>
      %57 = math.exp %56 : vector<2x16x16xf32>
      %cst_53 = arith.constant dense<0.000000e+00> : vector<2x16xf32>
      %58 = vector.multi_reduction <add>, %57, %cst_53 [2] : vector<2x16x16xf32> to vector<2x16xf32>
      %59 = vector.shape_cast %58 : vector<2x16xf32> to vector<2x16x1xf32>
      %60 = tpu.reciprocal %59 {approx = true} : vector<2x16x1xf32> -> vector<2x16x1xf32>
      %61 = vector.broadcast %60 : vector<2x16x1xf32> to vector<2x16x16xf32>
      %62 = arith.mulf %57, %61 : vector<2x16x16xf32>
      %63 = arith.truncf %62 : vector<2x16x16xf32> to vector<2x16x16xbf16>
      "tpu.trace_start"() <{level = 10 : i32, message = "tqk,tkd->tqd"}> : () -> ()
      %cst_54 = arith.constant dense<0.000000e+00> : vector<2x16x8xf32>
      %64 = tpu.matmul %63, %51, %cst_54 {dimension_numbers = #tpu.dot_dimension_numbers<[2], [1], [1], [2], [0, 0, 0, 1, 1, 2], [0], [0]>} : vector<2x16x16xbf16>, vector<2x16x8xbf16>, vector<2x16x8xf32> -> vector<2x16x8xf32>
      "tpu.trace_stop"() : () -> ()
      %c0_55 = arith.constant 0 : index
      %c3 = arith.constant 3 : index
      %c0_56 = arith.constant 0 : index
      %c0_57 = arith.constant 0 : index
      %c0_58 = arith.constant 0 : index
      %65 = vector.load %arg2[%c0_55, %c3, %c0_56, %c0_57, %c0_58] : memref<1x4x2x16x8xbf16, #tpu.memory_space<vmem>>, vector<1x1x2x16x8xbf16>
      %66 = vector.shape_cast %65 : vector<1x1x2x16x8xbf16> to vector<2x16x8xbf16>
      %c0_59 = arith.constant 0 : index
      %c3_60 = arith.constant 3 : index
      %c0_61 = arith.constant 0 : index
      %c0_62 = arith.constant 0 : index
      %c0_63 = arith.constant 0 : index
      %67 = vector.load %arg5[%c0_59, %c3_60, %c0_61, %c0_62, %c0_63] : memref<1x4x2x16x8xbf16, #tpu.memory_space<vmem>>, vector<1x1x2x16x8xbf16>
      %68 = vector.shape_cast %67 : vector<1x1x2x16x8xbf16> to vector<2x16x8xbf16>
      %c0_64 = arith.constant 0 : index
      %c3_65 = arith.constant 3 : index
      %c0_66 = arith.constant 0 : index
      %c0_67 = arith.constant 0 : index
      %c0_68 = arith.constant 0 : index
      %69 = vector.load %arg6[%c0_64, %c3_65, %c0_66, %c0_67, %c0_68] : memref<1x4x2x16x8xbf16, #tpu.memory_space<vmem>>, vector<1x1x2x16x8xbf16>
      %70 = vector.shape_cast %69 : vector<1x1x2x16x8xbf16> to vector<2x16x8xbf16>
      "tpu.trace_start"() <{level = 10 : i32, message = "tqd,tkd->tqk"}> : () -> ()
      %cst_69 = arith.constant dense<0.000000e+00> : vector<2x16x16xf32>
      %71 = tpu.matmul %66, %68, %cst_69 {dimension_numbers = #tpu.dot_dimension_numbers<[2], [2], [1], [1], [0, 0, 0, 1, 1, 1], [0], [0]>} : vector<2x16x8xbf16>, vector<2x16x8xbf16>, vector<2x16x16xf32> -> vector<2x16x16xf32>
      "tpu.trace_stop"() : () -> ()
      %cst_70 = arith.constant dense<0xFF800000> : vector<2x16xf32>
      %72 = vector.multi_reduction <maximumf>, %71, %cst_70 [2] : vector<2x16x16xf32> to vector<2x16xf32>
      %73 = vector.shape_cast %72 : vector<2x16xf32> to vector<2x16x1xf32>
      %74 = vector.broadcast %73 : vector<2x16x1xf32> to vector<2x16x16xf32>
      %75 = arith.subf %71, %74 : vector<2x16x16xf32>
      %76 = math.exp %75 : vector<2x16x16xf32>
      %cst_71 = arith.constant dense<0.000000e+00> : vector<2x16xf32>
      %77 = vector.multi_reduction <add>, %76, %cst_71 [2] : vector<2x16x16xf32> to vector<2x16xf32>
      %78 = vector.shape_cast %77 : vector<2x16xf32> to vector<2x16x1xf32>
      %79 = tpu.reciprocal %78 {approx = true} : vector<2x16x1xf32> -> vector<2x16x1xf32>
      %80 = vector.broadcast %79 : vector<2x16x1xf32> to vector<2x16x16xf32>
      %81 = arith.mulf %76, %80 : vector<2x16x16xf32>
      %82 = arith.truncf %81 : vector<2x16x16xf32> to vector<2x16x16xbf16>
      "tpu.trace_start"() <{level = 10 : i32, message = "tqk,tkd->tqd"}> : () -> ()
      %cst_72 = arith.constant dense<0.000000e+00> : vector<2x16x8xf32>
      %83 = tpu.matmul %82, %70, %cst_72 {dimension_numbers = #tpu.dot_dimension_numbers<[2], [1], [1], [2], [0, 0, 0, 1, 1, 2], [0], [0]>} : vector<2x16x16xbf16>, vector<2x16x8xbf16>, vector<2x16x8xf32> -> vector<2x16x8xf32>
      "tpu.trace_stop"() : () -> ()
      %84 = tpu.concatenate %26, %45, %64, %83 in 2 : vector<2x16x8xf32>, vector<2x16x8xf32>, vector<2x16x8xf32>, vector<2x16x8xf32> -> vector<2x16x32xf32>
      %c0_73 = arith.constant 0 : index
      %c0_74 = arith.constant 0 : index
      %c0_75 = arith.constant 0 : index
      %c0_76 = arith.constant 0 : index
      %85 = vector.load %arg7[%c0_73, %c0_74, %c0_75, %c0_76] : memref<1x2x16x32xf32, #tpu.memory_space<vmem>>, vector<1x2x16x32xf32>
      %86 = vector.shape_cast %85 : vector<1x2x16x32xf32> to vector<2x16x32xf32>
      %87 = vector.shape_cast %84 : vector<2x16x32xf32> to vector<1x2x16x32xf32>
      tpu.vector_store %arg7[%c0_73, %c0_74, %c0_75, %c0_76], %87 {strides = array<i32>} : memref<1x2x16x32xf32, #tpu.memory_space<vmem>>, vector<1x2x16x32xf32>,
    } else {
    }
    return
  }
  func.func @transform_0(%arg0: i32, %arg1: memref<8xi32, #tpu.memory_space<smem>>) -> (i32, i32, i32, i32, i32) {
    %c0_i32 = arith.constant 0 : i32
    %c0_i32_0 = arith.constant 0 : i32
    %c0_i32_1 = arith.constant 0 : i32
    %c0_i32_2 = arith.constant 0 : i32
    %c0_i32_3 = arith.constant 0 : i32
    return %arg0, %c0_i32, %c0_i32_0, %c0_i32_1, %c0_i32_2 : i32, i32, i32, i32, i32
  }
  func.func @transform_1(%arg0: i32, %arg1: memref<8xi32, #tpu.memory_space<smem>>) -> (i32, i32, i32, i32) {
    %c0_i32 = arith.constant 0 : i32
    %c0_i32_0 = arith.constant 0 : i32
    %c0_i32_1 = arith.constant 0 : i32
    %c0_i32_2 = arith.constant 0 : i32
    return %arg0, %c0_i32, %c0_i32_0, %c0_i32_1 : i32, i32, i32, i32
  }
  func.func @transform_2(%arg0: i32, %arg1: memref<8xi32, #tpu.memory_space<smem>>) -> (i32, i32, i32, i32) {
    %c0_i32 = arith.constant 0 : i32
    %c0_i32_0 = arith.constant 0 : i32
    %c0_i32_1 = arith.constant 0 : i32
    %c0_i32_2 = arith.constant 0 : i32
    return %arg0, %c0_i32, %c0_i32_0, %c0_i32_1 : i32, i32, i32, i32
  }
  func.func @transform_3(%arg0: i32, %arg1: memref<8xi32, #tpu.memory_space<smem>>) -> (i32, i32, i32, i32, i32) {
    %c0_i32 = arith.constant 0 : i32
    %c0_i32_0 = arith.constant 0 : i32
    %c0_i32_1 = arith.constant 0 : i32
    %c0_i32_2 = arith.constant 0 : i32
    %c0_i32_3 = arith.constant 0 : i32
    return %arg0, %c0_i32, %c0_i32_0, %c0_i32_1, %c0_i32_2 : i32, i32, i32, i32, i32
  }
  func.func @transform_4(%arg0: i32, %arg1: memref<8xi32, #tpu.memory_space<smem>>) -> (i32, i32, i32, i32, i32) {
    %c0_i32 = arith.constant 0 : i32
    %c0_i32_0 = arith.constant 0 : i32
    %c0_i32_1 = arith.constant 0 : i32
    %c0_i32_2 = arith.constant 0 : i32
    %c0_i32_3 = arith.constant 0 : i32
    return %arg0, %c0_i32, %c0_i32_0, %c0_i32_1, %c0_i32_2 : i32, i32, i32, i32, i32
  }
  func.func @transform_5(%arg0: i32, %arg1: memref<8xi32, #tpu.memory_space<smem>>) -> (i32, i32, i32, i32) {
    %c0_i32 = arith.constant 0 : i32
    %c0_i32_0 = arith.constant 0 : i32
    %c0_i32_1 = arith.constant 0 : i32
    %c0_i32_2 = arith.constant 0 : i32
    return %arg0, %c0_i32, %c0_i32_0, %c0_i32_1 : i32, i32, i32, i32
  }
}

module attributes {stable_mosaic.version = 11 : i64} {
  func.func @_linear_kernel(%arg0: i32, %arg1: memref<128x1960xf32, #tpu.memory_space<vmem>>, %arg2: memref<1960x32xbf16, #tpu.memory_space<vmem>>, %arg3: memref<1x32xf32, #tpu.memory_space<vmem>>, %arg4: memref<128x32xf32, #tpu.memory_space<vmem>>) attributes {dimension_semantics = [#tpu.dimension_semantics<parallel>], iteration_bounds = array<i64: 2>, scalar_prefetch = 0 : i64, scratch_operands = 0 : i64, tpu.core_type = #tpu.core_type<tc>, window_params = [{transform_indices = @transform_0, window_bounds = array<i64: 128, 1960>}, {pipeline_mode = #tpu.pipeline_mode<synchronous>, transform_indices = @transform_1, window_bounds = array<i64: 1960, 32>}, {pipeline_mode = #tpu.pipeline_mode<synchronous>, transform_indices = @transform_2, window_bounds = array<i64: 1, 32>}, {transform_indices = @transform_3, window_bounds = array<i64: 128, 32>}]} {
    %c0 = arith.constant 0 : index
    %c0_0 = arith.constant 0 : index
    %0 = vector.load %arg1[%c0, %c0_0] : memref<128x1960xf32, #tpu.memory_space<vmem>>, vector<128x1960xf32>
    %cst = arith.constant 5.000000e-01 : f32
    %1 = vector.broadcast %cst : f32 to vector<128x1960xf32>
    %2 = arith.mulf %1, %0 : vector<128x1960xf32>
    %cst_1 = arith.constant 0.707106769 : f32
    %3 = vector.broadcast %cst_1 : f32 to vector<128x1960xf32>
    %4 = arith.mulf %0, %3 : vector<128x1960xf32>
    %5 = math.erf %4 : vector<128x1960xf32>
    %cst_2 = arith.constant 1.000000e+00 : f32
    %6 = vector.broadcast %cst_2 : f32 to vector<128x1960xf32>
    %7 = arith.addf %6, %5 : vector<128x1960xf32>
    %8 = arith.mulf %2, %7 : vector<128x1960xf32>
    %9 = arith.truncf %8 : vector<128x1960xf32> to vector<128x1960xbf16>
    %c0_3 = arith.constant 0 : index
    %c0_4 = arith.constant 0 : index
    %10 = vector.load %arg2[%c0_3, %c0_4] : memref<1960x32xbf16, #tpu.memory_space<vmem>>, vector<1960x32xbf16>
    %cst_5 = arith.constant dense<0.000000e+00> : vector<128x32xf32>
    %11 = tpu.matmul %9, %10, %cst_5 {dimension_numbers = #tpu.dot_dimension_numbers<[1], [0], [0], [1], [0, 0, 1, 1], [], []>} : vector<128x1960xbf16>, vector<1960x32xbf16>, vector<128x32xf32> -> vector<128x32xf32>
    %c0_6 = arith.constant 0 : index
    %c0_7 = arith.constant 0 : index
    %12 = vector.load %arg3[%c0_6, %c0_7] : memref<1x32xf32, #tpu.memory_space<vmem>>, vector<1x32xf32>
    %13 = vector.broadcast %12 : vector<1x32xf32> to vector<128x32xf32>
    %14 = arith.addf %11, %13 : vector<128x32xf32>
    %c0_8 = arith.constant 0 : index
    %c0_9 = arith.constant 0 : index
    %15 = vector.load %arg4[%c0_8, %c0_9] : memref<128x32xf32, #tpu.memory_space<vmem>>, vector<128x32xf32>
    tpu.vector_store %arg4[%c0_8, %c0_9], %14 {strides = array<i32>} : memref<128x32xf32, #tpu.memory_space<vmem>>, vector<128x32xf32>,
    return
  }
  func.func @transform_0(%arg0: i32) -> (i32, i32) {
    %c0_i32 = arith.constant 0 : i32
    %c0_i32_0 = arith.constant 0 : i32
    return %arg0, %c0_i32 : i32, i32
  }
  func.func @transform_1(%arg0: i32) -> (i32, i32) {
    %c0_i32 = arith.constant 0 : i32
    %c0_i32_0 = arith.constant 0 : i32
    %c0_i32_1 = arith.constant 0 : i32
    return %c0_i32, %c0_i32_0 : i32, i32
  }
  func.func @transform_2(%arg0: i32) -> (i32, i32) {
    %c0_i32 = arith.constant 0 : i32
    %c0_i32_0 = arith.constant 0 : i32
    %c0_i32_1 = arith.constant 0 : i32
    return %c0_i32, %c0_i32_0 : i32, i32
  }
  func.func @transform_3(%arg0: i32) -> (i32, i32) {
    %c0_i32 = arith.constant 0 : i32
    %c0_i32_0 = arith.constant 0 : i32
    return %arg0, %c0_i32 : i32, i32
  }
}

</mosaic_0001>

<llo_original>
// kernel: _lambda_.6
$region0: #{_lambda_.6}
  #allocation0 [shape = 'u32[]', space=smem, size = 0x4, offset = 0x4, fixed_abs, tag = 'smem constant byte address 0x4 - core index']
  #allocation1 [shape = 'u32[144,128]{1,0:T(1,128)}', space=vmem, size = 0x12000, scoped, tag = 'internal scratch']
  %s0 = inlined_call_operand.hbm [shape: f32[256,32], index: 0, kind: input, shape index: {}]
  %s1 = inlined_call_operand.hbm [shape: f32[1,32], index: 1, kind: input, shape index: {}]
  %s2 = inlined_call_operand.hbm [shape: f32[1,32], index: 2, kind: input, shape index: {}]
  %s3 = inlined_call_operand.vmem [shape: bf16[32,96], index: 3, kind: input, shape index: {}]
  %s4 = inlined_call_operand.vmem [shape: f32[1,96], index: 4, kind: input, shape index: {}]
  %s5 = inlined_call_operand.vmem [shape: f32[256,96], index: 5, kind: output, shape index: {0}]
  %s6 = inlined_call_operand.vmem [shape: f32[256,32], index: 6, kind: output, shape index: {1}]
  %7 = xla_tuple %s5, %s6
  %s8 = sld [smem:[#allocation0]]
  $region73: #{_lambda_.6} parent=0
    _
  %s10 = ssub.s32 1, %s8
  %s11 = scalar_select 0, %s10, %s8
  $region1: #{_lambda_.6} parent=0
    #allocation2 [shape = 'u8[131072]{0}', space=vmem, size = 0x20000, scoped, tag = 'input window, operand 0']
    #allocation3 [shape = 's32[2]{0}', space=sflag, size = 0x8, scoped, tag = 'scoped memory for _lambda_.6']
    #allocation4 [shape = 'u8[512]{0}', space=vmem, size = 0x400, scoped, tag = 'input window, operand 1, single buffered']
    #allocation5 [shape = 's32[1]{0}', space=sflag, size = 0x4, scoped, tag = 'scoped memory for _lambda_.6']
    #allocation6 [shape = 'u8[512]{0}', space=vmem, size = 0x400, scoped, tag = 'input window, operand 2, single buffered']
    %12 = vsyncpa [#allocation3], 0
    %s13 = scalar_lea.sflag [#allocation3], 1
    %14 = vsyncpa %s13, 0
    %15 = vsyncpa [#allocation5], 0
    loop: start=0, step=1, limit=4
    $region2: #{_lambda_.6} parent=1 // loop_pre_header
      _
    $region3: #{_lambda_.6} parent=1 // loop_header
      %s17 = sphi 0, %s21
      %p18 = scmp.ge.s32.totalorder %s17, 4
      %s27 = sphi 0, %s29
      %s30 = sphi 0, %s27
      %s31 = sphi 0, %s30
      %s47 = sphi 0, %s31
      %s51 = sphi 0, %s51
      %s53 = sphi 0, %s51
      %s54 = sphi 0, %s53
      %s68 = sphi 0, %s54
      %s72 = sphi 0, %s72
      %s74 = sphi 0, %s72
      %s75 = sphi 0, %s74
      %s89 = sphi 0, %s75
      %s93 = sphi 0, %s93
      %s95 = sphi 0, %s93
      %s96 = sphi 0, %s95
      %s110 = sphi 0, %s96
      %s114 = sphi 0, %s114
      %s116 = sphi 0, %s114
      %s117 = sphi 0, %s116
      %s131 = sphi 0, %s117
      %s137 = sphi 0, %s139
      %s140 = sphi 0, %s137
      %s141 = sphi 0, %s140
      %s157 = sphi 0, %s141
      %s163 = sphi 0, %s165
      %s166 = sphi 0, %s163
      %s167 = sphi 0, %s166
      %s183 = sphi 0, %s167
    $region4: #{_lambda_.6} parent=1 // loop_header_branch
      %20 = sbr.rel (%p18) target = $region8
    $region5: #{_lambda_.6} parent=1 // loop_body
      %s22 = ssub.s32 %s17, 1
      %s23 = ssub.s32 %s17, 2
      %s24 = sadd.s32 %s17, 1
      %s25 = ssub.s32 %s17, %s24
      %p26 = scmp.eq.s32.totalorder %s25, 0
      %s28 = sadd.s32 %s27, 1
      %s29 = scalar_select %p26, %s27, %s28
      %p32 = pneg %p26
      %p33 = scmp.eq.s32.totalorder %s17, 1
      %p34 = por %p32, %p33
      %p35 = scmp.ne.s32.totalorder %s27, %s30
      %p36 = scmp.eq.s32.totalorder %s17, 0
      %p37 = por %p35, %p36
      %p38 = scmp.ne.s32.totalorder %s27, %s30
      %p39 = scmp.eq.s32.totalorder %s22, 1
      %p40 = por %p38, %p39
      %p41 = scmp.ne.s32.totalorder %s30, %s31
      %p42 = scmp.eq.s32.totalorder %s22, 0
      %p43 = por %p41, %p42
      %p44 = scmp.ne.s32.totalorder %s30, %s31
      %p45 = scmp.eq.s32.totalorder %s23, 1
      %p46 = por %p44, %p45
      %p48 = scmp.ne.s32.totalorder %s31, %s47
      %p49 = scmp.eq.s32.totalorder %s23, 0
      %p50 = por %p48, %p49
      %s52 = sadd.s32 %s51, 1
      %p55 = scmp.eq.s32.totalorder %s17, 1
      %p56 = scmp.ne.s32.totalorder %s51, %s53
      %p57 = scmp.eq.s32.totalorder %s17, 0
      %p58 = por %p56, %p57
      %p59 = scmp.ne.s32.totalorder %s51, %s53
      %p60 = scmp.eq.s32.totalorder %s22, 1
      %p61 = por %p59, %p60
      %p62 = scmp.ne.s32.totalorder %s53, %s54
      %p63 = scmp.eq.s32.totalorder %s22, 0
      %p64 = por %p62, %p63
      %p65 = scmp.ne.s32.totalorder %s53, %s54
      %p66 = scmp.eq.s32.totalorder %s23, 1
      %p67 = por %p65, %p66
      %p69 = scmp.ne.s32.totalorder %s54, %s68
      %p70 = scmp.eq.s32.totalorder %s23, 0
      %p71 = por %p69, %p70
      %s73 = sadd.s32 %s72, 1
      %p76 = scmp.eq.s32.totalorder %s17, 1
      %p77 = scmp.ne.s32.totalorder %s72, %s74
      %p78 = scmp.eq.s32.totalorder %s17, 0
      %p79 = por %p77, %p78
      %p80 = scmp.ne.s32.totalorder %s72, %s74
      %p81 = scmp.eq.s32.totalorder %s22, 1
      %p82 = por %p80, %p81
      %p83 = scmp.ne.s32.totalorder %s74, %s75
      %p84 = scmp.eq.s32.totalorder %s22, 0
      %p85 = por %p83, %p84
      %p86 = scmp.ne.s32.totalorder %s74, %s75
      %p87 = scmp.eq.s32.totalorder %s23, 1
      %p88 = por %p86, %p87
      %p90 = scmp.ne.s32.totalorder %s75, %s89
      %p91 = scmp.eq.s32.totalorder %s23, 0
      %p92 = por %p90, %p91
      %s94 = sadd.s32 %s93, 1
      %p97 = scmp.eq.s32.totalorder %s17, 1
      %p98 = scmp.ne.s32.totalorder %s93, %s95
      %p99 = scmp.eq.s32.totalorder %s17, 0
      %p100 = por %p98, %p99
      %p101 = scmp.ne.s32.totalorder %s93, %s95
      %p102 = scmp.eq.s32.totalorder %s22, 1
      %p103 = por %p101, %p102
      %p104 = scmp.ne.s32.totalorder %s95, %s96
      %p105 = scmp.eq.s32.totalorder %s22, 0
      %p106 = por %p104, %p105
      %p107 = scmp.ne.s32.totalorder %s95, %s96
      %p108 = scmp.eq.s32.totalorder %s23, 1
      %p109 = por %p107, %p108
      %p111 = scmp.ne.s32.totalorder %s96, %s110
      %p112 = scmp.eq.s32.totalorder %s23, 0
      %p113 = por %p111, %p112
      %s115 = sadd.s32 %s114, 1
      %p118 = scmp.eq.s32.totalorder %s17, 1
      %p119 = scmp.ne.s32.totalorder %s114, %s116
      %p120 = scmp.eq.s32.totalorder %s17, 0
      %p121 = por %p119, %p120
      %p122 = scmp.ne.s32.totalorder %s114, %s116
      %p123 = scmp.eq.s32.totalorder %s22, 1
      %p124 = por %p122, %p123
      %p125 = scmp.ne.s32.totalorder %s116, %s117
      %p126 = scmp.eq.s32.totalorder %s22, 0
      %p127 = por %p125, %p126
      %p128 = scmp.ne.s32.totalorder %s116, %s117
      %p129 = scmp.eq.s32.totalorder %s23, 1
      %p130 = por %p128, %p129
      %p132 = scmp.ne.s32.totalorder %s117, %s131
      %p133 = scmp.eq.s32.totalorder %s23, 0
      %p134 = por %p132, %p133
      %s135 = ssub.s32 %s17, %s24
      %p136 = scmp.eq.s32.totalorder %s135, 0
      %s138 = sadd.s32 %s137, 1
      %s139 = scalar_select %p136, %s137, %s138
      %p142 = pneg %p136
      %p143 = scmp.eq.s32.totalorder %s17, 1
      %p144 = por %p142, %p143
      %p145 = scmp.ne.s32.totalorder %s137, %s140
      %p146 = scmp.eq.s32.totalorder %s17, 0
      %p147 = por %p145, %p146
      %p148 = scmp.ne.s32.totalorder %s137, %s140
      %p149 = scmp.eq.s32.totalorder %s22, 1
      %p150 = por %p148, %p149
      %p151 = scmp.ne.s32.totalorder %s140, %s141
      %p152 = scmp.eq.s32.totalorder %s22, 0
      %p153 = por %p151, %p152
      %p154 = scmp.ne.s32.totalorder %s140, %s141
      %p155 = scmp.eq.s32.totalorder %s23, 1
      %p156 = por %p154, %p155
      %p158 = scmp.ne.s32.totalorder %s141, %s157
      %p159 = scmp.eq.s32.totalorder %s23, 0
      %p160 = por %p158, %p159
      %s161 = ssub.s32 %s17, %s24
      %p162 = scmp.eq.s32.totalorder %s161, 0
      %s164 = sadd.s32 %s163, 1
      %s165 = scalar_select %p162, %s163, %s164
      %p168 = pneg %p162
      %p169 = scmp.eq.s32.totalorder %s17, 1
      %p170 = por %p168, %p169
      %p171 = scmp.ne.s32.totalorder %s163, %s166
      %p172 = scmp.eq.s32.totalorder %s17, 0
      %p173 = por %p171, %p172
      %p174 = scmp.ne.s32.totalorder %s163, %s166
      %p175 = scmp.eq.s32.totalorder %s22, 1
      %p176 = por %p174, %p175
      %p177 = scmp.ne.s32.totalorder %s166, %s167
      %p178 = scmp.eq.s32.totalorder %s22, 0
      %p179 = por %p177, %p178
      %p180 = scmp.ne.s32.totalorder %s166, %s167
      %p181 = scmp.eq.s32.totalorder %s23, 1
      %p182 = por %p180, %p181
      %p184 = scmp.ne.s32.totalorder %s167, %s183
      %p185 = scmp.eq.s32.totalorder %s23, 0
      %p186 = por %p184, %p185
      %p187 = scmp.le.s32.totalorder 1, %s17
      %p188 = scmp.lt.s32.totalorder %s17, 3
      %p189 = pnand %p187, %p188
      %p190 = pneg %p189
      // Predicated region
      $region9: #{_lambda_.6} parent=5 // pred_check
        _
      $region10: #{_lambda_.6} parent=5 // pred_check_branch
        %192 = sbr.rel (%p189) target = $region12
      $region11: #{_lambda_.6} parent=5 // pred_region
        %s193 = ssub.s32 %s17, 1
        // Predicated region
        $region13: #{_lambda_.6} parent=11 // pred_check
          %p194 = pneg %p64
        $region14: #{_lambda_.6} parent=11 // pred_check_branch
          %196 = sbr.rel (%p194) target = $region16
        $region15: #{_lambda_.6} parent=11 // pred_region
          %s198 = ssub.s32 16, 16
          %199 = vsyncadd [#allocation5], %s198
          %s201 = sshll.u32 [#allocation4], 4
          %s202 = int_to_ptr.vmem [resolvable:$true] %s201
          %204 = dma.hbm_to_vmem [thread:$0]  %s1, 16, %s202, [#allocation5]
        $region16: #{_lambda_.6} parent=11 // pred_fallthru
          _
        // Predicated region
        $region17: #{_lambda_.6} parent=11 // pred_check
          %p205 = pneg %p85
        $region18: #{_lambda_.6} parent=11 // pred_check_branch
          %207 = sbr.rel (%p205) target = $region20
        $region19: #{_lambda_.6} parent=11 // pred_region
          %s209 = ssub.s32 16, 16
          %210 = vsyncadd [#allocation5], %s209
          %s212 = sshll.u32 [#allocation6], 4
          %s213 = int_to_ptr.vmem [resolvable:$true] %s212
          %215 = dma.hbm_to_vmem [thread:$0]  %s2, 16, %s213, [#allocation5]
        $region20: #{_lambda_.6} parent=11 // pred_fallthru
          _
        // Predicated region
        $region21: #{_lambda_.6} parent=11 // pred_check
          %p216 = pneg %p106
        $region22: #{_lambda_.6} parent=11 // pred_check_branch
          %218 = sbr.rel (%p216) target = $region24
        $region23: #{_lambda_.6} parent=11 // pred_region
          _
        $region24: #{_lambda_.6} parent=11 // pred_fallthru
          _
        // Predicated region
        $region25: #{_lambda_.6} parent=11 // pred_check
          %p219 = pneg %p127
        $region26: #{_lambda_.6} parent=11 // pred_check_branch
          %221 = sbr.rel (%p219) target = $region28
        $region27: #{_lambda_.6} parent=11 // pred_region
          _
        $region28: #{_lambda_.6} parent=11 // pred_fallthru
          _
      $region12: #{_lambda_.6} parent=5 // pred_fallthru
        _
      %p222 = scmp.lt.s32.totalorder %s17, 2
      // Predicated region
      $region29: #{_lambda_.6} parent=5 // pred_check
        %p223 = pneg %p222
      $region30: #{_lambda_.6} parent=5 // pred_check_branch
        %225 = sbr.rel (%p223) target = $region32
      $region31: #{_lambda_.6} parent=5 // pred_region
        // Predicated region
        $region33: #{_lambda_.6} parent=31 // pred_check
          %p226 = pneg %p37
        $region34: #{_lambda_.6} parent=31 // pred_check_branch
          %228 = sbr.rel (%p226) target = $region36
        $region35: #{_lambda_.6} parent=31 // pred_region
          %s229 = sand.u32 %s27, 1
          %s230 = scalar_lea.sflag [#allocation3], %s229
          %s231 = sand.u32 %s27, 1
          %s232 = smul.addr %s231, 128
          %s233 = scalar_lea.vmem [#allocation2], %s232
          %s234 = smul.u32 16, %s17
          %s236 = ssub.s32 2048, 2048
          %237 = vsyncadd %s230, %s236
          %s238 = smul.addr %s234, 128
          %s239 = scalar_lea.hbm %s0, %s238
          %s240 = sshll.u32 %s233, 4
          %s241 = int_to_ptr.vmem [resolvable:$true] %s240
          %246 = dma.hbm_to_vmem [thread:$0]  %s239, 2048, %s241, %s230, 128, 128, 8
        $region36: #{_lambda_.6} parent=31 // pred_fallthru
          _
      $region32: #{_lambda_.6} parent=5 // pred_fallthru
        _
      %p247 = scmp.le.s32.totalorder 1, %s17
      %p248 = scmp.lt.s32.totalorder %s17, 3
      %p249 = pnand %p247, %p248
      %p250 = pneg %p249
      // Predicated region
      $region37: #{_lambda_.6} parent=5 // pred_check
        _
      $region38: #{_lambda_.6} parent=5 // pred_check_branch
        %252 = sbr.rel (%p249) target = $region40
      $region39: #{_lambda_.6} parent=5 // pred_region
        %s253 = ssub.s32 %s17, 1
        %s254 = sand.u32 %s30, 1
        %s255 = scalar_lea.sflag [#allocation3], %s254
        %s256 = sand.u32 %s30, 1
        %s257 = smul.addr %s256, 128
        %s258 = scalar_lea.vmem [#allocation2], %s257
        // Predicated region
        $region41: #{_lambda_.6} parent=39 // pred_check
          %p259 = pneg %p43
        $region42: #{_lambda_.6} parent=39 // pred_check_branch
          %261 = sbr.rel (%p259) target = $region44
        $region43: #{_lambda_.6} parent=39 // pred_region
          %262 = dma.done %s255, 2048
        $region44: #{_lambda_.6} parent=39 // pred_fallthru
          _
        // Predicated region
        $region45: #{_lambda_.6} parent=39 // pred_check
          %p263 = pneg %p64
        $region46: #{_lambda_.6} parent=39 // pred_check_branch
          %265 = sbr.rel (%p263) target = $region48
        $region47: #{_lambda_.6} parent=39 // pred_region
          %266 = dma.done [#allocation5], 16
        $region48: #{_lambda_.6} parent=39 // pred_fallthru
          _
        // Predicated region
        $region49: #{_lambda_.6} parent=39 // pred_check
          %p267 = pneg %p85
        $region50: #{_lambda_.6} parent=39 // pred_check_branch
          %269 = sbr.rel (%p267) target = $region52
        $region51: #{_lambda_.6} parent=39 // pred_region
          %270 = dma.done [#allocation5], 16
        $region52: #{_lambda_.6} parent=39 // pred_fallthru
          _
        %s271 = sand.u32 %s30, 1
        %s272 = scalar_lea.sflag [#allocation3], %s271
        %s273 = sand.u32 %s30, 1
        %s274 = smul.addr %s273, 128
        %s275 = scalar_lea.vmem [#allocation2], %s274
        %p276 = pneg %p43
        %p277 = pneg %p40
        %p278 = pneg %p64
        %p279 = pneg %p61
        %p280 = pneg %p85
        %p281 = pneg %p82
        %p282 = pneg %p106
        %p283 = pneg %p103
        %p284 = pneg %p127
        %p285 = pneg %p124
        %p286 = pneg %p153
        %p287 = pneg %p150
        %s288 = smul.u32 16, %s22
        %p289 = scmp.lt.s32.totalorder %s288, 31
        %s290 = scalar_select %p289, %s288, 31
        %s291 = smul.addr %s290, 8
        %s292 = scalar_lea.vmem %s5, %s291
        %p293 = pneg %p179
        %p294 = pneg %p176
        %s295 = smul.u32 16, %s22
        %p296 = scmp.lt.s32.totalorder %s295, 31
        %s297 = scalar_select %p296, %s295, 31
        %s298 = smul.addr %s297, 8
        %s299 = scalar_lea.vmem %s6, %s298
        %s300 = smul.u32 16, %s22
        %s301 = smul.u32 16, %s22
        %p302 = scmp.lt.s32.totalorder %s301, 31
        %s303 = scalar_select %p302, %s301, 31
        %s304 = smul.addr %s303, 8
        %s305 = scalar_lea.vmem %s5, %s304
        %s306 = smul.u32 16, %s22
        %s307 = smul.u32 16, %s22
        %p308 = scmp.lt.s32.totalorder %s307, 31
        %s309 = scalar_select %p308, %s307, 31
        %s310 = smul.addr %s309, 8
        %s311 = scalar_lea.vmem %s6, %s310
        %s312 = smul.u32 16, %s22
        %v314 = vld [vmem:[%s258] sm:$0xff]
        %v315 = vld [vmem:[%s258 + $0x8] sm:$0xff]
        %v316 = vld [vmem:[%s258 + $0x10] sm:$0xff]
        %v317 = vld [vmem:[%s258 + $0x18] sm:$0xff]
        %v318 = vld [vmem:[%s258 + $0x20] sm:$0xff]
        %v319 = vld [vmem:[%s258 + $0x28] sm:$0xff]
        %v320 = vld [vmem:[%s258 + $0x30] sm:$0xff]
        %v321 = vld [vmem:[%s258 + $0x38] sm:$0xff]
        %v322 = vld [vmem:[%s258 + $0x40] sm:$0xff]
        %v323 = vld [vmem:[%s258 + $0x48] sm:$0xff]
        %v324 = vld [vmem:[%s258 + $0x50] sm:$0xff]
        %v325 = vld [vmem:[%s258 + $0x58] sm:$0xff]
        %v326 = vld [vmem:[%s258 + $0x60] sm:$0xff]
        %v327 = vld [vmem:[%s258 + $0x68] sm:$0xff]
        %v328 = vld [vmem:[%s258 + $0x70] sm:$0xff]
        %v329 = vld [vmem:[%s258 + $0x78] sm:$0xff]
        %vm330 = vcmask 261120
        %v331 = vsel %vm330, %v314, 0.0
        %332 = vadd.xlane.f32.xlu0 %v331
        %v333 = vpop.xlane.xlu0 %332
        %v334 = vsel %vm330, %v315, 0.0
        %335 = vadd.xlane.f32.xlu0 %v334
        %v336 = vpop.xlane.xlu0 %335
        %v337 = vsel %vm330, %v316, 0.0
        %338 = vadd.xlane.f32.xlu0 %v337
        %v339 = vpop.xlane.xlu0 %338
        %v340 = vsel %vm330, %v317, 0.0
        %341 = vadd.xlane.f32.xlu0 %v340
        %v342 = vpop.xlane.xlu0 %341
        %v343 = vsel %vm330, %v318, 0.0
        %344 = vadd.xlane.f32.xlu0 %v343
        %v345 = vpop.xlane.xlu0 %344
        %v346 = vsel %vm330, %v319, 0.0
        %347 = vadd.xlane.f32.xlu0 %v346
        %v348 = vpop.xlane.xlu0 %347
        %v349 = vsel %vm330, %v320, 0.0
        %350 = vadd.xlane.f32.xlu0 %v349
        %v351 = vpop.xlane.xlu0 %350
        %v352 = vsel %vm330, %v321, 0.0
        %353 = vadd.xlane.f32.xlu0 %v352
        %v354 = vpop.xlane.xlu0 %353
        %v355 = vsel %vm330, %v322, 0.0
        %356 = vadd.xlane.f32.xlu0 %v355
        %v357 = vpop.xlane.xlu0 %356
        %v358 = vsel %vm330, %v323, 0.0
        %359 = vadd.xlane.f32.xlu0 %v358
        %v360 = vpop.xlane.xlu0 %359
        %v361 = vsel %vm330, %v324, 0.0
        %362 = vadd.xlane.f32.xlu0 %v361
        %v363 = vpop.xlane.xlu0 %362
        %v364 = vsel %vm330, %v325, 0.0
        %365 = vadd.xlane.f32.xlu0 %v364
        %v366 = vpop.xlane.xlu0 %365
        %v367 = vsel %vm330, %v326, 0.0
        %368 = vadd.xlane.f32.xlu0 %v367
        %v369 = vpop.xlane.xlu0 %368
        %v370 = vsel %vm330, %v327, 0.0
        %371 = vadd.xlane.f32.xlu0 %v370
        %v372 = vpop.xlane.xlu0 %371
        %v373 = vsel %vm330, %v328, 0.0
        %374 = vadd.xlane.f32.xlu0 %v373
        %v375 = vpop.xlane.xlu0 %374
        %v376 = vsel %vm330, %v329, 0.0
        %377 = vadd.xlane.f32.xlu0 %v376
        %v378 = vpop.xlane.xlu0 %377
        %v379 = vrcp.pop 32.0
        %v380 = vmul.f32 %v333, %v379
        %v381 = vmul.f32 %v336, %v379
        %v382 = vmul.f32 %v339, %v379
        %v383 = vmul.f32 %v342, %v379
        %v384 = vmul.f32 %v345, %v379
        %v385 = vmul.f32 %v348, %v379
        %v386 = vmul.f32 %v351, %v379
        %v387 = vmul.f32 %v354, %v379
        %v388 = vmul.f32 %v357, %v379
        %v389 = vmul.f32 %v360, %v379
        %v390 = vmul.f32 %v363, %v379
        %v391 = vmul.f32 %v366, %v379
        %v392 = vmul.f32 %v369, %v379
        %v393 = vmul.f32 %v372, %v379
        %v394 = vmul.f32 %v375, %v379
        %v395 = vmul.f32 %v378, %v379
        %v396 = vsub.f32 %v314, %v380
        %v397 = vsub.f32 %v315, %v381
        %v398 = vsub.f32 %v316, %v382
        %v399 = vsub.f32 %v317, %v383
        %v400 = vsub.f32 %v318, %v384
        %v401 = vsub.f32 %v319, %v385
        %v402 = vsub.f32 %v320, %v386
        %v403 = vsub.f32 %v321, %v387
        %v404 = vsub.f32 %v322, %v388
        %v405 = vsub.f32 %v323, %v389
        %v406 = vsub.f32 %v324, %v390
        %v407 = vsub.f32 %v325, %v391
        %v408 = vsub.f32 %v326, %v392
        %v409 = vsub.f32 %v327, %v393
        %v410 = vsub.f32 %v328, %v394
        %v411 = vsub.f32 %v329, %v395
        %v412 = vmul.f32 %v396, %v396
        %v413 = vmul.f32 %v397, %v397
        %v414 = vmul.f32 %v398, %v398
        %v415 = vmul.f32 %v399, %v399
        %v416 = vmul.f32 %v400, %v400
        %v417 = vmul.f32 %v401, %v401
        %v418 = vmul.f32 %v402, %v402
        %v419 = vmul.f32 %v403, %v403
        %v420 = vmul.f32 %v404, %v404
        %v421 = vmul.f32 %v405, %v405
        %v422 = vmul.f32 %v406, %v406
        %v423 = vmul.f32 %v407, %v407
        %v424 = vmul.f32 %v408, %v408
        %v425 = vmul.f32 %v409, %v409
        %v426 = vmul.f32 %v410, %v410
        %v427 = vmul.f32 %v411, %v411
        %v428 = vsel %vm330, %v412, 0.0
        %429 = vadd.xlane.f32.xlu0 %v428
        %v430 = vpop.xlane.xlu0 %429
        %v431 = vsel %vm330, %v413, 0.0
        %432 = vadd.xlane.f32.xlu0 %v431
        %v433 = vpop.xlane.xlu0 %432
        %v434 = vsel %vm330, %v414, 0.0
        %435 = vadd.xlane.f32.xlu0 %v434
        %v436 = vpop.xlane.xlu0 %435
        %v437 = vsel %vm330, %v415, 0.0
        %438 = vadd.xlane.f32.xlu0 %v437
        %v439 = vpop.xlane.xlu0 %438
        %v440 = vsel %vm330, %v416, 0.0
        %441 = vadd.xlane.f32.xlu0 %v440
        %v442 = vpop.xlane.xlu0 %441
        %v443 = vsel %vm330, %v417, 0.0
        %444 = vadd.xlane.f32.xlu0 %v443
        %v445 = vpop.xlane.xlu0 %444
        %v446 = vsel %vm330, %v418, 0.0
        %447 = vadd.xlane.f32.xlu0 %v446
        %v448 = vpop.xlane.xlu0 %447
        %v449 = vsel %vm330, %v419, 0.0
        %450 = vadd.xlane.f32.xlu0 %v449
        %v451 = vpop.xlane.xlu0 %450
        %v452 = vsel %vm330, %v420, 0.0
        %453 = vadd.xlane.f32.xlu0 %v452
        %v454 = vpop.xlane.xlu0 %453
        %v455 = vsel %vm330, %v421, 0.0
        %456 = vadd.xlane.f32.xlu0 %v455
        %v457 = vpop.xlane.xlu0 %456
        %v458 = vsel %vm330, %v422, 0.0
        %459 = vadd.xlane.f32.xlu0 %v458
        %v460 = vpop.xlane.xlu0 %459
        %v461 = vsel %vm330, %v423, 0.0
        %462 = vadd.xlane.f32.xlu0 %v461
        %v463 = vpop.xlane.xlu0 %462
        %v464 = vsel %vm330, %v424, 0.0
        %465 = vadd.xlane.f32.xlu0 %v464
        %v466 = vpop.xlane.xlu0 %465
        %v467 = vsel %vm330, %v425, 0.0
        %468 = vadd.xlane.f32.xlu0 %v467
        %v469 = vpop.xlane.xlu0 %468
        %v470 = vsel %vm330, %v426, 0.0
        %471 = vadd.xlane.f32.xlu0 %v470
        %v472 = vpop.xlane.xlu0 %471
        %v473 = vsel %vm330, %v427, 0.0
        %474 = vadd.xlane.f32.xlu0 %v473
        %v475 = vpop.xlane.xlu0 %474
        %v476 = vmul.f32 %v430, %v379
        %v477 = vmul.f32 %v433, %v379
        %v478 = vmul.f32 %v436, %v379
        %v479 = vmul.f32 %v439, %v379
        %v480 = vmul.f32 %v442, %v379
        %v481 = vmul.f32 %v445, %v379
        %v482 = vmul.f32 %v448, %v379
        %v483 = vmul.f32 %v451, %v379
        %v484 = vmul.f32 %v454, %v379
        %v485 = vmul.f32 %v457, %v379
        %v486 = vmul.f32 %v460, %v379
        %v487 = vmul.f32 %v463, %v379
        %v488 = vmul.f32 %v466, %v379
        %v489 = vmul.f32 %v469, %v379
        %v490 = vmul.f32 %v472, %v379
        %v491 = vmul.f32 %v475, %v379
        %v492 = vadd.f32 %v476, 1e-05
        %v493 = vadd.f32 %v477, 1e-05
        %v494 = vadd.f32 %v478, 1e-05
        %v495 = vadd.f32 %v479, 1e-05
        %v496 = vadd.f32 %v480, 1e-05
        %v497 = vadd.f32 %v481, 1e-05
        %v498 = vadd.f32 %v482, 1e-05
        %v499 = vadd.f32 %v483, 1e-05
        %v500 = vadd.f32 %v484, 1e-05
        %v501 = vadd.f32 %v485, 1e-05
        %v502 = vadd.f32 %v486, 1e-05
        %v503 = vadd.f32 %v487, 1e-05
        %v504 = vadd.f32 %v488, 1e-05
        %v505 = vadd.f32 %v489, 1e-05
        %v506 = vadd.f32 %v490, 1e-05
        %v507 = vadd.f32 %v491, 1e-05
        %v508 = vrsqrt.pop %v492
        %v509 = vrsqrt.pop %v493
        %v510 = vrsqrt.pop %v494
        %v511 = vrsqrt.pop %v495
        %v512 = vrsqrt.pop %v496
        %v513 = vrsqrt.pop %v497
        %v514 = vrsqrt.pop %v498
        %v515 = vrsqrt.pop %v499
        %v516 = vrsqrt.pop %v500
        %v517 = vrsqrt.pop %v501
        %v518 = vrsqrt.pop %v502
        %v519 = vrsqrt.pop %v503
        %v520 = vrsqrt.pop %v504
        %v521 = vrsqrt.pop %v505
        %v522 = vrsqrt.pop %v506
        %v523 = vrsqrt.pop %v507
        %v524 = vmul.f32 %v396, %v508
        %v525 = vmul.f32 %v397, %v509
        %v526 = vmul.f32 %v398, %v510
        %v527 = vmul.f32 %v399, %v511
        %v528 = vmul.f32 %v400, %v512
        %v529 = vmul.f32 %v401, %v513
        %v530 = vmul.f32 %v402, %v514
        %v531 = vmul.f32 %v403, %v515
        %v532 = vmul.f32 %v404, %v516
        %v533 = vmul.f32 %v405, %v517
        %v534 = vmul.f32 %v406, %v518
        %v535 = vmul.f32 %v407, %v519
        %v536 = vmul.f32 %v408, %v520
        %v537 = vmul.f32 %v409, %v521
        %v538 = vmul.f32 %v410, %v522
        %v539 = vmul.f32 %v411, %v523
        %v540 = vld [vmem:[#allocation4] sm:$0x1]
        %v542 = vlaneseq
        %v543 = vshrl.u32 %v542, 7
        %v544 = vsub.s32 0, %v543
        %v545 = vrot.slane %v540, %v544
        %v547 = vmul.f32 %v524, %v545
        %v548 = vmul.f32 %v525, %v545
        %v549 = vmul.f32 %v526, %v545
        %v550 = vmul.f32 %v527, %v545
        %v551 = vmul.f32 %v528, %v545
        %v552 = vmul.f32 %v529, %v545
        %v553 = vmul.f32 %v530, %v545
        %v554 = vmul.f32 %v531, %v545
        %v555 = vmul.f32 %v532, %v545
        %v556 = vmul.f32 %v533, %v545
        %v557 = vmul.f32 %v534, %v545
        %v558 = vmul.f32 %v535, %v545
        %v559 = vmul.f32 %v536, %v545
        %v560 = vmul.f32 %v537, %v545
        %v561 = vmul.f32 %v538, %v545
        %v562 = vmul.f32 %v539, %v545
        %v563 = vld [vmem:[#allocation6] sm:$0x1]
        %v565 = vlaneseq
        %v566 = vshrl.u32 %v565, 7
        %v567 = vsub.s32 0, %v566
        %v568 = vrot.slane %v563, %v567
        %v570 = vadd.f32 %v547, %v568
        %v571 = vadd.f32 %v548, %v568
        %v572 = vadd.f32 %v549, %v568
        %v573 = vadd.f32 %v550, %v568
        %v574 = vadd.f32 %v551, %v568
        %v575 = vadd.f32 %v552, %v568
        %v576 = vadd.f32 %v553, %v568
        %v577 = vadd.f32 %v554, %v568
        %v578 = vadd.f32 %v555, %v568
        %v579 = vadd.f32 %v556, %v568
        %v580 = vadd.f32 %v557, %v568
        %v581 = vadd.f32 %v558, %v568
        %v582 = vadd.f32 %v559, %v568
        %v583 = vadd.f32 %v560, %v568
        %v584 = vadd.f32 %v561, %v568
        %v585 = vadd.f32 %v562, %v568
        %586 = vst.msk [vmem:[%s311] sm:$0xff] %vm330, %v570
        %587 = vst.msk [vmem:[%s311 + $0x8] sm:$0xff] %vm330, %v571
        %588 = vst.msk [vmem:[%s311 + $0x10] sm:$0xff] %vm330, %v572
        %589 = vst.msk [vmem:[%s311 + $0x18] sm:$0xff] %vm330, %v573
        %590 = vst.msk [vmem:[%s311 + $0x20] sm:$0xff] %vm330, %v574
        %591 = vst.msk [vmem:[%s311 + $0x28] sm:$0xff] %vm330, %v575
        %592 = vst.msk [vmem:[%s311 + $0x30] sm:$0xff] %vm330, %v576
        %593 = vst.msk [vmem:[%s311 + $0x38] sm:$0xff] %vm330, %v577
        %594 = vst.msk [vmem:[%s311 + $0x40] sm:$0xff] %vm330, %v578
        %595 = vst.msk [vmem:[%s311 + $0x48] sm:$0xff] %vm330, %v579
        %596 = vst.msk [vmem:[%s311 + $0x50] sm:$0xff] %vm330, %v580
        %597 = vst.msk [vmem:[%s311 + $0x58] sm:$0xff] %vm330, %v581
        %598 = vst.msk [vmem:[%s311 + $0x60] sm:$0xff] %vm330, %v582
        %599 = vst.msk [vmem:[%s311 + $0x68] sm:$0xff] %vm330, %v583
        %600 = vst.msk [vmem:[%s311 + $0x70] sm:$0xff] %vm330, %v584
        %601 = vst.msk [vmem:[%s311 + $0x78] sm:$0xff] %vm330, %v585
        %v602 = vpack.c.bf16 %v571, %v570
        %v603 = vpack.c.bf16 %v573, %v572
        %v604 = vpack.c.bf16 %v575, %v574
        %v605 = vpack.c.bf16 %v577, %v576
        %v606 = vpack.c.bf16 %v579, %v578
        %v607 = vpack.c.bf16 %v581, %v580
        %v608 = vpack.c.bf16 %v583, %v582
        %v609 = vpack.c.bf16 %v585, %v584
        %v610 = vld [vmem:[%s3] sm:$0xf]
        %v611 = vld [vmem:[%s3 + $0x4] sm:$0xf]
        %v612 = vld [vmem:[%s3 + $0x8] sm:$0xf]
        %v613 = vld [vmem:[%s3 + $0xc] sm:$0xf]
        %v614 = vld [vmem:[%s4] sm:$0x1]
        %v616 = vlaneseq
        %v617 = vshrl.u32 %v616, 7
        %v618 = vsub.s32 0, %v617
        %v619 = vrot.slane %v614, %v618
        %v625 = vunpack.c.l.b16 %v610
        %v626 = vunpack.c.l.b16 %v611
        %v627 = vunpack.c.l.b16 %v612
        %v628 = vunpack.c.l.b16 %v613
        %v629 = vpack.c.b16 %v626, %v625
        %v630 = vpack.c.b16 %v628, %v627
        %v634 = vsel %vm330, %v602, 0
        %v637 = vsel %vm330, %v603, 0
        %v640 = vsel %vm330, %v604, 0
        %v643 = vsel %vm330, %v605, 0
        %v646 = vsel %vm330, %v606, 0
        %v649 = vsel %vm330, %v607, 0
        %v652 = vsel %vm330, %v608, 0
        %v655 = vsel %vm330, %v609, 0
        %657 = vmatprep.subr.bf16.mxu0 0
        %658 = vmatpush1.bf16.msra.mxu0 0
        %659 = vmatprep.subr.bf16.mxu0 0
        %660 = vmatpush1.bf16.msra.mxu0 0
        %661 = vmatprep.subr.bf16.mxu0 0
        %662 = vmatpush1.bf16.msra.mxu0 0
        %663 = vmatprep.subr.bf16.mxu0 0
        %664 = vmatpush1.bf16.msra.mxu0 0
        %665 = vmatprep.subr.bf16.mxu0 0
        %666 = vmatpush1.bf16.msra.mxu0 0
        %667 = vmatprep.subr.bf16.mxu0 0
        %668 = vmatpush1.bf16.msra.mxu0 0
        %669 = vmatprep.subr.bf16.mxu0 0
        %670 = vmatpush1.bf16.msra.mxu0 %v630
        %671 = vmatprep.subr.bf16.mxu0 0
        %672 = vmatpush1.bf16.msra.mxu0 %v629
        %673 = vmatprep.subr.bf16.mxu0 0
        %674 = vmatpush2.bf16.msra.mxu0 0
        %675 = vmatprep.subr.bf16.mxu0 0
        %676 = vmatpush2.bf16.msra.mxu0 0
        %677 = vmatprep.subr.bf16.mxu0 0
        %678 = vmatpush2.bf16.msra.mxu0 0
        %679 = vmatprep.subr.bf16.mxu0 0
        %680 = vmatpush2.bf16.msra.mxu0 0
        %681 = vmatprep.subr.bf16.mxu0 0
        %682 = vmatpush2.bf16.msra.mxu0 0
        %683 = vmatprep.subr.bf16.mxu0 0
        %684 = vmatpush2.bf16.msra.mxu0 0
        %685 = vmatprep.subr.bf16.mxu0 0
        %686 = vmatpush2.bf16.msra.mxu0 0
        %687 = vmatprep.subr.bf16.mxu0 0
        %688 = vmatpush2.bf16.msra.mxu0 0
        %689 = vmatprep.mubr.bf16.mxu0 0
        %690 = vmatmul.mubr.bf16.gmra.mxu0 %v634
        %v691 = vpop.f32.mrf.mxu0
        %v692 = vadd.f32 %v619, %v691
        %v693 = vpop.f32.mrf.mxu0
        %v694 = vpop.f32.mrf.mxu0
        %v695 = vadd.f32 %v619, %v694
        %v696 = vpop.f32.mrf.mxu0
        %697 = vmatprep.mubr.bf16.mxu0 0
        %698 = vmatmul.mubr.bf16.gmra.mxu0 %v637
        %v699 = vpop.f32.mrf.mxu0
        %v700 = vadd.f32 %v619, %v699
        %v701 = vpop.f32.mrf.mxu0
        %v702 = vpop.f32.mrf.mxu0
        %v703 = vadd.f32 %v619, %v702
        %v704 = vpop.f32.mrf.mxu0
        %705 = vmatprep.mubr.bf16.mxu0 0
        %706 = vmatmul.mubr.bf16.gmra.mxu0 %v640
        %v707 = vpop.f32.mrf.mxu0
        %v708 = vadd.f32 %v619, %v707
        %v709 = vpop.f32.mrf.mxu0
        %v710 = vpop.f32.mrf.mxu0
        %v711 = vadd.f32 %v619, %v710
        %v712 = vpop.f32.mrf.mxu0
        %713 = vmatprep.mubr.bf16.mxu0 0
        %714 = vmatmul.mubr.bf16.gmra.mxu0 %v643
        %v715 = vpop.f32.mrf.mxu0
        %v716 = vadd.f32 %v619, %v715
        %v717 = vpop.f32.mrf.mxu0
        %v718 = vpop.f32.mrf.mxu0
        %v719 = vadd.f32 %v619, %v718
        %v720 = vpop.f32.mrf.mxu0
        %721 = vmatprep.mubr.bf16.mxu0 0
        %722 = vmatmul.mubr.bf16.gmra.mxu0 %v646
        %v723 = vpop.f32.mrf.mxu0
        %v724 = vadd.f32 %v619, %v723
        %v725 = vpop.f32.mrf.mxu0
        %v726 = vpop.f32.mrf.mxu0
        %v727 = vadd.f32 %v619, %v726
        %v728 = vpop.f32.mrf.mxu0
        %729 = vmatprep.mubr.bf16.mxu0 0
        %730 = vmatmul.mubr.bf16.gmra.mxu0 %v649
        %v731 = vpop.f32.mrf.mxu0
        %v732 = vadd.f32 %v619, %v731
        %v733 = vpop.f32.mrf.mxu0
        %v734 = vpop.f32.mrf.mxu0
        %v735 = vadd.f32 %v619, %v734
        %v736 = vpop.f32.mrf.mxu0
        %737 = vmatprep.mubr.bf16.mxu0 0
        %738 = vmatmul.mubr.bf16.gmra.mxu0 %v652
        %v739 = vpop.f32.mrf.mxu0
        %v740 = vadd.f32 %v619, %v739
        %v741 = vpop.f32.mrf.mxu0
        %v742 = vpop.f32.mrf.mxu0
        %v743 = vadd.f32 %v619, %v742
        %v744 = vpop.f32.mrf.mxu0
        %745 = vmatprep.mubr.bf16.mxu0 0
        %746 = vmatmul.mubr.bf16.gmra.mxu0 %v655
        %v747 = vpop.f32.mrf.mxu0
        %v748 = vadd.f32 %v619, %v747
        %v749 = vpop.f32.mrf.mxu0
        %v750 = vpop.f32.mrf.mxu0
        %v751 = vadd.f32 %v619, %v750
        %v752 = vpop.f32.mrf.mxu0
        %753 = vdwg.mxu0
        %vm754 = vcmask 785408
        %755 = vst.msk [vmem:[%s305] sm:$0xff] %vm754, %v692
        %756 = vst.msk [vmem:[%s305 + $0x8] sm:$0xff] %vm754, %v695
        %757 = vst.msk [vmem:[%s305 + $0x10] sm:$0xff] %vm754, %v700
        %758 = vst.msk [vmem:[%s305 + $0x18] sm:$0xff] %vm754, %v703
        %759 = vst.msk [vmem:[%s305 + $0x20] sm:$0xff] %vm754, %v708
        %760 = vst.msk [vmem:[%s305 + $0x28] sm:$0xff] %vm754, %v711
        %761 = vst.msk [vmem:[%s305 + $0x30] sm:$0xff] %vm754, %v716
        %762 = vst.msk [vmem:[%s305 + $0x38] sm:$0xff] %vm754, %v719
        %763 = vst.msk [vmem:[%s305 + $0x40] sm:$0xff] %vm754, %v724
        %764 = vst.msk [vmem:[%s305 + $0x48] sm:$0xff] %vm754, %v727
        %765 = vst.msk [vmem:[%s305 + $0x50] sm:$0xff] %vm754, %v732
        %766 = vst.msk [vmem:[%s305 + $0x58] sm:$0xff] %vm754, %v735
        %767 = vst.msk [vmem:[%s305 + $0x60] sm:$0xff] %vm754, %v740
        %768 = vst.msk [vmem:[%s305 + $0x68] sm:$0xff] %vm754, %v743
        %769 = vst.msk [vmem:[%s305 + $0x70] sm:$0xff] %vm754, %v748
        %770 = vst.msk [vmem:[%s305 + $0x78] sm:$0xff] %vm754, %v751
        %s771 = smul.u32 16, %s22
        %p772 = scmp.lt.s32.totalorder %s771, 31
        %s773 = scalar_select %p772, %s771, 31
        %s774 = smul.addr %s773, 8
        %s775 = scalar_lea.vmem %s5, %s774
        %s776 = smul.u32 16, %s22
        %p777 = scmp.lt.s32.totalorder %s776, 31
        %s778 = scalar_select %p777, %s776, 31
        %s779 = smul.addr %s778, 8
        %s780 = scalar_lea.vmem %s6, %s779
        // Predicated region
        $region53: #{_lambda_.6} parent=39 // pred_check
          %p781 = pneg %p150
        $region54: #{_lambda_.6} parent=39 // pred_check_branch
          %783 = sbr.rel (%p781) target = $region56
        $region55: #{_lambda_.6} parent=39 // pred_region
          %s784 = smul.u32 16, %s22
        $region56: #{_lambda_.6} parent=39 // pred_fallthru
          _
        // Predicated region
        $region57: #{_lambda_.6} parent=39 // pred_check
          %p785 = pneg %p176
        $region58: #{_lambda_.6} parent=39 // pred_check_branch
          %787 = sbr.rel (%p785) target = $region60
        $region59: #{_lambda_.6} parent=39 // pred_region
          %s788 = smul.u32 16, %s22
        $region60: #{_lambda_.6} parent=39 // pred_fallthru
          _
      $region40: #{_lambda_.6} parent=5 // pred_fallthru
        _
      %p789 = scmp.le.s32.totalorder 2, %s17
      // Predicated region
      $region61: #{_lambda_.6} parent=5 // pred_check
        %p790 = pneg %p789
      $region62: #{_lambda_.6} parent=5 // pred_check_branch
        %792 = sbr.rel (%p790) target = $region64
      $region63: #{_lambda_.6} parent=5 // pred_region
        %s793 = ssub.s32 %s17, 2
        // Predicated region
        $region65: #{_lambda_.6} parent=63 // pred_check
          %p794 = pneg %p156
        $region66: #{_lambda_.6} parent=63 // pred_check_branch
          %796 = sbr.rel (%p794) target = $region68
        $region67: #{_lambda_.6} parent=63 // pred_region
          %s797 = smul.u32 16, %s23
          %p798 = scmp.lt.s32.totalorder %s797, 31
          %s799 = scalar_select %p798, %s797, 31
          %s800 = smul.addr %s799, 8
          %s801 = scalar_lea.vmem %s5, %s800
        $region68: #{_lambda_.6} parent=63 // pred_fallthru
          _
        // Predicated region
        $region69: #{_lambda_.6} parent=63 // pred_check
          %p802 = pneg %p182
        $region70: #{_lambda_.6} parent=63 // pred_check_branch
          %804 = sbr.rel (%p802) target = $region72
        $region71: #{_lambda_.6} parent=63 // pred_region
          %s805 = smul.u32 16, %s23
          %p806 = scmp.lt.s32.totalorder %s805, 31
          %s807 = scalar_select %p806, %s805, 31
          %s808 = smul.addr %s807, 8
          %s809 = scalar_lea.vmem %s6, %s808
        $region72: #{_lambda_.6} parent=63 // pred_fallthru
          _
      $region64: #{_lambda_.6} parent=5 // pred_fallthru
        _
    $region6: #{_lambda_.6} parent=1 // loop_footer
      %s21 = sadd.s32 1, %s17
    $region7: #{_lambda_.6} parent=1 // loop_footer_branch
      %16 = sbr.rel target = $region3
    $region8: #{_lambda_.6} parent=1 // loop_exit
      _
    %810 = vsyncpa [#allocation3], 1
    %s811 = scalar_lea.sflag [#allocation3], 1
    %812 = vsyncpa %s811, 1
    %813 = vsyncpa [#allocation5], 1

// kernel: _lambda_.7
$region0: #{_lambda_.7}
  #allocation0 [shape = 'u32[]', space=smem, size = 0x4, offset = 0x4, fixed_abs, tag = 'smem constant byte address 0x4 - core index']
  #allocation1 [shape = 'u32[144,128]{1,0:T(1,128)}', space=vmem, size = 0x12000, scoped, tag = 'internal scratch']
  %s0 = inlined_call_operand.vmem [shape: f32[16,32], index: 0, kind: input, shape index: {}]
  %s1 = inlined_call_operand.vmem [shape: bf16[32,64], index: 1, kind: input, shape index: {}]
  %s2 = inlined_call_operand.vmem [shape: f32[1,64], index: 2, kind: input, shape index: {}]
  %s3 = inlined_call_operand.vmem [shape: f32[16,64], index: 3, kind: output, shape index: {}]
  %s4 = sld [smem:[#allocation0]]
  $region45: #{_lambda_.7} parent=0
    _
  %s6 = ssub.s32 1, %s4
  %s7 = scalar_select 0, %s6, %s4
  loop: start=0, step=1, limit=4
  $region2: #{_lambda_.7} parent=0 // loop_pre_header
    _
  $region3: #{_lambda_.7} parent=0 // loop_header
    %s9 = sphi 0, %s13
    %p10 = scmp.ge.s32.totalorder %s9, 4
    %s19 = sphi 0, %s21
    %s22 = sphi 0, %s19
    %s23 = sphi 0, %s22
    %s39 = sphi 0, %s23
    %s43 = sphi 0, %s43
    %s45 = sphi 0, %s43
    %s46 = sphi 0, %s45
    %s60 = sphi 0, %s46
    %s64 = sphi 0, %s64
    %s66 = sphi 0, %s64
    %s67 = sphi 0, %s66
    %s81 = sphi 0, %s67
    %s87 = sphi 0, %s89
    %s90 = sphi 0, %s87
    %s91 = sphi 0, %s90
    %s107 = sphi 0, %s91
  $region4: #{_lambda_.7} parent=0 // loop_header_branch
    %12 = sbr.rel (%p10) target = $region8
  $region5: #{_lambda_.7} parent=0 // loop_body
    %s14 = ssub.s32 %s9, 1
    %s15 = ssub.s32 %s9, 2
    %s16 = sadd.s32 %s9, 1
    %s17 = ssub.s32 %s9, %s16
    %p18 = scmp.eq.s32.totalorder %s17, 0
    %s20 = sadd.s32 %s19, 1
    %s21 = scalar_select %p18, %s19, %s20
    %p24 = pneg %p18
    %p25 = scmp.eq.s32.totalorder %s9, 1
    %p26 = por %p24, %p25
    %p27 = scmp.ne.s32.totalorder %s19, %s22
    %p28 = scmp.eq.s32.totalorder %s9, 0
    %p29 = por %p27, %p28
    %p30 = scmp.ne.s32.totalorder %s19, %s22
    %p31 = scmp.eq.s32.totalorder %s14, 1
    %p32 = por %p30, %p31
    %p33 = scmp.ne.s32.totalorder %s22, %s23
    %p34 = scmp.eq.s32.totalorder %s14, 0
    %p35 = por %p33, %p34
    %p36 = scmp.ne.s32.totalorder %s22, %s23
    %p37 = scmp.eq.s32.totalorder %s15, 1
    %p38 = por %p36, %p37
    %p40 = scmp.ne.s32.totalorder %s23, %s39
    %p41 = scmp.eq.s32.totalorder %s15, 0
    %p42 = por %p40, %p41
    %s44 = sadd.s32 %s43, 1
    %p47 = scmp.eq.s32.totalorder %s9, 1
    %p48 = scmp.ne.s32.totalorder %s43, %s45
    %p49 = scmp.eq.s32.totalorder %s9, 0
    %p50 = por %p48, %p49
    %p51 = scmp.ne.s32.totalorder %s43, %s45
    %p52 = scmp.eq.s32.totalorder %s14, 1
    %p53 = por %p51, %p52
    %p54 = scmp.ne.s32.totalorder %s45, %s46
    %p55 = scmp.eq.s32.totalorder %s14, 0
    %p56 = por %p54, %p55
    %p57 = scmp.ne.s32.totalorder %s45, %s46
    %p58 = scmp.eq.s32.totalorder %s15, 1
    %p59 = por %p57, %p58
    %p61 = scmp.ne.s32.totalorder %s46, %s60
    %p62 = scmp.eq.s32.totalorder %s15, 0
    %p63 = por %p61, %p62
    %s65 = sadd.s32 %s64, 1
    %p68 = scmp.eq.s32.totalorder %s9, 1
    %p69 = scmp.ne.s32.totalorder %s64, %s66
    %p70 = scmp.eq.s32.totalorder %s9, 0
    %p71 = por %p69, %p70
    %p72 = scmp.ne.s32.totalorder %s64, %s66
    %p73 = scmp.eq.s32.totalorder %s14, 1
    %p74 = por %p72, %p73
    %p75 = scmp.ne.s32.totalorder %s66, %s67
    %p76 = scmp.eq.s32.totalorder %s14, 0
    %p77 = por %p75, %p76
    %p78 = scmp.ne.s32.totalorder %s66, %s67
    %p79 = scmp.eq.s32.totalorder %s15, 1
    %p80 = por %p78, %p79
    %p82 = scmp.ne.s32.totalorder %s67, %s81
    %p83 = scmp.eq.s32.totalorder %s15, 0
    %p84 = por %p82, %p83
    %s85 = ssub.s32 %s9, %s16
    %p86 = scmp.eq.s32.totalorder %s85, 0
    %s88 = sadd.s32 %s87, 1
    %s89 = scalar_select %p86, %s87, %s88
    %p92 = pneg %p86
    %p93 = scmp.eq.s32.totalorder %s9, 1
    %p94 = por %p92, %p93
    %p95 = scmp.ne.s32.totalorder %s87, %s90
    %p96 = scmp.eq.s32.totalorder %s9, 0
    %p97 = por %p95, %p96
    %p98 = scmp.ne.s32.totalorder %s87, %s90
    %p99 = scmp.eq.s32.totalorder %s14, 1
    %p100 = por %p98, %p99
    %p101 = scmp.ne.s32.totalorder %s90, %s91
    %p102 = scmp.eq.s32.totalorder %s14, 0
    %p103 = por %p101, %p102
    %p104 = scmp.ne.s32.totalorder %s90, %s91
    %p105 = scmp.eq.s32.totalorder %s15, 1
    %p106 = por %p104, %p105
    %p108 = scmp.ne.s32.totalorder %s91, %s107
    %p109 = scmp.eq.s32.totalorder %s15, 0
    %p110 = por %p108, %p109
    %p111 = scmp.le.s32.totalorder 1, %s9
    %p112 = scmp.lt.s32.totalorder %s9, 3
    %p113 = pnand %p111, %p112
    %p114 = pneg %p113
    // Predicated region
    $region9: #{_lambda_.7} parent=5 // pred_check
      _
    $region10: #{_lambda_.7} parent=5 // pred_check_branch
      %116 = sbr.rel (%p113) target = $region12
    $region11: #{_lambda_.7} parent=5 // pred_region
      %s117 = ssub.s32 %s9, 1
      // Predicated region
      $region13: #{_lambda_.7} parent=11 // pred_check
        %p118 = pneg %p56
      $region14: #{_lambda_.7} parent=11 // pred_check_branch
        %120 = sbr.rel (%p118) target = $region16
      $region15: #{_lambda_.7} parent=11 // pred_region
        _
      $region16: #{_lambda_.7} parent=11 // pred_fallthru
        _
      // Predicated region
      $region17: #{_lambda_.7} parent=11 // pred_check
        %p121 = pneg %p77
      $region18: #{_lambda_.7} parent=11 // pred_check_branch
        %123 = sbr.rel (%p121) target = $region20
      $region19: #{_lambda_.7} parent=11 // pred_region
        _
      $region20: #{_lambda_.7} parent=11 // pred_fallthru
        _
    $region12: #{_lambda_.7} parent=5 // pred_fallthru
      _
    %p124 = scmp.lt.s32.totalorder %s9, 2
    // Predicated region
    $region21: #{_lambda_.7} parent=5 // pred_check
      %p125 = pneg %p124
    $region22: #{_lambda_.7} parent=5 // pred_check_branch
      %127 = sbr.rel (%p125) target = $region24
    $region23: #{_lambda_.7} parent=5 // pred_region
      // Predicated region
      $region25: #{_lambda_.7} parent=23 // pred_check
        %p128 = pneg %p29
      $region26: #{_lambda_.7} parent=23 // pred_check_branch
        %130 = sbr.rel (%p128) target = $region28
      $region27: #{_lambda_.7} parent=23 // pred_region
        %p131 = scmp.lt.s32.totalorder %s9, 1
        %s132 = scalar_select %p131, %s9, 1
        %s133 = smul.addr %s132, 8
        %s134 = scalar_lea.vmem %s0, %s133
      $region28: #{_lambda_.7} parent=23 // pred_fallthru
        _
    $region24: #{_lambda_.7} parent=5 // pred_fallthru
      _
    %p135 = scmp.le.s32.totalorder 1, %s9
    %p136 = scmp.lt.s32.totalorder %s9, 3
    %p137 = pnand %p135, %p136
    %p138 = pneg %p137
    // Predicated region
    $region29: #{_lambda_.7} parent=5 // pred_check
      _
    $region30: #{_lambda_.7} parent=5 // pred_check_branch
      %140 = sbr.rel (%p137) target = $region32
    $region31: #{_lambda_.7} parent=5 // pred_region
      %s141 = ssub.s32 %s9, 1
      %p142 = scmp.lt.s32.totalorder %s14, 1
      %s143 = scalar_select %p142, %s14, 1
      %s144 = smul.addr %s143, 8
      %s145 = scalar_lea.vmem %s0, %s144
      %p146 = pneg %p35
      %p147 = pneg %p32
      %p148 = pneg %p56
      %p149 = pneg %p53
      %p150 = pneg %p77
      %p151 = pneg %p74
      %p152 = pneg %p103
      %p153 = pneg %p100
      %p154 = scmp.lt.s32.totalorder %s14, 1
      %s155 = scalar_select %p154, %s14, 1
      %s156 = smul.addr %s155, 8
      %s157 = scalar_lea.vmem %s3, %s156
      %p158 = scmp.lt.s32.totalorder %s14, 1
      %s159 = scalar_select %p158, %s14, 1
      %s160 = smul.addr %s159, 8
      %s161 = scalar_lea.vmem %s0, %s160
      %p162 = scmp.lt.s32.totalorder %s14, 1
      %s163 = scalar_select %p162, %s14, 1
      %s164 = smul.addr %s163, 8
      %s165 = scalar_lea.vmem %s3, %s164
      %v167 = vld [vmem:[%s161] sm:$0xff]
      %v168 = vpack.c.bf16 %v167, %v167
      %v169 = vld [vmem:[%s1] sm:$0xf]
      %v170 = vld [vmem:[%s1 + $0x4] sm:$0xf]
      %v171 = vld [vmem:[%s1 + $0x8] sm:$0xf]
      %v172 = vld [vmem:[%s1 + $0xc] sm:$0xf]
      %v173 = vld [vmem:[%s2] sm:$0x1]
      %v175 = vlaneseq
      %v176 = vshrl.u32 %v175, 7
      %v177 = vsub.s32 0, %v176
      %v178 = vrot.slane %v173, %v177
      %v184 = vunpack.c.l.b16 %v169
      %v185 = vunpack.c.l.b16 %v170
      %v186 = vunpack.c.l.b16 %v171
      %v187 = vunpack.c.l.b16 %v172
      %v188 = vpack.c.b16 %v185, %v184
      %v189 = vpack.c.b16 %v187, %v186
      %vm192 = vcmask 261120
      %v194 = vsel %vm192, %v168, 0
      %196 = vmatprep.subr.bf16.mxu0 0
      %197 = vmatpush1.bf16.msra.mxu0 0
      %198 = vmatprep.subr.bf16.mxu0 0
      %199 = vmatpush1.bf16.msra.mxu0 0
      %200 = vmatprep.subr.bf16.mxu0 0
      %201 = vmatpush1.bf16.msra.mxu0 0
      %202 = vmatprep.subr.bf16.mxu0 0
      %203 = vmatpush1.bf16.msra.mxu0 0
      %204 = vmatprep.subr.bf16.mxu0 0
      %205 = vmatpush1.bf16.msra.mxu0 0
      %206 = vmatprep.subr.bf16.mxu0 0
      %207 = vmatpush1.bf16.msra.mxu0 0
      %208 = vmatprep.subr.bf16.mxu0 0
      %209 = vmatpush1.bf16.msra.mxu0 %v189
      %210 = vmatprep.subr.bf16.mxu0 0
      %211 = vmatpush1.bf16.msra.mxu0 %v188
      %212 = vmatprep.subr.bf16.mxu0 0
      %213 = vmatpush2.bf16.msra.mxu0 0
      %214 = vmatprep.subr.bf16.mxu0 0
      %215 = vmatpush2.bf16.msra.mxu0 0
      %216 = vmatprep.subr.bf16.mxu0 0
      %217 = vmatpush2.bf16.msra.mxu0 0
      %218 = vmatprep.subr.bf16.mxu0 0
      %219 = vmatpush2.bf16.msra.mxu0 0
      %220 = vmatprep.subr.bf16.mxu0 0
      %221 = vmatpush2.bf16.msra.mxu0 0
      %222 = vmatprep.subr.bf16.mxu0 0
      %223 = vmatpush2.bf16.msra.mxu0 0
      %224 = vmatprep.subr.bf16.mxu0 0
      %225 = vmatpush2.bf16.msra.mxu0 0
      %226 = vmatprep.subr.bf16.mxu0 0
      %227 = vmatpush2.bf16.msra.mxu0 0
      %228 = vmatprep.mubr.bf16.mxu0 0
      %229 = vmatmul.mubr.bf16.gmra.mxu0 %v194
      %v230 = vpop.f32.mrf.mxu0
      %v231 = vadd.f32 %v178, %v230
      %v232 = vpop.f32.mrf.mxu0
      %v233 = vpop.f32.mrf.mxu0
      %v234 = vpop.f32.mrf.mxu0
      %235 = vdwg.mxu0
      %vm236 = vcmask 523264
      %237 = vst.msk [vmem:[%s165] sm:$0xff] %vm236, %v231
      %p238 = scmp.lt.s32.totalorder %s14, 1
      %s239 = scalar_select %p238, %s14, 1
      %s240 = smul.addr %s239, 8
      %s241 = scalar_lea.vmem %s3, %s240
      // Predicated region
      $region33: #{_lambda_.7} parent=31 // pred_check
        %p242 = pneg %p100
      $region34: #{_lambda_.7} parent=31 // pred_check_branch
        %244 = sbr.rel (%p242) target = $region36
      $region35: #{_lambda_.7} parent=31 // pred_region
        _
      $region36: #{_lambda_.7} parent=31 // pred_fallthru
        _
    $region32: #{_lambda_.7} parent=5 // pred_fallthru
      _
    %p245 = scmp.le.s32.totalorder 2, %s9
    // Predicated region
    $region37: #{_lambda_.7} parent=5 // pred_check
      %p246 = pneg %p245
    $region38: #{_lambda_.7} parent=5 // pred_check_branch
      %248 = sbr.rel (%p246) target = $region40
    $region39: #{_lambda_.7} parent=5 // pred_region
      %s249 = ssub.s32 %s9, 2
      // Predicated region
      $region41: #{_lambda_.7} parent=39 // pred_check
        %p250 = pneg %p106
      $region42: #{_lambda_.7} parent=39 // pred_check_branch
        %252 = sbr.rel (%p250) target = $region44
      $region43: #{_lambda_.7} parent=39 // pred_region
        %p253 = scmp.lt.s32.totalorder %s15, 1
        %s254 = scalar_select %p253, %s15, 1
        %s255 = smul.addr %s254, 8
        %s256 = scalar_lea.vmem %s3, %s255
      $region44: #{_lambda_.7} parent=39 // pred_fallthru
        _
    $region40: #{_lambda_.7} parent=5 // pred_fallthru
      _
  $region6: #{_lambda_.7} parent=0 // loop_footer
    %s13 = sadd.s32 1, %s9
  $region7: #{_lambda_.7} parent=0 // loop_footer_branch
    %8 = sbr.rel target = $region3
  $region8: #{_lambda_.7} parent=0 // loop_exit
    _

// kernel: _lambda_.9
$region0: #{_lambda_.9}
  #allocation0 [shape = 'u32[]', space=smem, size = 0x4, offset = 0x4, fixed_abs, tag = 'smem constant byte address 0x4 - core index']
  #allocation1 [shape = 'u32[144,128]{1,0:T(1,128)}', space=vmem, size = 0x12000, scoped, tag = 'internal scratch']
  %s0 = inlined_call_operand.vmem [shape: f32[256,32], index: 0, kind: input, shape index: {}]
  %s1 = inlined_call_operand.vmem [shape: bf16[32,32], index: 1, kind: input, shape index: {}]
  %s2 = inlined_call_operand.vmem [shape: f32[1,32], index: 2, kind: input, shape index: {}]
  %s3 = inlined_call_operand.vmem [shape: f32[256,32], index: 3, kind: output, shape index: {}]
  %s4 = sld [smem:[#allocation0]]
  $region45: #{_lambda_.9} parent=0
    _
  %s6 = ssub.s32 1, %s4
  %s7 = scalar_select 0, %s6, %s4
  loop: start=0, step=1, limit=4
  $region2: #{_lambda_.9} parent=0 // loop_pre_header
    _
  $region3: #{_lambda_.9} parent=0 // loop_header
    %s9 = sphi 0, %s13
    %p10 = scmp.ge.s32.totalorder %s9, 4
    %s19 = sphi 0, %s21
    %s22 = sphi 0, %s19
    %s23 = sphi 0, %s22
    %s39 = sphi 0, %s23
    %s43 = sphi 0, %s43
    %s45 = sphi 0, %s43
    %s46 = sphi 0, %s45
    %s60 = sphi 0, %s46
    %s64 = sphi 0, %s64
    %s66 = sphi 0, %s64
    %s67 = sphi 0, %s66
    %s81 = sphi 0, %s67
    %s87 = sphi 0, %s89
    %s90 = sphi 0, %s87
    %s91 = sphi 0, %s90
    %s107 = sphi 0, %s91
  $region4: #{_lambda_.9} parent=0 // loop_header_branch
    %12 = sbr.rel (%p10) target = $region8
  $region5: #{_lambda_.9} parent=0 // loop_body
    %s14 = ssub.s32 %s9, 1
    %s15 = ssub.s32 %s9, 2
    %s16 = sadd.s32 %s9, 1
    %s17 = ssub.s32 %s9, %s16
    %p18 = scmp.eq.s32.totalorder %s17, 0
    %s20 = sadd.s32 %s19, 1
    %s21 = scalar_select %p18, %s19, %s20
    %p24 = pneg %p18
    %p25 = scmp.eq.s32.totalorder %s9, 1
    %p26 = por %p24, %p25
    %p27 = scmp.ne.s32.totalorder %s19, %s22
    %p28 = scmp.eq.s32.totalorder %s9, 0
    %p29 = por %p27, %p28
    %p30 = scmp.ne.s32.totalorder %s19, %s22
    %p31 = scmp.eq.s32.totalorder %s14, 1
    %p32 = por %p30, %p31
    %p33 = scmp.ne.s32.totalorder %s22, %s23
    %p34 = scmp.eq.s32.totalorder %s14, 0
    %p35 = por %p33, %p34
    %p36 = scmp.ne.s32.totalorder %s22, %s23
    %p37 = scmp.eq.s32.totalorder %s15, 1
    %p38 = por %p36, %p37
    %p40 = scmp.ne.s32.totalorder %s23, %s39
    %p41 = scmp.eq.s32.totalorder %s15, 0
    %p42 = por %p40, %p41
    %s44 = sadd.s32 %s43, 1
    %p47 = scmp.eq.s32.totalorder %s9, 1
    %p48 = scmp.ne.s32.totalorder %s43, %s45
    %p49 = scmp.eq.s32.totalorder %s9, 0
    %p50 = por %p48, %p49
    %p51 = scmp.ne.s32.totalorder %s43, %s45
    %p52 = scmp.eq.s32.totalorder %s14, 1
    %p53 = por %p51, %p52
    %p54 = scmp.ne.s32.totalorder %s45, %s46
    %p55 = scmp.eq.s32.totalorder %s14, 0
    %p56 = por %p54, %p55
    %p57 = scmp.ne.s32.totalorder %s45, %s46
    %p58 = scmp.eq.s32.totalorder %s15, 1
    %p59 = por %p57, %p58
    %p61 = scmp.ne.s32.totalorder %s46, %s60
    %p62 = scmp.eq.s32.totalorder %s15, 0
    %p63 = por %p61, %p62
    %s65 = sadd.s32 %s64, 1
    %p68 = scmp.eq.s32.totalorder %s9, 1
    %p69 = scmp.ne.s32.totalorder %s64, %s66
    %p70 = scmp.eq.s32.totalorder %s9, 0
    %p71 = por %p69, %p70
    %p72 = scmp.ne.s32.totalorder %s64, %s66
    %p73 = scmp.eq.s32.totalorder %s14, 1
    %p74 = por %p72, %p73
    %p75 = scmp.ne.s32.totalorder %s66, %s67
    %p76 = scmp.eq.s32.totalorder %s14, 0
    %p77 = por %p75, %p76
    %p78 = scmp.ne.s32.totalorder %s66, %s67
    %p79 = scmp.eq.s32.totalorder %s15, 1
    %p80 = por %p78, %p79
    %p82 = scmp.ne.s32.totalorder %s67, %s81
    %p83 = scmp.eq.s32.totalorder %s15, 0
    %p84 = por %p82, %p83
    %s85 = ssub.s32 %s9, %s16
    %p86 = scmp.eq.s32.totalorder %s85, 0
    %s88 = sadd.s32 %s87, 1
    %s89 = scalar_select %p86, %s87, %s88
    %p92 = pneg %p86
    %p93 = scmp.eq.s32.totalorder %s9, 1
    %p94 = por %p92, %p93
    %p95 = scmp.ne.s32.totalorder %s87, %s90
    %p96 = scmp.eq.s32.totalorder %s9, 0
    %p97 = por %p95, %p96
    %p98 = scmp.ne.s32.totalorder %s87, %s90
    %p99 = scmp.eq.s32.totalorder %s14, 1
    %p100 = por %p98, %p99
    %p101 = scmp.ne.s32.totalorder %s90, %s91
    %p102 = scmp.eq.s32.totalorder %s14, 0
    %p103 = por %p101, %p102
    %p104 = scmp.ne.s32.totalorder %s90, %s91
    %p105 = scmp.eq.s32.totalorder %s15, 1
    %p106 = por %p104, %p105
    %p108 = scmp.ne.s32.totalorder %s91, %s107
    %p109 = scmp.eq.s32.totalorder %s15, 0
    %p110 = por %p108, %p109
    %p111 = scmp.le.s32.totalorder 1, %s9
    %p112 = scmp.lt.s32.totalorder %s9, 3
    %p113 = pnand %p111, %p112
    %p114 = pneg %p113
    // Predicated region
    $region9: #{_lambda_.9} parent=5 // pred_check
      _
    $region10: #{_lambda_.9} parent=5 // pred_check_branch
      %116 = sbr.rel (%p113) target = $region12
    $region11: #{_lambda_.9} parent=5 // pred_region
      %s117 = ssub.s32 %s9, 1
      // Predicated region
      $region13: #{_lambda_.9} parent=11 // pred_check
        %p118 = pneg %p56
      $region14: #{_lambda_.9} parent=11 // pred_check_branch
        %120 = sbr.rel (%p118) target = $region16
      $region15: #{_lambda_.9} parent=11 // pred_region
        _
      $region16: #{_lambda_.9} parent=11 // pred_fallthru
        _
      // Predicated region
      $region17: #{_lambda_.9} parent=11 // pred_check
        %p121 = pneg %p77
      $region18: #{_lambda_.9} parent=11 // pred_check_branch
        %123 = sbr.rel (%p121) target = $region20
      $region19: #{_lambda_.9} parent=11 // pred_region
        _
      $region20: #{_lambda_.9} parent=11 // pred_fallthru
        _
    $region12: #{_lambda_.9} parent=5 // pred_fallthru
      _
    %p124 = scmp.lt.s32.totalorder %s9, 2
    // Predicated region
    $region21: #{_lambda_.9} parent=5 // pred_check
      %p125 = pneg %p124
    $region22: #{_lambda_.9} parent=5 // pred_check_branch
      %127 = sbr.rel (%p125) target = $region24
    $region23: #{_lambda_.9} parent=5 // pred_region
      // Predicated region
      $region25: #{_lambda_.9} parent=23 // pred_check
        %p128 = pneg %p29
      $region26: #{_lambda_.9} parent=23 // pred_check_branch
        %130 = sbr.rel (%p128) target = $region28
      $region27: #{_lambda_.9} parent=23 // pred_region
        %s131 = smul.u32 16, %s9
        %p132 = scmp.lt.s32.totalorder %s131, 31
        %s133 = scalar_select %p132, %s131, 31
        %s134 = smul.addr %s133, 8
        %s135 = scalar_lea.vmem %s0, %s134
        %s136 = smul.u32 16, %s9
      $region28: #{_lambda_.9} parent=23 // pred_fallthru
        _
    $region24: #{_lambda_.9} parent=5 // pred_fallthru
      _
    %p137 = scmp.le.s32.totalorder 1, %s9
    %p138 = scmp.lt.s32.totalorder %s9, 3
    %p139 = pnand %p137, %p138
    %p140 = pneg %p139
    // Predicated region
    $region29: #{_lambda_.9} parent=5 // pred_check
      _
    $region30: #{_lambda_.9} parent=5 // pred_check_branch
      %142 = sbr.rel (%p139) target = $region32
    $region31: #{_lambda_.9} parent=5 // pred_region
      %s143 = ssub.s32 %s9, 1
      %s144 = smul.u32 16, %s14
      %p145 = scmp.lt.s32.totalorder %s144, 31
      %s146 = scalar_select %p145, %s144, 31
      %s147 = smul.addr %s146, 8
      %s148 = scalar_lea.vmem %s0, %s147
      %p149 = pneg %p35
      %p150 = pneg %p32
      %p151 = pneg %p56
      %p152 = pneg %p53
      %p153 = pneg %p77
      %p154 = pneg %p74
      %p155 = pneg %p103
      %p156 = pneg %p100
      %s157 = smul.u32 16, %s14
      %p158 = scmp.lt.s32.totalorder %s157, 31
      %s159 = scalar_select %p158, %s157, 31
      %s160 = smul.addr %s159, 8
      %s161 = scalar_lea.vmem %s3, %s160
      %s162 = smul.u32 16, %s14
      %p163 = scmp.lt.s32.totalorder %s162, 31
      %s164 = scalar_select %p163, %s162, 31
      %s165 = smul.addr %s164, 8
      %s166 = scalar_lea.vmem %s0, %s165
      %s167 = smul.u32 16, %s14
      %s168 = smul.u32 16, %s14
      %p169 = scmp.lt.s32.totalorder %s168, 31
      %s170 = scalar_select %p169, %s168, 31
      %s171 = smul.addr %s170, 8
      %s172 = scalar_lea.vmem %s3, %s171
      %s173 = smul.u32 16, %s14
      %v175 = vld [vmem:[%s166] sm:$0xff]
      %v176 = vld [vmem:[%s166 + $0x8] sm:$0xff]
      %v177 = vld [vmem:[%s166 + $0x10] sm:$0xff]
      %v178 = vld [vmem:[%s166 + $0x18] sm:$0xff]
      %v179 = vld [vmem:[%s166 + $0x20] sm:$0xff]
      %v180 = vld [vmem:[%s166 + $0x28] sm:$0xff]
      %v181 = vld [vmem:[%s166 + $0x30] sm:$0xff]
      %v182 = vld [vmem:[%s166 + $0x38] sm:$0xff]
      %v183 = vld [vmem:[%s166 + $0x40] sm:$0xff]
      %v184 = vld [vmem:[%s166 + $0x48] sm:$0xff]
      %v185 = vld [vmem:[%s166 + $0x50] sm:$0xff]
      %v186 = vld [vmem:[%s166 + $0x58] sm:$0xff]
      %v187 = vld [vmem:[%s166 + $0x60] sm:$0xff]
      %v188 = vld [vmem:[%s166 + $0x68] sm:$0xff]
      %v189 = vld [vmem:[%s166 + $0x70] sm:$0xff]
      %v190 = vld [vmem:[%s166 + $0x78] sm:$0xff]
      %v191 = vpack.c.bf16 %v176, %v175
      %v192 = vpack.c.bf16 %v178, %v177
      %v193 = vpack.c.bf16 %v180, %v179
      %v194 = vpack.c.bf16 %v182, %v181
      %v195 = vpack.c.bf16 %v184, %v183
      %v196 = vpack.c.bf16 %v186, %v185
      %v197 = vpack.c.bf16 %v188, %v187
      %v198 = vpack.c.bf16 %v190, %v189
      %v199 = vld [vmem:[%s1] sm:$0xf]
      %v200 = vld [vmem:[%s1 + $0x4] sm:$0xf]
      %v201 = vld [vmem:[%s1 + $0x8] sm:$0xf]
      %v202 = vld [vmem:[%s1 + $0xc] sm:$0xf]
      %v203 = vld [vmem:[%s2] sm:$0x1]
      %v205 = vlaneseq
      %v206 = vshrl.u32 %v205, 7
      %v207 = vsub.s32 0, %v206
      %v208 = vrot.slane %v203, %v207
      %v214 = vunpack.c.l.b16 %v199
      %v215 = vunpack.c.l.b16 %v200
      %v216 = vunpack.c.l.b16 %v201
      %v217 = vunpack.c.l.b16 %v202
      %v218 = vpack.c.b16 %v215, %v214
      %v219 = vpack.c.b16 %v217, %v216
      %vm222 = vcmask 261120
      %v224 = vsel %vm222, %v191, 0
      %v227 = vsel %vm222, %v192, 0
      %v230 = vsel %vm222, %v193, 0
      %v233 = vsel %vm222, %v194, 0
      %v236 = vsel %vm222, %v195, 0
      %v239 = vsel %vm222, %v196, 0
      %v242 = vsel %vm222, %v197, 0
      %v245 = vsel %vm222, %v198, 0
      %247 = vmatprep.subr.bf16.mxu0 0
      %248 = vmatpush1.bf16.msra.mxu0 0
      %249 = vmatprep.subr.bf16.mxu0 0
      %250 = vmatpush1.bf16.msra.mxu0 0
      %251 = vmatprep.subr.bf16.mxu0 0
      %252 = vmatpush1.bf16.msra.mxu0 0
      %253 = vmatprep.subr.bf16.mxu0 0
      %254 = vmatpush1.bf16.msra.mxu0 0
      %255 = vmatprep.subr.bf16.mxu0 0
      %256 = vmatpush1.bf16.msra.mxu0 0
      %257 = vmatprep.subr.bf16.mxu0 0
      %258 = vmatpush1.bf16.msra.mxu0 0
      %259 = vmatprep.subr.bf16.mxu0 0
      %260 = vmatpush1.bf16.msra.mxu0 %v219
      %261 = vmatprep.subr.bf16.mxu0 0
      %262 = vmatpush1.bf16.msra.mxu0 %v218
      %263 = vmatprep.subr.bf16.mxu0 0
      %264 = vmatpush2.bf16.msra.mxu0 0
      %265 = vmatprep.subr.bf16.mxu0 0
      %266 = vmatpush2.bf16.msra.mxu0 0
      %267 = vmatprep.subr.bf16.mxu0 0
      %268 = vmatpush2.bf16.msra.mxu0 0
      %269 = vmatprep.subr.bf16.mxu0 0
      %270 = vmatpush2.bf16.msra.mxu0 0
      %271 = vmatprep.subr.bf16.mxu0 0
      %272 = vmatpush2.bf16.msra.mxu0 0
      %273 = vmatprep.subr.bf16.mxu0 0
      %274 = vmatpush2.bf16.msra.mxu0 0
      %275 = vmatprep.subr.bf16.mxu0 0
      %276 = vmatpush2.bf16.msra.mxu0 0
      %277 = vmatprep.subr.bf16.mxu0 0
      %278 = vmatpush2.bf16.msra.mxu0 0
      %279 = vmatprep.mubr.bf16.mxu0 0
      %280 = vmatmul.mubr.bf16.gmra.mxu0 %v224
      %v281 = vpop.f32.mrf.mxu0
      %v282 = vadd.f32 %v208, %v281
      %v283 = vpop.f32.mrf.mxu0
      %v284 = vpop.f32.mrf.mxu0
      %v285 = vadd.f32 %v208, %v284
      %v286 = vpop.f32.mrf.mxu0
      %287 = vmatprep.mubr.bf16.mxu0 0
      %288 = vmatmul.mubr.bf16.gmra.mxu0 %v227
      %v289 = vpop.f32.mrf.mxu0
      %v290 = vadd.f32 %v208, %v289
      %v291 = vpop.f32.mrf.mxu0
      %v292 = vpop.f32.mrf.mxu0
      %v293 = vadd.f32 %v208, %v292
      %v294 = vpop.f32.mrf.mxu0
      %295 = vmatprep.mubr.bf16.mxu0 0
      %296 = vmatmul.mubr.bf16.gmra.mxu0 %v230
      %v297 = vpop.f32.mrf.mxu0
      %v298 = vadd.f32 %v208, %v297
      %v299 = vpop.f32.mrf.mxu0
      %v300 = vpop.f32.mrf.mxu0
      %v301 = vadd.f32 %v208, %v300
      %v302 = vpop.f32.mrf.mxu0
      %303 = vmatprep.mubr.bf16.mxu0 0
      %304 = vmatmul.mubr.bf16.gmra.mxu0 %v233
      %v305 = vpop.f32.mrf.mxu0
      %v306 = vadd.f32 %v208, %v305
      %v307 = vpop.f32.mrf.mxu0
      %v308 = vpop.f32.mrf.mxu0
      %v309 = vadd.f32 %v208, %v308
      %v310 = vpop.f32.mrf.mxu0
      %311 = vmatprep.mubr.bf16.mxu0 0
      %312 = vmatmul.mubr.bf16.gmra.mxu0 %v236
      %v313 = vpop.f32.mrf.mxu0
      %v314 = vadd.f32 %v208, %v313
      %v315 = vpop.f32.mrf.mxu0
      %v316 = vpop.f32.mrf.mxu0
      %v317 = vadd.f32 %v208, %v316
      %v318 = vpop.f32.mrf.mxu0
      %319 = vmatprep.mubr.bf16.mxu0 0
      %320 = vmatmul.mubr.bf16.gmra.mxu0 %v239
      %v321 = vpop.f32.mrf.mxu0
      %v322 = vadd.f32 %v208, %v321
      %v323 = vpop.f32.mrf.mxu0
      %v324 = vpop.f32.mrf.mxu0
      %v325 = vadd.f32 %v208, %v324
      %v326 = vpop.f32.mrf.mxu0
      %327 = vmatprep.mubr.bf16.mxu0 0
      %328 = vmatmul.mubr.bf16.gmra.mxu0 %v242
      %v329 = vpop.f32.mrf.mxu0
      %v330 = vadd.f32 %v208, %v329
      %v331 = vpop.f32.mrf.mxu0
      %v332 = vpop.f32.mrf.mxu0
      %v333 = vadd.f32 %v208, %v332
      %v334 = vpop.f32.mrf.mxu0
      %335 = vmatprep.mubr.bf16.mxu0 0
      %336 = vmatmul.mubr.bf16.gmra.mxu0 %v245
      %v337 = vpop.f32.mrf.mxu0
      %v338 = vadd.f32 %v208, %v337
      %v339 = vpop.f32.mrf.mxu0
      %v340 = vpop.f32.mrf.mxu0
      %v341 = vadd.f32 %v208, %v340
      %v342 = vpop.f32.mrf.mxu0
      %343 = vdwg.mxu0
      %344 = vst.msk [vmem:[%s172] sm:$0xff] %vm222, %v282
      %345 = vst.msk [vmem:[%s172 + $0x8] sm:$0xff] %vm222, %v285
      %346 = vst.msk [vmem:[%s172 + $0x10] sm:$0xff] %vm222, %v290
      %347 = vst.msk [vmem:[%s172 + $0x18] sm:$0xff] %vm222, %v293
      %348 = vst.msk [vmem:[%s172 + $0x20] sm:$0xff] %vm222, %v298
      %349 = vst.msk [vmem:[%s172 + $0x28] sm:$0xff] %vm222, %v301
      %350 = vst.msk [vmem:[%s172 + $0x30] sm:$0xff] %vm222, %v306
      %351 = vst.msk [vmem:[%s172 + $0x38] sm:$0xff] %vm222, %v309
      %352 = vst.msk [vmem:[%s172 + $0x40] sm:$0xff] %vm222, %v314
      %353 = vst.msk [vmem:[%s172 + $0x48] sm:$0xff] %vm222, %v317
      %354 = vst.msk [vmem:[%s172 + $0x50] sm:$0xff] %vm222, %v322
      %355 = vst.msk [vmem:[%s172 + $0x58] sm:$0xff] %vm222, %v325
      %356 = vst.msk [vmem:[%s172 + $0x60] sm:$0xff] %vm222, %v330
      %357 = vst.msk [vmem:[%s172 + $0x68] sm:$0xff] %vm222, %v333
      %358 = vst.msk [vmem:[%s172 + $0x70] sm:$0xff] %vm222, %v338
      %359 = vst.msk [vmem:[%s172 + $0x78] sm:$0xff] %vm222, %v341
      %s360 = smul.u32 16, %s14
      %p361 = scmp.lt.s32.totalorder %s360, 31
      %s362 = scalar_select %p361, %s360, 31
      %s363 = smul.addr %s362, 8
      %s364 = scalar_lea.vmem %s3, %s363
      // Predicated region
      $region33: #{_lambda_.9} parent=31 // pred_check
        %p365 = pneg %p100
      $region34: #{_lambda_.9} parent=31 // pred_check_branch
        %367 = sbr.rel (%p365) target = $region36
      $region35: #{_lambda_.9} parent=31 // pred_region
        %s368 = smul.u32 16, %s14
      $region36: #{_lambda_.9} parent=31 // pred_fallthru
        _
    $region32: #{_lambda_.9} parent=5 // pred_fallthru
      _
    %p369 = scmp.le.s32.totalorder 2, %s9
    // Predicated region
    $region37: #{_lambda_.9} parent=5 // pred_check
      %p370 = pneg %p369
    $region38: #{_lambda_.9} parent=5 // pred_check_branch
      %372 = sbr.rel (%p370) target = $region40
    $region39: #{_lambda_.9} parent=5 // pred_region
      %s373 = ssub.s32 %s9, 2
      // Predicated region
      $region41: #{_lambda_.9} parent=39 // pred_check
        %p374 = pneg %p106
      $region42: #{_lambda_.9} parent=39 // pred_check_branch
        %376 = sbr.rel (%p374) target = $region44
      $region43: #{_lambda_.9} parent=39 // pred_region
        %s377 = smul.u32 16, %s15
        %p378 = scmp.lt.s32.totalorder %s377, 31
        %s379 = scalar_select %p378, %s377, 31
        %s380 = smul.addr %s379, 8
        %s381 = scalar_lea.vmem %s3, %s380
      $region44: #{_lambda_.9} parent=39 // pred_fallthru
        _
    $region40: #{_lambda_.9} parent=5 // pred_fallthru
      _
  $region6: #{_lambda_.9} parent=0 // loop_footer
    %s13 = sadd.s32 1, %s9
  $region7: #{_lambda_.9} parent=0 // loop_footer_branch
    %8 = sbr.rel target = $region3
  $region8: #{_lambda_.9} parent=0 // loop_exit
    _

// kernel: _lambda_.10
$region0: #{_lambda_.10}
  #allocation0 [shape = 'u32[]', space=smem, size = 0x4, offset = 0x4, fixed_abs, tag = 'smem constant byte address 0x4 - core index']
  #allocation1 [shape = 'u32[144,128]{1,0:T(1,128)}', space=vmem, size = 0x12000, scoped, tag = 'internal scratch']
  %s0 = inlined_call_operand.vmem [shape: f32[256,32], index: 0, kind: input, shape index: {}]
  %s1 = inlined_call_operand.vmem [shape: f32[1,32], index: 1, kind: input, shape index: {}]
  %s2 = inlined_call_operand.vmem [shape: f32[1,32], index: 2, kind: input, shape index: {}]
  %s3 = inlined_call_operand.vmem [shape: bf16[32,1960], index: 3, kind: input, shape index: {}]
  %s4 = inlined_call_operand.vmem [shape: f32[1,1960], index: 4, kind: input, shape index: {}]
  %s5 = inlined_call_operand.vmem [shape: f32[256,1960], index: 5, kind: output, shape index: {0}]
  %s6 = inlined_call_operand.hbm [shape: f32[256,32], index: 6, kind: output, shape index: {1}]
  %7 = xla_tuple %s5, %s6
  %s8 = sld [smem:[#allocation0]]
  $region61: #{_lambda_.10} parent=0
    _
  %s10 = ssub.s32 1, %s8
  %s11 = scalar_select 0, %s10, %s8
  $region1: #{_lambda_.10} parent=0
    #allocation2 [shape = 'u8[131072]{0}', space=vmem, size = 0x20000, scoped, tag = 'output window, operand 1']
    #allocation3 [shape = 's32[2]{0}', space=sflag, size = 0x8, scoped, tag = 'scoped memory for _lambda_.10']
    %12 = vsyncpa [#allocation3], 0
    %s13 = scalar_lea.sflag [#allocation3], 1
    %14 = vsyncpa %s13, 0
    loop: start=0, step=1, limit=4
    $region2: #{_lambda_.10} parent=1 // loop_pre_header
      _
    $region3: #{_lambda_.10} parent=1 // loop_header
      %s16 = sphi 0, %s20
      %p17 = scmp.ge.s32.totalorder %s16, 4
      %s26 = sphi 0, %s28
      %s29 = sphi 0, %s26
      %s30 = sphi 0, %s29
      %s46 = sphi 0, %s30
      %s50 = sphi 0, %s50
      %s52 = sphi 0, %s50
      %s53 = sphi 0, %s52
      %s67 = sphi 0, %s53
      %s71 = sphi 0, %s71
      %s73 = sphi 0, %s71
      %s74 = sphi 0, %s73
      %s88 = sphi 0, %s74
      %s92 = sphi 0, %s92
      %s94 = sphi 0, %s92
      %s95 = sphi 0, %s94
      %s109 = sphi 0, %s95
      %s113 = sphi 0, %s113
      %s115 = sphi 0, %s113
      %s116 = sphi 0, %s115
      %s130 = sphi 0, %s116
      %s136 = sphi 0, %s138
      %s139 = sphi 0, %s136
      %s140 = sphi 0, %s139
      %s156 = sphi 0, %s140
      %s162 = sphi 0, %s164
      %s165 = sphi 0, %s162
      %s166 = sphi 0, %s165
      %s182 = sphi 0, %s166
    $region4: #{_lambda_.10} parent=1 // loop_header_branch
      %19 = sbr.rel (%p17) target = $region8
    $region5: #{_lambda_.10} parent=1 // loop_body
      %s21 = ssub.s32 %s16, 1
      %s22 = ssub.s32 %s16, 2
      %s23 = sadd.s32 %s16, 1
      %s24 = ssub.s32 %s16, %s23
      %p25 = scmp.eq.s32.totalorder %s24, 0
      %s27 = sadd.s32 %s26, 1
      %s28 = scalar_select %p25, %s26, %s27
      %p31 = pneg %p25
      %p32 = scmp.eq.s32.totalorder %s16, 1
      %p33 = por %p31, %p32
      %p34 = scmp.ne.s32.totalorder %s26, %s29
      %p35 = scmp.eq.s32.totalorder %s16, 0
      %p36 = por %p34, %p35
      %p37 = scmp.ne.s32.totalorder %s26, %s29
      %p38 = scmp.eq.s32.totalorder %s21, 1
      %p39 = por %p37, %p38
      %p40 = scmp.ne.s32.totalorder %s29, %s30
      %p41 = scmp.eq.s32.totalorder %s21, 0
      %p42 = por %p40, %p41
      %p43 = scmp.ne.s32.totalorder %s29, %s30
      %p44 = scmp.eq.s32.totalorder %s22, 1
      %p45 = por %p43, %p44
      %p47 = scmp.ne.s32.totalorder %s30, %s46
      %p48 = scmp.eq.s32.totalorder %s22, 0
      %p49 = por %p47, %p48
      %s51 = sadd.s32 %s50, 1
      %p54 = scmp.eq.s32.totalorder %s16, 1
      %p55 = scmp.ne.s32.totalorder %s50, %s52
      %p56 = scmp.eq.s32.totalorder %s16, 0
      %p57 = por %p55, %p56
      %p58 = scmp.ne.s32.totalorder %s50, %s52
      %p59 = scmp.eq.s32.totalorder %s21, 1
      %p60 = por %p58, %p59
      %p61 = scmp.ne.s32.totalorder %s52, %s53
      %p62 = scmp.eq.s32.totalorder %s21, 0
      %p63 = por %p61, %p62
      %p64 = scmp.ne.s32.totalorder %s52, %s53
      %p65 = scmp.eq.s32.totalorder %s22, 1
      %p66 = por %p64, %p65
      %p68 = scmp.ne.s32.totalorder %s53, %s67
      %p69 = scmp.eq.s32.totalorder %s22, 0
      %p70 = por %p68, %p69
      %s72 = sadd.s32 %s71, 1
      %p75 = scmp.eq.s32.totalorder %s16, 1
      %p76 = scmp.ne.s32.totalorder %s71, %s73
      %p77 = scmp.eq.s32.totalorder %s16, 0
      %p78 = por %p76, %p77
      %p79 = scmp.ne.s32.totalorder %s71, %s73
      %p80 = scmp.eq.s32.totalorder %s21, 1
      %p81 = por %p79, %p80
      %p82 = scmp.ne.s32.totalorder %s73, %s74
      %p83 = scmp.eq.s32.totalorder %s21, 0
      %p84 = por %p82, %p83
      %p85 = scmp.ne.s32.totalorder %s73, %s74
      %p86 = scmp.eq.s32.totalorder %s22, 1
      %p87 = por %p85, %p86
      %p89 = scmp.ne.s32.totalorder %s74, %s88
      %p90 = scmp.eq.s32.totalorder %s22, 0
      %p91 = por %p89, %p90
      %s93 = sadd.s32 %s92, 1
      %p96 = scmp.eq.s32.totalorder %s16, 1
      %p97 = scmp.ne.s32.totalorder %s92, %s94
      %p98 = scmp.eq.s32.totalorder %s16, 0
      %p99 = por %p97, %p98
      %p100 = scmp.ne.s32.totalorder %s92, %s94
      %p101 = scmp.eq.s32.totalorder %s21, 1
      %p102 = por %p100, %p101
      %p103 = scmp.ne.s32.totalorder %s94, %s95
      %p104 = scmp.eq.s32.totalorder %s21, 0
      %p105 = por %p103, %p104
      %p106 = scmp.ne.s32.totalorder %s94, %s95
      %p107 = scmp.eq.s32.totalorder %s22, 1
      %p108 = por %p106, %p107
      %p110 = scmp.ne.s32.totalorder %s95, %s109
      %p111 = scmp.eq.s32.totalorder %s22, 0
      %p112 = por %p110, %p111
      %s114 = sadd.s32 %s113, 1
      %p117 = scmp.eq.s32.totalorder %s16, 1
      %p118 = scmp.ne.s32.totalorder %s113, %s115
      %p119 = scmp.eq.s32.totalorder %s16, 0
      %p120 = por %p118, %p119
      %p121 = scmp.ne.s32.totalorder %s113, %s115
      %p122 = scmp.eq.s32.totalorder %s21, 1
      %p123 = por %p121, %p122
      %p124 = scmp.ne.s32.totalorder %s115, %s116
      %p125 = scmp.eq.s32.totalorder %s21, 0
      %p126 = por %p124, %p125
      %p127 = scmp.ne.s32.totalorder %s115, %s116
      %p128 = scmp.eq.s32.totalorder %s22, 1
      %p129 = por %p127, %p128
      %p131 = scmp.ne.s32.totalorder %s116, %s130
      %p132 = scmp.eq.s32.totalorder %s22, 0
      %p133 = por %p131, %p132
      %s134 = ssub.s32 %s16, %s23
      %p135 = scmp.eq.s32.totalorder %s134, 0
      %s137 = sadd.s32 %s136, 1
      %s138 = scalar_select %p135, %s136, %s137
      %p141 = pneg %p135
      %p142 = scmp.eq.s32.totalorder %s16, 1
      %p143 = por %p141, %p142
      %p144 = scmp.ne.s32.totalorder %s136, %s139
      %p145 = scmp.eq.s32.totalorder %s16, 0
      %p146 = por %p144, %p145
      %p147 = scmp.ne.s32.totalorder %s136, %s139
      %p148 = scmp.eq.s32.totalorder %s21, 1
      %p149 = por %p147, %p148
      %p150 = scmp.ne.s32.totalorder %s139, %s140
      %p151 = scmp.eq.s32.totalorder %s21, 0
      %p152 = por %p150, %p151
      %p153 = scmp.ne.s32.totalorder %s139, %s140
      %p154 = scmp.eq.s32.totalorder %s22, 1
      %p155 = por %p153, %p154
      %p157 = scmp.ne.s32.totalorder %s140, %s156
      %p158 = scmp.eq.s32.totalorder %s22, 0
      %p159 = por %p157, %p158
      %s160 = ssub.s32 %s16, %s23
      %p161 = scmp.eq.s32.totalorder %s160, 0
      %s163 = sadd.s32 %s162, 1
      %s164 = scalar_select %p161, %s162, %s163
      %p167 = pneg %p161
      %p168 = scmp.eq.s32.totalorder %s16, 1
      %p169 = por %p167, %p168
      %p170 = scmp.ne.s32.totalorder %s162, %s165
      %p171 = scmp.eq.s32.totalorder %s16, 0
      %p172 = por %p170, %p171
      %p173 = scmp.ne.s32.totalorder %s162, %s165
      %p174 = scmp.eq.s32.totalorder %s21, 1
      %p175 = por %p173, %p174
      %p176 = scmp.ne.s32.totalorder %s165, %s166
      %p177 = scmp.eq.s32.totalorder %s21, 0
      %p178 = por %p176, %p177
      %p179 = scmp.ne.s32.totalorder %s165, %s166
      %p180 = scmp.eq.s32.totalorder %s22, 1
      %p181 = por %p179, %p180
      %p183 = scmp.ne.s32.totalorder %s166, %s182
      %p184 = scmp.eq.s32.totalorder %s22, 0
      %p185 = por %p183, %p184
      %p186 = scmp.le.s32.totalorder 1, %s16
      %p187 = scmp.lt.s32.totalorder %s16, 3
      %p188 = pnand %p186, %p187
      %p189 = pneg %p188
      // Predicated region
      $region9: #{_lambda_.10} parent=5 // pred_check
        _
      $region10: #{_lambda_.10} parent=5 // pred_check_branch
        %191 = sbr.rel (%p188) target = $region12
      $region11: #{_lambda_.10} parent=5 // pred_region
        %s192 = ssub.s32 %s16, 1
        // Predicated region
        $region13: #{_lambda_.10} parent=11 // pred_check
          %p193 = pneg %p63
        $region14: #{_lambda_.10} parent=11 // pred_check_branch
          %195 = sbr.rel (%p193) target = $region16
        $region15: #{_lambda_.10} parent=11 // pred_region
          _
        $region16: #{_lambda_.10} parent=11 // pred_fallthru
          _
        // Predicated region
        $region17: #{_lambda_.10} parent=11 // pred_check
          %p196 = pneg %p84
        $region18: #{_lambda_.10} parent=11 // pred_check_branch
          %198 = sbr.rel (%p196) target = $region20
        $region19: #{_lambda_.10} parent=11 // pred_region
          _
        $region20: #{_lambda_.10} parent=11 // pred_fallthru
          _
        // Predicated region
        $region21: #{_lambda_.10} parent=11 // pred_check
          %p199 = pneg %p105
        $region22: #{_lambda_.10} parent=11 // pred_check_branch
          %201 = sbr.rel (%p199) target = $region24
        $region23: #{_lambda_.10} parent=11 // pred_region
          _
        $region24: #{_lambda_.10} parent=11 // pred_fallthru
          _
        // Predicated region
        $region25: #{_lambda_.10} parent=11 // pred_check
          %p202 = pneg %p126
        $region26: #{_lambda_.10} parent=11 // pred_check_branch
          %204 = sbr.rel (%p202) target = $region28
        $region27: #{_lambda_.10} parent=11 // pred_region
          _
        $region28: #{_lambda_.10} parent=11 // pred_fallthru
          _
      $region12: #{_lambda_.10} parent=5 // pred_fallthru
        _
      %p205 = scmp.lt.s32.totalorder %s16, 2
      // Predicated region
      $region29: #{_lambda_.10} parent=5 // pred_check
        %p206 = pneg %p205
      $region30: #{_lambda_.10} parent=5 // pred_check_branch
        %208 = sbr.rel (%p206) target = $region32
      $region31: #{_lambda_.10} parent=5 // pred_region
        // Predicated region
        $region33: #{_lambda_.10} parent=31 // pred_check
          %p209 = pneg %p36
        $region34: #{_lambda_.10} parent=31 // pred_check_branch
          %211 = sbr.rel (%p209) target = $region36
        $region35: #{_lambda_.10} parent=31 // pred_region
          %s212 = smul.u32 16, %s16
          %p213 = scmp.lt.s32.totalorder %s212, 31
          %s214 = scalar_select %p213, %s212, 31
          %s215 = smul.addr %s214, 8
          %s216 = scalar_lea.vmem %s0, %s215
          %s217 = smul.u32 16, %s16
        $region36: #{_lambda_.10} parent=31 // pred_fallthru
          _
      $region32: #{_lambda_.10} parent=5 // pred_fallthru
        _
      %p218 = scmp.le.s32.totalorder 1, %s16
      %p219 = scmp.lt.s32.totalorder %s16, 3
      %p220 = pnand %p218, %p219
      %p221 = pneg %p220
      // Predicated region
      $region37: #{_lambda_.10} parent=5 // pred_check
        _
      $region38: #{_lambda_.10} parent=5 // pred_check_branch
        %223 = sbr.rel (%p220) target = $region40
      $region39: #{_lambda_.10} parent=5 // pred_region
        %s224 = ssub.s32 %s16, 1
        %s225 = smul.u32 16, %s21
        %p226 = scmp.lt.s32.totalorder %s225, 31
        %s227 = scalar_select %p226, %s225, 31
        %s228 = smul.addr %s227, 8
        %s229 = scalar_lea.vmem %s0, %s228
        %p230 = pneg %p42
        %p231 = pneg %p39
        %p232 = pneg %p63
        %p233 = pneg %p60
        %p234 = pneg %p84
        %p235 = pneg %p81
        %p236 = pneg %p105
        %p237 = pneg %p102
        %p238 = pneg %p126
        %p239 = pneg %p123
        %p240 = pneg %p152
        %p241 = pneg %p149
        %s242 = smul.u32 16, %s21
        %p243 = scmp.lt.s32.totalorder %s242, 31
        %s244 = scalar_select %p243, %s242, 31
        %s245 = smul.addr %s244, 16
        %s246 = smul.addr %s245, 8
        %s247 = scalar_lea.vmem %s5, %s246
        %p248 = pneg %p178
        %p249 = pneg %p175
        %s250 = sand.u32 %s165, 1
        %s251 = scalar_lea.sflag [#allocation3], %s250
        %s252 = sand.u32 %s165, 1
        %s253 = smul.addr %s252, 128
        %s254 = scalar_lea.vmem [#allocation2], %s253
        %s255 = smul.u32 16, %s21
        %p256 = scmp.lt.s32.totalorder %s255, 31
        %s257 = scalar_select %p256, %s255, 31
        %s258 = smul.addr %s257, 8
        %s259 = scalar_lea.vmem %s0, %s258
        %s260 = smul.u32 16, %s21
        %s261 = smul.u32 16, %s21
        %p262 = scmp.lt.s32.totalorder %s261, 31
        %s263 = scalar_select %p262, %s261, 31
        %s264 = smul.addr %s263, 16
        %s265 = smul.addr %s264, 8
        %s266 = scalar_lea.vmem %s5, %s265
        %s267 = smul.u32 16, %s21
        %s268 = smul.u32 16, %s21
        %v270 = vld [vmem:[%s259] sm:$0xff]
        %v271 = vld [vmem:[%s259 + $0x8] sm:$0xff]
        %v272 = vld [vmem:[%s259 + $0x10] sm:$0xff]
        %v273 = vld [vmem:[%s259 + $0x18] sm:$0xff]
        %v274 = vld [vmem:[%s259 + $0x20] sm:$0xff]
        %v275 = vld [vmem:[%s259 + $0x28] sm:$0xff]
        %v276 = vld [vmem:[%s259 + $0x30] sm:$0xff]
        %v277 = vld [vmem:[%s259 + $0x38] sm:$0xff]
        %v278 = vld [vmem:[%s259 + $0x40] sm:$0xff]
        %v279 = vld [vmem:[%s259 + $0x48] sm:$0xff]
        %v280 = vld [vmem:[%s259 + $0x50] sm:$0xff]
        %v281 = vld [vmem:[%s259 + $0x58] sm:$0xff]
        %v282 = vld [vmem:[%s259 + $0x60] sm:$0xff]
        %v283 = vld [vmem:[%s259 + $0x68] sm:$0xff]
        %v284 = vld [vmem:[%s259 + $0x70] sm:$0xff]
        %v285 = vld [vmem:[%s259 + $0x78] sm:$0xff]
        %vm286 = vcmask 261120
        %v287 = vsel %vm286, %v270, 0.0
        %288 = vadd.xlane.f32.xlu0 %v287
        %v289 = vpop.xlane.xlu0 %288
        %v290 = vsel %vm286, %v271, 0.0
        %291 = vadd.xlane.f32.xlu0 %v290
        %v292 = vpop.xlane.xlu0 %291
        %v293 = vsel %vm286, %v272, 0.0
        %294 = vadd.xlane.f32.xlu0 %v293
        %v295 = vpop.xlane.xlu0 %294
        %v296 = vsel %vm286, %v273, 0.0
        %297 = vadd.xlane.f32.xlu0 %v296
        %v298 = vpop.xlane.xlu0 %297
        %v299 = vsel %vm286, %v274, 0.0
        %300 = vadd.xlane.f32.xlu0 %v299
        %v301 = vpop.xlane.xlu0 %300
        %v302 = vsel %vm286, %v275, 0.0
        %303 = vadd.xlane.f32.xlu0 %v302
        %v304 = vpop.xlane.xlu0 %303
        %v305 = vsel %vm286, %v276, 0.0
        %306 = vadd.xlane.f32.xlu0 %v305
        %v307 = vpop.xlane.xlu0 %306
        %v308 = vsel %vm286, %v277, 0.0
        %309 = vadd.xlane.f32.xlu0 %v308
        %v310 = vpop.xlane.xlu0 %309
        %v311 = vsel %vm286, %v278, 0.0
        %312 = vadd.xlane.f32.xlu0 %v311
        %v313 = vpop.xlane.xlu0 %312
        %v314 = vsel %vm286, %v279, 0.0
        %315 = vadd.xlane.f32.xlu0 %v314
        %v316 = vpop.xlane.xlu0 %315
        %v317 = vsel %vm286, %v280, 0.0
        %318 = vadd.xlane.f32.xlu0 %v317
        %v319 = vpop.xlane.xlu0 %318
        %v320 = vsel %vm286, %v281, 0.0
        %321 = vadd.xlane.f32.xlu0 %v320
        %v322 = vpop.xlane.xlu0 %321
        %v323 = vsel %vm286, %v282, 0.0
        %324 = vadd.xlane.f32.xlu0 %v323
        %v325 = vpop.xlane.xlu0 %324
        %v326 = vsel %vm286, %v283, 0.0
        %327 = vadd.xlane.f32.xlu0 %v326
        %v328 = vpop.xlane.xlu0 %327
        %v329 = vsel %vm286, %v284, 0.0
        %330 = vadd.xlane.f32.xlu0 %v329
        %v331 = vpop.xlane.xlu0 %330
        %v332 = vsel %vm286, %v285, 0.0
        %333 = vadd.xlane.f32.xlu0 %v332
        %v334 = vpop.xlane.xlu0 %333
        %v335 = vrcp.pop 32.0
        %v336 = vmul.f32 %v289, %v335
        %v337 = vmul.f32 %v292, %v335
        %v338 = vmul.f32 %v295, %v335
        %v339 = vmul.f32 %v298, %v335
        %v340 = vmul.f32 %v301, %v335
        %v341 = vmul.f32 %v304, %v335
        %v342 = vmul.f32 %v307, %v335
        %v343 = vmul.f32 %v310, %v335
        %v344 = vmul.f32 %v313, %v335
        %v345 = vmul.f32 %v316, %v335
        %v346 = vmul.f32 %v319, %v335
        %v347 = vmul.f32 %v322, %v335
        %v348 = vmul.f32 %v325, %v335
        %v349 = vmul.f32 %v328, %v335
        %v350 = vmul.f32 %v331, %v335
        %v351 = vmul.f32 %v334, %v335
        %v352 = vsub.f32 %v270, %v336
        %v353 = vsub.f32 %v271, %v337
        %v354 = vsub.f32 %v272, %v338
        %v355 = vsub.f32 %v273, %v339
        %v356 = vsub.f32 %v274, %v340
        %v357 = vsub.f32 %v275, %v341
        %v358 = vsub.f32 %v276, %v342
        %v359 = vsub.f32 %v277, %v343
        %v360 = vsub.f32 %v278, %v344
        %v361 = vsub.f32 %v279, %v345
        %v362 = vsub.f32 %v280, %v346
        %v363 = vsub.f32 %v281, %v347
        %v364 = vsub.f32 %v282, %v348
        %v365 = vsub.f32 %v283, %v349
        %v366 = vsub.f32 %v284, %v350
        %v367 = vsub.f32 %v285, %v351
        %v368 = vmul.f32 %v352, %v352
        %v369 = vmul.f32 %v353, %v353
        %v370 = vmul.f32 %v354, %v354
        %v371 = vmul.f32 %v355, %v355
        %v372 = vmul.f32 %v356, %v356
        %v373 = vmul.f32 %v357, %v357
        %v374 = vmul.f32 %v358, %v358
        %v375 = vmul.f32 %v359, %v359
        %v376 = vmul.f32 %v360, %v360
        %v377 = vmul.f32 %v361, %v361
        %v378 = vmul.f32 %v362, %v362
        %v379 = vmul.f32 %v363, %v363
        %v380 = vmul.f32 %v364, %v364
        %v381 = vmul.f32 %v365, %v365
        %v382 = vmul.f32 %v366, %v366
        %v383 = vmul.f32 %v367, %v367
        %v384 = vsel %vm286, %v368, 0.0
        %385 = vadd.xlane.f32.xlu0 %v384
        %v386 = vpop.xlane.xlu0 %385
        %v387 = vsel %vm286, %v369, 0.0
        %388 = vadd.xlane.f32.xlu0 %v387
        %v389 = vpop.xlane.xlu0 %388
        %v390 = vsel %vm286, %v370, 0.0
        %391 = vadd.xlane.f32.xlu0 %v390
        %v392 = vpop.xlane.xlu0 %391
        %v393 = vsel %vm286, %v371, 0.0
        %394 = vadd.xlane.f32.xlu0 %v393
        %v395 = vpop.xlane.xlu0 %394
        %v396 = vsel %vm286, %v372, 0.0
        %397 = vadd.xlane.f32.xlu0 %v396
        %v398 = vpop.xlane.xlu0 %397
        %v399 = vsel %vm286, %v373, 0.0
        %400 = vadd.xlane.f32.xlu0 %v399
        %v401 = vpop.xlane.xlu0 %400
        %v402 = vsel %vm286, %v374, 0.0
        %403 = vadd.xlane.f32.xlu0 %v402
        %v404 = vpop.xlane.xlu0 %403
        %v405 = vsel %vm286, %v375, 0.0
        %406 = vadd.xlane.f32.xlu0 %v405
        %v407 = vpop.xlane.xlu0 %406
        %v408 = vsel %vm286, %v376, 0.0
        %409 = vadd.xlane.f32.xlu0 %v408
        %v410 = vpop.xlane.xlu0 %409
        %v411 = vsel %vm286, %v377, 0.0
        %412 = vadd.xlane.f32.xlu0 %v411
        %v413 = vpop.xlane.xlu0 %412
        %v414 = vsel %vm286, %v378, 0.0
        %415 = vadd.xlane.f32.xlu0 %v414
        %v416 = vpop.xlane.xlu0 %415
        %v417 = vsel %vm286, %v379, 0.0
        %418 = vadd.xlane.f32.xlu0 %v417
        %v419 = vpop.xlane.xlu0 %418
        %v420 = vsel %vm286, %v380, 0.0
        %421 = vadd.xlane.f32.xlu0 %v420
        %v422 = vpop.xlane.xlu0 %421
        %v423 = vsel %vm286, %v381, 0.0
        %424 = vadd.xlane.f32.xlu0 %v423
        %v425 = vpop.xlane.xlu0 %424
        %v426 = vsel %vm286, %v382, 0.0
        %427 = vadd.xlane.f32.xlu0 %v426
        %v428 = vpop.xlane.xlu0 %427
        %v429 = vsel %vm286, %v383, 0.0
        %430 = vadd.xlane.f32.xlu0 %v429
        %v431 = vpop.xlane.xlu0 %430
        %v432 = vmul.f32 %v386, %v335
        %v433 = vmul.f32 %v389, %v335
        %v434 = vmul.f32 %v392, %v335
        %v435 = vmul.f32 %v395, %v335
        %v436 = vmul.f32 %v398, %v335
        %v437 = vmul.f32 %v401, %v335
        %v438 = vmul.f32 %v404, %v335
        %v439 = vmul.f32 %v407, %v335
        %v440 = vmul.f32 %v410, %v335
        %v441 = vmul.f32 %v413, %v335
        %v442 = vmul.f32 %v416, %v335
        %v443 = vmul.f32 %v419, %v335
        %v444 = vmul.f32 %v422, %v335
        %v445 = vmul.f32 %v425, %v335
        %v446 = vmul.f32 %v428, %v335
        %v447 = vmul.f32 %v431, %v335
        %v448 = vadd.f32 %v432, 1e-05
        %v449 = vadd.f32 %v433, 1e-05
        %v450 = vadd.f32 %v434, 1e-05
        %v451 = vadd.f32 %v435, 1e-05
        %v452 = vadd.f32 %v436, 1e-05
        %v453 = vadd.f32 %v437, 1e-05
        %v454 = vadd.f32 %v438, 1e-05
        %v455 = vadd.f32 %v439, 1e-05
        %v456 = vadd.f32 %v440, 1e-05
        %v457 = vadd.f32 %v441, 1e-05
        %v458 = vadd.f32 %v442, 1e-05
        %v459 = vadd.f32 %v443, 1e-05
        %v460 = vadd.f32 %v444, 1e-05
        %v461 = vadd.f32 %v445, 1e-05
        %v462 = vadd.f32 %v446, 1e-05
        %v463 = vadd.f32 %v447, 1e-05
        %v464 = vrsqrt.pop %v448
        %v465 = vrsqrt.pop %v449
        %v466 = vrsqrt.pop %v450
        %v467 = vrsqrt.pop %v451
        %v468 = vrsqrt.pop %v452
        %v469 = vrsqrt.pop %v453
        %v470 = vrsqrt.pop %v454
        %v471 = vrsqrt.pop %v455
        %v472 = vrsqrt.pop %v456
        %v473 = vrsqrt.pop %v457
        %v474 = vrsqrt.pop %v458
        %v475 = vrsqrt.pop %v459
        %v476 = vrsqrt.pop %v460
        %v477 = vrsqrt.pop %v461
        %v478 = vrsqrt.pop %v462
        %v479 = vrsqrt.pop %v463
        %v480 = vmul.f32 %v352, %v464
        %v481 = vmul.f32 %v353, %v465
        %v482 = vmul.f32 %v354, %v466
        %v483 = vmul.f32 %v355, %v467
        %v484 = vmul.f32 %v356, %v468
        %v485 = vmul.f32 %v357, %v469
        %v486 = vmul.f32 %v358, %v470
        %v487 = vmul.f32 %v359, %v471
        %v488 = vmul.f32 %v360, %v472
        %v489 = vmul.f32 %v361, %v473
        %v490 = vmul.f32 %v362, %v474
        %v491 = vmul.f32 %v363, %v475
        %v492 = vmul.f32 %v364, %v476
        %v493 = vmul.f32 %v365, %v477
        %v494 = vmul.f32 %v366, %v478
        %v495 = vmul.f32 %v367, %v479
        %v496 = vld [vmem:[%s1] sm:$0x1]
        %v498 = vlaneseq
        %v499 = vshrl.u32 %v498, 7
        %v500 = vsub.s32 0, %v499
        %v501 = vrot.slane %v496, %v500
        %v503 = vmul.f32 %v480, %v501
        %v504 = vmul.f32 %v481, %v501
        %v505 = vmul.f32 %v482, %v501
        %v506 = vmul.f32 %v483, %v501
        %v507 = vmul.f32 %v484, %v501
        %v508 = vmul.f32 %v485, %v501
        %v509 = vmul.f32 %v486, %v501
        %v510 = vmul.f32 %v487, %v501
        %v511 = vmul.f32 %v488, %v501
        %v512 = vmul.f32 %v489, %v501
        %v513 = vmul.f32 %v490, %v501
        %v514 = vmul.f32 %v491, %v501
        %v515 = vmul.f32 %v492, %v501
        %v516 = vmul.f32 %v493, %v501
        %v517 = vmul.f32 %v494, %v501
        %v518 = vmul.f32 %v495, %v501
        %v519 = vld [vmem:[%s2] sm:$0x1]
        %v521 = vlaneseq
        %v522 = vshrl.u32 %v521, 7
        %v523 = vsub.s32 0, %v522
        %v524 = vrot.slane %v519, %v523
        %v526 = vadd.f32 %v503, %v524
        %v527 = vadd.f32 %v504, %v524
        %v528 = vadd.f32 %v505, %v524
        %v529 = vadd.f32 %v506, %v524
        %v530 = vadd.f32 %v507, %v524
        %v531 = vadd.f32 %v508, %v524
        %v532 = vadd.f32 %v509, %v524
        %v533 = vadd.f32 %v510, %v524
        %v534 = vadd.f32 %v511, %v524
        %v535 = vadd.f32 %v512, %v524
        %v536 = vadd.f32 %v513, %v524
        %v537 = vadd.f32 %v514, %v524
        %v538 = vadd.f32 %v515, %v524
        %v539 = vadd.f32 %v516, %v524
        %v540 = vadd.f32 %v517, %v524
        %v541 = vadd.f32 %v518, %v524
        %542 = vst.msk [vmem:[%s254] sm:$0xff] %vm286, %v526
        %543 = vst.msk [vmem:[%s254 + $0x8] sm:$0xff] %vm286, %v527
        %544 = vst.msk [vmem:[%s254 + $0x10] sm:$0xff] %vm286, %v528
        %545 = vst.msk [vmem:[%s254 + $0x18] sm:$0xff] %vm286, %v529
        %546 = vst.msk [vmem:[%s254 + $0x20] sm:$0xff] %vm286, %v530
        %547 = vst.msk [vmem:[%s254 + $0x28] sm:$0xff] %vm286, %v531
        %548 = vst.msk [vmem:[%s254 + $0x30] sm:$0xff] %vm286, %v532
        %549 = vst.msk [vmem:[%s254 + $0x38] sm:$0xff] %vm286, %v533
        %550 = vst.msk [vmem:[%s254 + $0x40] sm:$0xff] %vm286, %v534
        %551 = vst.msk [vmem:[%s254 + $0x48] sm:$0xff] %vm286, %v535
        %552 = vst.msk [vmem:[%s254 + $0x50] sm:$0xff] %vm286, %v536
        %553 = vst.msk [vmem:[%s254 + $0x58] sm:$0xff] %vm286, %v537
        %554 = vst.msk [vmem:[%s254 + $0x60] sm:$0xff] %vm286, %v538
        %555 = vst.msk [vmem:[%s254 + $0x68] sm:$0xff] %vm286, %v539
        %556 = vst.msk [vmem:[%s254 + $0x70] sm:$0xff] %vm286, %v540
        %557 = vst.msk [vmem:[%s254 + $0x78] sm:$0xff] %vm286, %v541
        %v558 = vpack.c.bf16 %v527, %v526
        %v559 = vpack.c.bf16 %v529, %v528
        %v560 = vpack.c.bf16 %v531, %v530
        %v561 = vpack.c.bf16 %v533, %v532
        %v562 = vpack.c.bf16 %v535, %v534
        %v563 = vpack.c.bf16 %v537, %v536
        %v564 = vpack.c.bf16 %v539, %v538
        %v565 = vpack.c.bf16 %v541, %v540
        %v566 = vld [vmem:[%s3] sm:$0xff]
        %v567 = vld [vmem:[%s3 + $0x8] sm:$0xff]
        %v568 = vld [vmem:[%s3 + $0x10] sm:$0xff]
        %v569 = vld [vmem:[%s3 + $0x18] sm:$0xff]
        %v570 = vld [vmem:[%s3 + $0x20] sm:$0xff]
        %v571 = vld [vmem:[%s3 + $0x28] sm:$0xff]
        %v572 = vld [vmem:[%s3 + $0x30] sm:$0xff]
        %v573 = vld [vmem:[%s3 + $0x38] sm:$0xff]
        %v574 = vld [vmem:[%s3 + $0x40] sm:$0xff]
        %v575 = vld [vmem:[%s3 + $0x48] sm:$0xff]
        %v576 = vld [vmem:[%s3 + $0x50] sm:$0xff]
        %v577 = vld [vmem:[%s3 + $0x58] sm:$0xff]
        %v578 = vld [vmem:[%s3 + $0x60] sm:$0xff]
        %v579 = vld [vmem:[%s3 + $0x68] sm:$0xff]
        %v580 = vld [vmem:[%s3 + $0x70] sm:$0xff]
        %v581 = vld [vmem:[%s3 + $0x78] sm:$0xff]
        %v582 = vld [vmem:[%s3 + $0x80] sm:$0xff]
        %v583 = vld [vmem:[%s3 + $0x88] sm:$0xff]
        %v584 = vld [vmem:[%s3 + $0x90] sm:$0xff]
        %v585 = vld [vmem:[%s3 + $0x98] sm:$0xff]
        %v586 = vld [vmem:[%s3 + $0xa0] sm:$0xff]
        %v587 = vld [vmem:[%s3 + $0xa8] sm:$0xff]
        %v588 = vld [vmem:[%s3 + $0xb0] sm:$0xff]
        %v589 = vld [vmem:[%s3 + $0xb8] sm:$0xff]
        %v590 = vld [vmem:[%s3 + $0xc0] sm:$0xff]
        %v591 = vld [vmem:[%s3 + $0xc8] sm:$0xff]
        %v592 = vld [vmem:[%s3 + $0xd0] sm:$0xff]
        %v593 = vld [vmem:[%s3 + $0xd8] sm:$0xff]
        %v594 = vld [vmem:[%s3 + $0xe0] sm:$0xff]
        %v595 = vld [vmem:[%s3 + $0xe8] sm:$0xff]
        %v596 = vld [vmem:[%s3 + $0xf0] sm:$0xff]
        %v597 = vld [vmem:[%s3 + $0xf8] sm:$0xff]
        %v598 = vld [vmem:[%s4] sm:$0xff]
        %v599 = vld [vmem:[%s4 + $0x8] sm:$0xff]
        %v602 = vlaneseq
        %v603 = vshrl.u32 %v602, 7
        %v604 = vsub.s32 0, %v603
        %v605 = vrot.slane %v598, %v604
        %v606 = vlaneseq
        %v607 = vshrl.u32 %v606, 7
        %v608 = vsub.s32 1, %v607
        %v609 = vrot.slane %v598, %v608
        %v610 = vlaneseq
        %v611 = vshrl.u32 %v610, 7
        %v612 = vsub.s32 2, %v611
        %v613 = vrot.slane %v598, %v612
        %v614 = vlaneseq
        %v615 = vshrl.u32 %v614, 7
        %v616 = vsub.s32 3, %v615
        %v617 = vrot.slane %v598, %v616
        %v618 = vlaneseq
        %v619 = vshrl.u32 %v618, 7
        %v620 = vsub.s32 4, %v619
        %v621 = vrot.slane %v598, %v620
        %v622 = vlaneseq
        %v623 = vshrl.u32 %v622, 7
        %v624 = vsub.s32 5, %v623
        %v625 = vrot.slane %v598, %v624
        %v626 = vlaneseq
        %v627 = vshrl.u32 %v626, 7
        %v628 = vsub.s32 6, %v627
        %v629 = vrot.slane %v598, %v628
        %v630 = vlaneseq
        %v631 = vshrl.u32 %v630, 7
        %v632 = vsub.s32 7, %v631
        %v633 = vrot.slane %v598, %v632
        %v634 = vlaneseq
        %v635 = vshrl.u32 %v634, 7
        %v636 = vsub.s32 0, %v635
        %v637 = vrot.slane %v599, %v636
        %v638 = vlaneseq
        %v639 = vshrl.u32 %v638, 7
        %v640 = vsub.s32 1, %v639
        %v641 = vrot.slane %v599, %v640
        %v642 = vlaneseq
        %v643 = vshrl.u32 %v642, 7
        %v644 = vsub.s32 2, %v643
        %v645 = vrot.slane %v599, %v644
        %v646 = vlaneseq
        %v647 = vshrl.u32 %v646, 7
        %v648 = vsub.s32 3, %v647
        %v649 = vrot.slane %v599, %v648
        %v650 = vlaneseq
        %v651 = vshrl.u32 %v650, 7
        %v652 = vsub.s32 4, %v651
        %v653 = vrot.slane %v599, %v652
        %v654 = vlaneseq
        %v655 = vshrl.u32 %v654, 7
        %v656 = vsub.s32 5, %v655
        %v657 = vrot.slane %v599, %v656
        %v658 = vlaneseq
        %v659 = vshrl.u32 %v658, 7
        %v660 = vsub.s32 6, %v659
        %v661 = vrot.slane %v599, %v660
        %v662 = vlaneseq
        %v663 = vshrl.u32 %v662, 7
        %v664 = vsub.s32 7, %v663
        %v665 = vrot.slane %v599, %v664
        %v714 = vunpack.c.l.b16 %v566
        %v715 = vunpack.c.h.b16 %v566
        %v716 = vunpack.c.l.b16 %v567
        %v717 = vunpack.c.h.b16 %v567
        %v718 = vunpack.c.l.b16 %v568
        %v719 = vunpack.c.h.b16 %v568
        %v720 = vunpack.c.l.b16 %v569
        %v721 = vunpack.c.h.b16 %v569
        %v722 = vunpack.c.l.b16 %v570
        %v723 = vunpack.c.h.b16 %v570
        %v724 = vunpack.c.l.b16 %v571
        %v725 = vunpack.c.h.b16 %v571
        %v726 = vunpack.c.l.b16 %v572
        %v727 = vunpack.c.h.b16 %v572
        %v728 = vunpack.c.l.b16 %v573
        %v729 = vunpack.c.h.b16 %v573
        %v730 = vunpack.c.l.b16 %v574
        %v731 = vunpack.c.h.b16 %v574
        %v732 = vunpack.c.l.b16 %v575
        %v733 = vunpack.c.h.b16 %v575
        %v734 = vunpack.c.l.b16 %v576
        %v735 = vunpack.c.h.b16 %v576
        %v736 = vunpack.c.l.b16 %v577
        %v737 = vunpack.c.h.b16 %v577
        %v738 = vunpack.c.l.b16 %v578
        %v739 = vunpack.c.h.b16 %v578
        %v740 = vunpack.c.l.b16 %v579
        %v741 = vunpack.c.h.b16 %v579
        %v742 = vunpack.c.l.b16 %v580
        %v743 = vunpack.c.h.b16 %v580
        %v744 = vunpack.c.l.b16 %v581
        %v745 = vunpack.c.h.b16 %v581
        %v746 = vunpack.c.l.b16 %v582
        %v747 = vunpack.c.h.b16 %v582
        %v748 = vunpack.c.l.b16 %v583
        %v749 = vunpack.c.h.b16 %v583
        %v750 = vunpack.c.l.b16 %v584
        %v751 = vunpack.c.h.b16 %v584
        %v752 = vunpack.c.l.b16 %v585
        %v753 = vunpack.c.h.b16 %v585
        %v754 = vunpack.c.l.b16 %v586
        %v755 = vunpack.c.h.b16 %v586
        %v756 = vunpack.c.l.b16 %v587
        %v757 = vunpack.c.h.b16 %v587
        %v758 = vunpack.c.l.b16 %v588
        %v759 = vunpack.c.h.b16 %v588
        %v760 = vunpack.c.l.b16 %v589
        %v761 = vunpack.c.h.b16 %v589
        %v762 = vunpack.c.l.b16 %v590
        %v763 = vunpack.c.h.b16 %v590
        %v764 = vunpack.c.l.b16 %v591
        %v765 = vunpack.c.h.b16 %v591
        %v766 = vunpack.c.l.b16 %v592
        %v767 = vunpack.c.h.b16 %v592
        %v768 = vunpack.c.l.b16 %v593
        %v769 = vunpack.c.h.b16 %v593
        %v770 = vunpack.c.l.b16 %v594
        %v771 = vunpack.c.h.b16 %v594
        %v772 = vunpack.c.l.b16 %v595
        %v773 = vunpack.c.h.b16 %v595
        %v774 = vunpack.c.l.b16 %v596
        %v775 = vunpack.c.h.b16 %v596
        %v776 = vunpack.c.l.b16 %v597
        %v777 = vunpack.c.h.b16 %v597
        %v778 = vpack.c.b16 %v730, %v714
        %v779 = vpack.c.b16 %v731, %v715
        %v780 = vpack.c.b16 %v732, %v716
        %v781 = vpack.c.b16 %v733, %v717
        %v782 = vpack.c.b16 %v734, %v718
        %v783 = vpack.c.b16 %v735, %v719
        %v784 = vpack.c.b16 %v736, %v720
        %v785 = vpack.c.b16 %v737, %v721
        %v786 = vpack.c.b16 %v738, %v722
        %v787 = vpack.c.b16 %v739, %v723
        %v788 = vpack.c.b16 %v740, %v724
        %v789 = vpack.c.b16 %v741, %v725
        %v790 = vpack.c.b16 %v742, %v726
        %v791 = vpack.c.b16 %v743, %v727
        %v792 = vpack.c.b16 %v744, %v728
        %v793 = vpack.c.b16 %v745, %v729
        %v794 = vpack.c.b16 %v762, %v746
        %v795 = vpack.c.b16 %v763, %v747
        %v796 = vpack.c.b16 %v764, %v748
        %v797 = vpack.c.b16 %v765, %v749
        %v798 = vpack.c.b16 %v766, %v750
        %v799 = vpack.c.b16 %v767, %v751
        %v800 = vpack.c.b16 %v768, %v752
        %v801 = vpack.c.b16 %v769, %v753
        %v802 = vpack.c.b16 %v770, %v754
        %v803 = vpack.c.b16 %v771, %v755
        %v804 = vpack.c.b16 %v772, %v756
        %v805 = vpack.c.b16 %v773, %v757
        %v806 = vpack.c.b16 %v774, %v758
        %v807 = vpack.c.b16 %v775, %v759
        %v808 = vpack.c.b16 %v776, %v760
        %v809 = vpack.c.b16 %v777, %v761
        %v843 = vsel %vm286, %v558, 0
        %v846 = vsel %vm286, %v559, 0
        %v849 = vsel %vm286, %v560, 0
        %v852 = vsel %vm286, %v561, 0
        %v855 = vsel %vm286, %v562, 0
        %v858 = vsel %vm286, %v563, 0
        %v861 = vsel %vm286, %v564, 0
        %v864 = vsel %vm286, %v565, 0
        %866 = vmatprep.subr.bf16.mxu0 0
        %867 = vmatpush1.bf16.msra.mxu0 0
        %868 = vmatprep.subr.bf16.mxu0 0
        %869 = vmatpush1.bf16.msra.mxu0 0
        %870 = vmatprep.subr.bf16.mxu0 0
        %871 = vmatpush1.bf16.msra.mxu0 0
        %872 = vmatprep.subr.bf16.mxu0 0
        %873 = vmatpush1.bf16.msra.mxu0 0
        %874 = vmatprep.subr.bf16.mxu0 0
        %875 = vmatpush1.bf16.msra.mxu0 0
        %876 = vmatprep.subr.bf16.mxu0 0
        %877 = vmatpush1.bf16.msra.mxu0 0
        %878 = vmatprep.subr.bf16.mxu0 %v795
        %879 = vmatpush1.bf16.msra.mxu0 %v794
        %880 = vmatprep.subr.bf16.mxu0 %v779
        %881 = vmatpush1.bf16.msra.mxu0 %v778
        %882 = vmatprep.subr.bf16.mxu0 0
        %883 = vmatpush2.bf16.msra.mxu0 0
        %884 = vmatprep.subr.bf16.mxu0 0
        %885 = vmatpush2.bf16.msra.mxu0 0
        %886 = vmatprep.subr.bf16.mxu0 0
        %887 = vmatpush2.bf16.msra.mxu0 0
        %888 = vmatprep.subr.bf16.mxu0 0
        %889 = vmatpush2.bf16.msra.mxu0 0
        %890 = vmatprep.subr.bf16.mxu0 0
        %891 = vmatpush2.bf16.msra.mxu0 0
        %892 = vmatprep.subr.bf16.mxu0 0
        %893 = vmatpush2.bf16.msra.mxu0 0
        %894 = vmatprep.subr.bf16.mxu0 0
        %895 = vmatpush2.bf16.msra.mxu0 0
        %896 = vmatprep.subr.bf16.mxu0 0
        %897 = vmatpush2.bf16.msra.mxu0 0
        %898 = vmatprep.mubr.bf16.mxu0 0
        %899 = vmatmul.mubr.bf16.gmra.mxu0 %v843
        %v900 = vpop.f32.mrf.mxu0
        %v901 = vadd.f32 %v605, %v900
        %v902 = vpop.f32.mrf.mxu0
        %v903 = vadd.f32 %v609, %v902
        %v904 = vpop.f32.mrf.mxu0
        %v905 = vadd.f32 %v605, %v904
        %v906 = vpop.f32.mrf.mxu0
        %v907 = vadd.f32 %v609, %v906
        %908 = vmatprep.mubr.bf16.mxu0 0
        %909 = vmatmul.mubr.bf16.gmra.mxu0 %v846
        %v910 = vpop.f32.mrf.mxu0
        %v911 = vadd.f32 %v605, %v910
        %v912 = vpop.f32.mrf.mxu0
        %v913 = vadd.f32 %v609, %v912
        %v914 = vpop.f32.mrf.mxu0
        %v915 = vadd.f32 %v605, %v914
        %v916 = vpop.f32.mrf.mxu0
        %v917 = vadd.f32 %v609, %v916
        %918 = vmatprep.mubr.bf16.mxu0 0
        %919 = vmatmul.mubr.bf16.gmra.mxu0 %v849
        %v920 = vpop.f32.mrf.mxu0
        %v921 = vadd.f32 %v605, %v920
        %v922 = vpop.f32.mrf.mxu0
        %v923 = vadd.f32 %v609, %v922
        %v924 = vpop.f32.mrf.mxu0
        %v925 = vadd.f32 %v605, %v924
        %v926 = vpop.f32.mrf.mxu0
        %v927 = vadd.f32 %v609, %v926
        %928 = vmatprep.mubr.bf16.mxu0 0
        %929 = vmatmul.mubr.bf16.gmra.mxu0 %v852
        %v930 = vpop.f32.mrf.mxu0
        %v931 = vadd.f32 %v605, %v930
        %v932 = vpop.f32.mrf.mxu0
        %v933 = vadd.f32 %v609, %v932
        %v934 = vpop.f32.mrf.mxu0
        %v935 = vadd.f32 %v605, %v934
        %v936 = vpop.f32.mrf.mxu0
        %v937 = vadd.f32 %v609, %v936
        %938 = vmatprep.mubr.bf16.mxu0 0
        %939 = vmatmul.mubr.bf16.gmra.mxu0 %v855
        %v940 = vpop.f32.mrf.mxu0
        %v941 = vadd.f32 %v605, %v940
        %v942 = vpop.f32.mrf.mxu0
        %v943 = vadd.f32 %v609, %v942
        %v944 = vpop.f32.mrf.mxu0
        %v945 = vadd.f32 %v605, %v944
        %v946 = vpop.f32.mrf.mxu0
        %v947 = vadd.f32 %v609, %v946
        %948 = vmatprep.mubr.bf16.mxu0 0
        %949 = vmatmul.mubr.bf16.gmra.mxu0 %v858
        %v950 = vpop.f32.mrf.mxu0
        %v951 = vadd.f32 %v605, %v950
        %v952 = vpop.f32.mrf.mxu0
        %v953 = vadd.f32 %v609, %v952
        %v954 = vpop.f32.mrf.mxu0
        %v955 = vadd.f32 %v605, %v954
        %v956 = vpop.f32.mrf.mxu0
        %v957 = vadd.f32 %v609, %v956
        %958 = vmatprep.mubr.bf16.mxu0 0
        %959 = vmatmul.mubr.bf16.gmra.mxu0 %v861
        %v960 = vpop.f32.mrf.mxu0
        %v961 = vadd.f32 %v605, %v960
        %v962 = vpop.f32.mrf.mxu0
        %v963 = vadd.f32 %v609, %v962
        %v964 = vpop.f32.mrf.mxu0
        %v965 = vadd.f32 %v605, %v964
        %v966 = vpop.f32.mrf.mxu0
        %v967 = vadd.f32 %v609, %v966
        %968 = vmatprep.mubr.bf16.mxu0 0
        %969 = vmatmul.mubr.bf16.gmra.mxu0 %v864
        %v970 = vpop.f32.mrf.mxu0
        %v971 = vadd.f32 %v605, %v970
        %v972 = vpop.f32.mrf.mxu0
        %v973 = vadd.f32 %v609, %v972
        %v974 = vpop.f32.mrf.mxu0
        %v975 = vadd.f32 %v605, %v974
        %v976 = vpop.f32.mrf.mxu0
        %v977 = vadd.f32 %v609, %v976
        %978 = vdwg.mxu0
        %979 = vmatprep.subr.bf16.mxu0 0
        %980 = vmatpush1.bf16.msra.mxu0 0
        %981 = vmatprep.subr.bf16.mxu0 0
        %982 = vmatpush1.bf16.msra.mxu0 0
        %983 = vmatprep.subr.bf16.mxu0 0
        %984 = vmatpush1.bf16.msra.mxu0 0
        %985 = vmatprep.subr.bf16.mxu0 0
        %986 = vmatpush1.bf16.msra.mxu0 0
        %987 = vmatprep.subr.bf16.mxu0 0
        %988 = vmatpush1.bf16.msra.mxu0 0
        %989 = vmatprep.subr.bf16.mxu0 0
        %990 = vmatpush1.bf16.msra.mxu0 0
        %991 = vmatprep.subr.bf16.mxu0 %v797
        %992 = vmatpush1.bf16.msra.mxu0 %v796
        %993 = vmatprep.subr.bf16.mxu0 %v781
        %994 = vmatpush1.bf16.msra.mxu0 %v780
        %995 = vmatprep.subr.bf16.mxu0 0
        %996 = vmatpush2.bf16.msra.mxu0 0
        %997 = vmatprep.subr.bf16.mxu0 0
        %998 = vmatpush2.bf16.msra.mxu0 0
        %999 = vmatprep.subr.bf16.mxu0 0
        %1000 = vmatpush2.bf16.msra.mxu0 0
        %1001 = vmatprep.subr.bf16.mxu0 0
        %1002 = vmatpush2.bf16.msra.mxu0 0
        %1003 = vmatprep.subr.bf16.mxu0 0
        %1004 = vmatpush2.bf16.msra.mxu0 0
        %1005 = vmatprep.subr.bf16.mxu0 0
        %1006 = vmatpush2.bf16.msra.mxu0 0
        %1007 = vmatprep.subr.bf16.mxu0 0
        %1008 = vmatpush2.bf16.msra.mxu0 0
        %1009 = vmatprep.subr.bf16.mxu0 0
        %1010 = vmatpush2.bf16.msra.mxu0 0
        %1011 = vmatprep.mubr.bf16.mxu0 0
        %1012 = vmatmul.mubr.bf16.gmra.mxu0 %v843
        %v1013 = vpop.f32.mrf.mxu0
        %v1014 = vadd.f32 %v613, %v1013
        %v1015 = vpop.f32.mrf.mxu0
        %v1016 = vadd.f32 %v617, %v1015
        %v1017 = vpop.f32.mrf.mxu0
        %v1018 = vadd.f32 %v613, %v1017
        %v1019 = vpop.f32.mrf.mxu0
        %v1020 = vadd.f32 %v617, %v1019
        %1021 = vmatprep.mubr.bf16.mxu0 0
        %1022 = vmatmul.mubr.bf16.gmra.mxu0 %v846
        %v1023 = vpop.f32.mrf.mxu0
        %v1024 = vadd.f32 %v613, %v1023
        %v1025 = vpop.f32.mrf.mxu0
        %v1026 = vadd.f32 %v617, %v1025
        %v1027 = vpop.f32.mrf.mxu0
        %v1028 = vadd.f32 %v613, %v1027
        %v1029 = vpop.f32.mrf.mxu0
        %v1030 = vadd.f32 %v617, %v1029
        %1031 = vmatprep.mubr.bf16.mxu0 0
        %1032 = vmatmul.mubr.bf16.gmra.mxu0 %v849
        %v1033 = vpop.f32.mrf.mxu0
        %v1034 = vadd.f32 %v613, %v1033
        %v1035 = vpop.f32.mrf.mxu0
        %v1036 = vadd.f32 %v617, %v1035
        %v1037 = vpop.f32.mrf.mxu0
        %v1038 = vadd.f32 %v613, %v1037
        %v1039 = vpop.f32.mrf.mxu0
        %v1040 = vadd.f32 %v617, %v1039
        %1041 = vmatprep.mubr.bf16.mxu0 0
        %1042 = vmatmul.mubr.bf16.gmra.mxu0 %v852
        %v1043 = vpop.f32.mrf.mxu0
        %v1044 = vadd.f32 %v613, %v1043
        %v1045 = vpop.f32.mrf.mxu0
        %v1046 = vadd.f32 %v617, %v1045
        %v1047 = vpop.f32.mrf.mxu0
        %v1048 = vadd.f32 %v613, %v1047
        %v1049 = vpop.f32.mrf.mxu0
        %v1050 = vadd.f32 %v617, %v1049
        %1051 = vmatprep.mubr.bf16.mxu0 0
        %1052 = vmatmul.mubr.bf16.gmra.mxu0 %v855
        %v1053 = vpop.f32.mrf.mxu0
        %v1054 = vadd.f32 %v613, %v1053
        %v1055 = vpop.f32.mrf.mxu0
        %v1056 = vadd.f32 %v617, %v1055
        %v1057 = vpop.f32.mrf.mxu0
        %v1058 = vadd.f32 %v613, %v1057
        %v1059 = vpop.f32.mrf.mxu0
        %v1060 = vadd.f32 %v617, %v1059
        %1061 = vmatprep.mubr.bf16.mxu0 0
        %1062 = vmatmul.mubr.bf16.gmra.mxu0 %v858
        %v1063 = vpop.f32.mrf.mxu0
        %v1064 = vadd.f32 %v613, %v1063
        %v1065 = vpop.f32.mrf.mxu0
        %v1066 = vadd.f32 %v617, %v1065
        %v1067 = vpop.f32.mrf.mxu0
        %v1068 = vadd.f32 %v613, %v1067
        %v1069 = vpop.f32.mrf.mxu0
        %v1070 = vadd.f32 %v617, %v1069
        %1071 = vmatprep.mubr.bf16.mxu0 0
        %1072 = vmatmul.mubr.bf16.gmra.mxu0 %v861
        %v1073 = vpop.f32.mrf.mxu0
        %v1074 = vadd.f32 %v613, %v1073
        %v1075 = vpop.f32.mrf.mxu0
        %v1076 = vadd.f32 %v617, %v1075
        %v1077 = vpop.f32.mrf.mxu0
        %v1078 = vadd.f32 %v613, %v1077
        %v1079 = vpop.f32.mrf.mxu0
        %v1080 = vadd.f32 %v617, %v1079
        %1081 = vmatprep.mubr.bf16.mxu0 0
        %1082 = vmatmul.mubr.bf16.gmra.mxu0 %v864
        %v1083 = vpop.f32.mrf.mxu0
        %v1084 = vadd.f32 %v613, %v1083
        %v1085 = vpop.f32.mrf.mxu0
        %v1086 = vadd.f32 %v617, %v1085
        %v1087 = vpop.f32.mrf.mxu0
        %v1088 = vadd.f32 %v613, %v1087
        %v1089 = vpop.f32.mrf.mxu0
        %v1090 = vadd.f32 %v617, %v1089
        %1091 = vdwg.mxu0
        %1092 = vmatprep.subr.bf16.mxu0 0
        %1093 = vmatpush1.bf16.msra.mxu0 0
        %1094 = vmatprep.subr.bf16.mxu0 0
        %1095 = vmatpush1.bf16.msra.mxu0 0
        %1096 = vmatprep.subr.bf16.mxu0 0
        %1097 = vmatpush1.bf16.msra.mxu0 0
        %1098 = vmatprep.subr.bf16.mxu0 0
        %1099 = vmatpush1.bf16.msra.mxu0 0
        %1100 = vmatprep.subr.bf16.mxu0 0
        %1101 = vmatpush1.bf16.msra.mxu0 0
        %1102 = vmatprep.subr.bf16.mxu0 0
        %1103 = vmatpush1.bf16.msra.mxu0 0
        %1104 = vmatprep.subr.bf16.mxu0 %v799
        %1105 = vmatpush1.bf16.msra.mxu0 %v798
        %1106 = vmatprep.subr.bf16.mxu0 %v783
        %1107 = vmatpush1.bf16.msra.mxu0 %v782
        %1108 = vmatprep.subr.bf16.mxu0 0
        %1109 = vmatpush2.bf16.msra.mxu0 0
        %1110 = vmatprep.subr.bf16.mxu0 0
        %1111 = vmatpush2.bf16.msra.mxu0 0
        %1112 = vmatprep.subr.bf16.mxu0 0
        %1113 = vmatpush2.bf16.msra.mxu0 0
        %1114 = vmatprep.subr.bf16.mxu0 0
        %1115 = vmatpush2.bf16.msra.mxu0 0
        %1116 = vmatprep.subr.bf16.mxu0 0
        %1117 = vmatpush2.bf16.msra.mxu0 0
        %1118 = vmatprep.subr.bf16.mxu0 0
        %1119 = vmatpush2.bf16.msra.mxu0 0
        %1120 = vmatprep.subr.bf16.mxu0 0
        %1121 = vmatpush2.bf16.msra.mxu0 0
        %1122 = vmatprep.subr.bf16.mxu0 0
        %1123 = vmatpush2.bf16.msra.mxu0 0
        %1124 = vmatprep.mubr.bf16.mxu0 0
        %1125 = vmatmul.mubr.bf16.gmra.mxu0 %v843
        %v1126 = vpop.f32.mrf.mxu0
        %v1127 = vadd.f32 %v621, %v1126
        %v1128 = vpop.f32.mrf.mxu0
        %v1129 = vadd.f32 %v625, %v1128
        %v1130 = vpop.f32.mrf.mxu0
        %v1131 = vadd.f32 %v621, %v1130
        %v1132 = vpop.f32.mrf.mxu0
        %v1133 = vadd.f32 %v625, %v1132
        %1134 = vmatprep.mubr.bf16.mxu0 0
        %1135 = vmatmul.mubr.bf16.gmra.mxu0 %v846
        %v1136 = vpop.f32.mrf.mxu0
        %v1137 = vadd.f32 %v621, %v1136
        %v1138 = vpop.f32.mrf.mxu0
        %v1139 = vadd.f32 %v625, %v1138
        %v1140 = vpop.f32.mrf.mxu0
        %v1141 = vadd.f32 %v621, %v1140
        %v1142 = vpop.f32.mrf.mxu0
        %v1143 = vadd.f32 %v625, %v1142
        %1144 = vmatprep.mubr.bf16.mxu0 0
        %1145 = vmatmul.mubr.bf16.gmra.mxu0 %v849
        %v1146 = vpop.f32.mrf.mxu0
        %v1147 = vadd.f32 %v621, %v1146
        %v1148 = vpop.f32.mrf.mxu0
        %v1149 = vadd.f32 %v625, %v1148
        %v1150 = vpop.f32.mrf.mxu0
        %v1151 = vadd.f32 %v621, %v1150
        %v1152 = vpop.f32.mrf.mxu0
        %v1153 = vadd.f32 %v625, %v1152
        %1154 = vmatprep.mubr.bf16.mxu0 0
        %1155 = vmatmul.mubr.bf16.gmra.mxu0 %v852
        %v1156 = vpop.f32.mrf.mxu0
        %v1157 = vadd.f32 %v621, %v1156
        %v1158 = vpop.f32.mrf.mxu0
        %v1159 = vadd.f32 %v625, %v1158
        %v1160 = vpop.f32.mrf.mxu0
        %v1161 = vadd.f32 %v621, %v1160
        %v1162 = vpop.f32.mrf.mxu0
        %v1163 = vadd.f32 %v625, %v1162
        %1164 = vmatprep.mubr.bf16.mxu0 0
        %1165 = vmatmul.mubr.bf16.gmra.mxu0 %v855
        %v1166 = vpop.f32.mrf.mxu0
        %v1167 = vadd.f32 %v621, %v1166
        %v1168 = vpop.f32.mrf.mxu0
        %v1169 = vadd.f32 %v625, %v1168
        %v1170 = vpop.f32.mrf.mxu0
        %v1171 = vadd.f32 %v621, %v1170
        %v1172 = vpop.f32.mrf.mxu0
        %v1173 = vadd.f32 %v625, %v1172
        %1174 = vmatprep.mubr.bf16.mxu0 0
        %1175 = vmatmul.mubr.bf16.gmra.mxu0 %v858
        %v1176 = vpop.f32.mrf.mxu0
        %v1177 = vadd.f32 %v621, %v1176
        %v1178 = vpop.f32.mrf.mxu0
        %v1179 = vadd.f32 %v625, %v1178
        %v1180 = vpop.f32.mrf.mxu0
        %v1181 = vadd.f32 %v621, %v1180
        %v1182 = vpop.f32.mrf.mxu0
        %v1183 = vadd.f32 %v625, %v1182
        %1184 = vmatprep.mubr.bf16.mxu0 0
        %1185 = vmatmul.mubr.bf16.gmra.mxu0 %v861
        %v1186 = vpop.f32.mrf.mxu0
        %v1187 = vadd.f32 %v621, %v1186
        %v1188 = vpop.f32.mrf.mxu0
        %v1189 = vadd.f32 %v625, %v1188
        %v1190 = vpop.f32.mrf.mxu0
        %v1191 = vadd.f32 %v621, %v1190
        %v1192 = vpop.f32.mrf.mxu0
        %v1193 = vadd.f32 %v625, %v1192
        %1194 = vmatprep.mubr.bf16.mxu0 0
        %1195 = vmatmul.mubr.bf16.gmra.mxu0 %v864
        %v1196 = vpop.f32.mrf.mxu0
        %v1197 = vadd.f32 %v621, %v1196
        %v1198 = vpop.f32.mrf.mxu0
        %v1199 = vadd.f32 %v625, %v1198
        %v1200 = vpop.f32.mrf.mxu0
        %v1201 = vadd.f32 %v621, %v1200
        %v1202 = vpop.f32.mrf.mxu0
        %v1203 = vadd.f32 %v625, %v1202
        %1204 = vdwg.mxu0
        %1205 = vmatprep.subr.bf16.mxu0 0
        %1206 = vmatpush1.bf16.msra.mxu0 0
        %1207 = vmatprep.subr.bf16.mxu0 0
        %1208 = vmatpush1.bf16.msra.mxu0 0
        %1209 = vmatprep.subr.bf16.mxu0 0
        %1210 = vmatpush1.bf16.msra.mxu0 0
        %1211 = vmatprep.subr.bf16.mxu0 0
        %1212 = vmatpush1.bf16.msra.mxu0 0
        %1213 = vmatprep.subr.bf16.mxu0 0
        %1214 = vmatpush1.bf16.msra.mxu0 0
        %1215 = vmatprep.subr.bf16.mxu0 0
        %1216 = vmatpush1.bf16.msra.mxu0 0
        %1217 = vmatprep.subr.bf16.mxu0 %v801
        %1218 = vmatpush1.bf16.msra.mxu0 %v800
        %1219 = vmatprep.subr.bf16.mxu0 %v785
        %1220 = vmatpush1.bf16.msra.mxu0 %v784
        %1221 = vmatprep.subr.bf16.mxu0 0
        %1222 = vmatpush2.bf16.msra.mxu0 0
        %1223 = vmatprep.subr.bf16.mxu0 0
        %1224 = vmatpush2.bf16.msra.mxu0 0
        %1225 = vmatprep.subr.bf16.mxu0 0
        %1226 = vmatpush2.bf16.msra.mxu0 0
        %1227 = vmatprep.subr.bf16.mxu0 0
        %1228 = vmatpush2.bf16.msra.mxu0 0
        %1229 = vmatprep.subr.bf16.mxu0 0
        %1230 = vmatpush2.bf16.msra.mxu0 0
        %1231 = vmatprep.subr.bf16.mxu0 0
        %1232 = vmatpush2.bf16.msra.mxu0 0
        %1233 = vmatprep.subr.bf16.mxu0 0
        %1234 = vmatpush2.bf16.msra.mxu0 0
        %1235 = vmatprep.subr.bf16.mxu0 0
        %1236 = vmatpush2.bf16.msra.mxu0 0
        %1237 = vmatprep.mubr.bf16.mxu0 0
        %1238 = vmatmul.mubr.bf16.gmra.mxu0 %v843
        %v1239 = vpop.f32.mrf.mxu0
        %v1240 = vadd.f32 %v629, %v1239
        %v1241 = vpop.f32.mrf.mxu0
        %v1242 = vadd.f32 %v633, %v1241
        %v1243 = vpop.f32.mrf.mxu0
        %v1244 = vadd.f32 %v629, %v1243
        %v1245 = vpop.f32.mrf.mxu0
        %v1246 = vadd.f32 %v633, %v1245
        %1247 = vmatprep.mubr.bf16.mxu0 0
        %1248 = vmatmul.mubr.bf16.gmra.mxu0 %v846
        %v1249 = vpop.f32.mrf.mxu0
        %v1250 = vadd.f32 %v629, %v1249
        %v1251 = vpop.f32.mrf.mxu0
        %v1252 = vadd.f32 %v633, %v1251
        %v1253 = vpop.f32.mrf.mxu0
        %v1254 = vadd.f32 %v629, %v1253
        %v1255 = vpop.f32.mrf.mxu0
        %v1256 = vadd.f32 %v633, %v1255
        %1257 = vmatprep.mubr.bf16.mxu0 0
        %1258 = vmatmul.mubr.bf16.gmra.mxu0 %v849
        %v1259 = vpop.f32.mrf.mxu0
        %v1260 = vadd.f32 %v629, %v1259
        %v1261 = vpop.f32.mrf.mxu0
        %v1262 = vadd.f32 %v633, %v1261
        %v1263 = vpop.f32.mrf.mxu0
        %v1264 = vadd.f32 %v629, %v1263
        %v1265 = vpop.f32.mrf.mxu0
        %v1266 = vadd.f32 %v633, %v1265
        %1267 = vmatprep.mubr.bf16.mxu0 0
        %1268 = vmatmul.mubr.bf16.gmra.mxu0 %v852
        %v1269 = vpop.f32.mrf.mxu0
        %v1270 = vadd.f32 %v629, %v1269
        %v1271 = vpop.f32.mrf.mxu0
        %v1272 = vadd.f32 %v633, %v1271
        %v1273 = vpop.f32.mrf.mxu0
        %v1274 = vadd.f32 %v629, %v1273
        %v1275 = vpop.f32.mrf.mxu0
        %v1276 = vadd.f32 %v633, %v1275
        %1277 = vmatprep.mubr.bf16.mxu0 0
        %1278 = vmatmul.mubr.bf16.gmra.mxu0 %v855
        %v1279 = vpop.f32.mrf.mxu0
        %v1280 = vadd.f32 %v629, %v1279
        %v1281 = vpop.f32.mrf.mxu0
        %v1282 = vadd.f32 %v633, %v1281
        %v1283 = vpop.f32.mrf.mxu0
        %v1284 = vadd.f32 %v629, %v1283
        %v1285 = vpop.f32.mrf.mxu0
        %v1286 = vadd.f32 %v633, %v1285
        %1287 = vmatprep.mubr.bf16.mxu0 0
        %1288 = vmatmul.mubr.bf16.gmra.mxu0 %v858
        %v1289 = vpop.f32.mrf.mxu0
        %v1290 = vadd.f32 %v629, %v1289
        %v1291 = vpop.f32.mrf.mxu0
        %v1292 = vadd.f32 %v633, %v1291
        %v1293 = vpop.f32.mrf.mxu0
        %v1294 = vadd.f32 %v629, %v1293
        %v1295 = vpop.f32.mrf.mxu0
        %v1296 = vadd.f32 %v633, %v1295
        %1297 = vmatprep.mubr.bf16.mxu0 0
        %1298 = vmatmul.mubr.bf16.gmra.mxu0 %v861
        %v1299 = vpop.f32.mrf.mxu0
        %v1300 = vadd.f32 %v629, %v1299
        %v1301 = vpop.f32.mrf.mxu0
        %v1302 = vadd.f32 %v633, %v1301
        %v1303 = vpop.f32.mrf.mxu0
        %v1304 = vadd.f32 %v629, %v1303
        %v1305 = vpop.f32.mrf.mxu0
        %v1306 = vadd.f32 %v633, %v1305
        %1307 = vmatprep.mubr.bf16.mxu0 0
        %1308 = vmatmul.mubr.bf16.gmra.mxu0 %v864
        %v1309 = vpop.f32.mrf.mxu0
        %v1310 = vadd.f32 %v629, %v1309
        %v1311 = vpop.f32.mrf.mxu0
        %v1312 = vadd.f32 %v633, %v1311
        %v1313 = vpop.f32.mrf.mxu0
        %v1314 = vadd.f32 %v629, %v1313
        %v1315 = vpop.f32.mrf.mxu0
        %v1316 = vadd.f32 %v633, %v1315
        %1317 = vdwg.mxu0
        %1318 = vmatprep.subr.bf16.mxu0 0
        %1319 = vmatpush1.bf16.msra.mxu0 0
        %1320 = vmatprep.subr.bf16.mxu0 0
        %1321 = vmatpush1.bf16.msra.mxu0 0
        %1322 = vmatprep.subr.bf16.mxu0 0
        %1323 = vmatpush1.bf16.msra.mxu0 0
        %1324 = vmatprep.subr.bf16.mxu0 0
        %1325 = vmatpush1.bf16.msra.mxu0 0
        %1326 = vmatprep.subr.bf16.mxu0 0
        %1327 = vmatpush1.bf16.msra.mxu0 0
        %1328 = vmatprep.subr.bf16.mxu0 0
        %1329 = vmatpush1.bf16.msra.mxu0 0
        %1330 = vmatprep.subr.bf16.mxu0 %v803
        %1331 = vmatpush1.bf16.msra.mxu0 %v802
        %1332 = vmatprep.subr.bf16.mxu0 %v787
        %1333 = vmatpush1.bf16.msra.mxu0 %v786
        %1334 = vmatprep.subr.bf16.mxu0 0
        %1335 = vmatpush2.bf16.msra.mxu0 0
        %1336 = vmatprep.subr.bf16.mxu0 0
        %1337 = vmatpush2.bf16.msra.mxu0 0
        %1338 = vmatprep.subr.bf16.mxu0 0
        %1339 = vmatpush2.bf16.msra.mxu0 0
        %1340 = vmatprep.subr.bf16.mxu0 0
        %1341 = vmatpush2.bf16.msra.mxu0 0
        %1342 = vmatprep.subr.bf16.mxu0 0
        %1343 = vmatpush2.bf16.msra.mxu0 0
        %1344 = vmatprep.subr.bf16.mxu0 0
        %1345 = vmatpush2.bf16.msra.mxu0 0
        %1346 = vmatprep.subr.bf16.mxu0 0
        %1347 = vmatpush2.bf16.msra.mxu0 0
        %1348 = vmatprep.subr.bf16.mxu0 0
        %1349 = vmatpush2.bf16.msra.mxu0 0
        %1350 = vmatprep.mubr.bf16.mxu0 0
        %1351 = vmatmul.mubr.bf16.gmra.mxu0 %v843
        %v1352 = vpop.f32.mrf.mxu0
        %v1353 = vadd.f32 %v637, %v1352
        %v1354 = vpop.f32.mrf.mxu0
        %v1355 = vadd.f32 %v641, %v1354
        %v1356 = vpop.f32.mrf.mxu0
        %v1357 = vadd.f32 %v637, %v1356
        %v1358 = vpop.f32.mrf.mxu0
        %v1359 = vadd.f32 %v641, %v1358
        %1360 = vmatprep.mubr.bf16.mxu0 0
        %1361 = vmatmul.mubr.bf16.gmra.mxu0 %v846
        %v1362 = vpop.f32.mrf.mxu0
        %v1363 = vadd.f32 %v637, %v1362
        %v1364 = vpop.f32.mrf.mxu0
        %v1365 = vadd.f32 %v641, %v1364
        %v1366 = vpop.f32.mrf.mxu0
        %v1367 = vadd.f32 %v637, %v1366
        %v1368 = vpop.f32.mrf.mxu0
        %v1369 = vadd.f32 %v641, %v1368
        %1370 = vmatprep.mubr.bf16.mxu0 0
        %1371 = vmatmul.mubr.bf16.gmra.mxu0 %v849
        %v1372 = vpop.f32.mrf.mxu0
        %v1373 = vadd.f32 %v637, %v1372
        %v1374 = vpop.f32.mrf.mxu0
        %v1375 = vadd.f32 %v641, %v1374
        %v1376 = vpop.f32.mrf.mxu0
        %v1377 = vadd.f32 %v637, %v1376
        %v1378 = vpop.f32.mrf.mxu0
        %v1379 = vadd.f32 %v641, %v1378
        %1380 = vmatprep.mubr.bf16.mxu0 0
        %1381 = vmatmul.mubr.bf16.gmra.mxu0 %v852
        %v1382 = vpop.f32.mrf.mxu0
        %v1383 = vadd.f32 %v637, %v1382
        %v1384 = vpop.f32.mrf.mxu0
        %v1385 = vadd.f32 %v641, %v1384
        %v1386 = vpop.f32.mrf.mxu0
        %v1387 = vadd.f32 %v637, %v1386
        %v1388 = vpop.f32.mrf.mxu0
        %v1389 = vadd.f32 %v641, %v1388
        %1390 = vmatprep.mubr.bf16.mxu0 0
        %1391 = vmatmul.mubr.bf16.gmra.mxu0 %v855
        %v1392 = vpop.f32.mrf.mxu0
        %v1393 = vadd.f32 %v637, %v1392
        %v1394 = vpop.f32.mrf.mxu0
        %v1395 = vadd.f32 %v641, %v1394
        %v1396 = vpop.f32.mrf.mxu0
        %v1397 = vadd.f32 %v637, %v1396
        %v1398 = vpop.f32.mrf.mxu0
        %v1399 = vadd.f32 %v641, %v1398
        %1400 = vmatprep.mubr.bf16.mxu0 0
        %1401 = vmatmul.mubr.bf16.gmra.mxu0 %v858
        %v1402 = vpop.f32.mrf.mxu0
        %v1403 = vadd.f32 %v637, %v1402
        %v1404 = vpop.f32.mrf.mxu0
        %v1405 = vadd.f32 %v641, %v1404
        %v1406 = vpop.f32.mrf.mxu0
        %v1407 = vadd.f32 %v637, %v1406
        %v1408 = vpop.f32.mrf.mxu0
        %v1409 = vadd.f32 %v641, %v1408
        %1410 = vmatprep.mubr.bf16.mxu0 0
        %1411 = vmatmul.mubr.bf16.gmra.mxu0 %v861
        %v1412 = vpop.f32.mrf.mxu0
        %v1413 = vadd.f32 %v637, %v1412
        %v1414 = vpop.f32.mrf.mxu0
        %v1415 = vadd.f32 %v641, %v1414
        %v1416 = vpop.f32.mrf.mxu0
        %v1417 = vadd.f32 %v637, %v1416
        %v1418 = vpop.f32.mrf.mxu0
        %v1419 = vadd.f32 %v641, %v1418
        %1420 = vmatprep.mubr.bf16.mxu0 0
        %1421 = vmatmul.mubr.bf16.gmra.mxu0 %v864
        %v1422 = vpop.f32.mrf.mxu0
        %v1423 = vadd.f32 %v637, %v1422
        %v1424 = vpop.f32.mrf.mxu0
        %v1425 = vadd.f32 %v641, %v1424
        %v1426 = vpop.f32.mrf.mxu0
        %v1427 = vadd.f32 %v637, %v1426
        %v1428 = vpop.f32.mrf.mxu0
        %v1429 = vadd.f32 %v641, %v1428
        %1430 = vdwg.mxu0
        %1431 = vmatprep.subr.bf16.mxu0 0
        %1432 = vmatpush1.bf16.msra.mxu0 0
        %1433 = vmatprep.subr.bf16.mxu0 0
        %1434 = vmatpush1.bf16.msra.mxu0 0
        %1435 = vmatprep.subr.bf16.mxu0 0
        %1436 = vmatpush1.bf16.msra.mxu0 0
        %1437 = vmatprep.subr.bf16.mxu0 0
        %1438 = vmatpush1.bf16.msra.mxu0 0
        %1439 = vmatprep.subr.bf16.mxu0 0
        %1440 = vmatpush1.bf16.msra.mxu0 0
        %1441 = vmatprep.subr.bf16.mxu0 0
        %1442 = vmatpush1.bf16.msra.mxu0 0
        %1443 = vmatprep.subr.bf16.mxu0 %v805
        %1444 = vmatpush1.bf16.msra.mxu0 %v804
        %1445 = vmatprep.subr.bf16.mxu0 %v789
        %1446 = vmatpush1.bf16.msra.mxu0 %v788
        %1447 = vmatprep.subr.bf16.mxu0 0
        %1448 = vmatpush2.bf16.msra.mxu0 0
        %1449 = vmatprep.subr.bf16.mxu0 0
        %1450 = vmatpush2.bf16.msra.mxu0 0
        %1451 = vmatprep.subr.bf16.mxu0 0
        %1452 = vmatpush2.bf16.msra.mxu0 0
        %1453 = vmatprep.subr.bf16.mxu0 0
        %1454 = vmatpush2.bf16.msra.mxu0 0
        %1455 = vmatprep.subr.bf16.mxu0 0
        %1456 = vmatpush2.bf16.msra.mxu0 0
        %1457 = vmatprep.subr.bf16.mxu0 0
        %1458 = vmatpush2.bf16.msra.mxu0 0
        %1459 = vmatprep.subr.bf16.mxu0 0
        %1460 = vmatpush2.bf16.msra.mxu0 0
        %1461 = vmatprep.subr.bf16.mxu0 0
        %1462 = vmatpush2.bf16.msra.mxu0 0
        %1463 = vmatprep.mubr.bf16.mxu0 0
        %1464 = vmatmul.mubr.bf16.gmra.mxu0 %v843
        %v1465 = vpop.f32.mrf.mxu0
        %v1466 = vadd.f32 %v645, %v1465
        %v1467 = vpop.f32.mrf.mxu0
        %v1468 = vadd.f32 %v649, %v1467
        %v1469 = vpop.f32.mrf.mxu0
        %v1470 = vadd.f32 %v645, %v1469
        %v1471 = vpop.f32.mrf.mxu0
        %v1472 = vadd.f32 %v649, %v1471
        %1473 = vmatprep.mubr.bf16.mxu0 0
        %1474 = vmatmul.mubr.bf16.gmra.mxu0 %v846
        %v1475 = vpop.f32.mrf.mxu0
        %v1476 = vadd.f32 %v645, %v1475
        %v1477 = vpop.f32.mrf.mxu0
        %v1478 = vadd.f32 %v649, %v1477
        %v1479 = vpop.f32.mrf.mxu0
        %v1480 = vadd.f32 %v645, %v1479
        %v1481 = vpop.f32.mrf.mxu0
        %v1482 = vadd.f32 %v649, %v1481
        %1483 = vmatprep.mubr.bf16.mxu0 0
        %1484 = vmatmul.mubr.bf16.gmra.mxu0 %v849
        %v1485 = vpop.f32.mrf.mxu0
        %v1486 = vadd.f32 %v645, %v1485
        %v1487 = vpop.f32.mrf.mxu0
        %v1488 = vadd.f32 %v649, %v1487
        %v1489 = vpop.f32.mrf.mxu0
        %v1490 = vadd.f32 %v645, %v1489
        %v1491 = vpop.f32.mrf.mxu0
        %v1492 = vadd.f32 %v649, %v1491
        %1493 = vmatprep.mubr.bf16.mxu0 0
        %1494 = vmatmul.mubr.bf16.gmra.mxu0 %v852
        %v1495 = vpop.f32.mrf.mxu0
        %v1496 = vadd.f32 %v645, %v1495
        %v1497 = vpop.f32.mrf.mxu0
        %v1498 = vadd.f32 %v649, %v1497
        %v1499 = vpop.f32.mrf.mxu0
        %v1500 = vadd.f32 %v645, %v1499
        %v1501 = vpop.f32.mrf.mxu0
        %v1502 = vadd.f32 %v649, %v1501
        %1503 = vmatprep.mubr.bf16.mxu0 0
        %1504 = vmatmul.mubr.bf16.gmra.mxu0 %v855
        %v1505 = vpop.f32.mrf.mxu0
        %v1506 = vadd.f32 %v645, %v1505
        %v1507 = vpop.f32.mrf.mxu0
        %v1508 = vadd.f32 %v649, %v1507
        %v1509 = vpop.f32.mrf.mxu0
        %v1510 = vadd.f32 %v645, %v1509
        %v1511 = vpop.f32.mrf.mxu0
        %v1512 = vadd.f32 %v649, %v1511
        %1513 = vmatprep.mubr.bf16.mxu0 0
        %1514 = vmatmul.mubr.bf16.gmra.mxu0 %v858
        %v1515 = vpop.f32.mrf.mxu0
        %v1516 = vadd.f32 %v645, %v1515
        %v1517 = vpop.f32.mrf.mxu0
        %v1518 = vadd.f32 %v649, %v1517
        %v1519 = vpop.f32.mrf.mxu0
        %v1520 = vadd.f32 %v645, %v1519
        %v1521 = vpop.f32.mrf.mxu0
        %v1522 = vadd.f32 %v649, %v1521
        %1523 = vmatprep.mubr.bf16.mxu0 0
        %1524 = vmatmul.mubr.bf16.gmra.mxu0 %v861
        %v1525 = vpop.f32.mrf.mxu0
        %v1526 = vadd.f32 %v645, %v1525
        %v1527 = vpop.f32.mrf.mxu0
        %v1528 = vadd.f32 %v649, %v1527
        %v1529 = vpop.f32.mrf.mxu0
        %v1530 = vadd.f32 %v645, %v1529
        %v1531 = vpop.f32.mrf.mxu0
        %v1532 = vadd.f32 %v649, %v1531
        %1533 = vmatprep.mubr.bf16.mxu0 0
        %1534 = vmatmul.mubr.bf16.gmra.mxu0 %v864
        %v1535 = vpop.f32.mrf.mxu0
        %v1536 = vadd.f32 %v645, %v1535
        %v1537 = vpop.f32.mrf.mxu0
        %v1538 = vadd.f32 %v649, %v1537
        %v1539 = vpop.f32.mrf.mxu0
        %v1540 = vadd.f32 %v645, %v1539
        %v1541 = vpop.f32.mrf.mxu0
        %v1542 = vadd.f32 %v649, %v1541
        %1543 = vdwg.mxu0
        %1544 = vmatprep.subr.bf16.mxu0 0
        %1545 = vmatpush1.bf16.msra.mxu0 0
        %1546 = vmatprep.subr.bf16.mxu0 0
        %1547 = vmatpush1.bf16.msra.mxu0 0
        %1548 = vmatprep.subr.bf16.mxu0 0
        %1549 = vmatpush1.bf16.msra.mxu0 0
        %1550 = vmatprep.subr.bf16.mxu0 0
        %1551 = vmatpush1.bf16.msra.mxu0 0
        %1552 = vmatprep.subr.bf16.mxu0 0
        %1553 = vmatpush1.bf16.msra.mxu0 0
        %1554 = vmatprep.subr.bf16.mxu0 0
        %1555 = vmatpush1.bf16.msra.mxu0 0
        %1556 = vmatprep.subr.bf16.mxu0 %v807
        %1557 = vmatpush1.bf16.msra.mxu0 %v806
        %1558 = vmatprep.subr.bf16.mxu0 %v791
        %1559 = vmatpush1.bf16.msra.mxu0 %v790
        %1560 = vmatprep.subr.bf16.mxu0 0
        %1561 = vmatpush2.bf16.msra.mxu0 0
        %1562 = vmatprep.subr.bf16.mxu0 0
        %1563 = vmatpush2.bf16.msra.mxu0 0
        %1564 = vmatprep.subr.bf16.mxu0 0
        %1565 = vmatpush2.bf16.msra.mxu0 0
        %1566 = vmatprep.subr.bf16.mxu0 0
        %1567 = vmatpush2.bf16.msra.mxu0 0
        %1568 = vmatprep.subr.bf16.mxu0 0
        %1569 = vmatpush2.bf16.msra.mxu0 0
        %1570 = vmatprep.subr.bf16.mxu0 0
        %1571 = vmatpush2.bf16.msra.mxu0 0
        %1572 = vmatprep.subr.bf16.mxu0 0
        %1573 = vmatpush2.bf16.msra.mxu0 0
        %1574 = vmatprep.subr.bf16.mxu0 0
        %1575 = vmatpush2.bf16.msra.mxu0 0
        %1576 = vmatprep.mubr.bf16.mxu0 0
        %1577 = vmatmul.mubr.bf16.gmra.mxu0 %v843
        %v1578 = vpop.f32.mrf.mxu0
        %v1579 = vadd.f32 %v653, %v1578
        %v1580 = vpop.f32.mrf.mxu0
        %v1581 = vadd.f32 %v657, %v1580
        %v1582 = vpop.f32.mrf.mxu0
        %v1583 = vadd.f32 %v653, %v1582
        %v1584 = vpop.f32.mrf.mxu0
        %v1585 = vadd.f32 %v657, %v1584
        %1586 = vmatprep.mubr.bf16.mxu0 0
        %1587 = vmatmul.mubr.bf16.gmra.mxu0 %v846
        %v1588 = vpop.f32.mrf.mxu0
        %v1589 = vadd.f32 %v653, %v1588
        %v1590 = vpop.f32.mrf.mxu0
        %v1591 = vadd.f32 %v657, %v1590
        %v1592 = vpop.f32.mrf.mxu0
        %v1593 = vadd.f32 %v653, %v1592
        %v1594 = vpop.f32.mrf.mxu0
        %v1595 = vadd.f32 %v657, %v1594
        %1596 = vmatprep.mubr.bf16.mxu0 0
        %1597 = vmatmul.mubr.bf16.gmra.mxu0 %v849
        %v1598 = vpop.f32.mrf.mxu0
        %v1599 = vadd.f32 %v653, %v1598
        %v1600 = vpop.f32.mrf.mxu0
        %v1601 = vadd.f32 %v657, %v1600
        %v1602 = vpop.f32.mrf.mxu0
        %v1603 = vadd.f32 %v653, %v1602
        %v1604 = vpop.f32.mrf.mxu0
        %v1605 = vadd.f32 %v657, %v1604
        %1606 = vmatprep.mubr.bf16.mxu0 0
        %1607 = vmatmul.mubr.bf16.gmra.mxu0 %v852
        %v1608 = vpop.f32.mrf.mxu0
        %v1609 = vadd.f32 %v653, %v1608
        %v1610 = vpop.f32.mrf.mxu0
        %v1611 = vadd.f32 %v657, %v1610
        %v1612 = vpop.f32.mrf.mxu0
        %v1613 = vadd.f32 %v653, %v1612
        %v1614 = vpop.f32.mrf.mxu0
        %v1615 = vadd.f32 %v657, %v1614
        %1616 = vmatprep.mubr.bf16.mxu0 0
        %1617 = vmatmul.mubr.bf16.gmra.mxu0 %v855
        %v1618 = vpop.f32.mrf.mxu0
        %v1619 = vadd.f32 %v653, %v1618
        %v1620 = vpop.f32.mrf.mxu0
        %v1621 = vadd.f32 %v657, %v1620
        %v1622 = vpop.f32.mrf.mxu0
        %v1623 = vadd.f32 %v653, %v1622
        %v1624 = vpop.f32.mrf.mxu0
        %v1625 = vadd.f32 %v657, %v1624
        %1626 = vmatprep.mubr.bf16.mxu0 0
        %1627 = vmatmul.mubr.bf16.gmra.mxu0 %v858
        %v1628 = vpop.f32.mrf.mxu0
        %v1629 = vadd.f32 %v653, %v1628
        %v1630 = vpop.f32.mrf.mxu0
        %v1631 = vadd.f32 %v657, %v1630
        %v1632 = vpop.f32.mrf.mxu0
        %v1633 = vadd.f32 %v653, %v1632
        %v1634 = vpop.f32.mrf.mxu0
        %v1635 = vadd.f32 %v657, %v1634
        %1636 = vmatprep.mubr.bf16.mxu0 0
        %1637 = vmatmul.mubr.bf16.gmra.mxu0 %v861
        %v1638 = vpop.f32.mrf.mxu0
        %v1639 = vadd.f32 %v653, %v1638
        %v1640 = vpop.f32.mrf.mxu0
        %v1641 = vadd.f32 %v657, %v1640
        %v1642 = vpop.f32.mrf.mxu0
        %v1643 = vadd.f32 %v653, %v1642
        %v1644 = vpop.f32.mrf.mxu0
        %v1645 = vadd.f32 %v657, %v1644
        %1646 = vmatprep.mubr.bf16.mxu0 0
        %1647 = vmatmul.mubr.bf16.gmra.mxu0 %v864
        %v1648 = vpop.f32.mrf.mxu0
        %v1649 = vadd.f32 %v653, %v1648
        %v1650 = vpop.f32.mrf.mxu0
        %v1651 = vadd.f32 %v657, %v1650
        %v1652 = vpop.f32.mrf.mxu0
        %v1653 = vadd.f32 %v653, %v1652
        %v1654 = vpop.f32.mrf.mxu0
        %v1655 = vadd.f32 %v657, %v1654
        %1656 = vdwg.mxu0
        %1657 = vmatprep.subr.bf16.mxu0 0
        %1658 = vmatpush1.bf16.msra.mxu0 0
        %1659 = vmatprep.subr.bf16.mxu0 0
        %1660 = vmatpush1.bf16.msra.mxu0 0
        %1661 = vmatprep.subr.bf16.mxu0 0
        %1662 = vmatpush1.bf16.msra.mxu0 0
        %1663 = vmatprep.subr.bf16.mxu0 0
        %1664 = vmatpush1.bf16.msra.mxu0 0
        %1665 = vmatprep.subr.bf16.mxu0 0
        %1666 = vmatpush1.bf16.msra.mxu0 0
        %1667 = vmatprep.subr.bf16.mxu0 0
        %1668 = vmatpush1.bf16.msra.mxu0 0
        %1669 = vmatprep.subr.bf16.mxu0 %v809
        %1670 = vmatpush1.bf16.msra.mxu0 %v808
        %1671 = vmatprep.subr.bf16.mxu0 %v793
        %1672 = vmatpush1.bf16.msra.mxu0 %v792
        %1673 = vmatprep.subr.bf16.mxu0 0
        %1674 = vmatpush2.bf16.msra.mxu0 0
        %1675 = vmatprep.subr.bf16.mxu0 0
        %1676 = vmatpush2.bf16.msra.mxu0 0
        %1677 = vmatprep.subr.bf16.mxu0 0
        %1678 = vmatpush2.bf16.msra.mxu0 0
        %1679 = vmatprep.subr.bf16.mxu0 0
        %1680 = vmatpush2.bf16.msra.mxu0 0
        %1681 = vmatprep.subr.bf16.mxu0 0
        %1682 = vmatpush2.bf16.msra.mxu0 0
        %1683 = vmatprep.subr.bf16.mxu0 0
        %1684 = vmatpush2.bf16.msra.mxu0 0
        %1685 = vmatprep.subr.bf16.mxu0 0
        %1686 = vmatpush2.bf16.msra.mxu0 0
        %1687 = vmatprep.subr.bf16.mxu0 0
        %1688 = vmatpush2.bf16.msra.mxu0 0
        %1689 = vmatprep.mubr.bf16.mxu0 0
        %1690 = vmatmul.mubr.bf16.gmra.mxu0 %v843
        %v1691 = vpop.f32.mrf.mxu0
        %v1692 = vadd.f32 %v661, %v1691
        %v1693 = vpop.f32.mrf.mxu0
        %v1694 = vadd.f32 %v665, %v1693
        %v1695 = vpop.f32.mrf.mxu0
        %v1696 = vadd.f32 %v661, %v1695
        %v1697 = vpop.f32.mrf.mxu0
        %v1698 = vadd.f32 %v665, %v1697
        %1699 = vmatprep.mubr.bf16.mxu0 0
        %1700 = vmatmul.mubr.bf16.gmra.mxu0 %v846
        %v1701 = vpop.f32.mrf.mxu0
        %v1702 = vadd.f32 %v661, %v1701
        %v1703 = vpop.f32.mrf.mxu0
        %v1704 = vadd.f32 %v665, %v1703
        %v1705 = vpop.f32.mrf.mxu0
        %v1706 = vadd.f32 %v661, %v1705
        %v1707 = vpop.f32.mrf.mxu0
        %v1708 = vadd.f32 %v665, %v1707
        %1709 = vmatprep.mubr.bf16.mxu0 0
        %1710 = vmatmul.mubr.bf16.gmra.mxu0 %v849
        %v1711 = vpop.f32.mrf.mxu0
        %v1712 = vadd.f32 %v661, %v1711
        %v1713 = vpop.f32.mrf.mxu0
        %v1714 = vadd.f32 %v665, %v1713
        %v1715 = vpop.f32.mrf.mxu0
        %v1716 = vadd.f32 %v661, %v1715
        %v1717 = vpop.f32.mrf.mxu0
        %v1718 = vadd.f32 %v665, %v1717
        %1719 = vmatprep.mubr.bf16.mxu0 0
        %1720 = vmatmul.mubr.bf16.gmra.mxu0 %v852
        %v1721 = vpop.f32.mrf.mxu0
        %v1722 = vadd.f32 %v661, %v1721
        %v1723 = vpop.f32.mrf.mxu0
        %v1724 = vadd.f32 %v665, %v1723
        %v1725 = vpop.f32.mrf.mxu0
        %v1726 = vadd.f32 %v661, %v1725
        %v1727 = vpop.f32.mrf.mxu0
        %v1728 = vadd.f32 %v665, %v1727
        %1729 = vmatprep.mubr.bf16.mxu0 0
        %1730 = vmatmul.mubr.bf16.gmra.mxu0 %v855
        %v1731 = vpop.f32.mrf.mxu0
        %v1732 = vadd.f32 %v661, %v1731
        %v1733 = vpop.f32.mrf.mxu0
        %v1734 = vadd.f32 %v665, %v1733
        %v1735 = vpop.f32.mrf.mxu0
        %v1736 = vadd.f32 %v661, %v1735
        %v1737 = vpop.f32.mrf.mxu0
        %v1738 = vadd.f32 %v665, %v1737
        %1739 = vmatprep.mubr.bf16.mxu0 0
        %1740 = vmatmul.mubr.bf16.gmra.mxu0 %v858
        %v1741 = vpop.f32.mrf.mxu0
        %v1742 = vadd.f32 %v661, %v1741
        %v1743 = vpop.f32.mrf.mxu0
        %v1744 = vadd.f32 %v665, %v1743
        %v1745 = vpop.f32.mrf.mxu0
        %v1746 = vadd.f32 %v661, %v1745
        %v1747 = vpop.f32.mrf.mxu0
        %v1748 = vadd.f32 %v665, %v1747
        %1749 = vmatprep.mubr.bf16.mxu0 0
        %1750 = vmatmul.mubr.bf16.gmra.mxu0 %v861
        %v1751 = vpop.f32.mrf.mxu0
        %v1752 = vadd.f32 %v661, %v1751
        %v1753 = vpop.f32.mrf.mxu0
        %v1754 = vadd.f32 %v665, %v1753
        %v1755 = vpop.f32.mrf.mxu0
        %v1756 = vadd.f32 %v661, %v1755
        %v1757 = vpop.f32.mrf.mxu0
        %v1758 = vadd.f32 %v665, %v1757
        %1759 = vmatprep.mubr.bf16.mxu0 0
        %1760 = vmatmul.mubr.bf16.gmra.mxu0 %v864
        %v1761 = vpop.f32.mrf.mxu0
        %v1762 = vadd.f32 %v661, %v1761
        %v1763 = vpop.f32.mrf.mxu0
        %v1764 = vadd.f32 %v665, %v1763
        %v1765 = vpop.f32.mrf.mxu0
        %v1766 = vadd.f32 %v661, %v1765
        %v1767 = vpop.f32.mrf.mxu0
        %v1768 = vadd.f32 %v665, %v1767
        %1769 = vdwg.mxu0
        %1770 = vst [vmem:[%s266] sm:$0xff] %v901
        %1771 = vst [vmem:[%s266 + $0x8] sm:$0xff] %v903
        %1772 = vst [vmem:[%s266 + $0x10] sm:$0xff] %v1014
        %1773 = vst [vmem:[%s266 + $0x18] sm:$0xff] %v1016
        %1774 = vst [vmem:[%s266 + $0x20] sm:$0xff] %v1127
        %1775 = vst [vmem:[%s266 + $0x28] sm:$0xff] %v1129
        %1776 = vst [vmem:[%s266 + $0x30] sm:$0xff] %v1240
        %1777 = vst [vmem:[%s266 + $0x38] sm:$0xff] %v1242
        %1778 = vst [vmem:[%s266 + $0x40] sm:$0xff] %v1353
        %1779 = vst [vmem:[%s266 + $0x48] sm:$0xff] %v1355
        %1780 = vst [vmem:[%s266 + $0x50] sm:$0xff] %v1466
        %1781 = vst [vmem:[%s266 + $0x58] sm:$0xff] %v1468
        %1782 = vst [vmem:[%s266 + $0x60] sm:$0xff] %v1579
        %1783 = vst [vmem:[%s266 + $0x68] sm:$0xff] %v1581
        %1784 = vst [vmem:[%s266 + $0x70] sm:$0xff] %v1692
        %vm1785 = vcmask 326656
        %1786 = vst.msk [vmem:[%s266 + $0x78] sm:$0xff] %vm1785, %v1694
        %1787 = vst [vmem:[%s266 + $0x80] sm:$0xff] %v905
        %1788 = vst [vmem:[%s266 + $0x88] sm:$0xff] %v907
        %1789 = vst [vmem:[%s266 + $0x90] sm:$0xff] %v1018
        %1790 = vst [vmem:[%s266 + $0x98] sm:$0xff] %v1020
        %1791 = vst [vmem:[%s266 + $0xa0] sm:$0xff] %v1131
        %1792 = vst [vmem:[%s266 + $0xa8] sm:$0xff] %v1133
        %1793 = vst [vmem:[%s266 + $0xb0] sm:$0xff] %v1244
        %1794 = vst [vmem:[%s266 + $0xb8] sm:$0xff] %v1246
        %1795 = vst [vmem:[%s266 + $0xc0] sm:$0xff] %v1357
        %1796 = vst [vmem:[%s266 + $0xc8] sm:$0xff] %v1359
        %1797 = vst [vmem:[%s266 + $0xd0] sm:$0xff] %v1470
        %1798 = vst [vmem:[%s266 + $0xd8] sm:$0xff] %v1472
        %1799 = vst [vmem:[%s266 + $0xe0] sm:$0xff] %v1583
        %1800 = vst [vmem:[%s266 + $0xe8] sm:$0xff] %v1585
        %1801 = vst [vmem:[%s266 + $0xf0] sm:$0xff] %v1696
        %1802 = vst.msk [vmem:[%s266 + $0xf8] sm:$0xff] %vm1785, %v1698
        %1803 = vst [vmem:[%s266 + $0x100] sm:$0xff] %v911
        %1804 = vst [vmem:[%s266 + $0x108] sm:$0xff] %v913
        %1805 = vst [vmem:[%s266 + $0x110] sm:$0xff] %v1024
        %1806 = vst [vmem:[%s266 + $0x118] sm:$0xff] %v1026
        %1807 = vst [vmem:[%s266 + $0x120] sm:$0xff] %v1137
        %1808 = vst [vmem:[%s266 + $0x128] sm:$0xff] %v1139
        %1809 = vst [vmem:[%s266 + $0x130] sm:$0xff] %v1250
        %1810 = vst [vmem:[%s266 + $0x138] sm:$0xff] %v1252
        %1811 = vst [vmem:[%s266 + $0x140] sm:$0xff] %v1363
        %1812 = vst [vmem:[%s266 + $0x148] sm:$0xff] %v1365
        %1813 = vst [vmem:[%s266 + $0x150] sm:$0xff] %v1476
        %1814 = vst [vmem:[%s266 + $0x158] sm:$0xff] %v1478
        %1815 = vst [vmem:[%s266 + $0x160] sm:$0xff] %v1589
        %1816 = vst [vmem:[%s266 + $0x168] sm:$0xff] %v1591
        %1817 = vst [vmem:[%s266 + $0x170] sm:$0xff] %v1702
        %1818 = vst.msk [vmem:[%s266 + $0x178] sm:$0xff] %vm1785, %v1704
        %1819 = vst [vmem:[%s266 + $0x180] sm:$0xff] %v915
        %1820 = vst [vmem:[%s266 + $0x188] sm:$0xff] %v917
        %1821 = vst [vmem:[%s266 + $0x190] sm:$0xff] %v1028
        %1822 = vst [vmem:[%s266 + $0x198] sm:$0xff] %v1030
        %1823 = vst [vmem:[%s266 + $0x1a0] sm:$0xff] %v1141
        %1824 = vst [vmem:[%s266 + $0x1a8] sm:$0xff] %v1143
        %1825 = vst [vmem:[%s266 + $0x1b0] sm:$0xff] %v1254
        %1826 = vst [vmem:[%s266 + $0x1b8] sm:$0xff] %v1256
        %1827 = vst [vmem:[%s266 + $0x1c0] sm:$0xff] %v1367
        %1828 = vst [vmem:[%s266 + $0x1c8] sm:$0xff] %v1369
        %1829 = vst [vmem:[%s266 + $0x1d0] sm:$0xff] %v1480
        %1830 = vst [vmem:[%s266 + $0x1d8] sm:$0xff] %v1482
        %1831 = vst [vmem:[%s266 + $0x1e0] sm:$0xff] %v1593
        %1832 = vst [vmem:[%s266 + $0x1e8] sm:$0xff] %v1595
        %1833 = vst [vmem:[%s266 + $0x1f0] sm:$0xff] %v1706
        %1834 = vst.msk [vmem:[%s266 + $0x1f8] sm:$0xff] %vm1785, %v1708
        %1835 = vst [vmem:[%s266 + $0x200] sm:$0xff] %v921
        %1836 = vst [vmem:[%s266 + $0x208] sm:$0xff] %v923
        %1837 = vst [vmem:[%s266 + $0x210] sm:$0xff] %v1034
        %1838 = vst [vmem:[%s266 + $0x218] sm:$0xff] %v1036
        %1839 = vst [vmem:[%s266 + $0x220] sm:$0xff] %v1147
        %1840 = vst [vmem:[%s266 + $0x228] sm:$0xff] %v1149
        %1841 = vst [vmem:[%s266 + $0x230] sm:$0xff] %v1260
        %1842 = vst [vmem:[%s266 + $0x238] sm:$0xff] %v1262
        %1843 = vst [vmem:[%s266 + $0x240] sm:$0xff] %v1373
        %1844 = vst [vmem:[%s266 + $0x248] sm:$0xff] %v1375
        %1845 = vst [vmem:[%s266 + $0x250] sm:$0xff] %v1486
        %1846 = vst [vmem:[%s266 + $0x258] sm:$0xff] %v1488
        %1847 = vst [vmem:[%s266 + $0x260] sm:$0xff] %v1599
        %1848 = vst [vmem:[%s266 + $0x268] sm:$0xff] %v1601
        %1849 = vst [vmem:[%s266 + $0x270] sm:$0xff] %v1712
        %1850 = vst.msk [vmem:[%s266 + $0x278] sm:$0xff] %vm1785, %v1714
        %1851 = vst [vmem:[%s266 + $0x280] sm:$0xff] %v925
        %1852 = vst [vmem:[%s266 + $0x288] sm:$0xff] %v927
        %1853 = vst [vmem:[%s266 + $0x290] sm:$0xff] %v1038
        %1854 = vst [vmem:[%s266 + $0x298] sm:$0xff] %v1040
        %1855 = vst [vmem:[%s266 + $0x2a0] sm:$0xff] %v1151
        %1856 = vst [vmem:[%s266 + $0x2a8] sm:$0xff] %v1153
        %1857 = vst [vmem:[%s266 + $0x2b0] sm:$0xff] %v1264
        %1858 = vst [vmem:[%s266 + $0x2b8] sm:$0xff] %v1266
        %1859 = vst [vmem:[%s266 + $0x2c0] sm:$0xff] %v1377
        %1860 = vst [vmem:[%s266 + $0x2c8] sm:$0xff] %v1379
        %1861 = vst [vmem:[%s266 + $0x2d0] sm:$0xff] %v1490
        %1862 = vst [vmem:[%s266 + $0x2d8] sm:$0xff] %v1492
        %1863 = vst [vmem:[%s266 + $0x2e0] sm:$0xff] %v1603
        %1864 = vst [vmem:[%s266 + $0x2e8] sm:$0xff] %v1605
        %1865 = vst [vmem:[%s266 + $0x2f0] sm:$0xff] %v1716
        %1866 = vst.msk [vmem:[%s266 + $0x2f8] sm:$0xff] %vm1785, %v1718
        %1867 = vst [vmem:[%s266 + $0x300] sm:$0xff] %v931
        %1868 = vst [vmem:[%s266 + $0x308] sm:$0xff] %v933
        %1869 = vst [vmem:[%s266 + $0x310] sm:$0xff] %v1044
        %1870 = vst [vmem:[%s266 + $0x318] sm:$0xff] %v1046
        %1871 = vst [vmem:[%s266 + $0x320] sm:$0xff] %v1157
        %1872 = vst [vmem:[%s266 + $0x328] sm:$0xff] %v1159
        %1873 = vst [vmem:[%s266 + $0x330] sm:$0xff] %v1270
        %1874 = vst [vmem:[%s266 + $0x338] sm:$0xff] %v1272
        %1875 = vst [vmem:[%s266 + $0x340] sm:$0xff] %v1383
        %1876 = vst [vmem:[%s266 + $0x348] sm:$0xff] %v1385
        %1877 = vst [vmem:[%s266 + $0x350] sm:$0xff] %v1496
        %1878 = vst [vmem:[%s266 + $0x358] sm:$0xff] %v1498
        %1879 = vst [vmem:[%s266 + $0x360] sm:$0xff] %v1609
        %1880 = vst [vmem:[%s266 + $0x368] sm:$0xff] %v1611
        %1881 = vst [vmem:[%s266 + $0x370] sm:$0xff] %v1722
        %1882 = vst.msk [vmem:[%s266 + $0x378] sm:$0xff] %vm1785, %v1724
        %1883 = vst [vmem:[%s266 + $0x380] sm:$0xff] %v935
        %1884 = vst [vmem:[%s266 + $0x388] sm:$0xff] %v937
        %1885 = vst [vmem:[%s266 + $0x390] sm:$0xff] %v1048
        %1886 = vst [vmem:[%s266 + $0x398] sm:$0xff] %v1050
        %1887 = vst [vmem:[%s266 + $0x3a0] sm:$0xff] %v1161
        %1888 = vst [vmem:[%s266 + $0x3a8] sm:$0xff] %v1163
        %1889 = vst [vmem:[%s266 + $0x3b0] sm:$0xff] %v1274
        %1890 = vst [vmem:[%s266 + $0x3b8] sm:$0xff] %v1276
        %1891 = vst [vmem:[%s266 + $0x3c0] sm:$0xff] %v1387
        %1892 = vst [vmem:[%s266 + $0x3c8] sm:$0xff] %v1389
        %1893 = vst [vmem:[%s266 + $0x3d0] sm:$0xff] %v1500
        %1894 = vst [vmem:[%s266 + $0x3d8] sm:$0xff] %v1502
        %1895 = vst [vmem:[%s266 + $0x3e0] sm:$0xff] %v1613
        %1896 = vst [vmem:[%s266 + $0x3e8] sm:$0xff] %v1615
        %1897 = vst [vmem:[%s266 + $0x3f0] sm:$0xff] %v1726
        %1898 = vst.msk [vmem:[%s266 + $0x3f8] sm:$0xff] %vm1785, %v1728
        %1899 = vst [vmem:[%s266 + $0x400] sm:$0xff] %v941
        %1900 = vst [vmem:[%s266 + $0x408] sm:$0xff] %v943
        %1901 = vst [vmem:[%s266 + $0x410] sm:$0xff] %v1054
        %1902 = vst [vmem:[%s266 + $0x418] sm:$0xff] %v1056
        %1903 = vst [vmem:[%s266 + $0x420] sm:$0xff] %v1167
        %1904 = vst [vmem:[%s266 + $0x428] sm:$0xff] %v1169
        %1905 = vst [vmem:[%s266 + $0x430] sm:$0xff] %v1280
        %1906 = vst [vmem:[%s266 + $0x438] sm:$0xff] %v1282
        %1907 = vst [vmem:[%s266 + $0x440] sm:$0xff] %v1393
        %1908 = vst [vmem:[%s266 + $0x448] sm:$0xff] %v1395
        %1909 = vst [vmem:[%s266 + $0x450] sm:$0xff] %v1506
        %1910 = vst [vmem:[%s266 + $0x458] sm:$0xff] %v1508
        %1911 = vst [vmem:[%s266 + $0x460] sm:$0xff] %v1619
        %1912 = vst [vmem:[%s266 + $0x468] sm:$0xff] %v1621
        %1913 = vst [vmem:[%s266 + $0x470] sm:$0xff] %v1732
        %1914 = vst.msk [vmem:[%s266 + $0x478] sm:$0xff] %vm1785, %v1734
        %1915 = vst [vmem:[%s266 + $0x480] sm:$0xff] %v945
        %1916 = vst [vmem:[%s266 + $0x488] sm:$0xff] %v947
        %1917 = vst [vmem:[%s266 + $0x490] sm:$0xff] %v1058
        %1918 = vst [vmem:[%s266 + $0x498] sm:$0xff] %v1060
        %1919 = vst [vmem:[%s266 + $0x4a0] sm:$0xff] %v1171
        %1920 = vst [vmem:[%s266 + $0x4a8] sm:$0xff] %v1173
        %1921 = vst [vmem:[%s266 + $0x4b0] sm:$0xff] %v1284
        %1922 = vst [vmem:[%s266 + $0x4b8] sm:$0xff] %v1286
        %1923 = vst [vmem:[%s266 + $0x4c0] sm:$0xff] %v1397
        %1924 = vst [vmem:[%s266 + $0x4c8] sm:$0xff] %v1399
        %1925 = vst [vmem:[%s266 + $0x4d0] sm:$0xff] %v1510
        %1926 = vst [vmem:[%s266 + $0x4d8] sm:$0xff] %v1512
        %1927 = vst [vmem:[%s266 + $0x4e0] sm:$0xff] %v1623
        %1928 = vst [vmem:[%s266 + $0x4e8] sm:$0xff] %v1625
        %1929 = vst [vmem:[%s266 + $0x4f0] sm:$0xff] %v1736
        %1930 = vst.msk [vmem:[%s266 + $0x4f8] sm:$0xff] %vm1785, %v1738
        %1931 = vst [vmem:[%s266 + $0x500] sm:$0xff] %v951
        %1932 = vst [vmem:[%s266 + $0x508] sm:$0xff] %v953
        %1933 = vst [vmem:[%s266 + $0x510] sm:$0xff] %v1064
        %1934 = vst [vmem:[%s266 + $0x518] sm:$0xff] %v1066
        %1935 = vst [vmem:[%s266 + $0x520] sm:$0xff] %v1177
        %1936 = vst [vmem:[%s266 + $0x528] sm:$0xff] %v1179
        %1937 = vst [vmem:[%s266 + $0x530] sm:$0xff] %v1290
        %1938 = vst [vmem:[%s266 + $0x538] sm:$0xff] %v1292
        %1939 = vst [vmem:[%s266 + $0x540] sm:$0xff] %v1403
        %1940 = vst [vmem:[%s266 + $0x548] sm:$0xff] %v1405
        %1941 = vst [vmem:[%s266 + $0x550] sm:$0xff] %v1516
        %1942 = vst [vmem:[%s266 + $0x558] sm:$0xff] %v1518
        %1943 = vst [vmem:[%s266 + $0x560] sm:$0xff] %v1629
        %1944 = vst [vmem:[%s266 + $0x568] sm:$0xff] %v1631
        %1945 = vst [vmem:[%s266 + $0x570] sm:$0xff] %v1742
        %1946 = vst.msk [vmem:[%s266 + $0x578] sm:$0xff] %vm1785, %v1744
        %1947 = vst [vmem:[%s266 + $0x580] sm:$0xff] %v955
        %1948 = vst [vmem:[%s266 + $0x588] sm:$0xff] %v957
        %1949 = vst [vmem:[%s266 + $0x590] sm:$0xff] %v1068
        %1950 = vst [vmem:[%s266 + $0x598] sm:$0xff] %v1070
        %1951 = vst [vmem:[%s266 + $0x5a0] sm:$0xff] %v1181
        %1952 = vst [vmem:[%s266 + $0x5a8] sm:$0xff] %v1183
        %1953 = vst [vmem:[%s266 + $0x5b0] sm:$0xff] %v1294
        %1954 = vst [vmem:[%s266 + $0x5b8] sm:$0xff] %v1296
        %1955 = vst [vmem:[%s266 + $0x5c0] sm:$0xff] %v1407
        %1956 = vst [vmem:[%s266 + $0x5c8] sm:$0xff] %v1409
        %1957 = vst [vmem:[%s266 + $0x5d0] sm:$0xff] %v1520
        %1958 = vst [vmem:[%s266 + $0x5d8] sm:$0xff] %v1522
        %1959 = vst [vmem:[%s266 + $0x5e0] sm:$0xff] %v1633
        %1960 = vst [vmem:[%s266 + $0x5e8] sm:$0xff] %v1635
        %1961 = vst [vmem:[%s266 + $0x5f0] sm:$0xff] %v1746
        %1962 = vst.msk [vmem:[%s266 + $0x5f8] sm:$0xff] %vm1785, %v1748
        %1963 = vst [vmem:[%s266 + $0x600] sm:$0xff] %v961
        %1964 = vst [vmem:[%s266 + $0x608] sm:$0xff] %v963
        %1965 = vst [vmem:[%s266 + $0x610] sm:$0xff] %v1074
        %1966 = vst [vmem:[%s266 + $0x618] sm:$0xff] %v1076
        %1967 = vst [vmem:[%s266 + $0x620] sm:$0xff] %v1187
        %1968 = vst [vmem:[%s266 + $0x628] sm:$0xff] %v1189
        %1969 = vst [vmem:[%s266 + $0x630] sm:$0xff] %v1300
        %1970 = vst [vmem:[%s266 + $0x638] sm:$0xff] %v1302
        %1971 = vst [vmem:[%s266 + $0x640] sm:$0xff] %v1413
        %1972 = vst [vmem:[%s266 + $0x648] sm:$0xff] %v1415
        %1973 = vst [vmem:[%s266 + $0x650] sm:$0xff] %v1526
        %1974 = vst [vmem:[%s266 + $0x658] sm:$0xff] %v1528
        %1975 = vst [vmem:[%s266 + $0x660] sm:$0xff] %v1639
        %1976 = vst [vmem:[%s266 + $0x668] sm:$0xff] %v1641
        %1977 = vst [vmem:[%s266 + $0x670] sm:$0xff] %v1752
        %1978 = vst.msk [vmem:[%s266 + $0x678] sm:$0xff] %vm1785, %v1754
        %1979 = vst [vmem:[%s266 + $0x680] sm:$0xff] %v965
        %1980 = vst [vmem:[%s266 + $0x688] sm:$0xff] %v967
        %1981 = vst [vmem:[%s266 + $0x690] sm:$0xff] %v1078
        %1982 = vst [vmem:[%s266 + $0x698] sm:$0xff] %v1080
        %1983 = vst [vmem:[%s266 + $0x6a0] sm:$0xff] %v1191
        %1984 = vst [vmem:[%s266 + $0x6a8] sm:$0xff] %v1193
        %1985 = vst [vmem:[%s266 + $0x6b0] sm:$0xff] %v1304
        %1986 = vst [vmem:[%s266 + $0x6b8] sm:$0xff] %v1306
        %1987 = vst [vmem:[%s266 + $0x6c0] sm:$0xff] %v1417
        %1988 = vst [vmem:[%s266 + $0x6c8] sm:$0xff] %v1419
        %1989 = vst [vmem:[%s266 + $0x6d0] sm:$0xff] %v1530
        %1990 = vst [vmem:[%s266 + $0x6d8] sm:$0xff] %v1532
        %1991 = vst [vmem:[%s266 + $0x6e0] sm:$0xff] %v1643
        %1992 = vst [vmem:[%s266 + $0x6e8] sm:$0xff] %v1645
        %1993 = vst [vmem:[%s266 + $0x6f0] sm:$0xff] %v1756
        %1994 = vst.msk [vmem:[%s266 + $0x6f8] sm:$0xff] %vm1785, %v1758
        %1995 = vst [vmem:[%s266 + $0x700] sm:$0xff] %v971
        %1996 = vst [vmem:[%s266 + $0x708] sm:$0xff] %v973
        %1997 = vst [vmem:[%s266 + $0x710] sm:$0xff] %v1084
        %1998 = vst [vmem:[%s266 + $0x718] sm:$0xff] %v1086
        %1999 = vst [vmem:[%s266 + $0x720] sm:$0xff] %v1197
        %2000 = vst [vmem:[%s266 + $0x728] sm:$0xff] %v1199
        %2001 = vst [vmem:[%s266 + $0x730] sm:$0xff] %v1310
        %2002 = vst [vmem:[%s266 + $0x738] sm:$0xff] %v1312
        %2003 = vst [vmem:[%s266 + $0x740] sm:$0xff] %v1423
        %2004 = vst [vmem:[%s266 + $0x748] sm:$0xff] %v1425
        %2005 = vst [vmem:[%s266 + $0x750] sm:$0xff] %v1536
        %2006 = vst [vmem:[%s266 + $0x758] sm:$0xff] %v1538
        %2007 = vst [vmem:[%s266 + $0x760] sm:$0xff] %v1649
        %2008 = vst [vmem:[%s266 + $0x768] sm:$0xff] %v1651
        %2009 = vst [vmem:[%s266 + $0x770] sm:$0xff] %v1762
        %2010 = vst.msk [vmem:[%s266 + $0x778] sm:$0xff] %vm1785, %v1764
        %2011 = vst [vmem:[%s266 + $0x780] sm:$0xff] %v975
        %2012 = vst [vmem:[%s266 + $0x788] sm:$0xff] %v977
        %2013 = vst [vmem:[%s266 + $0x790] sm:$0xff] %v1088
        %2014 = vst [vmem:[%s266 + $0x798] sm:$0xff] %v1090
        %2015 = vst [vmem:[%s266 + $0x7a0] sm:$0xff] %v1201
        %2016 = vst [vmem:[%s266 + $0x7a8] sm:$0xff] %v1203
        %2017 = vst [vmem:[%s266 + $0x7b0] sm:$0xff] %v1314
        %2018 = vst [vmem:[%s266 + $0x7b8] sm:$0xff] %v1316
        %2019 = vst [vmem:[%s266 + $0x7c0] sm:$0xff] %v1427
        %2020 = vst [vmem:[%s266 + $0x7c8] sm:$0xff] %v1429
        %2021 = vst [vmem:[%s266 + $0x7d0] sm:$0xff] %v1540
        %2022 = vst [vmem:[%s266 + $0x7d8] sm:$0xff] %v1542
        %2023 = vst [vmem:[%s266 + $0x7e0] sm:$0xff] %v1653
        %2024 = vst [vmem:[%s266 + $0x7e8] sm:$0xff] %v1655
        %2025 = vst [vmem:[%s266 + $0x7f0] sm:$0xff] %v1766
        %2026 = vst.msk [vmem:[%s266 + $0x7f8] sm:$0xff] %vm1785, %v1768
        %s2027 = smul.u32 16, %s21
        %p2028 = scmp.lt.s32.totalorder %s2027, 31
        %s2029 = scalar_select %p2028, %s2027, 31
        %s2030 = smul.addr %s2029, 16
        %s2031 = smul.addr %s2030, 8
        %s2032 = scalar_lea.vmem %s5, %s2031
        %s2033 = sand.u32 %s165, 1
        %s2034 = scalar_lea.sflag [#allocation3], %s2033
        %s2035 = sand.u32 %s165, 1
        %s2036 = smul.addr %s2035, 128
        %s2037 = scalar_lea.vmem [#allocation2], %s2036
        // Predicated region
        $region41: #{_lambda_.10} parent=39 // pred_check
          %p2038 = pneg %p149
        $region42: #{_lambda_.10} parent=39 // pred_check_branch
          %2040 = sbr.rel (%p2038) target = $region44
        $region43: #{_lambda_.10} parent=39 // pred_region
          %s2041 = smul.u32 16, %s21
        $region44: #{_lambda_.10} parent=39 // pred_fallthru
          _
        // Predicated region
        $region45: #{_lambda_.10} parent=39 // pred_check
          %p2042 = pneg %p175
        $region46: #{_lambda_.10} parent=39 // pred_check_branch
          %2044 = sbr.rel (%p2042) target = $region48
        $region47: #{_lambda_.10} parent=39 // pred_region
          %s2045 = smul.u32 16, %s21
          %s2047 = ssub.s32 2048, 2048
          %2048 = vsyncadd %s2034, %s2047
          %s2049 = smul.addr %s2045, 128
          %s2050 = scalar_lea.hbm %s6, %s2049
          %s2051 = sshll.u32 %s2037, 4
          %s2052 = int_to_ptr.vmem [resolvable:$true] %s2051
          %2057 = dma.vmem_to_hbm [thread:$0]  %s2052, 2048, %s2050, %s2034, 128, 128, 8
        $region48: #{_lambda_.10} parent=39 // pred_fallthru
          _
      $region40: #{_lambda_.10} parent=5 // pred_fallthru
        _
      %p2058 = scmp.le.s32.totalorder 2, %s16
      // Predicated region
      $region49: #{_lambda_.10} parent=5 // pred_check
        %p2059 = pneg %p2058
      $region50: #{_lambda_.10} parent=5 // pred_check_branch
        %2061 = sbr.rel (%p2059) target = $region52
      $region51: #{_lambda_.10} parent=5 // pred_region
        %s2062 = ssub.s32 %s16, 2
        // Predicated region
        $region53: #{_lambda_.10} parent=51 // pred_check
          %p2063 = pneg %p155
        $region54: #{_lambda_.10} parent=51 // pred_check_branch
          %2065 = sbr.rel (%p2063) target = $region56
        $region55: #{_lambda_.10} parent=51 // pred_region
          %s2066 = smul.u32 16, %s22
          %p2067 = scmp.lt.s32.totalorder %s2066, 31
          %s2068 = scalar_select %p2067, %s2066, 31
          %s2069 = smul.addr %s2068, 16
          %s2070 = smul.addr %s2069, 8
          %s2071 = scalar_lea.vmem %s5, %s2070
        $region56: #{_lambda_.10} parent=51 // pred_fallthru
          _
        // Predicated region
        $region57: #{_lambda_.10} parent=51 // pred_check
          %p2072 = pneg %p181
        $region58: #{_lambda_.10} parent=51 // pred_check_branch
          %2074 = sbr.rel (%p2072) target = $region60
        $region59: #{_lambda_.10} parent=51 // pred_region
          %s2075 = sand.u32 %s166, 1
          %s2076 = scalar_lea.sflag [#allocation3], %s2075
          %s2077 = sand.u32 %s166, 1
          %s2078 = smul.addr %s2077, 128
          %s2079 = scalar_lea.vmem [#allocation2], %s2078
          %2080 = dma.done %s2076, 2048
        $region60: #{_lambda_.10} parent=51 // pred_fallthru
          _
      $region52: #{_lambda_.10} parent=5 // pred_fallthru
        _
    $region6: #{_lambda_.10} parent=1 // loop_footer
      %s20 = sadd.s32 1, %s16
    $region7: #{_lambda_.10} parent=1 // loop_footer_branch
      %15 = sbr.rel target = $region3
    $region8: #{_lambda_.10} parent=1 // loop_exit
      _
    %2081 = vsyncpa [#allocation3], 1
    %s2082 = scalar_lea.sflag [#allocation3], 1
    %2083 = vsyncpa %s2082, 1

// kernel: _lambda_.8
$region0: #{_lambda_.8}
  #allocation0 [shape = 'u32[]', space=smem, size = 0x4, offset = 0x4, fixed_abs, tag = 'smem constant byte address 0x4 - core index']
  #allocation1 [shape = 'u32[144,128]{1,0:T(1,128)}', space=vmem, size = 0x12000, scoped, tag = 'internal scratch']
  #allocation2 [shape = 's32[1]{0}', space=sflag, size = 0x4, scoped, tag = 'scoped memory for _lambda_.8']
  #allocation3 [shape = 'u8[512]{0}', space=smem, size = 0x200, scoped, tag = 'prefetched SMEM operand 0']
  %s0 = inlined_call_operand.vmem [shape: s32[8], index: 0, kind: input, shape index: {}]
  %s1 = inlined_call_operand.vmem [shape: bf16[8,4,2,16,8], index: 1, kind: input, shape index: {}]
  %s2 = inlined_call_operand.vmem [shape: bf16[8,4,136,8], index: 2, kind: input, shape index: {}]
  %s3 = inlined_call_operand.vmem [shape: bf16[8,4,136,8], index: 3, kind: input, shape index: {}]
  %s4 = inlined_call_operand.vmem [shape: bf16[8,4,2,16,8], index: 4, kind: input, shape index: {}]
  %s5 = inlined_call_operand.vmem [shape: bf16[8,4,2,16,8], index: 5, kind: input, shape index: {}]
  %s6 = inlined_call_operand.vmem [shape: f32[8,2,16,32], index: 6, kind: output, shape index: {}]
  %s7 = sld [smem:[#allocation0]]
  $region61: #{_lambda_.8} parent=0
    _
  %s9 = ssub.s32 1, %s7
  %s10 = scalar_select 0, %s9, %s7
  %s11 = sshll.u32 %s0, 4
  %s12 = int_to_ptr.vmem [resolvable:$true] %s11
  %14 = dma.vmem_to_smem %s12, 16, [#allocation3], [#allocation2]
  %15 = dma.done [#allocation2], 16
  %16 = sfence
  loop: start=0, step=1, limit=10
  $region2: #{_lambda_.8} parent=0 // loop_pre_header
    _
  $region3: #{_lambda_.8} parent=0 // loop_header
    %s18 = sphi 0, %s22
    %p19 = scmp.ge.s32.totalorder %s18, 10
    %s28 = sphi 0, %s30
    %s31 = sphi 0, %s28
    %s32 = sphi 0, %s31
    %s48 = sphi 0, %s32
    %s54 = sphi 0, %s56
    %s57 = sphi 0, %s54
    %s58 = sphi 0, %s57
    %s74 = sphi 0, %s58
    %s80 = sphi 0, %s82
    %s83 = sphi 0, %s80
    %s84 = sphi 0, %s83
    %s100 = sphi 0, %s84
    %s106 = sphi 0, %s108
    %s109 = sphi 0, %s106
    %s110 = sphi 0, %s109
    %s126 = sphi 0, %s110
    %s132 = sphi 0, %s134
    %s135 = sphi 0, %s132
    %s136 = sphi 0, %s135
    %s152 = sphi 0, %s136
    %s158 = sphi 0, %s160
    %s161 = sphi 0, %s158
    %s162 = sphi 0, %s161
    %s178 = sphi 0, %s162
  $region4: #{_lambda_.8} parent=0 // loop_header_branch
    %21 = sbr.rel (%p19) target = $region8
  $region5: #{_lambda_.8} parent=0 // loop_body
    %s23 = ssub.s32 %s18, 1
    %s24 = ssub.s32 %s18, 2
    %s25 = sadd.s32 %s18, 1
    %s26 = ssub.s32 %s18, %s25
    %p27 = scmp.eq.s32.totalorder %s26, 0
    %s29 = sadd.s32 %s28, 1
    %s30 = scalar_select %p27, %s28, %s29
    %p33 = pneg %p27
    %p34 = scmp.eq.s32.totalorder %s18, 7
    %p35 = por %p33, %p34
    %p36 = scmp.ne.s32.totalorder %s28, %s31
    %p37 = scmp.eq.s32.totalorder %s18, 0
    %p38 = por %p36, %p37
    %p39 = scmp.ne.s32.totalorder %s28, %s31
    %p40 = scmp.eq.s32.totalorder %s23, 7
    %p41 = por %p39, %p40
    %p42 = scmp.ne.s32.totalorder %s31, %s32
    %p43 = scmp.eq.s32.totalorder %s23, 0
    %p44 = por %p42, %p43
    %p45 = scmp.ne.s32.totalorder %s31, %s32
    %p46 = scmp.eq.s32.totalorder %s24, 7
    %p47 = por %p45, %p46
    %p49 = scmp.ne.s32.totalorder %s32, %s48
    %p50 = scmp.eq.s32.totalorder %s24, 0
    %p51 = por %p49, %p50
    %s52 = ssub.s32 %s18, %s25
    %p53 = scmp.eq.s32.totalorder %s52, 0
    %s55 = sadd.s32 %s54, 1
    %s56 = scalar_select %p53, %s54, %s55
    %p59 = pneg %p53
    %p60 = scmp.eq.s32.totalorder %s18, 7
    %p61 = por %p59, %p60
    %p62 = scmp.ne.s32.totalorder %s54, %s57
    %p63 = scmp.eq.s32.totalorder %s18, 0
    %p64 = por %p62, %p63
    %p65 = scmp.ne.s32.totalorder %s54, %s57
    %p66 = scmp.eq.s32.totalorder %s23, 7
    %p67 = por %p65, %p66
    %p68 = scmp.ne.s32.totalorder %s57, %s58
    %p69 = scmp.eq.s32.totalorder %s23, 0
    %p70 = por %p68, %p69
    %p71 = scmp.ne.s32.totalorder %s57, %s58
    %p72 = scmp.eq.s32.totalorder %s24, 7
    %p73 = por %p71, %p72
    %p75 = scmp.ne.s32.totalorder %s58, %s74
    %p76 = scmp.eq.s32.totalorder %s24, 0
    %p77 = por %p75, %p76
    %s78 = ssub.s32 %s18, %s25
    %p79 = scmp.eq.s32.totalorder %s78, 0
    %s81 = sadd.s32 %s80, 1
    %s82 = scalar_select %p79, %s80, %s81
    %p85 = pneg %p79
    %p86 = scmp.eq.s32.totalorder %s18, 7
    %p87 = por %p85, %p86
    %p88 = scmp.ne.s32.totalorder %s80, %s83
    %p89 = scmp.eq.s32.totalorder %s18, 0
    %p90 = por %p88, %p89
    %p91 = scmp.ne.s32.totalorder %s80, %s83
    %p92 = scmp.eq.s32.totalorder %s23, 7
    %p93 = por %p91, %p92
    %p94 = scmp.ne.s32.totalorder %s83, %s84
    %p95 = scmp.eq.s32.totalorder %s23, 0
    %p96 = por %p94, %p95
    %p97 = scmp.ne.s32.totalorder %s83, %s84
    %p98 = scmp.eq.s32.totalorder %s24, 7
    %p99 = por %p97, %p98
    %p101 = scmp.ne.s32.totalorder %s84, %s100
    %p102 = scmp.eq.s32.totalorder %s24, 0
    %p103 = por %p101, %p102
    %s104 = ssub.s32 %s18, %s25
    %p105 = scmp.eq.s32.totalorder %s104, 0
    %s107 = sadd.s32 %s106, 1
    %s108 = scalar_select %p105, %s106, %s107
    %p111 = pneg %p105
    %p112 = scmp.eq.s32.totalorder %s18, 7
    %p113 = por %p111, %p112
    %p114 = scmp.ne.s32.totalorder %s106, %s109
    %p115 = scmp.eq.s32.totalorder %s18, 0
    %p116 = por %p114, %p115
    %p117 = scmp.ne.s32.totalorder %s106, %s109
    %p118 = scmp.eq.s32.totalorder %s23, 7
    %p119 = por %p117, %p118
    %p120 = scmp.ne.s32.totalorder %s109, %s110
    %p121 = scmp.eq.s32.totalorder %s23, 0
    %p122 = por %p120, %p121
    %p123 = scmp.ne.s32.totalorder %s109, %s110
    %p124 = scmp.eq.s32.totalorder %s24, 7
    %p125 = por %p123, %p124
    %p127 = scmp.ne.s32.totalorder %s110, %s126
    %p128 = scmp.eq.s32.totalorder %s24, 0
    %p129 = por %p127, %p128
    %s130 = ssub.s32 %s18, %s25
    %p131 = scmp.eq.s32.totalorder %s130, 0
    %s133 = sadd.s32 %s132, 1
    %s134 = scalar_select %p131, %s132, %s133
    %p137 = pneg %p131
    %p138 = scmp.eq.s32.totalorder %s18, 7
    %p139 = por %p137, %p138
    %p140 = scmp.ne.s32.totalorder %s132, %s135
    %p141 = scmp.eq.s32.totalorder %s18, 0
    %p142 = por %p140, %p141
    %p143 = scmp.ne.s32.totalorder %s132, %s135
    %p144 = scmp.eq.s32.totalorder %s23, 7
    %p145 = por %p143, %p144
    %p146 = scmp.ne.s32.totalorder %s135, %s136
    %p147 = scmp.eq.s32.totalorder %s23, 0
    %p148 = por %p146, %p147
    %p149 = scmp.ne.s32.totalorder %s135, %s136
    %p150 = scmp.eq.s32.totalorder %s24, 7
    %p151 = por %p149, %p150
    %p153 = scmp.ne.s32.totalorder %s136, %s152
    %p154 = scmp.eq.s32.totalorder %s24, 0
    %p155 = por %p153, %p154
    %s156 = ssub.s32 %s18, %s25
    %p157 = scmp.eq.s32.totalorder %s156, 0
    %s159 = sadd.s32 %s158, 1
    %s160 = scalar_select %p157, %s158, %s159
    %p163 = pneg %p157
    %p164 = scmp.eq.s32.totalorder %s18, 7
    %p165 = por %p163, %p164
    %p166 = scmp.ne.s32.totalorder %s158, %s161
    %p167 = scmp.eq.s32.totalorder %s18, 0
    %p168 = por %p166, %p167
    %p169 = scmp.ne.s32.totalorder %s158, %s161
    %p170 = scmp.eq.s32.totalorder %s23, 7
    %p171 = por %p169, %p170
    %p172 = scmp.ne.s32.totalorder %s161, %s162
    %p173 = scmp.eq.s32.totalorder %s23, 0
    %p174 = por %p172, %p173
    %p175 = scmp.ne.s32.totalorder %s161, %s162
    %p176 = scmp.eq.s32.totalorder %s24, 7
    %p177 = por %p175, %p176
    %p179 = scmp.ne.s32.totalorder %s162, %s178
    %p180 = scmp.eq.s32.totalorder %s24, 0
    %p181 = por %p179, %p180
    %p182 = scmp.le.s32.totalorder 1, %s18
    %p183 = scmp.lt.s32.totalorder %s18, 9
    %p184 = pnand %p182, %p183
    %p185 = pneg %p184
    // Predicated region
    $region9: #{_lambda_.8} parent=5 // pred_check
      _
    $region10: #{_lambda_.8} parent=5 // pred_check_branch
      %187 = sbr.rel (%p184) target = $region12
    $region11: #{_lambda_.8} parent=5 // pred_region
      %s188 = ssub.s32 %s18, 1
    $region12: #{_lambda_.8} parent=5 // pred_fallthru
      _
    %p189 = scmp.lt.s32.totalorder %s18, 8
    // Predicated region
    $region13: #{_lambda_.8} parent=5 // pred_check
      %p190 = pneg %p189
    $region14: #{_lambda_.8} parent=5 // pred_check_branch
      %192 = sbr.rel (%p190) target = $region16
    $region15: #{_lambda_.8} parent=5 // pred_region
      // Predicated region
      $region17: #{_lambda_.8} parent=15 // pred_check
        %p193 = pneg %p38
      $region18: #{_lambda_.8} parent=15 // pred_check_branch
        %195 = sbr.rel (%p193) target = $region20
      $region19: #{_lambda_.8} parent=15 // pred_region
        %p196 = scmp.lt.s32.totalorder %s18, 7
        %s197 = scalar_select %p196, %s18, 7
        %s198 = smul.addr %s197, 16
        %s199 = smul.addr %s198, 4
        %s200 = scalar_lea.vmem %s1, %s199
      $region20: #{_lambda_.8} parent=15 // pred_fallthru
        _
      // Predicated region
      $region21: #{_lambda_.8} parent=15 // pred_check
        %p201 = pneg %p64
      $region22: #{_lambda_.8} parent=15 // pred_check_branch
        %203 = sbr.rel (%p201) target = $region24
      $region23: #{_lambda_.8} parent=15 // pred_region
        %p204 = scmp.lt.s32.totalorder %s18, 7
        %s205 = scalar_select %p204, %s18, 7
        %s206 = smul.addr %s205, 68
        %s207 = smul.addr %s206, 4
        %s208 = scalar_lea.vmem %s2, %s207
      $region24: #{_lambda_.8} parent=15 // pred_fallthru
        _
      // Predicated region
      $region25: #{_lambda_.8} parent=15 // pred_check
        %p209 = pneg %p90
      $region26: #{_lambda_.8} parent=15 // pred_check_branch
        %211 = sbr.rel (%p209) target = $region28
      $region27: #{_lambda_.8} parent=15 // pred_region
        %p212 = scmp.lt.s32.totalorder %s18, 7
        %s213 = scalar_select %p212, %s18, 7
        %s214 = smul.addr %s213, 68
        %s215 = smul.addr %s214, 4
        %s216 = scalar_lea.vmem %s3, %s215
      $region28: #{_lambda_.8} parent=15 // pred_fallthru
        _
      // Predicated region
      $region29: #{_lambda_.8} parent=15 // pred_check
        %p217 = pneg %p116
      $region30: #{_lambda_.8} parent=15 // pred_check_branch
        %219 = sbr.rel (%p217) target = $region32
      $region31: #{_lambda_.8} parent=15 // pred_region
        %p220 = scmp.lt.s32.totalorder %s18, 7
        %s221 = scalar_select %p220, %s18, 7
        %s222 = smul.addr %s221, 16
        %s223 = smul.addr %s222, 4
        %s224 = scalar_lea.vmem %s4, %s223
      $region32: #{_lambda_.8} parent=15 // pred_fallthru
        _
      // Predicated region
      $region33: #{_lambda_.8} parent=15 // pred_check
        %p225 = pneg %p142
      $region34: #{_lambda_.8} parent=15 // pred_check_branch
        %227 = sbr.rel (%p225) target = $region36
      $region35: #{_lambda_.8} parent=15 // pred_region
        %p228 = scmp.lt.s32.totalorder %s18, 7
        %s229 = scalar_select %p228, %s18, 7
        %s230 = smul.addr %s229, 16
        %s231 = smul.addr %s230, 4
        %s232 = scalar_lea.vmem %s5, %s231
      $region36: #{_lambda_.8} parent=15 // pred_fallthru
        _
    $region16: #{_lambda_.8} parent=5 // pred_fallthru
      _
    %p233 = scmp.le.s32.totalorder 1, %s18
    %p234 = scmp.lt.s32.totalorder %s18, 9
    %p235 = pnand %p233, %p234
    %p236 = pneg %p235
    // Predicated region
    $region37: #{_lambda_.8} parent=5 // pred_check
      _
    $region38: #{_lambda_.8} parent=5 // pred_check_branch
      %238 = sbr.rel (%p235) target = $region40
    $region39: #{_lambda_.8} parent=5 // pred_region
      %s239 = ssub.s32 %s18, 1
      %p240 = scmp.lt.s32.totalorder %s23, 7
      %s241 = scalar_select %p240, %s23, 7
      %s242 = smul.addr %s241, 16
      %s243 = smul.addr %s242, 4
      %s244 = scalar_lea.vmem %s1, %s243
      %p245 = pneg %p44
      %p246 = pneg %p41
      %p247 = scmp.lt.s32.totalorder %s23, 7
      %s248 = scalar_select %p247, %s23, 7
      %s249 = smul.addr %s248, 68
      %s250 = smul.addr %s249, 4
      %s251 = scalar_lea.vmem %s2, %s250
      %p252 = pneg %p70
      %p253 = pneg %p67
      %p254 = scmp.lt.s32.totalorder %s23, 7
      %s255 = scalar_select %p254, %s23, 7
      %s256 = smul.addr %s255, 68
      %s257 = smul.addr %s256, 4
      %s258 = scalar_lea.vmem %s3, %s257
      %p259 = pneg %p96
      %p260 = pneg %p93
      %p261 = scmp.lt.s32.totalorder %s23, 7
      %s262 = scalar_select %p261, %s23, 7
      %s263 = smul.addr %s262, 16
      %s264 = smul.addr %s263, 4
      %s265 = scalar_lea.vmem %s4, %s264
      %p266 = pneg %p122
      %p267 = pneg %p119
      %p268 = scmp.lt.s32.totalorder %s23, 7
      %s269 = scalar_select %p268, %s23, 7
      %s270 = smul.addr %s269, 16
      %s271 = smul.addr %s270, 4
      %s272 = scalar_lea.vmem %s5, %s271
      %p273 = pneg %p148
      %p274 = pneg %p145
      %p275 = pneg %p174
      %p276 = pneg %p171
      %p277 = scmp.lt.s32.totalorder %s23, 7
      %s278 = scalar_select %p277, %s23, 7
      %s279 = smul.addr %s278, 4
      %s280 = smul.addr %s279, 8
      %s281 = scalar_lea.vmem %s6, %s280
      %p282 = scmp.lt.s32.totalorder %s23, 7
      %s283 = scalar_select %p282, %s23, 7
      %s284 = smul.addr %s283, 16
      %s285 = smul.addr %s284, 4
      %s286 = scalar_lea.vmem %s1, %s285
      %p287 = scmp.lt.s32.totalorder %s23, 7
      %s288 = scalar_select %p287, %s23, 7
      %s289 = smul.addr %s288, 68
      %s290 = smul.addr %s289, 4
      %s291 = scalar_lea.vmem %s2, %s290
      %p292 = scmp.lt.s32.totalorder %s23, 7
      %s293 = scalar_select %p292, %s23, 7
      %s294 = smul.addr %s293, 68
      %s295 = smul.addr %s294, 4
      %s296 = scalar_lea.vmem %s3, %s295
      %p297 = scmp.lt.s32.totalorder %s23, 7
      %s298 = scalar_select %p297, %s23, 7
      %s299 = smul.addr %s298, 16
      %s300 = smul.addr %s299, 4
      %s301 = scalar_lea.vmem %s4, %s300
      %p302 = scmp.lt.s32.totalorder %s23, 7
      %s303 = scalar_select %p302, %s23, 7
      %s304 = smul.addr %s303, 16
      %s305 = smul.addr %s304, 4
      %s306 = scalar_lea.vmem %s5, %s305
      %p307 = scmp.lt.s32.totalorder %s23, 7
      %s308 = scalar_select %p307, %s23, 7
      %s309 = smul.addr %s308, 4
      %s310 = smul.addr %s309, 8
      %s311 = scalar_lea.vmem %s6, %s310
      %s313 = sld [smem:[#allocation3 + %s23]]
      %p314 = scmp.gt.s32.totalorder %s313, 0
      // Predicated region
      $region41: #{_lambda_.8} parent=39 // pred_check
        %p315 = pneg %p314
      $region42: #{_lambda_.8} parent=39 // pred_check_branch
        %317 = sbr.rel (%p315) target = $region44
      $region43: #{_lambda_.8} parent=39 // pred_region
        %v318 = vld [vmem:[%s286] sm:$0xf]
        %v319 = vld [vmem:[%s286 + $0x4] sm:$0xf]
        %v320 = vld [vmem:[%s286 + $0x8] sm:$0xf]
        %v321 = vld [vmem:[%s286 + $0xc] sm:$0xf]
        %v322 = vld [vmem:[%s291] sm:$0xf]
        %v323 = vld [vmem:[%s291 + $0x4] sm:$0xf]
        %v324 = vld [vmem:[%s291 + $0x8] sm:$0xf]
        %v325 = vld [vmem:[%s291 + $0xc] sm:$0xf]
        %v326 = vld [vmem:[%s291 + $0x10] sm:$0xf]
        %v327 = vld [vmem:[%s291 + $0x14] sm:$0xf]
        %v328 = vld [vmem:[%s291 + $0x18] sm:$0xf]
        %v329 = vld [vmem:[%s291 + $0x1c] sm:$0xf]
        %v330 = vld [vmem:[%s291 + $0x20] sm:$0xf]
        %v331 = vld [vmem:[%s291 + $0x24] sm:$0xf]
        %v332 = vld [vmem:[%s291 + $0x28] sm:$0xf]
        %v333 = vld [vmem:[%s291 + $0x2c] sm:$0xf]
        %v334 = vld [vmem:[%s291 + $0x30] sm:$0xf]
        %v335 = vld [vmem:[%s291 + $0x34] sm:$0xf]
        %v336 = vld [vmem:[%s291 + $0x38] sm:$0xf]
        %v337 = vld [vmem:[%s291 + $0x3c] sm:$0xf]
        %v338 = vld [vmem:[%s291 + $0x40] sm:$0xf]
        %v339 = vld [vmem:[%s296] sm:$0xf]
        %v340 = vld [vmem:[%s296 + $0x4] sm:$0xf]
        %v341 = vld [vmem:[%s296 + $0x8] sm:$0xf]
        %v342 = vld [vmem:[%s296 + $0xc] sm:$0xf]
        %v343 = vld [vmem:[%s296 + $0x10] sm:$0xf]
        %v344 = vld [vmem:[%s296 + $0x14] sm:$0xf]
        %v345 = vld [vmem:[%s296 + $0x18] sm:$0xf]
        %v346 = vld [vmem:[%s296 + $0x1c] sm:$0xf]
        %v347 = vld [vmem:[%s296 + $0x20] sm:$0xf]
        %v348 = vld [vmem:[%s296 + $0x24] sm:$0xf]
        %v349 = vld [vmem:[%s296 + $0x28] sm:$0xf]
        %v350 = vld [vmem:[%s296 + $0x2c] sm:$0xf]
        %v351 = vld [vmem:[%s296 + $0x30] sm:$0xf]
        %v352 = vld [vmem:[%s296 + $0x34] sm:$0xf]
        %v353 = vld [vmem:[%s296 + $0x38] sm:$0xf]
        %v354 = vld [vmem:[%s296 + $0x3c] sm:$0xf]
        %v355 = vld [vmem:[%s296 + $0x40] sm:$0xf]
        %v360 = vunpack.c.l.b16 %v318
        %v361 = vunpack.c.l.b16 %v319
        %v362 = vunpack.c.l.b16 %v320
        %v363 = vunpack.c.l.b16 %v321
        %v364 = vpack.c.b16 %v361, %v360
        %v365 = vpack.c.b16 %v363, %v362
        %v383 = vunpack.c.l.b16 %v322
        %v384 = vunpack.c.l.b16 %v323
        %v385 = vunpack.c.l.b16 %v324
        %v386 = vunpack.c.l.b16 %v325
        %v387 = vunpack.c.l.b16 %v326
        %v388 = vunpack.c.l.b16 %v327
        %v389 = vunpack.c.l.b16 %v328
        %v390 = vunpack.c.l.b16 %v329
        %v391 = vunpack.c.l.b16 %v330
        %v392 = vunpack.c.l.b16 %v331
        %v393 = vunpack.c.l.b16 %v332
        %v394 = vunpack.c.l.b16 %v333
        %v395 = vunpack.c.l.b16 %v334
        %v396 = vunpack.c.l.b16 %v335
        %v397 = vunpack.c.l.b16 %v336
        %v398 = vunpack.c.l.b16 %v337
        %v399 = vunpack.c.l.b16 %v338
        %v400 = vpack.c.b16 %v384, %v383
        %v401 = vpack.c.b16 %v386, %v385
        %v402 = vpack.c.b16 %v388, %v387
        %v403 = vpack.c.b16 %v390, %v389
        %v404 = vpack.c.b16 %v392, %v391
        %v405 = vpack.c.b16 %v394, %v393
        %v406 = vpack.c.b16 %v396, %v395
        %v407 = vpack.c.b16 %v398, %v397
        %v408 = vpack.c.b16 %v399, %v399
        %vm409 = vcmask 64512
        %v411 = vsel %vm409, %v364, 0
        %v414 = vsel %vm409, %v365, 0
        %v417 = vsel %vm409, %v400, 0
        %v420 = vsel %vm409, %v401, 0
        %v423 = vsel %vm409, %v402, 0
        %v426 = vsel %vm409, %v403, 0
        %v429 = vsel %vm409, %v404, 0
        %v432 = vsel %vm409, %v405, 0
        %v435 = vsel %vm409, %v406, 0
        %v438 = vsel %vm409, %v407, 0
        %v441 = vsel %vm409, %v408, 0
        %443 = vmatprep.subr.bf16.mxu0 0
        %444 = vmatpush1.bf16.xpose.msra.mxu0 %v438
        %445 = vmatprep.subr.bf16.mxu0 0
        %446 = vmatpush1.bf16.xpose.msra.mxu0 %v435
        %447 = vmatprep.subr.bf16.mxu0 0
        %448 = vmatpush1.bf16.xpose.msra.mxu0 %v432
        %449 = vmatprep.subr.bf16.mxu0 0
        %450 = vmatpush1.bf16.xpose.msra.mxu0 %v429
        %451 = vmatprep.subr.bf16.mxu0 0
        %452 = vmatpush1.bf16.xpose.msra.mxu0 %v426
        %453 = vmatprep.subr.bf16.mxu0 0
        %454 = vmatpush1.bf16.xpose.msra.mxu0 %v423
        %455 = vmatprep.subr.bf16.mxu0 0
        %456 = vmatpush1.bf16.xpose.msra.mxu0 %v420
        %457 = vmatprep.subr.bf16.mxu0 0
        %458 = vmatpush1.bf16.xpose.msra.mxu0 %v417
        %459 = vmatprep.subr.bf16.mxu0 0
        %460 = vmatpush2.bf16.xpose.msra.mxu0 0
        %461 = vmatprep.subr.bf16.mxu0 0
        %462 = vmatpush2.bf16.xpose.msra.mxu0 0
        %463 = vmatprep.subr.bf16.mxu0 0
        %464 = vmatpush2.bf16.xpose.msra.mxu0 0
        %465 = vmatprep.subr.bf16.mxu0 0
        %466 = vmatpush2.bf16.xpose.msra.mxu0 0
        %467 = vmatprep.subr.bf16.mxu0 0
        %468 = vmatpush2.bf16.xpose.msra.mxu0 0
        %469 = vmatprep.subr.bf16.mxu0 0
        %470 = vmatpush2.bf16.xpose.msra.mxu0 0
        %471 = vmatprep.subr.bf16.mxu0 0
        %472 = vmatpush2.bf16.xpose.msra.mxu0 0
        %473 = vmatprep.subr.bf16.mxu0 0
        %474 = vmatpush2.bf16.xpose.msra.mxu0 %v441
        %475 = vmatprep.mubr.bf16.mxu0 0
        %476 = vmatmul.mubr.bf16.gmra.mxu0 %v411
        %v477 = vpop.f32.mrf.mxu0
        %v478 = vadd.f32 0.0, %v477
        %v479 = vpop.f32.mrf.mxu0
        %v480 = vadd.f32 0.0, %v479
        %v481 = vpop.f32.mrf.mxu0
        %v482 = vadd.f32 0.0, %v481
        %v483 = vpop.f32.mrf.mxu0
        %v484 = vadd.f32 0.0, %v483
        %485 = vmatprep.mubr.bf16.mxu0 0
        %486 = vmatmul.mubr.bf16.gmra.mxu0 %v414
        %v487 = vpop.f32.mrf.mxu0
        %v488 = vadd.f32 0.0, %v487
        %v489 = vpop.f32.mrf.mxu0
        %v490 = vadd.f32 0.0, %v489
        %v491 = vpop.f32.mrf.mxu0
        %v492 = vadd.f32 0.0, %v491
        %v493 = vpop.f32.mrf.mxu0
        %v494 = vadd.f32 0.0, %v493
        %495 = vdwg.mxu0
        %v496 = vsel %vm409, %v480, -inf
        %v497 = vmax.f32 %v478, %v496
        %498 = vmax.xlane.f32.xlu0 %v497
        %v499 = vpop.xlane.xlu0 %498
        %v500 = vsel %vm409, %v484, -inf
        %v501 = vmax.f32 %v482, %v500
        %502 = vmax.xlane.f32.xlu0 %v501
        %v503 = vpop.xlane.xlu0 %502
        %v504 = vsel %vm409, %v490, -inf
        %v505 = vmax.f32 %v488, %v504
        %506 = vmax.xlane.f32.xlu0 %v505
        %v507 = vpop.xlane.xlu0 %506
        %v508 = vsel %vm409, %v494, -inf
        %v509 = vmax.f32 %v492, %v508
        %510 = vmax.xlane.f32.xlu0 %v509
        %v511 = vpop.xlane.xlu0 %510
        %v512 = vsub.f32 %v478, %v499
        %v513 = vsub.f32 %v480, %v499
        %v514 = vsub.f32 %v482, %v503
        %v515 = vsub.f32 %v484, %v503
        %v516 = vsub.f32 %v488, %v507
        %v517 = vsub.f32 %v490, %v507
        %v518 = vsub.f32 %v492, %v511
        %v519 = vsub.f32 %v494, %v511
        %v520 = vmul.f32 %v512, 1.442695
        %v521 = vpow.pop %v520
        %v522 = vmul.f32 %v513, 1.442695
        %v523 = vpow.pop %v522
        %v524 = vmul.f32 %v514, 1.442695
        %v525 = vpow.pop %v524
        %v526 = vmul.f32 %v515, 1.442695
        %v527 = vpow.pop %v526
        %v528 = vmul.f32 %v516, 1.442695
        %v529 = vpow.pop %v528
        %v530 = vmul.f32 %v517, 1.442695
        %v531 = vpow.pop %v530
        %v532 = vmul.f32 %v518, 1.442695
        %v533 = vpow.pop %v532
        %v534 = vmul.f32 %v519, 1.442695
        %v535 = vpow.pop %v534
        %v536 = vsel %vm409, %v523, 0.0
        %v537 = vadd.f32 %v521, %v536
        %538 = vadd.xlane.f32.xlu0 %v537
        %v539 = vpop.xlane.xlu0 %538
        %v540 = vsel %vm409, %v527, 0.0
        %v541 = vadd.f32 %v525, %v540
        %542 = vadd.xlane.f32.xlu0 %v541
        %v543 = vpop.xlane.xlu0 %542
        %v544 = vsel %vm409, %v531, 0.0
        %v545 = vadd.f32 %v529, %v544
        %546 = vadd.xlane.f32.xlu0 %v545
        %v547 = vpop.xlane.xlu0 %546
        %v548 = vsel %vm409, %v535, 0.0
        %v549 = vadd.f32 %v533, %v548
        %550 = vadd.xlane.f32.xlu0 %v549
        %v551 = vpop.xlane.xlu0 %550
        %v552 = vrcp.pop %v539
        %v553 = vrcp.pop %v543
        %v554 = vrcp.pop %v547
        %v555 = vrcp.pop %v551
        %v556 = vmul.f32 %v521, %v552
        %v557 = vmul.f32 %v523, %v552
        %v558 = vmul.f32 %v525, %v553
        %v559 = vmul.f32 %v527, %v553
        %v560 = vmul.f32 %v529, %v554
        %v561 = vmul.f32 %v531, %v554
        %v562 = vmul.f32 %v533, %v555
        %v563 = vmul.f32 %v535, %v555
        %v564 = vpack.c.bf16 %v558, %v556
        %v565 = vpack.c.bf16 %v559, %v557
        %v566 = vpack.c.bf16 %v562, %v560
        %v567 = vpack.c.bf16 %v563, %v561
        %v585 = vunpack.c.l.b16 %v339
        %v586 = vunpack.c.l.b16 %v340
        %v587 = vunpack.c.l.b16 %v341
        %v588 = vunpack.c.l.b16 %v342
        %v589 = vunpack.c.l.b16 %v343
        %v590 = vunpack.c.l.b16 %v344
        %v591 = vunpack.c.l.b16 %v345
        %v592 = vunpack.c.l.b16 %v346
        %v593 = vunpack.c.l.b16 %v347
        %v594 = vunpack.c.l.b16 %v348
        %v595 = vunpack.c.l.b16 %v349
        %v596 = vunpack.c.l.b16 %v350
        %v597 = vunpack.c.l.b16 %v351
        %v598 = vunpack.c.l.b16 %v352
        %v599 = vunpack.c.l.b16 %v353
        %v600 = vunpack.c.l.b16 %v354
        %v601 = vunpack.c.l.b16 %v355
        %v602 = vpack.c.b16 %v586, %v585
        %v603 = vpack.c.b16 %v588, %v587
        %v604 = vpack.c.b16 %v590, %v589
        %v605 = vpack.c.b16 %v592, %v591
        %v606 = vpack.c.b16 %v594, %v593
        %v607 = vpack.c.b16 %v596, %v595
        %v608 = vpack.c.b16 %v598, %v597
        %v609 = vpack.c.b16 %v600, %v599
        %v610 = vpack.c.b16 %v601, %v601
        %v620 = vsel %vm409, %v565, 0
        %v623 = vsel %vm409, %v567, 0
        %vm625 = vcmask 1043456
        %v627 = vsel %vm625, %v610, 0
        %629 = vmatprep.subr.bf16.mxu0 0
        %630 = vmatpush1.bf16.msra.mxu0 %v609
        %631 = vmatprep.subr.bf16.mxu0 0
        %632 = vmatpush1.bf16.msra.mxu0 %v608
        %633 = vmatprep.subr.bf16.mxu0 0
        %634 = vmatpush1.bf16.msra.mxu0 %v607
        %635 = vmatprep.subr.bf16.mxu0 0
        %636 = vmatpush1.bf16.msra.mxu0 %v606
        %637 = vmatprep.subr.bf16.mxu0 0
        %638 = vmatpush1.bf16.msra.mxu0 %v605
        %639 = vmatprep.subr.bf16.mxu0 0
        %640 = vmatpush1.bf16.msra.mxu0 %v604
        %641 = vmatprep.subr.bf16.mxu0 0
        %642 = vmatpush1.bf16.msra.mxu0 %v603
        %643 = vmatprep.subr.bf16.mxu0 0
        %644 = vmatpush1.bf16.msra.mxu0 %v602
        %645 = vmatprep.subr.bf16.mxu0 0
        %646 = vmatpush2.bf16.msra.mxu0 0
        %647 = vmatprep.subr.bf16.mxu0 0
        %648 = vmatpush2.bf16.msra.mxu0 0
        %649 = vmatprep.subr.bf16.mxu0 0
        %650 = vmatpush2.bf16.msra.mxu0 0
        %651 = vmatprep.subr.bf16.mxu0 0
        %652 = vmatpush2.bf16.msra.mxu0 0
        %653 = vmatprep.subr.bf16.mxu0 0
        %654 = vmatpush2.bf16.msra.mxu0 0
        %655 = vmatprep.subr.bf16.mxu0 0
        %656 = vmatpush2.bf16.msra.mxu0 0
        %657 = vmatprep.subr.bf16.mxu0 0
        %658 = vmatpush2.bf16.msra.mxu0 0
        %659 = vmatprep.subr.bf16.mxu0 0
        %660 = vmatpush2.bf16.msra.mxu0 %v627
        %661 = vmatprep.mubr.bf16.mxu0 %v620
        %662 = vmatmul.mubr.bf16.gmra.mxu0 %v564
        %v663 = vpop.f32.mrf.mxu0
        %v664 = vadd.f32 0.0, %v663
        %v665 = vpop.f32.mrf.mxu0
        %v666 = vpop.f32.mrf.mxu0
        %v667 = vadd.f32 0.0, %v666
        %v668 = vpop.f32.mrf.mxu0
        %669 = vmatprep.mubr.bf16.mxu0 %v623
        %670 = vmatmul.mubr.bf16.gmra.mxu0 %v566
        %v671 = vpop.f32.mrf.mxu0
        %v672 = vadd.f32 0.0, %v671
        %v673 = vpop.f32.mrf.mxu0
        %v674 = vpop.f32.mrf.mxu0
        %v675 = vadd.f32 0.0, %v674
        %v676 = vpop.f32.mrf.mxu0
        %677 = vdwg.mxu0
        %s678 = scalar_lea.vmem %s286, 16
        %v679 = vld [vmem:[%s678] sm:$0xf]
        %v680 = vld [vmem:[%s678 + $0x4] sm:$0xf]
        %v681 = vld [vmem:[%s678 + $0x8] sm:$0xf]
        %v682 = vld [vmem:[%s678 + $0xc] sm:$0xf]
        %s683 = scalar_lea.vmem %s291, 68
        %v684 = vld [vmem:[%s683] sm:$0xf]
        %v685 = vld [vmem:[%s683 + $0x4] sm:$0xf]
        %v686 = vld [vmem:[%s683 + $0x8] sm:$0xf]
        %v687 = vld [vmem:[%s683 + $0xc] sm:$0xf]
        %v688 = vld [vmem:[%s683 + $0x10] sm:$0xf]
        %v689 = vld [vmem:[%s683 + $0x14] sm:$0xf]
        %v690 = vld [vmem:[%s683 + $0x18] sm:$0xf]
        %v691 = vld [vmem:[%s683 + $0x1c] sm:$0xf]
        %v692 = vld [vmem:[%s683 + $0x20] sm:$0xf]
        %v693 = vld [vmem:[%s683 + $0x24] sm:$0xf]
        %v694 = vld [vmem:[%s683 + $0x28] sm:$0xf]
        %v695 = vld [vmem:[%s683 + $0x2c] sm:$0xf]
        %v696 = vld [vmem:[%s683 + $0x30] sm:$0xf]
        %v697 = vld [vmem:[%s683 + $0x34] sm:$0xf]
        %v698 = vld [vmem:[%s683 + $0x38] sm:$0xf]
        %v699 = vld [vmem:[%s683 + $0x3c] sm:$0xf]
        %v700 = vld [vmem:[%s683 + $0x40] sm:$0xf]
        %s701 = scalar_lea.vmem %s296, 68
        %v702 = vld [vmem:[%s701] sm:$0xf]
        %v703 = vld [vmem:[%s701 + $0x4] sm:$0xf]
        %v704 = vld [vmem:[%s701 + $0x8] sm:$0xf]
        %v705 = vld [vmem:[%s701 + $0xc] sm:$0xf]
        %v706 = vld [vmem:[%s701 + $0x10] sm:$0xf]
        %v707 = vld [vmem:[%s701 + $0x14] sm:$0xf]
        %v708 = vld [vmem:[%s701 + $0x18] sm:$0xf]
        %v709 = vld [vmem:[%s701 + $0x1c] sm:$0xf]
        %v710 = vld [vmem:[%s701 + $0x20] sm:$0xf]
        %v711 = vld [vmem:[%s701 + $0x24] sm:$0xf]
        %v712 = vld [vmem:[%s701 + $0x28] sm:$0xf]
        %v713 = vld [vmem:[%s701 + $0x2c] sm:$0xf]
        %v714 = vld [vmem:[%s701 + $0x30] sm:$0xf]
        %v715 = vld [vmem:[%s701 + $0x34] sm:$0xf]
        %v716 = vld [vmem:[%s701 + $0x38] sm:$0xf]
        %v717 = vld [vmem:[%s701 + $0x3c] sm:$0xf]
        %v718 = vld [vmem:[%s701 + $0x40] sm:$0xf]
        %v723 = vunpack.c.l.b16 %v679
        %v724 = vunpack.c.l.b16 %v680
        %v725 = vunpack.c.l.b16 %v681
        %v726 = vunpack.c.l.b16 %v682
        %v727 = vpack.c.b16 %v724, %v723
        %v728 = vpack.c.b16 %v726, %v725
        %v746 = vunpack.c.l.b16 %v684
        %v747 = vunpack.c.l.b16 %v685
        %v748 = vunpack.c.l.b16 %v686
        %v749 = vunpack.c.l.b16 %v687
        %v750 = vunpack.c.l.b16 %v688
        %v751 = vunpack.c.l.b16 %v689
        %v752 = vunpack.c.l.b16 %v690
        %v753 = vunpack.c.l.b16 %v691
        %v754 = vunpack.c.l.b16 %v692
        %v755 = vunpack.c.l.b16 %v693
        %v756 = vunpack.c.l.b16 %v694
        %v757 = vunpack.c.l.b16 %v695
        %v758 = vunpack.c.l.b16 %v696
        %v759 = vunpack.c.l.b16 %v697
        %v760 = vunpack.c.l.b16 %v698
        %v761 = vunpack.c.l.b16 %v699
        %v762 = vunpack.c.l.b16 %v700
        %v763 = vpack.c.b16 %v747, %v746
        %v764 = vpack.c.b16 %v749, %v748
        %v765 = vpack.c.b16 %v751, %v750
        %v766 = vpack.c.b16 %v753, %v752
        %v767 = vpack.c.b16 %v755, %v754
        %v768 = vpack.c.b16 %v757, %v756
        %v769 = vpack.c.b16 %v759, %v758
        %v770 = vpack.c.b16 %v761, %v760
        %v771 = vpack.c.b16 %v762, %v762
        %v773 = vsel %vm409, %v727, 0
        %v776 = vsel %vm409, %v728, 0
        %v779 = vsel %vm409, %v763, 0
        %v782 = vsel %vm409, %v764, 0
        %v785 = vsel %vm409, %v765, 0
        %v788 = vsel %vm409, %v766, 0
        %v791 = vsel %vm409, %v767, 0
        %v794 = vsel %vm409, %v768, 0
        %v797 = vsel %vm409, %v769, 0
        %v800 = vsel %vm409, %v770, 0
        %v803 = vsel %vm409, %v771, 0
        %805 = vmatprep.subr.bf16.mxu0 0
        %806 = vmatpush1.bf16.xpose.msra.mxu0 %v800
        %807 = vmatprep.subr.bf16.mxu0 0
        %808 = vmatpush1.bf16.xpose.msra.mxu0 %v797
        %809 = vmatprep.subr.bf16.mxu0 0
        %810 = vmatpush1.bf16.xpose.msra.mxu0 %v794
        %811 = vmatprep.subr.bf16.mxu0 0
        %812 = vmatpush1.bf16.xpose.msra.mxu0 %v791
        %813 = vmatprep.subr.bf16.mxu0 0
        %814 = vmatpush1.bf16.xpose.msra.mxu0 %v788
        %815 = vmatprep.subr.bf16.mxu0 0
        %816 = vmatpush1.bf16.xpose.msra.mxu0 %v785
        %817 = vmatprep.subr.bf16.mxu0 0
        %818 = vmatpush1.bf16.xpose.msra.mxu0 %v782
        %819 = vmatprep.subr.bf16.mxu0 0
        %820 = vmatpush1.bf16.xpose.msra.mxu0 %v779
        %821 = vmatprep.subr.bf16.mxu0 0
        %822 = vmatpush2.bf16.xpose.msra.mxu0 0
        %823 = vmatprep.subr.bf16.mxu0 0
        %824 = vmatpush2.bf16.xpose.msra.mxu0 0
        %825 = vmatprep.subr.bf16.mxu0 0
        %826 = vmatpush2.bf16.xpose.msra.mxu0 0
        %827 = vmatprep.subr.bf16.mxu0 0
        %828 = vmatpush2.bf16.xpose.msra.mxu0 0
        %829 = vmatprep.subr.bf16.mxu0 0
        %830 = vmatpush2.bf16.xpose.msra.mxu0 0
        %831 = vmatprep.subr.bf16.mxu0 0
        %832 = vmatpush2.bf16.xpose.msra.mxu0 0
        %833 = vmatprep.subr.bf16.mxu0 0
        %834 = vmatpush2.bf16.xpose.msra.mxu0 0
        %835 = vmatprep.subr.bf16.mxu0 0
        %836 = vmatpush2.bf16.xpose.msra.mxu0 %v803
        %837 = vmatprep.mubr.bf16.mxu0 0
        %838 = vmatmul.mubr.bf16.gmra.mxu0 %v773
        %v839 = vpop.f32.mrf.mxu0
        %v840 = vadd.f32 0.0, %v839
        %v841 = vpop.f32.mrf.mxu0
        %v842 = vadd.f32 0.0, %v841
        %v843 = vpop.f32.mrf.mxu0
        %v844 = vadd.f32 0.0, %v843
        %v845 = vpop.f32.mrf.mxu0
        %v846 = vadd.f32 0.0, %v845
        %847 = vmatprep.mubr.bf16.mxu0 0
        %848 = vmatmul.mubr.bf16.gmra.mxu0 %v776
        %v849 = vpop.f32.mrf.mxu0
        %v850 = vadd.f32 0.0, %v849
        %v851 = vpop.f32.mrf.mxu0
        %v852 = vadd.f32 0.0, %v851
        %v853 = vpop.f32.mrf.mxu0
        %v854 = vadd.f32 0.0, %v853
        %v855 = vpop.f32.mrf.mxu0
        %v856 = vadd.f32 0.0, %v855
        %857 = vdwg.mxu0
        %v858 = vsel %vm409, %v842, -inf
        %v859 = vmax.f32 %v840, %v858
        %860 = vmax.xlane.f32.xlu0 %v859
        %v861 = vpop.xlane.xlu0 %860
        %v862 = vsel %vm409, %v846, -inf
        %v863 = vmax.f32 %v844, %v862
        %864 = vmax.xlane.f32.xlu0 %v863
        %v865 = vpop.xlane.xlu0 %864
        %v866 = vsel %vm409, %v852, -inf
        %v867 = vmax.f32 %v850, %v866
        %868 = vmax.xlane.f32.xlu0 %v867
        %v869 = vpop.xlane.xlu0 %868
        %v870 = vsel %vm409, %v856, -inf
        %v871 = vmax.f32 %v854, %v870
        %872 = vmax.xlane.f32.xlu0 %v871
        %v873 = vpop.xlane.xlu0 %872
        %v874 = vsub.f32 %v840, %v861
        %v875 = vsub.f32 %v842, %v861
        %v876 = vsub.f32 %v844, %v865
        %v877 = vsub.f32 %v846, %v865
        %v878 = vsub.f32 %v850, %v869
        %v879 = vsub.f32 %v852, %v869
        %v880 = vsub.f32 %v854, %v873
        %v881 = vsub.f32 %v856, %v873
        %v882 = vmul.f32 %v874, 1.442695
        %v883 = vpow.pop %v882
        %v884 = vmul.f32 %v875, 1.442695
        %v885 = vpow.pop %v884
        %v886 = vmul.f32 %v876, 1.442695
        %v887 = vpow.pop %v886
        %v888 = vmul.f32 %v877, 1.442695
        %v889 = vpow.pop %v888
        %v890 = vmul.f32 %v878, 1.442695
        %v891 = vpow.pop %v890
        %v892 = vmul.f32 %v879, 1.442695
        %v893 = vpow.pop %v892
        %v894 = vmul.f32 %v880, 1.442695
        %v895 = vpow.pop %v894
        %v896 = vmul.f32 %v881, 1.442695
        %v897 = vpow.pop %v896
        %v898 = vsel %vm409, %v885, 0.0
        %v899 = vadd.f32 %v883, %v898
        %900 = vadd.xlane.f32.xlu0 %v899
        %v901 = vpop.xlane.xlu0 %900
        %v902 = vsel %vm409, %v889, 0.0
        %v903 = vadd.f32 %v887, %v902
        %904 = vadd.xlane.f32.xlu0 %v903
        %v905 = vpop.xlane.xlu0 %904
        %v906 = vsel %vm409, %v893, 0.0
        %v907 = vadd.f32 %v891, %v906
        %908 = vadd.xlane.f32.xlu0 %v907
        %v909 = vpop.xlane.xlu0 %908
        %v910 = vsel %vm409, %v897, 0.0
        %v911 = vadd.f32 %v895, %v910
        %912 = vadd.xlane.f32.xlu0 %v911
        %v913 = vpop.xlane.xlu0 %912
        %v914 = vrcp.pop %v901
        %v915 = vrcp.pop %v905
        %v916 = vrcp.pop %v909
        %v917 = vrcp.pop %v913
        %v918 = vmul.f32 %v883, %v914
        %v919 = vmul.f32 %v885, %v914
        %v920 = vmul.f32 %v887, %v915
        %v921 = vmul.f32 %v889, %v915
        %v922 = vmul.f32 %v891, %v916
        %v923 = vmul.f32 %v893, %v916
        %v924 = vmul.f32 %v895, %v917
        %v925 = vmul.f32 %v897, %v917
        %v926 = vpack.c.bf16 %v920, %v918
        %v927 = vpack.c.bf16 %v921, %v919
        %v928 = vpack.c.bf16 %v924, %v922
        %v929 = vpack.c.bf16 %v925, %v923
        %v947 = vunpack.c.l.b16 %v702
        %v948 = vunpack.c.l.b16 %v703
        %v949 = vunpack.c.l.b16 %v704
        %v950 = vunpack.c.l.b16 %v705
        %v951 = vunpack.c.l.b16 %v706
        %v952 = vunpack.c.l.b16 %v707
        %v953 = vunpack.c.l.b16 %v708
        %v954 = vunpack.c.l.b16 %v709
        %v955 = vunpack.c.l.b16 %v710
        %v956 = vunpack.c.l.b16 %v711
        %v957 = vunpack.c.l.b16 %v712
        %v958 = vunpack.c.l.b16 %v713
        %v959 = vunpack.c.l.b16 %v714
        %v960 = vunpack.c.l.b16 %v715
        %v961 = vunpack.c.l.b16 %v716
        %v962 = vunpack.c.l.b16 %v717
        %v963 = vunpack.c.l.b16 %v718
        %v964 = vpack.c.b16 %v948, %v947
        %v965 = vpack.c.b16 %v950, %v949
        %v966 = vpack.c.b16 %v952, %v951
        %v967 = vpack.c.b16 %v954, %v953
        %v968 = vpack.c.b16 %v956, %v955
        %v969 = vpack.c.b16 %v958, %v957
        %v970 = vpack.c.b16 %v960, %v959
        %v971 = vpack.c.b16 %v962, %v961
        %v972 = vpack.c.b16 %v963, %v963
        %v982 = vsel %vm409, %v927, 0
        %v985 = vsel %vm409, %v929, 0
        %v988 = vsel %vm625, %v972, 0
        %990 = vmatprep.subr.bf16.mxu0 0
        %991 = vmatpush1.bf16.msra.mxu0 %v971
        %992 = vmatprep.subr.bf16.mxu0 0
        %993 = vmatpush1.bf16.msra.mxu0 %v970
        %994 = vmatprep.subr.bf16.mxu0 0
        %995 = vmatpush1.bf16.msra.mxu0 %v969
        %996 = vmatprep.subr.bf16.mxu0 0
        %997 = vmatpush1.bf16.msra.mxu0 %v968
        %998 = vmatprep.subr.bf16.mxu0 0
        %999 = vmatpush1.bf16.msra.mxu0 %v967
        %1000 = vmatprep.subr.bf16.mxu0 0
        %1001 = vmatpush1.bf16.msra.mxu0 %v966
        %1002 = vmatprep.subr.bf16.mxu0 0
        %1003 = vmatpush1.bf16.msra.mxu0 %v965
        %1004 = vmatprep.subr.bf16.mxu0 0
        %1005 = vmatpush1.bf16.msra.mxu0 %v964
        %1006 = vmatprep.subr.bf16.mxu0 0
        %1007 = vmatpush2.bf16.msra.mxu0 0
        %1008 = vmatprep.subr.bf16.mxu0 0
        %1009 = vmatpush2.bf16.msra.mxu0 0
        %1010 = vmatprep.subr.bf16.mxu0 0
        %1011 = vmatpush2.bf16.msra.mxu0 0
        %1012 = vmatprep.subr.bf16.mxu0 0
        %1013 = vmatpush2.bf16.msra.mxu0 0
        %1014 = vmatprep.subr.bf16.mxu0 0
        %1015 = vmatpush2.bf16.msra.mxu0 0
        %1016 = vmatprep.subr.bf16.mxu0 0
        %1017 = vmatpush2.bf16.msra.mxu0 0
        %1018 = vmatprep.subr.bf16.mxu0 0
        %1019 = vmatpush2.bf16.msra.mxu0 0
        %1020 = vmatprep.subr.bf16.mxu0 0
        %1021 = vmatpush2.bf16.msra.mxu0 %v988
        %1022 = vmatprep.mubr.bf16.mxu0 %v982
        %1023 = vmatmul.mubr.bf16.gmra.mxu0 %v926
        %v1024 = vpop.f32.mrf.mxu0
        %v1025 = vadd.f32 0.0, %v1024
        %v1026 = vpop.f32.mrf.mxu0
        %v1027 = vpop.f32.mrf.mxu0
        %v1028 = vadd.f32 0.0, %v1027
        %v1029 = vpop.f32.mrf.mxu0
        %1030 = vmatprep.mubr.bf16.mxu0 %v985
        %1031 = vmatmul.mubr.bf16.gmra.mxu0 %v928
        %v1032 = vpop.f32.mrf.mxu0
        %v1033 = vadd.f32 0.0, %v1032
        %v1034 = vpop.f32.mrf.mxu0
        %v1035 = vpop.f32.mrf.mxu0
        %v1036 = vadd.f32 0.0, %v1035
        %v1037 = vpop.f32.mrf.mxu0
        %1038 = vdwg.mxu0
        %s1039 = scalar_lea.vmem %s286, 32
        %v1040 = vld [vmem:[%s1039] sm:$0xf]
        %v1041 = vld [vmem:[%s1039 + $0x4] sm:$0xf]
        %v1042 = vld [vmem:[%s1039 + $0x8] sm:$0xf]
        %v1043 = vld [vmem:[%s1039 + $0xc] sm:$0xf]
        %s1044 = scalar_lea.vmem %s291, 136
        %v1045 = vld [vmem:[%s1044] sm:$0xf]
        %v1046 = vld [vmem:[%s1044 + $0x4] sm:$0xf]
        %v1047 = vld [vmem:[%s1044 + $0x8] sm:$0xf]
        %v1048 = vld [vmem:[%s1044 + $0xc] sm:$0xf]
        %v1049 = vld [vmem:[%s1044 + $0x10] sm:$0xf]
        %v1050 = vld [vmem:[%s1044 + $0x14] sm:$0xf]
        %v1051 = vld [vmem:[%s1044 + $0x18] sm:$0xf]
        %v1052 = vld [vmem:[%s1044 + $0x1c] sm:$0xf]
        %v1053 = vld [vmem:[%s1044 + $0x20] sm:$0xf]
        %v1054 = vld [vmem:[%s1044 + $0x24] sm:$0xf]
        %v1055 = vld [vmem:[%s1044 + $0x28] sm:$0xf]
        %v1056 = vld [vmem:[%s1044 + $0x2c] sm:$0xf]
        %v1057 = vld [vmem:[%s1044 + $0x30] sm:$0xf]
        %v1058 = vld [vmem:[%s1044 + $0x34] sm:$0xf]
        %v1059 = vld [vmem:[%s1044 + $0x38] sm:$0xf]
        %v1060 = vld [vmem:[%s1044 + $0x3c] sm:$0xf]
        %v1061 = vld [vmem:[%s1044 + $0x40] sm:$0xf]
        %s1062 = scalar_lea.vmem %s296, 136
        %v1063 = vld [vmem:[%s1062] sm:$0xf]
        %v1064 = vld [vmem:[%s1062 + $0x4] sm:$0xf]
        %v1065 = vld [vmem:[%s1062 + $0x8] sm:$0xf]
        %v1066 = vld [vmem:[%s1062 + $0xc] sm:$0xf]
        %v1067 = vld [vmem:[%s1062 + $0x10] sm:$0xf]
        %v1068 = vld [vmem:[%s1062 + $0x14] sm:$0xf]
        %v1069 = vld [vmem:[%s1062 + $0x18] sm:$0xf]
        %v1070 = vld [vmem:[%s1062 + $0x1c] sm:$0xf]
        %v1071 = vld [vmem:[%s1062 + $0x20] sm:$0xf]
        %v1072 = vld [vmem:[%s1062 + $0x24] sm:$0xf]
        %v1073 = vld [vmem:[%s1062 + $0x28] sm:$0xf]
        %v1074 = vld [vmem:[%s1062 + $0x2c] sm:$0xf]
        %v1075 = vld [vmem:[%s1062 + $0x30] sm:$0xf]
        %v1076 = vld [vmem:[%s1062 + $0x34] sm:$0xf]
        %v1077 = vld [vmem:[%s1062 + $0x38] sm:$0xf]
        %v1078 = vld [vmem:[%s1062 + $0x3c] sm:$0xf]
        %v1079 = vld [vmem:[%s1062 + $0x40] sm:$0xf]
        %v1084 = vunpack.c.l.b16 %v1040
        %v1085 = vunpack.c.l.b16 %v1041
        %v1086 = vunpack.c.l.b16 %v1042
        %v1087 = vunpack.c.l.b16 %v1043
        %v1088 = vpack.c.b16 %v1085, %v1084
        %v1089 = vpack.c.b16 %v1087, %v1086
        %v1107 = vunpack.c.l.b16 %v1045
        %v1108 = vunpack.c.l.b16 %v1046
        %v1109 = vunpack.c.l.b16 %v1047
        %v1110 = vunpack.c.l.b16 %v1048
        %v1111 = vunpack.c.l.b16 %v1049
        %v1112 = vunpack.c.l.b16 %v1050
        %v1113 = vunpack.c.l.b16 %v1051
        %v1114 = vunpack.c.l.b16 %v1052
        %v1115 = vunpack.c.l.b16 %v1053
        %v1116 = vunpack.c.l.b16 %v1054
        %v1117 = vunpack.c.l.b16 %v1055
        %v1118 = vunpack.c.l.b16 %v1056
        %v1119 = vunpack.c.l.b16 %v1057
        %v1120 = vunpack.c.l.b16 %v1058
        %v1121 = vunpack.c.l.b16 %v1059
        %v1122 = vunpack.c.l.b16 %v1060
        %v1123 = vunpack.c.l.b16 %v1061
        %v1124 = vpack.c.b16 %v1108, %v1107
        %v1125 = vpack.c.b16 %v1110, %v1109
        %v1126 = vpack.c.b16 %v1112, %v1111
        %v1127 = vpack.c.b16 %v1114, %v1113
        %v1128 = vpack.c.b16 %v1116, %v1115
        %v1129 = vpack.c.b16 %v1118, %v1117
        %v1130 = vpack.c.b16 %v1120, %v1119
        %v1131 = vpack.c.b16 %v1122, %v1121
        %v1132 = vpack.c.b16 %v1123, %v1123
        %v1134 = vsel %vm409, %v1088, 0
        %v1137 = vsel %vm409, %v1089, 0
        %v1140 = vsel %vm409, %v1124, 0
        %v1143 = vsel %vm409, %v1125, 0
        %v1146 = vsel %vm409, %v1126, 0
        %v1149 = vsel %vm409, %v1127, 0
        %v1152 = vsel %vm409, %v1128, 0
        %v1155 = vsel %vm409, %v1129, 0
        %v1158 = vsel %vm409, %v1130, 0
        %v1161 = vsel %vm409, %v1131, 0
        %v1164 = vsel %vm409, %v1132, 0
        %1166 = vmatprep.subr.bf16.mxu0 0
        %1167 = vmatpush1.bf16.xpose.msra.mxu0 %v1161
        %1168 = vmatprep.subr.bf16.mxu0 0
        %1169 = vmatpush1.bf16.xpose.msra.mxu0 %v1158
        %1170 = vmatprep.subr.bf16.mxu0 0
        %1171 = vmatpush1.bf16.xpose.msra.mxu0 %v1155
        %1172 = vmatprep.subr.bf16.mxu0 0
        %1173 = vmatpush1.bf16.xpose.msra.mxu0 %v1152
        %1174 = vmatprep.subr.bf16.mxu0 0
        %1175 = vmatpush1.bf16.xpose.msra.mxu0 %v1149
        %1176 = vmatprep.subr.bf16.mxu0 0
        %1177 = vmatpush1.bf16.xpose.msra.mxu0 %v1146
        %1178 = vmatprep.subr.bf16.mxu0 0
        %1179 = vmatpush1.bf16.xpose.msra.mxu0 %v1143
        %1180 = vmatprep.subr.bf16.mxu0 0
        %1181 = vmatpush1.bf16.xpose.msra.mxu0 %v1140
        %1182 = vmatprep.subr.bf16.mxu0 0
        %1183 = vmatpush2.bf16.xpose.msra.mxu0 0
        %1184 = vmatprep.subr.bf16.mxu0 0
        %1185 = vmatpush2.bf16.xpose.msra.mxu0 0
        %1186 = vmatprep.subr.bf16.mxu0 0
        %1187 = vmatpush2.bf16.xpose.msra.mxu0 0
        %1188 = vmatprep.subr.bf16.mxu0 0
        %1189 = vmatpush2.bf16.xpose.msra.mxu0 0
        %1190 = vmatprep.subr.bf16.mxu0 0
        %1191 = vmatpush2.bf16.xpose.msra.mxu0 0
        %1192 = vmatprep.subr.bf16.mxu0 0
        %1193 = vmatpush2.bf16.xpose.msra.mxu0 0
        %1194 = vmatprep.subr.bf16.mxu0 0
        %1195 = vmatpush2.bf16.xpose.msra.mxu0 0
        %1196 = vmatprep.subr.bf16.mxu0 0
        %1197 = vmatpush2.bf16.xpose.msra.mxu0 %v1164
        %1198 = vmatprep.mubr.bf16.mxu0 0
        %1199 = vmatmul.mubr.bf16.gmra.mxu0 %v1134
        %v1200 = vpop.f32.mrf.mxu0
        %v1201 = vadd.f32 0.0, %v1200
        %v1202 = vpop.f32.mrf.mxu0
        %v1203 = vadd.f32 0.0, %v1202
        %v1204 = vpop.f32.mrf.mxu0
        %v1205 = vadd.f32 0.0, %v1204
        %v1206 = vpop.f32.mrf.mxu0
        %v1207 = vadd.f32 0.0, %v1206
        %1208 = vmatprep.mubr.bf16.mxu0 0
        %1209 = vmatmul.mubr.bf16.gmra.mxu0 %v1137
        %v1210 = vpop.f32.mrf.mxu0
        %v1211 = vadd.f32 0.0, %v1210
        %v1212 = vpop.f32.mrf.mxu0
        %v1213 = vadd.f32 0.0, %v1212
        %v1214 = vpop.f32.mrf.mxu0
        %v1215 = vadd.f32 0.0, %v1214
        %v1216 = vpop.f32.mrf.mxu0
        %v1217 = vadd.f32 0.0, %v1216
        %1218 = vdwg.mxu0
        %v1219 = vsel %vm409, %v1203, -inf
        %v1220 = vmax.f32 %v1201, %v1219
        %1221 = vmax.xlane.f32.xlu0 %v1220
        %v1222 = vpop.xlane.xlu0 %1221
        %v1223 = vsel %vm409, %v1207, -inf
        %v1224 = vmax.f32 %v1205, %v1223
        %1225 = vmax.xlane.f32.xlu0 %v1224
        %v1226 = vpop.xlane.xlu0 %1225
        %v1227 = vsel %vm409, %v1213, -inf
        %v1228 = vmax.f32 %v1211, %v1227
        %1229 = vmax.xlane.f32.xlu0 %v1228
        %v1230 = vpop.xlane.xlu0 %1229
        %v1231 = vsel %vm409, %v1217, -inf
        %v1232 = vmax.f32 %v1215, %v1231
        %1233 = vmax.xlane.f32.xlu0 %v1232
        %v1234 = vpop.xlane.xlu0 %1233
        %v1235 = vsub.f32 %v1201, %v1222
        %v1236 = vsub.f32 %v1203, %v1222
        %v1237 = vsub.f32 %v1205, %v1226
        %v1238 = vsub.f32 %v1207, %v1226
        %v1239 = vsub.f32 %v1211, %v1230
        %v1240 = vsub.f32 %v1213, %v1230
        %v1241 = vsub.f32 %v1215, %v1234
        %v1242 = vsub.f32 %v1217, %v1234
        %v1243 = vmul.f32 %v1235, 1.442695
        %v1244 = vpow.pop %v1243
        %v1245 = vmul.f32 %v1236, 1.442695
        %v1246 = vpow.pop %v1245
        %v1247 = vmul.f32 %v1237, 1.442695
        %v1248 = vpow.pop %v1247
        %v1249 = vmul.f32 %v1238, 1.442695
        %v1250 = vpow.pop %v1249
        %v1251 = vmul.f32 %v1239, 1.442695
        %v1252 = vpow.pop %v1251
        %v1253 = vmul.f32 %v1240, 1.442695
        %v1254 = vpow.pop %v1253
        %v1255 = vmul.f32 %v1241, 1.442695
        %v1256 = vpow.pop %v1255
        %v1257 = vmul.f32 %v1242, 1.442695
        %v1258 = vpow.pop %v1257
        %v1259 = vsel %vm409, %v1246, 0.0
        %v1260 = vadd.f32 %v1244, %v1259
        %1261 = vadd.xlane.f32.xlu0 %v1260
        %v1262 = vpop.xlane.xlu0 %1261
        %v1263 = vsel %vm409, %v1250, 0.0
        %v1264 = vadd.f32 %v1248, %v1263
        %1265 = vadd.xlane.f32.xlu0 %v1264
        %v1266 = vpop.xlane.xlu0 %1265
        %v1267 = vsel %vm409, %v1254, 0.0
        %v1268 = vadd.f32 %v1252, %v1267
        %1269 = vadd.xlane.f32.xlu0 %v1268
        %v1270 = vpop.xlane.xlu0 %1269
        %v1271 = vsel %vm409, %v1258, 0.0
        %v1272 = vadd.f32 %v1256, %v1271
        %1273 = vadd.xlane.f32.xlu0 %v1272
        %v1274 = vpop.xlane.xlu0 %1273
        %v1275 = vrcp.pop %v1262
        %v1276 = vrcp.pop %v1266
        %v1277 = vrcp.pop %v1270
        %v1278 = vrcp.pop %v1274
        %v1279 = vmul.f32 %v1244, %v1275
        %v1280 = vmul.f32 %v1246, %v1275
        %v1281 = vmul.f32 %v1248, %v1276
        %v1282 = vmul.f32 %v1250, %v1276
        %v1283 = vmul.f32 %v1252, %v1277
        %v1284 = vmul.f32 %v1254, %v1277
        %v1285 = vmul.f32 %v1256, %v1278
        %v1286 = vmul.f32 %v1258, %v1278
        %v1287 = vpack.c.bf16 %v1281, %v1279
        %v1288 = vpack.c.bf16 %v1282, %v1280
        %v1289 = vpack.c.bf16 %v1285, %v1283
        %v1290 = vpack.c.bf16 %v1286, %v1284
        %v1308 = vunpack.c.l.b16 %v1063
        %v1309 = vunpack.c.l.b16 %v1064
        %v1310 = vunpack.c.l.b16 %v1065
        %v1311 = vunpack.c.l.b16 %v1066
        %v1312 = vunpack.c.l.b16 %v1067
        %v1313 = vunpack.c.l.b16 %v1068
        %v1314 = vunpack.c.l.b16 %v1069
        %v1315 = vunpack.c.l.b16 %v1070
        %v1316 = vunpack.c.l.b16 %v1071
        %v1317 = vunpack.c.l.b16 %v1072
        %v1318 = vunpack.c.l.b16 %v1073
        %v1319 = vunpack.c.l.b16 %v1074
        %v1320 = vunpack.c.l.b16 %v1075
        %v1321 = vunpack.c.l.b16 %v1076
        %v1322 = vunpack.c.l.b16 %v1077
        %v1323 = vunpack.c.l.b16 %v1078
        %v1324 = vunpack.c.l.b16 %v1079
        %v1325 = vpack.c.b16 %v1309, %v1308
        %v1326 = vpack.c.b16 %v1311, %v1310
        %v1327 = vpack.c.b16 %v1313, %v1312
        %v1328 = vpack.c.b16 %v1315, %v1314
        %v1329 = vpack.c.b16 %v1317, %v1316
        %v1330 = vpack.c.b16 %v1319, %v1318
        %v1331 = vpack.c.b16 %v1321, %v1320
        %v1332 = vpack.c.b16 %v1323, %v1322
        %v1333 = vpack.c.b16 %v1324, %v1324
        %v1343 = vsel %vm409, %v1288, 0
        %v1346 = vsel %vm409, %v1290, 0
        %v1349 = vsel %vm625, %v1333, 0
        %1351 = vmatprep.subr.bf16.mxu0 0
        %1352 = vmatpush1.bf16.msra.mxu0 %v1332
        %1353 = vmatprep.subr.bf16.mxu0 0
        %1354 = vmatpush1.bf16.msra.mxu0 %v1331
        %1355 = vmatprep.subr.bf16.mxu0 0
        %1356 = vmatpush1.bf16.msra.mxu0 %v1330
        %1357 = vmatprep.subr.bf16.mxu0 0
        %1358 = vmatpush1.bf16.msra.mxu0 %v1329
        %1359 = vmatprep.subr.bf16.mxu0 0
        %1360 = vmatpush1.bf16.msra.mxu0 %v1328
        %1361 = vmatprep.subr.bf16.mxu0 0
        %1362 = vmatpush1.bf16.msra.mxu0 %v1327
        %1363 = vmatprep.subr.bf16.mxu0 0
        %1364 = vmatpush1.bf16.msra.mxu0 %v1326
        %1365 = vmatprep.subr.bf16.mxu0 0
        %1366 = vmatpush1.bf16.msra.mxu0 %v1325
        %1367 = vmatprep.subr.bf16.mxu0 0
        %1368 = vmatpush2.bf16.msra.mxu0 0
        %1369 = vmatprep.subr.bf16.mxu0 0
        %1370 = vmatpush2.bf16.msra.mxu0 0
        %1371 = vmatprep.subr.bf16.mxu0 0
        %1372 = vmatpush2.bf16.msra.mxu0 0
        %1373 = vmatprep.subr.bf16.mxu0 0
        %1374 = vmatpush2.bf16.msra.mxu0 0
        %1375 = vmatprep.subr.bf16.mxu0 0
        %1376 = vmatpush2.bf16.msra.mxu0 0
        %1377 = vmatprep.subr.bf16.mxu0 0
        %1378 = vmatpush2.bf16.msra.mxu0 0
        %1379 = vmatprep.subr.bf16.mxu0 0
        %1380 = vmatpush2.bf16.msra.mxu0 0
        %1381 = vmatprep.subr.bf16.mxu0 0
        %1382 = vmatpush2.bf16.msra.mxu0 %v1349
        %1383 = vmatprep.mubr.bf16.mxu0 %v1343
        %1384 = vmatmul.mubr.bf16.gmra.mxu0 %v1287
        %v1385 = vpop.f32.mrf.mxu0
        %v1386 = vadd.f32 0.0, %v1385
        %v1387 = vpop.f32.mrf.mxu0
        %v1388 = vpop.f32.mrf.mxu0
        %v1389 = vadd.f32 0.0, %v1388
        %v1390 = vpop.f32.mrf.mxu0
        %1391 = vmatprep.mubr.bf16.mxu0 %v1346
        %1392 = vmatmul.mubr.bf16.gmra.mxu0 %v1289
        %v1393 = vpop.f32.mrf.mxu0
        %v1394 = vadd.f32 0.0, %v1393
        %v1395 = vpop.f32.mrf.mxu0
        %v1396 = vpop.f32.mrf.mxu0
        %v1397 = vadd.f32 0.0, %v1396
        %v1398 = vpop.f32.mrf.mxu0
        %1399 = vdwg.mxu0
        %s1400 = scalar_lea.vmem %s286, 48
        %v1401 = vld [vmem:[%s1400] sm:$0xf]
        %v1402 = vld [vmem:[%s1400 + $0x4] sm:$0xf]
        %v1403 = vld [vmem:[%s1400 + $0x8] sm:$0xf]
        %v1404 = vld [vmem:[%s1400 + $0xc] sm:$0xf]
        %s1405 = scalar_lea.vmem %s291, 204
        %v1406 = vld [vmem:[%s1405] sm:$0xf]
        %v1407 = vld [vmem:[%s1405 + $0x4] sm:$0xf]
        %v1408 = vld [vmem:[%s1405 + $0x8] sm:$0xf]
        %v1409 = vld [vmem:[%s1405 + $0xc] sm:$0xf]
        %v1410 = vld [vmem:[%s1405 + $0x10] sm:$0xf]
        %v1411 = vld [vmem:[%s1405 + $0x14] sm:$0xf]
        %v1412 = vld [vmem:[%s1405 + $0x18] sm:$0xf]
        %v1413 = vld [vmem:[%s1405 + $0x1c] sm:$0xf]
        %v1414 = vld [vmem:[%s1405 + $0x20] sm:$0xf]
        %v1415 = vld [vmem:[%s1405 + $0x24] sm:$0xf]
        %v1416 = vld [vmem:[%s1405 + $0x28] sm:$0xf]
        %v1417 = vld [vmem:[%s1405 + $0x2c] sm:$0xf]
        %v1418 = vld [vmem:[%s1405 + $0x30] sm:$0xf]
        %v1419 = vld [vmem:[%s1405 + $0x34] sm:$0xf]
        %v1420 = vld [vmem:[%s1405 + $0x38] sm:$0xf]
        %v1421 = vld [vmem:[%s1405 + $0x3c] sm:$0xf]
        %v1422 = vld [vmem:[%s1405 + $0x40] sm:$0xf]
        %s1423 = scalar_lea.vmem %s296, 204
        %v1424 = vld [vmem:[%s1423] sm:$0xf]
        %v1425 = vld [vmem:[%s1423 + $0x4] sm:$0xf]
        %v1426 = vld [vmem:[%s1423 + $0x8] sm:$0xf]
        %v1427 = vld [vmem:[%s1423 + $0xc] sm:$0xf]
        %v1428 = vld [vmem:[%s1423 + $0x10] sm:$0xf]
        %v1429 = vld [vmem:[%s1423 + $0x14] sm:$0xf]
        %v1430 = vld [vmem:[%s1423 + $0x18] sm:$0xf]
        %v1431 = vld [vmem:[%s1423 + $0x1c] sm:$0xf]
        %v1432 = vld [vmem:[%s1423 + $0x20] sm:$0xf]
        %v1433 = vld [vmem:[%s1423 + $0x24] sm:$0xf]
        %v1434 = vld [vmem:[%s1423 + $0x28] sm:$0xf]
        %v1435 = vld [vmem:[%s1423 + $0x2c] sm:$0xf]
        %v1436 = vld [vmem:[%s1423 + $0x30] sm:$0xf]
        %v1437 = vld [vmem:[%s1423 + $0x34] sm:$0xf]
        %v1438 = vld [vmem:[%s1423 + $0x38] sm:$0xf]
        %v1439 = vld [vmem:[%s1423 + $0x3c] sm:$0xf]
        %v1440 = vld [vmem:[%s1423 + $0x40] sm:$0xf]
        %v1445 = vunpack.c.l.b16 %v1401
        %v1446 = vunpack.c.l.b16 %v1402
        %v1447 = vunpack.c.l.b16 %v1403
        %v1448 = vunpack.c.l.b16 %v1404
        %v1449 = vpack.c.b16 %v1446, %v1445
        %v1450 = vpack.c.b16 %v1448, %v1447
        %v1468 = vunpack.c.l.b16 %v1406
        %v1469 = vunpack.c.l.b16 %v1407
        %v1470 = vunpack.c.l.b16 %v1408
        %v1471 = vunpack.c.l.b16 %v1409
        %v1472 = vunpack.c.l.b16 %v1410
        %v1473 = vunpack.c.l.b16 %v1411
        %v1474 = vunpack.c.l.b16 %v1412
        %v1475 = vunpack.c.l.b16 %v1413
        %v1476 = vunpack.c.l.b16 %v1414
        %v1477 = vunpack.c.l.b16 %v1415
        %v1478 = vunpack.c.l.b16 %v1416
        %v1479 = vunpack.c.l.b16 %v1417
        %v1480 = vunpack.c.l.b16 %v1418
        %v1481 = vunpack.c.l.b16 %v1419
        %v1482 = vunpack.c.l.b16 %v1420
        %v1483 = vunpack.c.l.b16 %v1421
        %v1484 = vunpack.c.l.b16 %v1422
        %v1485 = vpack.c.b16 %v1469, %v1468
        %v1486 = vpack.c.b16 %v1471, %v1470
        %v1487 = vpack.c.b16 %v1473, %v1472
        %v1488 = vpack.c.b16 %v1475, %v1474
        %v1489 = vpack.c.b16 %v1477, %v1476
        %v1490 = vpack.c.b16 %v1479, %v1478
        %v1491 = vpack.c.b16 %v1481, %v1480
        %v1492 = vpack.c.b16 %v1483, %v1482
        %v1493 = vpack.c.b16 %v1484, %v1484
        %v1495 = vsel %vm409, %v1449, 0
        %v1498 = vsel %vm409, %v1450, 0
        %v1501 = vsel %vm409, %v1485, 0
        %v1504 = vsel %vm409, %v1486, 0
        %v1507 = vsel %vm409, %v1487, 0
        %v1510 = vsel %vm409, %v1488, 0
        %v1513 = vsel %vm409, %v1489, 0
        %v1516 = vsel %vm409, %v1490, 0
        %v1519 = vsel %vm409, %v1491, 0
        %v1522 = vsel %vm409, %v1492, 0
        %v1525 = vsel %vm409, %v1493, 0
        %1527 = vmatprep.subr.bf16.mxu0 0
        %1528 = vmatpush1.bf16.xpose.msra.mxu0 %v1522
        %1529 = vmatprep.subr.bf16.mxu0 0
        %1530 = vmatpush1.bf16.xpose.msra.mxu0 %v1519
        %1531 = vmatprep.subr.bf16.mxu0 0
        %1532 = vmatpush1.bf16.xpose.msra.mxu0 %v1516
        %1533 = vmatprep.subr.bf16.mxu0 0
        %1534 = vmatpush1.bf16.xpose.msra.mxu0 %v1513
        %1535 = vmatprep.subr.bf16.mxu0 0
        %1536 = vmatpush1.bf16.xpose.msra.mxu0 %v1510
        %1537 = vmatprep.subr.bf16.mxu0 0
        %1538 = vmatpush1.bf16.xpose.msra.mxu0 %v1507
        %1539 = vmatprep.subr.bf16.mxu0 0
        %1540 = vmatpush1.bf16.xpose.msra.mxu0 %v1504
        %1541 = vmatprep.subr.bf16.mxu0 0
        %1542 = vmatpush1.bf16.xpose.msra.mxu0 %v1501
        %1543 = vmatprep.subr.bf16.mxu0 0
        %1544 = vmatpush2.bf16.xpose.msra.mxu0 0
        %1545 = vmatprep.subr.bf16.mxu0 0
        %1546 = vmatpush2.bf16.xpose.msra.mxu0 0
        %1547 = vmatprep.subr.bf16.mxu0 0
        %1548 = vmatpush2.bf16.xpose.msra.mxu0 0
        %1549 = vmatprep.subr.bf16.mxu0 0
        %1550 = vmatpush2.bf16.xpose.msra.mxu0 0
        %1551 = vmatprep.subr.bf16.mxu0 0
        %1552 = vmatpush2.bf16.xpose.msra.mxu0 0
        %1553 = vmatprep.subr.bf16.mxu0 0
        %1554 = vmatpush2.bf16.xpose.msra.mxu0 0
        %1555 = vmatprep.subr.bf16.mxu0 0
        %1556 = vmatpush2.bf16.xpose.msra.mxu0 0
        %1557 = vmatprep.subr.bf16.mxu0 0
        %1558 = vmatpush2.bf16.xpose.msra.mxu0 %v1525
        %1559 = vmatprep.mubr.bf16.mxu0 0
        %1560 = vmatmul.mubr.bf16.gmra.mxu0 %v1495
        %v1561 = vpop.f32.mrf.mxu0
        %v1562 = vadd.f32 0.0, %v1561
        %v1563 = vpop.f32.mrf.mxu0
        %v1564 = vadd.f32 0.0, %v1563
        %v1565 = vpop.f32.mrf.mxu0
        %v1566 = vadd.f32 0.0, %v1565
        %v1567 = vpop.f32.mrf.mxu0
        %v1568 = vadd.f32 0.0, %v1567
        %1569 = vmatprep.mubr.bf16.mxu0 0
        %1570 = vmatmul.mubr.bf16.gmra.mxu0 %v1498
        %v1571 = vpop.f32.mrf.mxu0
        %v1572 = vadd.f32 0.0, %v1571
        %v1573 = vpop.f32.mrf.mxu0
        %v1574 = vadd.f32 0.0, %v1573
        %v1575 = vpop.f32.mrf.mxu0
        %v1576 = vadd.f32 0.0, %v1575
        %v1577 = vpop.f32.mrf.mxu0
        %v1578 = vadd.f32 0.0, %v1577
        %1579 = vdwg.mxu0
        %v1580 = vsel %vm409, %v1564, -inf
        %v1581 = vmax.f32 %v1562, %v1580
        %1582 = vmax.xlane.f32.xlu0 %v1581
        %v1583 = vpop.xlane.xlu0 %1582
        %v1584 = vsel %vm409, %v1568, -inf
        %v1585 = vmax.f32 %v1566, %v1584
        %1586 = vmax.xlane.f32.xlu0 %v1585
        %v1587 = vpop.xlane.xlu0 %1586
        %v1588 = vsel %vm409, %v1574, -inf
        %v1589 = vmax.f32 %v1572, %v1588
        %1590 = vmax.xlane.f32.xlu0 %v1589
        %v1591 = vpop.xlane.xlu0 %1590
        %v1592 = vsel %vm409, %v1578, -inf
        %v1593 = vmax.f32 %v1576, %v1592
        %1594 = vmax.xlane.f32.xlu0 %v1593
        %v1595 = vpop.xlane.xlu0 %1594
        %v1596 = vsub.f32 %v1562, %v1583
        %v1597 = vsub.f32 %v1564, %v1583
        %v1598 = vsub.f32 %v1566, %v1587
        %v1599 = vsub.f32 %v1568, %v1587
        %v1600 = vsub.f32 %v1572, %v1591
        %v1601 = vsub.f32 %v1574, %v1591
        %v1602 = vsub.f32 %v1576, %v1595
        %v1603 = vsub.f32 %v1578, %v1595
        %v1604 = vmul.f32 %v1596, 1.442695
        %v1605 = vpow.pop %v1604
        %v1606 = vmul.f32 %v1597, 1.442695
        %v1607 = vpow.pop %v1606
        %v1608 = vmul.f32 %v1598, 1.442695
        %v1609 = vpow.pop %v1608
        %v1610 = vmul.f32 %v1599, 1.442695
        %v1611 = vpow.pop %v1610
        %v1612 = vmul.f32 %v1600, 1.442695
        %v1613 = vpow.pop %v1612
        %v1614 = vmul.f32 %v1601, 1.442695
        %v1615 = vpow.pop %v1614
        %v1616 = vmul.f32 %v1602, 1.442695
        %v1617 = vpow.pop %v1616
        %v1618 = vmul.f32 %v1603, 1.442695
        %v1619 = vpow.pop %v1618
        %v1620 = vsel %vm409, %v1607, 0.0
        %v1621 = vadd.f32 %v1605, %v1620
        %1622 = vadd.xlane.f32.xlu0 %v1621
        %v1623 = vpop.xlane.xlu0 %1622
        %v1624 = vsel %vm409, %v1611, 0.0
        %v1625 = vadd.f32 %v1609, %v1624
        %1626 = vadd.xlane.f32.xlu0 %v1625
        %v1627 = vpop.xlane.xlu0 %1626
        %v1628 = vsel %vm409, %v1615, 0.0
        %v1629 = vadd.f32 %v1613, %v1628
        %1630 = vadd.xlane.f32.xlu0 %v1629
        %v1631 = vpop.xlane.xlu0 %1630
        %v1632 = vsel %vm409, %v1619, 0.0
        %v1633 = vadd.f32 %v1617, %v1632
        %1634 = vadd.xlane.f32.xlu0 %v1633
        %v1635 = vpop.xlane.xlu0 %1634
        %v1636 = vrcp.pop %v1623
        %v1637 = vrcp.pop %v1627
        %v1638 = vrcp.pop %v1631
        %v1639 = vrcp.pop %v1635
        %v1640 = vmul.f32 %v1605, %v1636
        %v1641 = vmul.f32 %v1607, %v1636
        %v1642 = vmul.f32 %v1609, %v1637
        %v1643 = vmul.f32 %v1611, %v1637
        %v1644 = vmul.f32 %v1613, %v1638
        %v1645 = vmul.f32 %v1615, %v1638
        %v1646 = vmul.f32 %v1617, %v1639
        %v1647 = vmul.f32 %v1619, %v1639
        %v1648 = vpack.c.bf16 %v1642, %v1640
        %v1649 = vpack.c.bf16 %v1643, %v1641
        %v1650 = vpack.c.bf16 %v1646, %v1644
        %v1651 = vpack.c.bf16 %v1647, %v1645
        %v1669 = vunpack.c.l.b16 %v1424
        %v1670 = vunpack.c.l.b16 %v1425
        %v1671 = vunpack.c.l.b16 %v1426
        %v1672 = vunpack.c.l.b16 %v1427
        %v1673 = vunpack.c.l.b16 %v1428
        %v1674 = vunpack.c.l.b16 %v1429
        %v1675 = vunpack.c.l.b16 %v1430
        %v1676 = vunpack.c.l.b16 %v1431
        %v1677 = vunpack.c.l.b16 %v1432
        %v1678 = vunpack.c.l.b16 %v1433
        %v1679 = vunpack.c.l.b16 %v1434
        %v1680 = vunpack.c.l.b16 %v1435
        %v1681 = vunpack.c.l.b16 %v1436
        %v1682 = vunpack.c.l.b16 %v1437
        %v1683 = vunpack.c.l.b16 %v1438
        %v1684 = vunpack.c.l.b16 %v1439
        %v1685 = vunpack.c.l.b16 %v1440
        %v1686 = vpack.c.b16 %v1670, %v1669
        %v1687 = vpack.c.b16 %v1672, %v1671
        %v1688 = vpack.c.b16 %v1674, %v1673
        %v1689 = vpack.c.b16 %v1676, %v1675
        %v1690 = vpack.c.b16 %v1678, %v1677
        %v1691 = vpack.c.b16 %v1680, %v1679
        %v1692 = vpack.c.b16 %v1682, %v1681
        %v1693 = vpack.c.b16 %v1684, %v1683
        %v1694 = vpack.c.b16 %v1685, %v1685
        %v1704 = vsel %vm409, %v1649, 0
        %v1707 = vsel %vm409, %v1651, 0
        %v1710 = vsel %vm625, %v1694, 0
        %1712 = vmatprep.subr.bf16.mxu0 0
        %1713 = vmatpush1.bf16.msra.mxu0 %v1693
        %1714 = vmatprep.subr.bf16.mxu0 0
        %1715 = vmatpush1.bf16.msra.mxu0 %v1692
        %1716 = vmatprep.subr.bf16.mxu0 0
        %1717 = vmatpush1.bf16.msra.mxu0 %v1691
        %1718 = vmatprep.subr.bf16.mxu0 0
        %1719 = vmatpush1.bf16.msra.mxu0 %v1690
        %1720 = vmatprep.subr.bf16.mxu0 0
        %1721 = vmatpush1.bf16.msra.mxu0 %v1689
        %1722 = vmatprep.subr.bf16.mxu0 0
        %1723 = vmatpush1.bf16.msra.mxu0 %v1688
        %1724 = vmatprep.subr.bf16.mxu0 0
        %1725 = vmatpush1.bf16.msra.mxu0 %v1687
        %1726 = vmatprep.subr.bf16.mxu0 0
        %1727 = vmatpush1.bf16.msra.mxu0 %v1686
        %1728 = vmatprep.subr.bf16.mxu0 0
        %1729 = vmatpush2.bf16.msra.mxu0 0
        %1730 = vmatprep.subr.bf16.mxu0 0
        %1731 = vmatpush2.bf16.msra.mxu0 0
        %1732 = vmatprep.subr.bf16.mxu0 0
        %1733 = vmatpush2.bf16.msra.mxu0 0
        %1734 = vmatprep.subr.bf16.mxu0 0
        %1735 = vmatpush2.bf16.msra.mxu0 0
        %1736 = vmatprep.subr.bf16.mxu0 0
        %1737 = vmatpush2.bf16.msra.mxu0 0
        %1738 = vmatprep.subr.bf16.mxu0 0
        %1739 = vmatpush2.bf16.msra.mxu0 0
        %1740 = vmatprep.subr.bf16.mxu0 0
        %1741 = vmatpush2.bf16.msra.mxu0 0
        %1742 = vmatprep.subr.bf16.mxu0 0
        %1743 = vmatpush2.bf16.msra.mxu0 %v1710
        %1744 = vmatprep.mubr.bf16.mxu0 %v1704
        %1745 = vmatmul.mubr.bf16.gmra.mxu0 %v1648
        %v1746 = vpop.f32.mrf.mxu0
        %v1747 = vadd.f32 0.0, %v1746
        %v1748 = vpop.f32.mrf.mxu0
        %v1749 = vpop.f32.mrf.mxu0
        %v1750 = vadd.f32 0.0, %v1749
        %v1751 = vpop.f32.mrf.mxu0
        %1752 = vmatprep.mubr.bf16.mxu0 %v1707
        %1753 = vmatmul.mubr.bf16.gmra.mxu0 %v1650
        %v1754 = vpop.f32.mrf.mxu0
        %v1755 = vadd.f32 0.0, %v1754
        %v1756 = vpop.f32.mrf.mxu0
        %v1757 = vpop.f32.mrf.mxu0
        %v1758 = vadd.f32 0.0, %v1757
        %v1759 = vpop.f32.mrf.mxu0
        %1760 = vdwg.mxu0
        %1765 = vrot.lane.b32.xlu0 %v1025, 8
        %v1766 = vpop.permute.xlu0 %1765
        %1767 = vrot.lane.b32.xlu0 %v1028, 8
        %v1768 = vpop.permute.xlu0 %1767
        %1769 = vrot.lane.b32.xlu0 %v1033, 8
        %v1770 = vpop.permute.xlu0 %1769
        %1771 = vrot.lane.b32.xlu0 %v1036, 8
        %v1772 = vpop.permute.xlu0 %1771
        %1781 = vrot.lane.b32.xlu0 %v1386, 16
        %v1782 = vpop.permute.xlu0 %1781
        %1783 = vrot.lane.b32.xlu0 %v1389, 16
        %v1784 = vpop.permute.xlu0 %1783
        %1785 = vrot.lane.b32.xlu0 %v1394, 16
        %v1786 = vpop.permute.xlu0 %1785
        %1787 = vrot.lane.b32.xlu0 %v1397, 16
        %v1788 = vpop.permute.xlu0 %1787
        %1797 = vrot.lane.b32.xlu0 %v1747, 24
        %v1798 = vpop.permute.xlu0 %1797
        %1799 = vrot.lane.b32.xlu0 %v1750, 24
        %v1800 = vpop.permute.xlu0 %1799
        %1801 = vrot.lane.b32.xlu0 %v1755, 24
        %v1802 = vpop.permute.xlu0 %1801
        %1803 = vrot.lane.b32.xlu0 %v1758, 24
        %v1804 = vpop.permute.xlu0 %1803
        %v1809 = vsel %vm409, %v664, %v1766
        %v1810 = vsel %vm409, %v667, %v1768
        %v1811 = vsel %vm409, %v672, %v1770
        %v1812 = vsel %vm409, %v675, %v1772
        %vm1813 = vcmask 130048
        %v1814 = vsel %vm1813, %v1809, %v1782
        %v1815 = vsel %vm1813, %v1810, %v1784
        %v1816 = vsel %vm1813, %v1811, %v1786
        %v1817 = vsel %vm1813, %v1812, %v1788
        %vm1818 = vcmask 195584
        %v1819 = vsel %vm1818, %v1814, %v1798
        %v1820 = vsel %vm1818, %v1815, %v1800
        %v1821 = vsel %vm1818, %v1816, %v1802
        %v1822 = vsel %vm1818, %v1817, %v1804
        %vm1823 = vcmask 261120
        %1824 = vst.msk [vmem:[%s311] sm:$0xff] %vm1823, %v1819
        %1825 = vst.msk [vmem:[%s311 + $0x8] sm:$0xff] %vm1823, %v1820
        %1826 = vst.msk [vmem:[%s311 + $0x10] sm:$0xff] %vm1823, %v1821
        %1827 = vst.msk [vmem:[%s311 + $0x18] sm:$0xff] %vm1823, %v1822
      $region44: #{_lambda_.8} parent=39 // pred_fallthru
        _
      %p1828 = scmp.le.s32.totalorder %s313, 0
      // Predicated region
      $region45: #{_lambda_.8} parent=39 // pred_check
        %p1829 = pneg %p1828
      $region46: #{_lambda_.8} parent=39 // pred_check_branch
        %1831 = sbr.rel (%p1829) target = $region48
      $region47: #{_lambda_.8} parent=39 // pred_region
        %v1832 = vld [vmem:[%s286] sm:$0xf]
        %v1833 = vld [vmem:[%s286 + $0x4] sm:$0xf]
        %v1834 = vld [vmem:[%s286 + $0x8] sm:$0xf]
        %v1835 = vld [vmem:[%s286 + $0xc] sm:$0xf]
        %v1836 = vld [vmem:[%s301] sm:$0xf]
        %v1837 = vld [vmem:[%s301 + $0x4] sm:$0xf]
        %v1838 = vld [vmem:[%s301 + $0x8] sm:$0xf]
        %v1839 = vld [vmem:[%s301 + $0xc] sm:$0xf]
        %v1840 = vld [vmem:[%s306] sm:$0xf]
        %v1841 = vld [vmem:[%s306 + $0x4] sm:$0xf]
        %v1842 = vld [vmem:[%s306 + $0x8] sm:$0xf]
        %v1843 = vld [vmem:[%s306 + $0xc] sm:$0xf]
        %v1846 = vunpack.c.l.b16 %v1832
        %v1847 = vunpack.c.l.b16 %v1833
        %v1848 = vpack.c.b16 %v1847, %v1846
        %v1851 = vunpack.c.l.b16 %v1836
        %v1852 = vunpack.c.l.b16 %v1837
        %v1853 = vpack.c.b16 %v1852, %v1851
        %vm1854 = vcmask 64512
        %v1856 = vsel %vm1854, %v1848, 0
        %v1859 = vsel %vm1854, %v1853, 0
        %1861 = vmatprep.subr.bf16.mxu0 0
        %1862 = vmatpush1.bf16.xpose.msra.mxu0 0
        %1863 = vmatprep.subr.bf16.mxu0 0
        %1864 = vmatpush1.bf16.xpose.msra.mxu0 0
        %1865 = vmatprep.subr.bf16.mxu0 0
        %1866 = vmatpush1.bf16.xpose.msra.mxu0 0
        %1867 = vmatprep.subr.bf16.mxu0 0
        %1868 = vmatpush1.bf16.xpose.msra.mxu0 0
        %1869 = vmatprep.subr.bf16.mxu0 0
        %1870 = vmatpush1.bf16.xpose.msra.mxu0 0
        %1871 = vmatprep.subr.bf16.mxu0 0
        %1872 = vmatpush1.bf16.xpose.msra.mxu0 0
        %1873 = vmatprep.subr.bf16.mxu0 0
        %1874 = vmatpush1.bf16.xpose.msra.mxu0 0
        %1875 = vmatprep.subr.bf16.mxu0 0
        %1876 = vmatpush1.bf16.xpose.msra.mxu0 %v1859
        %1877 = vmatprep.subr.bf16.mxu0 0
        %1878 = vmatpush2.bf16.xpose.msra.mxu0 0
        %1879 = vmatprep.subr.bf16.mxu0 0
        %1880 = vmatpush2.bf16.xpose.msra.mxu0 0
        %1881 = vmatprep.subr.bf16.mxu0 0
        %1882 = vmatpush2.bf16.xpose.msra.mxu0 0
        %1883 = vmatprep.subr.bf16.mxu0 0
        %1884 = vmatpush2.bf16.xpose.msra.mxu0 0
        %1885 = vmatprep.subr.bf16.mxu0 0
        %1886 = vmatpush2.bf16.xpose.msra.mxu0 0
        %1887 = vmatprep.subr.bf16.mxu0 0
        %1888 = vmatpush2.bf16.xpose.msra.mxu0 0
        %1889 = vmatprep.subr.bf16.mxu0 0
        %1890 = vmatpush2.bf16.xpose.msra.mxu0 0
        %1891 = vmatprep.subr.bf16.mxu0 0
        %1892 = vmatpush2.bf16.xpose.msra.mxu0 0
        %1893 = vmatprep.mubr.bf16.mxu0 0
        %1894 = vmatmul.mubr.bf16.gmra.mxu0 %v1856
        %v1895 = vpop.f32.mrf.mxu0
        %v1896 = vadd.f32 0.0, %v1895
        %v1897 = vpop.f32.mrf.mxu0
        %v1898 = vpop.f32.mrf.mxu0
        %v1899 = vadd.f32 0.0, %v1898
        %v1900 = vpop.f32.mrf.mxu0
        %1901 = vdwg.mxu0
        %v1904 = vunpack.c.l.b16 %v1834
        %v1905 = vunpack.c.l.b16 %v1835
        %v1906 = vpack.c.b16 %v1905, %v1904
        %v1909 = vunpack.c.l.b16 %v1838
        %v1910 = vunpack.c.l.b16 %v1839
        %v1911 = vpack.c.b16 %v1910, %v1909
        %v1913 = vsel %vm1854, %v1906, 0
        %v1916 = vsel %vm1854, %v1911, 0
        %1918 = vmatprep.subr.bf16.mxu0 0
        %1919 = vmatpush1.bf16.xpose.msra.mxu0 0
        %1920 = vmatprep.subr.bf16.mxu0 0
        %1921 = vmatpush1.bf16.xpose.msra.mxu0 0
        %1922 = vmatprep.subr.bf16.mxu0 0
        %1923 = vmatpush1.bf16.xpose.msra.mxu0 0
        %1924 = vmatprep.subr.bf16.mxu0 0
        %1925 = vmatpush1.bf16.xpose.msra.mxu0 0
        %1926 = vmatprep.subr.bf16.mxu0 0
        %1927 = vmatpush1.bf16.xpose.msra.mxu0 0
        %1928 = vmatprep.subr.bf16.mxu0 0
        %1929 = vmatpush1.bf16.xpose.msra.mxu0 0
        %1930 = vmatprep.subr.bf16.mxu0 0
        %1931 = vmatpush1.bf16.xpose.msra.mxu0 0
        %1932 = vmatprep.subr.bf16.mxu0 0
        %1933 = vmatpush1.bf16.xpose.msra.mxu0 %v1916
        %1934 = vmatprep.subr.bf16.mxu0 0
        %1935 = vmatpush2.bf16.xpose.msra.mxu0 0
        %1936 = vmatprep.subr.bf16.mxu0 0
        %1937 = vmatpush2.bf16.xpose.msra.mxu0 0
        %1938 = vmatprep.subr.bf16.mxu0 0
        %1939 = vmatpush2.bf16.xpose.msra.mxu0 0
        %1940 = vmatprep.subr.bf16.mxu0 0
        %1941 = vmatpush2.bf16.xpose.msra.mxu0 0
        %1942 = vmatprep.subr.bf16.mxu0 0
        %1943 = vmatpush2.bf16.xpose.msra.mxu0 0
        %1944 = vmatprep.subr.bf16.mxu0 0
        %1945 = vmatpush2.bf16.xpose.msra.mxu0 0
        %1946 = vmatprep.subr.bf16.mxu0 0
        %1947 = vmatpush2.bf16.xpose.msra.mxu0 0
        %1948 = vmatprep.subr.bf16.mxu0 0
        %1949 = vmatpush2.bf16.xpose.msra.mxu0 0
        %1950 = vmatprep.mubr.bf16.mxu0 0
        %1951 = vmatmul.mubr.bf16.gmra.mxu0 %v1913
        %v1952 = vpop.f32.mrf.mxu0
        %v1953 = vadd.f32 0.0, %v1952
        %v1954 = vpop.f32.mrf.mxu0
        %v1955 = vpop.f32.mrf.mxu0
        %v1956 = vadd.f32 0.0, %v1955
        %v1957 = vpop.f32.mrf.mxu0
        %1958 = vdwg.mxu0
        %vm1959 = vcmask 130048
        %v1960 = vsel %vm1959, %v1896, -inf
        %1961 = vmax.xlane.f32.xlu0 %v1960
        %v1962 = vpop.xlane.xlu0 %1961
        %v1963 = vsel %vm1959, %v1899, -inf
        %1964 = vmax.xlane.f32.xlu0 %v1963
        %v1965 = vpop.xlane.xlu0 %1964
        %v1966 = vsel %vm1959, %v1953, -inf
        %1967 = vmax.xlane.f32.xlu0 %v1966
        %v1968 = vpop.xlane.xlu0 %1967
        %v1969 = vsel %vm1959, %v1956, -inf
        %1970 = vmax.xlane.f32.xlu0 %v1969
        %v1971 = vpop.xlane.xlu0 %1970
        %v1972 = vsub.f32 %v1896, %v1962
        %v1973 = vsub.f32 %v1899, %v1965
        %v1974 = vsub.f32 %v1953, %v1968
        %v1975 = vsub.f32 %v1956, %v1971
        %v1976 = vmul.f32 %v1972, 1.442695
        %v1977 = vpow.pop %v1976
        %v1978 = vmul.f32 %v1973, 1.442695
        %v1979 = vpow.pop %v1978
        %v1980 = vmul.f32 %v1974, 1.442695
        %v1981 = vpow.pop %v1980
        %v1982 = vmul.f32 %v1975, 1.442695
        %v1983 = vpow.pop %v1982
        %v1984 = vsel %vm1959, %v1977, 0.0
        %1985 = vadd.xlane.f32.xlu0 %v1984
        %v1986 = vpop.xlane.xlu0 %1985
        %v1987 = vsel %vm1959, %v1979, 0.0
        %1988 = vadd.xlane.f32.xlu0 %v1987
        %v1989 = vpop.xlane.xlu0 %1988
        %v1990 = vsel %vm1959, %v1981, 0.0
        %1991 = vadd.xlane.f32.xlu0 %v1990
        %v1992 = vpop.xlane.xlu0 %1991
        %v1993 = vsel %vm1959, %v1983, 0.0
        %1994 = vadd.xlane.f32.xlu0 %v1993
        %v1995 = vpop.xlane.xlu0 %1994
        %v1996 = vrcp.pop %v1986
        %v1997 = vrcp.pop %v1989
        %v1998 = vrcp.pop %v1992
        %v1999 = vrcp.pop %v1995
        %v2000 = vmul.f32 %v1977, %v1996
        %v2001 = vmul.f32 %v1979, %v1997
        %v2002 = vmul.f32 %v1981, %v1998
        %v2003 = vmul.f32 %v1983, %v1999
        %v2004 = vpack.c.bf16 %v2001, %v2000
        %v2005 = vpack.c.bf16 %v2003, %v2002
        %v2008 = vunpack.c.l.b16 %v1840
        %v2009 = vunpack.c.l.b16 %v1841
        %v2010 = vpack.c.b16 %v2009, %v2008
        %v2013 = vsel %vm1959, %v2004, 0
        %2015 = vmatprep.subr.bf16.mxu0 0
        %2016 = vmatpush1.bf16.msra.mxu0 0
        %2017 = vmatprep.subr.bf16.mxu0 0
        %2018 = vmatpush1.bf16.msra.mxu0 0
        %2019 = vmatprep.subr.bf16.mxu0 0
        %2020 = vmatpush1.bf16.msra.mxu0 0
        %2021 = vmatprep.subr.bf16.mxu0 0
        %2022 = vmatpush1.bf16.msra.mxu0 0
        %2023 = vmatprep.subr.bf16.mxu0 0
        %2024 = vmatpush1.bf16.msra.mxu0 0
        %2025 = vmatprep.subr.bf16.mxu0 0
        %2026 = vmatpush1.bf16.msra.mxu0 0
        %2027 = vmatprep.subr.bf16.mxu0 0
        %2028 = vmatpush1.bf16.msra.mxu0 0
        %2029 = vmatprep.subr.bf16.mxu0 0
        %2030 = vmatpush1.bf16.msra.mxu0 %v2010
        %2031 = vmatprep.subr.bf16.mxu0 0
        %2032 = vmatpush2.bf16.msra.mxu0 0
        %2033 = vmatprep.subr.bf16.mxu0 0
        %2034 = vmatpush2.bf16.msra.mxu0 0
        %2035 = vmatprep.subr.bf16.mxu0 0
        %2036 = vmatpush2.bf16.msra.mxu0 0
        %2037 = vmatprep.subr.bf16.mxu0 0
        %2038 = vmatpush2.bf16.msra.mxu0 0
        %2039 = vmatprep.subr.bf16.mxu0 0
        %2040 = vmatpush2.bf16.msra.mxu0 0
        %2041 = vmatprep.subr.bf16.mxu0 0
        %2042 = vmatpush2.bf16.msra.mxu0 0
        %2043 = vmatprep.subr.bf16.mxu0 0
        %2044 = vmatpush2.bf16.msra.mxu0 0
        %2045 = vmatprep.subr.bf16.mxu0 0
        %2046 = vmatpush2.bf16.msra.mxu0 0
        %2047 = vmatprep.mubr.bf16.mxu0 0
        %2048 = vmatmul.mubr.bf16.gmra.mxu0 %v2013
        %v2049 = vpop.f32.mrf.mxu0
        %v2050 = vadd.f32 0.0, %v2049
        %v2051 = vpop.f32.mrf.mxu0
        %v2052 = vpop.f32.mrf.mxu0
        %v2053 = vadd.f32 0.0, %v2052
        %v2054 = vpop.f32.mrf.mxu0
        %2055 = vdwg.mxu0
        %v2058 = vunpack.c.l.b16 %v1842
        %v2059 = vunpack.c.l.b16 %v1843
        %v2060 = vpack.c.b16 %v2059, %v2058
        %v2063 = vsel %vm1959, %v2005, 0
        %2065 = vmatprep.subr.bf16.mxu0 0
        %2066 = vmatpush1.bf16.msra.mxu0 0
        %2067 = vmatprep.subr.bf16.mxu0 0
        %2068 = vmatpush1.bf16.msra.mxu0 0
        %2069 = vmatprep.subr.bf16.mxu0 0
        %2070 = vmatpush1.bf16.msra.mxu0 0
        %2071 = vmatprep.subr.bf16.mxu0 0
        %2072 = vmatpush1.bf16.msra.mxu0 0
        %2073 = vmatprep.subr.bf16.mxu0 0
        %2074 = vmatpush1.bf16.msra.mxu0 0
        %2075 = vmatprep.subr.bf16.mxu0 0
        %2076 = vmatpush1.bf16.msra.mxu0 0
        %2077 = vmatprep.subr.bf16.mxu0 0
        %2078 = vmatpush1.bf16.msra.mxu0 0
        %2079 = vmatprep.subr.bf16.mxu0 0
        %2080 = vmatpush1.bf16.msra.mxu0 %v2060
        %2081 = vmatprep.subr.bf16.mxu0 0
        %2082 = vmatpush2.bf16.msra.mxu0 0
        %2083 = vmatprep.subr.bf16.mxu0 0
        %2084 = vmatpush2.bf16.msra.mxu0 0
        %2085 = vmatprep.subr.bf16.mxu0 0
        %2086 = vmatpush2.bf16.msra.mxu0 0
        %2087 = vmatprep.subr.bf16.mxu0 0
        %2088 = vmatpush2.bf16.msra.mxu0 0
        %2089 = vmatprep.subr.bf16.mxu0 0
        %2090 = vmatpush2.bf16.msra.mxu0 0
        %2091 = vmatprep.subr.bf16.mxu0 0
        %2092 = vmatpush2.bf16.msra.mxu0 0
        %2093 = vmatprep.subr.bf16.mxu0 0
        %2094 = vmatpush2.bf16.msra.mxu0 0
        %2095 = vmatprep.subr.bf16.mxu0 0
        %2096 = vmatpush2.bf16.msra.mxu0 0
        %2097 = vmatprep.mubr.bf16.mxu0 0
        %2098 = vmatmul.mubr.bf16.gmra.mxu0 %v2063
        %v2099 = vpop.f32.mrf.mxu0
        %v2100 = vadd.f32 0.0, %v2099
        %v2101 = vpop.f32.mrf.mxu0
        %v2102 = vpop.f32.mrf.mxu0
        %v2103 = vadd.f32 0.0, %v2102
        %v2104 = vpop.f32.mrf.mxu0
        %2105 = vdwg.mxu0
        %s2106 = scalar_lea.vmem %s286, 16
        %v2107 = vld [vmem:[%s2106] sm:$0xf]
        %v2108 = vld [vmem:[%s2106 + $0x4] sm:$0xf]
        %v2109 = vld [vmem:[%s2106 + $0x8] sm:$0xf]
        %v2110 = vld [vmem:[%s2106 + $0xc] sm:$0xf]
        %s2111 = scalar_lea.vmem %s301, 16
        %v2112 = vld [vmem:[%s2111] sm:$0xf]
        %v2113 = vld [vmem:[%s2111 + $0x4] sm:$0xf]
        %v2114 = vld [vmem:[%s2111 + $0x8] sm:$0xf]
        %v2115 = vld [vmem:[%s2111 + $0xc] sm:$0xf]
        %s2116 = scalar_lea.vmem %s306, 16
        %v2117 = vld [vmem:[%s2116] sm:$0xf]
        %v2118 = vld [vmem:[%s2116 + $0x4] sm:$0xf]
        %v2119 = vld [vmem:[%s2116 + $0x8] sm:$0xf]
        %v2120 = vld [vmem:[%s2116 + $0xc] sm:$0xf]
        %v2123 = vunpack.c.l.b16 %v2107
        %v2124 = vunpack.c.l.b16 %v2108
        %v2125 = vpack.c.b16 %v2124, %v2123
        %v2128 = vunpack.c.l.b16 %v2112
        %v2129 = vunpack.c.l.b16 %v2113
        %v2130 = vpack.c.b16 %v2129, %v2128
        %v2132 = vsel %vm1854, %v2125, 0
        %v2135 = vsel %vm1854, %v2130, 0
        %2137 = vmatprep.subr.bf16.mxu0 0
        %2138 = vmatpush1.bf16.xpose.msra.mxu0 0
        %2139 = vmatprep.subr.bf16.mxu0 0
        %2140 = vmatpush1.bf16.xpose.msra.mxu0 0
        %2141 = vmatprep.subr.bf16.mxu0 0
        %2142 = vmatpush1.bf16.xpose.msra.mxu0 0
        %2143 = vmatprep.subr.bf16.mxu0 0
        %2144 = vmatpush1.bf16.xpose.msra.mxu0 0
        %2145 = vmatprep.subr.bf16.mxu0 0
        %2146 = vmatpush1.bf16.xpose.msra.mxu0 0
        %2147 = vmatprep.subr.bf16.mxu0 0
        %2148 = vmatpush1.bf16.xpose.msra.mxu0 0
        %2149 = vmatprep.subr.bf16.mxu0 0
        %2150 = vmatpush1.bf16.xpose.msra.mxu0 0
        %2151 = vmatprep.subr.bf16.mxu0 0
        %2152 = vmatpush1.bf16.xpose.msra.mxu0 %v2135
        %2153 = vmatprep.subr.bf16.mxu0 0
        %2154 = vmatpush2.bf16.xpose.msra.mxu0 0
        %2155 = vmatprep.subr.bf16.mxu0 0
        %2156 = vmatpush2.bf16.xpose.msra.mxu0 0
        %2157 = vmatprep.subr.bf16.mxu0 0
        %2158 = vmatpush2.bf16.xpose.msra.mxu0 0
        %2159 = vmatprep.subr.bf16.mxu0 0
        %2160 = vmatpush2.bf16.xpose.msra.mxu0 0
        %2161 = vmatprep.subr.bf16.mxu0 0
        %2162 = vmatpush2.bf16.xpose.msra.mxu0 0
        %2163 = vmatprep.subr.bf16.mxu0 0
        %2164 = vmatpush2.bf16.xpose.msra.mxu0 0
        %2165 = vmatprep.subr.bf16.mxu0 0
        %2166 = vmatpush2.bf16.xpose.msra.mxu0 0
        %2167 = vmatprep.subr.bf16.mxu0 0
        %2168 = vmatpush2.bf16.xpose.msra.mxu0 0
        %2169 = vmatprep.mubr.bf16.mxu0 0
        %2170 = vmatmul.mubr.bf16.gmra.mxu0 %v2132
        %v2171 = vpop.f32.mrf.mxu0
        %v2172 = vadd.f32 0.0, %v2171
        %v2173 = vpop.f32.mrf.mxu0
        %v2174 = vpop.f32.mrf.mxu0
        %v2175 = vadd.f32 0.0, %v2174
        %v2176 = vpop.f32.mrf.mxu0
        %2177 = vdwg.mxu0
        %v2180 = vunpack.c.l.b16 %v2109
        %v2181 = vunpack.c.l.b16 %v2110
        %v2182 = vpack.c.b16 %v2181, %v2180
        %v2185 = vunpack.c.l.b16 %v2114
        %v2186 = vunpack.c.l.b16 %v2115
        %v2187 = vpack.c.b16 %v2186, %v2185
        %v2189 = vsel %vm1854, %v2182, 0
        %v2192 = vsel %vm1854, %v2187, 0
        %2194 = vmatprep.subr.bf16.mxu0 0
        %2195 = vmatpush1.bf16.xpose.msra.mxu0 0
        %2196 = vmatprep.subr.bf16.mxu0 0
        %2197 = vmatpush1.bf16.xpose.msra.mxu0 0
        %2198 = vmatprep.subr.bf16.mxu0 0
        %2199 = vmatpush1.bf16.xpose.msra.mxu0 0
        %2200 = vmatprep.subr.bf16.mxu0 0
        %2201 = vmatpush1.bf16.xpose.msra.mxu0 0
        %2202 = vmatprep.subr.bf16.mxu0 0
        %2203 = vmatpush1.bf16.xpose.msra.mxu0 0
        %2204 = vmatprep.subr.bf16.mxu0 0
        %2205 = vmatpush1.bf16.xpose.msra.mxu0 0
        %2206 = vmatprep.subr.bf16.mxu0 0
        %2207 = vmatpush1.bf16.xpose.msra.mxu0 0
        %2208 = vmatprep.subr.bf16.mxu0 0
        %2209 = vmatpush1.bf16.xpose.msra.mxu0 %v2192
        %2210 = vmatprep.subr.bf16.mxu0 0
        %2211 = vmatpush2.bf16.xpose.msra.mxu0 0
        %2212 = vmatprep.subr.bf16.mxu0 0
        %2213 = vmatpush2.bf16.xpose.msra.mxu0 0
        %2214 = vmatprep.subr.bf16.mxu0 0
        %2215 = vmatpush2.bf16.xpose.msra.mxu0 0
        %2216 = vmatprep.subr.bf16.mxu0 0
        %2217 = vmatpush2.bf16.xpose.msra.mxu0 0
        %2218 = vmatprep.subr.bf16.mxu0 0
        %2219 = vmatpush2.bf16.xpose.msra.mxu0 0
        %2220 = vmatprep.subr.bf16.mxu0 0
        %2221 = vmatpush2.bf16.xpose.msra.mxu0 0
        %2222 = vmatprep.subr.bf16.mxu0 0
        %2223 = vmatpush2.bf16.xpose.msra.mxu0 0
        %2224 = vmatprep.subr.bf16.mxu0 0
        %2225 = vmatpush2.bf16.xpose.msra.mxu0 0
        %2226 = vmatprep.mubr.bf16.mxu0 0
        %2227 = vmatmul.mubr.bf16.gmra.mxu0 %v2189
        %v2228 = vpop.f32.mrf.mxu0
        %v2229 = vadd.f32 0.0, %v2228
        %v2230 = vpop.f32.mrf.mxu0
        %v2231 = vpop.f32.mrf.mxu0
        %v2232 = vadd.f32 0.0, %v2231
        %v2233 = vpop.f32.mrf.mxu0
        %2234 = vdwg.mxu0
        %v2235 = vsel %vm1959, %v2172, -inf
        %2236 = vmax.xlane.f32.xlu0 %v2235
        %v2237 = vpop.xlane.xlu0 %2236
        %v2238 = vsel %vm1959, %v2175, -inf
        %2239 = vmax.xlane.f32.xlu0 %v2238
        %v2240 = vpop.xlane.xlu0 %2239
        %v2241 = vsel %vm1959, %v2229, -inf
        %2242 = vmax.xlane.f32.xlu0 %v2241
        %v2243 = vpop.xlane.xlu0 %2242
        %v2244 = vsel %vm1959, %v2232, -inf
        %2245 = vmax.xlane.f32.xlu0 %v2244
        %v2246 = vpop.xlane.xlu0 %2245
        %v2247 = vsub.f32 %v2172, %v2237
        %v2248 = vsub.f32 %v2175, %v2240
        %v2249 = vsub.f32 %v2229, %v2243
        %v2250 = vsub.f32 %v2232, %v2246
        %v2251 = vmul.f32 %v2247, 1.442695
        %v2252 = vpow.pop %v2251
        %v2253 = vmul.f32 %v2248, 1.442695
        %v2254 = vpow.pop %v2253
        %v2255 = vmul.f32 %v2249, 1.442695
        %v2256 = vpow.pop %v2255
        %v2257 = vmul.f32 %v2250, 1.442695
        %v2258 = vpow.pop %v2257
        %v2259 = vsel %vm1959, %v2252, 0.0
        %2260 = vadd.xlane.f32.xlu0 %v2259
        %v2261 = vpop.xlane.xlu0 %2260
        %v2262 = vsel %vm1959, %v2254, 0.0
        %2263 = vadd.xlane.f32.xlu0 %v2262
        %v2264 = vpop.xlane.xlu0 %2263
        %v2265 = vsel %vm1959, %v2256, 0.0
        %2266 = vadd.xlane.f32.xlu0 %v2265
        %v2267 = vpop.xlane.xlu0 %2266
        %v2268 = vsel %vm1959, %v2258, 0.0
        %2269 = vadd.xlane.f32.xlu0 %v2268
        %v2270 = vpop.xlane.xlu0 %2269
        %v2271 = vrcp.pop %v2261
        %v2272 = vrcp.pop %v2264
        %v2273 = vrcp.pop %v2267
        %v2274 = vrcp.pop %v2270
        %v2275 = vmul.f32 %v2252, %v2271
        %v2276 = vmul.f32 %v2254, %v2272
        %v2277 = vmul.f32 %v2256, %v2273
        %v2278 = vmul.f32 %v2258, %v2274
        %v2279 = vpack.c.bf16 %v2276, %v2275
        %v2280 = vpack.c.bf16 %v2278, %v2277
        %v2283 = vunpack.c.l.b16 %v2117
        %v2284 = vunpack.c.l.b16 %v2118
        %v2285 = vpack.c.b16 %v2284, %v2283
        %v2288 = vsel %vm1959, %v2279, 0
        %2290 = vmatprep.subr.bf16.mxu0 0
        %2291 = vmatpush1.bf16.msra.mxu0 0
        %2292 = vmatprep.subr.bf16.mxu0 0
        %2293 = vmatpush1.bf16.msra.mxu0 0
        %2294 = vmatprep.subr.bf16.mxu0 0
        %2295 = vmatpush1.bf16.msra.mxu0 0
        %2296 = vmatprep.subr.bf16.mxu0 0
        %2297 = vmatpush1.bf16.msra.mxu0 0
        %2298 = vmatprep.subr.bf16.mxu0 0
        %2299 = vmatpush1.bf16.msra.mxu0 0
        %2300 = vmatprep.subr.bf16.mxu0 0
        %2301 = vmatpush1.bf16.msra.mxu0 0
        %2302 = vmatprep.subr.bf16.mxu0 0
        %2303 = vmatpush1.bf16.msra.mxu0 0
        %2304 = vmatprep.subr.bf16.mxu0 0
        %2305 = vmatpush1.bf16.msra.mxu0 %v2285
        %2306 = vmatprep.subr.bf16.mxu0 0
        %2307 = vmatpush2.bf16.msra.mxu0 0
        %2308 = vmatprep.subr.bf16.mxu0 0
        %2309 = vmatpush2.bf16.msra.mxu0 0
        %2310 = vmatprep.subr.bf16.mxu0 0
        %2311 = vmatpush2.bf16.msra.mxu0 0
        %2312 = vmatprep.subr.bf16.mxu0 0
        %2313 = vmatpush2.bf16.msra.mxu0 0
        %2314 = vmatprep.subr.bf16.mxu0 0
        %2315 = vmatpush2.bf16.msra.mxu0 0
        %2316 = vmatprep.subr.bf16.mxu0 0
        %2317 = vmatpush2.bf16.msra.mxu0 0
        %2318 = vmatprep.subr.bf16.mxu0 0
        %2319 = vmatpush2.bf16.msra.mxu0 0
        %2320 = vmatprep.subr.bf16.mxu0 0
        %2321 = vmatpush2.bf16.msra.mxu0 0
        %2322 = vmatprep.mubr.bf16.mxu0 0
        %2323 = vmatmul.mubr.bf16.gmra.mxu0 %v2288
        %v2324 = vpop.f32.mrf.mxu0
        %v2325 = vadd.f32 0.0, %v2324
        %v2326 = vpop.f32.mrf.mxu0
        %v2327 = vpop.f32.mrf.mxu0
        %v2328 = vadd.f32 0.0, %v2327
        %v2329 = vpop.f32.mrf.mxu0
        %2330 = vdwg.mxu0
        %v2333 = vunpack.c.l.b16 %v2119
        %v2334 = vunpack.c.l.b16 %v2120
        %v2335 = vpack.c.b16 %v2334, %v2333
        %v2338 = vsel %vm1959, %v2280, 0
        %2340 = vmatprep.subr.bf16.mxu0 0
        %2341 = vmatpush1.bf16.msra.mxu0 0
        %2342 = vmatprep.subr.bf16.mxu0 0
        %2343 = vmatpush1.bf16.msra.mxu0 0
        %2344 = vmatprep.subr.bf16.mxu0 0
        %2345 = vmatpush1.bf16.msra.mxu0 0
        %2346 = vmatprep.subr.bf16.mxu0 0
        %2347 = vmatpush1.bf16.msra.mxu0 0
        %2348 = vmatprep.subr.bf16.mxu0 0
        %2349 = vmatpush1.bf16.msra.mxu0 0
        %2350 = vmatprep.subr.bf16.mxu0 0
        %2351 = vmatpush1.bf16.msra.mxu0 0
        %2352 = vmatprep.subr.bf16.mxu0 0
        %2353 = vmatpush1.bf16.msra.mxu0 0
        %2354 = vmatprep.subr.bf16.mxu0 0
        %2355 = vmatpush1.bf16.msra.mxu0 %v2335
        %2356 = vmatprep.subr.bf16.mxu0 0
        %2357 = vmatpush2.bf16.msra.mxu0 0
        %2358 = vmatprep.subr.bf16.mxu0 0
        %2359 = vmatpush2.bf16.msra.mxu0 0
        %2360 = vmatprep.subr.bf16.mxu0 0
        %2361 = vmatpush2.bf16.msra.mxu0 0
        %2362 = vmatprep.subr.bf16.mxu0 0
        %2363 = vmatpush2.bf16.msra.mxu0 0
        %2364 = vmatprep.subr.bf16.mxu0 0
        %2365 = vmatpush2.bf16.msra.mxu0 0
        %2366 = vmatprep.subr.bf16.mxu0 0
        %2367 = vmatpush2.bf16.msra.mxu0 0
        %2368 = vmatprep.subr.bf16.mxu0 0
        %2369 = vmatpush2.bf16.msra.mxu0 0
        %2370 = vmatprep.subr.bf16.mxu0 0
        %2371 = vmatpush2.bf16.msra.mxu0 0
        %2372 = vmatprep.mubr.bf16.mxu0 0
        %2373 = vmatmul.mubr.bf16.gmra.mxu0 %v2338
        %v2374 = vpop.f32.mrf.mxu0
        %v2375 = vadd.f32 0.0, %v2374
        %v2376 = vpop.f32.mrf.mxu0
        %v2377 = vpop.f32.mrf.mxu0
        %v2378 = vadd.f32 0.0, %v2377
        %v2379 = vpop.f32.mrf.mxu0
        %2380 = vdwg.mxu0
        %s2381 = scalar_lea.vmem %s286, 32
        %v2382 = vld [vmem:[%s2381] sm:$0xf]
        %v2383 = vld [vmem:[%s2381 + $0x4] sm:$0xf]
        %v2384 = vld [vmem:[%s2381 + $0x8] sm:$0xf]
        %v2385 = vld [vmem:[%s2381 + $0xc] sm:$0xf]
        %s2386 = scalar_lea.vmem %s301, 32
        %v2387 = vld [vmem:[%s2386] sm:$0xf]
        %v2388 = vld [vmem:[%s2386 + $0x4] sm:$0xf]
        %v2389 = vld [vmem:[%s2386 + $0x8] sm:$0xf]
        %v2390 = vld [vmem:[%s2386 + $0xc] sm:$0xf]
        %s2391 = scalar_lea.vmem %s306, 32
        %v2392 = vld [vmem:[%s2391] sm:$0xf]
        %v2393 = vld [vmem:[%s2391 + $0x4] sm:$0xf]
        %v2394 = vld [vmem:[%s2391 + $0x8] sm:$0xf]
        %v2395 = vld [vmem:[%s2391 + $0xc] sm:$0xf]
        %v2398 = vunpack.c.l.b16 %v2382
        %v2399 = vunpack.c.l.b16 %v2383
        %v2400 = vpack.c.b16 %v2399, %v2398
        %v2403 = vunpack.c.l.b16 %v2387
        %v2404 = vunpack.c.l.b16 %v2388
        %v2405 = vpack.c.b16 %v2404, %v2403
        %v2407 = vsel %vm1854, %v2400, 0
        %v2410 = vsel %vm1854, %v2405, 0
        %2412 = vmatprep.subr.bf16.mxu0 0
        %2413 = vmatpush1.bf16.xpose.msra.mxu0 0
        %2414 = vmatprep.subr.bf16.mxu0 0
        %2415 = vmatpush1.bf16.xpose.msra.mxu0 0
        %2416 = vmatprep.subr.bf16.mxu0 0
        %2417 = vmatpush1.bf16.xpose.msra.mxu0 0
        %2418 = vmatprep.subr.bf16.mxu0 0
        %2419 = vmatpush1.bf16.xpose.msra.mxu0 0
        %2420 = vmatprep.subr.bf16.mxu0 0
        %2421 = vmatpush1.bf16.xpose.msra.mxu0 0
        %2422 = vmatprep.subr.bf16.mxu0 0
        %2423 = vmatpush1.bf16.xpose.msra.mxu0 0
        %2424 = vmatprep.subr.bf16.mxu0 0
        %2425 = vmatpush1.bf16.xpose.msra.mxu0 0
        %2426 = vmatprep.subr.bf16.mxu0 0
        %2427 = vmatpush1.bf16.xpose.msra.mxu0 %v2410
        %2428 = vmatprep.subr.bf16.mxu0 0
        %2429 = vmatpush2.bf16.xpose.msra.mxu0 0
        %2430 = vmatprep.subr.bf16.mxu0 0
        %2431 = vmatpush2.bf16.xpose.msra.mxu0 0
        %2432 = vmatprep.subr.bf16.mxu0 0
        %2433 = vmatpush2.bf16.xpose.msra.mxu0 0
        %2434 = vmatprep.subr.bf16.mxu0 0
        %2435 = vmatpush2.bf16.xpose.msra.mxu0 0
        %2436 = vmatprep.subr.bf16.mxu0 0
        %2437 = vmatpush2.bf16.xpose.msra.mxu0 0
        %2438 = vmatprep.subr.bf16.mxu0 0
        %2439 = vmatpush2.bf16.xpose.msra.mxu0 0
        %2440 = vmatprep.subr.bf16.mxu0 0
        %2441 = vmatpush2.bf16.xpose.msra.mxu0 0
        %2442 = vmatprep.subr.bf16.mxu0 0
        %2443 = vmatpush2.bf16.xpose.msra.mxu0 0
        %2444 = vmatprep.mubr.bf16.mxu0 0
        %2445 = vmatmul.mubr.bf16.gmra.mxu0 %v2407
        %v2446 = vpop.f32.mrf.mxu0
        %v2447 = vadd.f32 0.0, %v2446
        %v2448 = vpop.f32.mrf.mxu0
        %v2449 = vpop.f32.mrf.mxu0
        %v2450 = vadd.f32 0.0, %v2449
        %v2451 = vpop.f32.mrf.mxu0
        %2452 = vdwg.mxu0
        %v2455 = vunpack.c.l.b16 %v2384
        %v2456 = vunpack.c.l.b16 %v2385
        %v2457 = vpack.c.b16 %v2456, %v2455
        %v2460 = vunpack.c.l.b16 %v2389
        %v2461 = vunpack.c.l.b16 %v2390
        %v2462 = vpack.c.b16 %v2461, %v2460
        %v2464 = vsel %vm1854, %v2457, 0
        %v2467 = vsel %vm1854, %v2462, 0
        %2469 = vmatprep.subr.bf16.mxu0 0
        %2470 = vmatpush1.bf16.xpose.msra.mxu0 0
        %2471 = vmatprep.subr.bf16.mxu0 0
        %2472 = vmatpush1.bf16.xpose.msra.mxu0 0
        %2473 = vmatprep.subr.bf16.mxu0 0
        %2474 = vmatpush1.bf16.xpose.msra.mxu0 0
        %2475 = vmatprep.subr.bf16.mxu0 0
        %2476 = vmatpush1.bf16.xpose.msra.mxu0 0
        %2477 = vmatprep.subr.bf16.mxu0 0
        %2478 = vmatpush1.bf16.xpose.msra.mxu0 0
        %2479 = vmatprep.subr.bf16.mxu0 0
        %2480 = vmatpush1.bf16.xpose.msra.mxu0 0
        %2481 = vmatprep.subr.bf16.mxu0 0
        %2482 = vmatpush1.bf16.xpose.msra.mxu0 0
        %2483 = vmatprep.subr.bf16.mxu0 0
        %2484 = vmatpush1.bf16.xpose.msra.mxu0 %v2467
        %2485 = vmatprep.subr.bf16.mxu0 0
        %2486 = vmatpush2.bf16.xpose.msra.mxu0 0
        %2487 = vmatprep.subr.bf16.mxu0 0
        %2488 = vmatpush2.bf16.xpose.msra.mxu0 0
        %2489 = vmatprep.subr.bf16.mxu0 0
        %2490 = vmatpush2.bf16.xpose.msra.mxu0 0
        %2491 = vmatprep.subr.bf16.mxu0 0
        %2492 = vmatpush2.bf16.xpose.msra.mxu0 0
        %2493 = vmatprep.subr.bf16.mxu0 0
        %2494 = vmatpush2.bf16.xpose.msra.mxu0 0
        %2495 = vmatprep.subr.bf16.mxu0 0
        %2496 = vmatpush2.bf16.xpose.msra.mxu0 0
        %2497 = vmatprep.subr.bf16.mxu0 0
        %2498 = vmatpush2.bf16.xpose.msra.mxu0 0
        %2499 = vmatprep.subr.bf16.mxu0 0
        %2500 = vmatpush2.bf16.xpose.msra.mxu0 0
        %2501 = vmatprep.mubr.bf16.mxu0 0
        %2502 = vmatmul.mubr.bf16.gmra.mxu0 %v2464
        %v2503 = vpop.f32.mrf.mxu0
        %v2504 = vadd.f32 0.0, %v2503
        %v2505 = vpop.f32.mrf.mxu0
        %v2506 = vpop.f32.mrf.mxu0
        %v2507 = vadd.f32 0.0, %v2506
        %v2508 = vpop.f32.mrf.mxu0
        %2509 = vdwg.mxu0
        %v2510 = vsel %vm1959, %v2447, -inf
        %2511 = vmax.xlane.f32.xlu0 %v2510
        %v2512 = vpop.xlane.xlu0 %2511
        %v2513 = vsel %vm1959, %v2450, -inf
        %2514 = vmax.xlane.f32.xlu0 %v2513
        %v2515 = vpop.xlane.xlu0 %2514
        %v2516 = vsel %vm1959, %v2504, -inf
        %2517 = vmax.xlane.f32.xlu0 %v2516
        %v2518 = vpop.xlane.xlu0 %2517
        %v2519 = vsel %vm1959, %v2507, -inf
        %2520 = vmax.xlane.f32.xlu0 %v2519
        %v2521 = vpop.xlane.xlu0 %2520
        %v2522 = vsub.f32 %v2447, %v2512
        %v2523 = vsub.f32 %v2450, %v2515
        %v2524 = vsub.f32 %v2504, %v2518
        %v2525 = vsub.f32 %v2507, %v2521
        %v2526 = vmul.f32 %v2522, 1.442695
        %v2527 = vpow.pop %v2526
        %v2528 = vmul.f32 %v2523, 1.442695
        %v2529 = vpow.pop %v2528
        %v2530 = vmul.f32 %v2524, 1.442695
        %v2531 = vpow.pop %v2530
        %v2532 = vmul.f32 %v2525, 1.442695
        %v2533 = vpow.pop %v2532
        %v2534 = vsel %vm1959, %v2527, 0.0
        %2535 = vadd.xlane.f32.xlu0 %v2534
        %v2536 = vpop.xlane.xlu0 %2535
        %v2537 = vsel %vm1959, %v2529, 0.0
        %2538 = vadd.xlane.f32.xlu0 %v2537
        %v2539 = vpop.xlane.xlu0 %2538
        %v2540 = vsel %vm1959, %v2531, 0.0
        %2541 = vadd.xlane.f32.xlu0 %v2540
        %v2542 = vpop.xlane.xlu0 %2541
        %v2543 = vsel %vm1959, %v2533, 0.0
        %2544 = vadd.xlane.f32.xlu0 %v2543
        %v2545 = vpop.xlane.xlu0 %2544
        %v2546 = vrcp.pop %v2536
        %v2547 = vrcp.pop %v2539
        %v2548 = vrcp.pop %v2542
        %v2549 = vrcp.pop %v2545
        %v2550 = vmul.f32 %v2527, %v2546
        %v2551 = vmul.f32 %v2529, %v2547
        %v2552 = vmul.f32 %v2531, %v2548
        %v2553 = vmul.f32 %v2533, %v2549
        %v2554 = vpack.c.bf16 %v2551, %v2550
        %v2555 = vpack.c.bf16 %v2553, %v2552
        %v2558 = vunpack.c.l.b16 %v2392
        %v2559 = vunpack.c.l.b16 %v2393
        %v2560 = vpack.c.b16 %v2559, %v2558
        %v2563 = vsel %vm1959, %v2554, 0
        %2565 = vmatprep.subr.bf16.mxu0 0
        %2566 = vmatpush1.bf16.msra.mxu0 0
        %2567 = vmatprep.subr.bf16.mxu0 0
        %2568 = vmatpush1.bf16.msra.mxu0 0
        %2569 = vmatprep.subr.bf16.mxu0 0
        %2570 = vmatpush1.bf16.msra.mxu0 0
        %2571 = vmatprep.subr.bf16.mxu0 0
        %2572 = vmatpush1.bf16.msra.mxu0 0
        %2573 = vmatprep.subr.bf16.mxu0 0
        %2574 = vmatpush1.bf16.msra.mxu0 0
        %2575 = vmatprep.subr.bf16.mxu0 0
        %2576 = vmatpush1.bf16.msra.mxu0 0
        %2577 = vmatprep.subr.bf16.mxu0 0
        %2578 = vmatpush1.bf16.msra.mxu0 0
        %2579 = vmatprep.subr.bf16.mxu0 0
        %2580 = vmatpush1.bf16.msra.mxu0 %v2560
        %2581 = vmatprep.subr.bf16.mxu0 0
        %2582 = vmatpush2.bf16.msra.mxu0 0
        %2583 = vmatprep.subr.bf16.mxu0 0
        %2584 = vmatpush2.bf16.msra.mxu0 0
        %2585 = vmatprep.subr.bf16.mxu0 0
        %2586 = vmatpush2.bf16.msra.mxu0 0
        %2587 = vmatprep.subr.bf16.mxu0 0
        %2588 = vmatpush2.bf16.msra.mxu0 0
        %2589 = vmatprep.subr.bf16.mxu0 0
        %2590 = vmatpush2.bf16.msra.mxu0 0
        %2591 = vmatprep.subr.bf16.mxu0 0
        %2592 = vmatpush2.bf16.msra.mxu0 0
        %2593 = vmatprep.subr.bf16.mxu0 0
        %2594 = vmatpush2.bf16.msra.mxu0 0
        %2595 = vmatprep.subr.bf16.mxu0 0
        %2596 = vmatpush2.bf16.msra.mxu0 0
        %2597 = vmatprep.mubr.bf16.mxu0 0
        %2598 = vmatmul.mubr.bf16.gmra.mxu0 %v2563
        %v2599 = vpop.f32.mrf.mxu0
        %v2600 = vadd.f32 0.0, %v2599
        %v2601 = vpop.f32.mrf.mxu0
        %v2602 = vpop.f32.mrf.mxu0
        %v2603 = vadd.f32 0.0, %v2602
        %v2604 = vpop.f32.mrf.mxu0
        %2605 = vdwg.mxu0
        %v2608 = vunpack.c.l.b16 %v2394
        %v2609 = vunpack.c.l.b16 %v2395
        %v2610 = vpack.c.b16 %v2609, %v2608
        %v2613 = vsel %vm1959, %v2555, 0
        %2615 = vmatprep.subr.bf16.mxu0 0
        %2616 = vmatpush1.bf16.msra.mxu0 0
        %2617 = vmatprep.subr.bf16.mxu0 0
        %2618 = vmatpush1.bf16.msra.mxu0 0
        %2619 = vmatprep.subr.bf16.mxu0 0
        %2620 = vmatpush1.bf16.msra.mxu0 0
        %2621 = vmatprep.subr.bf16.mxu0 0
        %2622 = vmatpush1.bf16.msra.mxu0 0
        %2623 = vmatprep.subr.bf16.mxu0 0
        %2624 = vmatpush1.bf16.msra.mxu0 0
        %2625 = vmatprep.subr.bf16.mxu0 0
        %2626 = vmatpush1.bf16.msra.mxu0 0
        %2627 = vmatprep.subr.bf16.mxu0 0
        %2628 = vmatpush1.bf16.msra.mxu0 0
        %2629 = vmatprep.subr.bf16.mxu0 0
        %2630 = vmatpush1.bf16.msra.mxu0 %v2610
        %2631 = vmatprep.subr.bf16.mxu0 0
        %2632 = vmatpush2.bf16.msra.mxu0 0
        %2633 = vmatprep.subr.bf16.mxu0 0
        %2634 = vmatpush2.bf16.msra.mxu0 0
        %2635 = vmatprep.subr.bf16.mxu0 0
        %2636 = vmatpush2.bf16.msra.mxu0 0
        %2637 = vmatprep.subr.bf16.mxu0 0
        %2638 = vmatpush2.bf16.msra.mxu0 0
        %2639 = vmatprep.subr.bf16.mxu0 0
        %2640 = vmatpush2.bf16.msra.mxu0 0
        %2641 = vmatprep.subr.bf16.mxu0 0
        %2642 = vmatpush2.bf16.msra.mxu0 0
        %2643 = vmatprep.subr.bf16.mxu0 0
        %2644 = vmatpush2.bf16.msra.mxu0 0
        %2645 = vmatprep.subr.bf16.mxu0 0
        %2646 = vmatpush2.bf16.msra.mxu0 0
        %2647 = vmatprep.mubr.bf16.mxu0 0
        %2648 = vmatmul.mubr.bf16.gmra.mxu0 %v2613
        %v2649 = vpop.f32.mrf.mxu0
        %v2650 = vadd.f32 0.0, %v2649
        %v2651 = vpop.f32.mrf.mxu0
        %v2652 = vpop.f32.mrf.mxu0
        %v2653 = vadd.f32 0.0, %v2652
        %v2654 = vpop.f32.mrf.mxu0
        %2655 = vdwg.mxu0
        %s2656 = scalar_lea.vmem %s286, 48
        %v2657 = vld [vmem:[%s2656] sm:$0xf]
        %v2658 = vld [vmem:[%s2656 + $0x4] sm:$0xf]
        %v2659 = vld [vmem:[%s2656 + $0x8] sm:$0xf]
        %v2660 = vld [vmem:[%s2656 + $0xc] sm:$0xf]
        %s2661 = scalar_lea.vmem %s301, 48
        %v2662 = vld [vmem:[%s2661] sm:$0xf]
        %v2663 = vld [vmem:[%s2661 + $0x4] sm:$0xf]
        %v2664 = vld [vmem:[%s2661 + $0x8] sm:$0xf]
        %v2665 = vld [vmem:[%s2661 + $0xc] sm:$0xf]
        %s2666 = scalar_lea.vmem %s306, 48
        %v2667 = vld [vmem:[%s2666] sm:$0xf]
        %v2668 = vld [vmem:[%s2666 + $0x4] sm:$0xf]
        %v2669 = vld [vmem:[%s2666 + $0x8] sm:$0xf]
        %v2670 = vld [vmem:[%s2666 + $0xc] sm:$0xf]
        %v2673 = vunpack.c.l.b16 %v2657
        %v2674 = vunpack.c.l.b16 %v2658
        %v2675 = vpack.c.b16 %v2674, %v2673
        %v2678 = vunpack.c.l.b16 %v2662
        %v2679 = vunpack.c.l.b16 %v2663
        %v2680 = vpack.c.b16 %v2679, %v2678
        %v2682 = vsel %vm1854, %v2675, 0
        %v2685 = vsel %vm1854, %v2680, 0
        %2687 = vmatprep.subr.bf16.mxu0 0
        %2688 = vmatpush1.bf16.xpose.msra.mxu0 0
        %2689 = vmatprep.subr.bf16.mxu0 0
        %2690 = vmatpush1.bf16.xpose.msra.mxu0 0
        %2691 = vmatprep.subr.bf16.mxu0 0
        %2692 = vmatpush1.bf16.xpose.msra.mxu0 0
        %2693 = vmatprep.subr.bf16.mxu0 0
        %2694 = vmatpush1.bf16.xpose.msra.mxu0 0
        %2695 = vmatprep.subr.bf16.mxu0 0
        %2696 = vmatpush1.bf16.xpose.msra.mxu0 0
        %2697 = vmatprep.subr.bf16.mxu0 0
        %2698 = vmatpush1.bf16.xpose.msra.mxu0 0
        %2699 = vmatprep.subr.bf16.mxu0 0
        %2700 = vmatpush1.bf16.xpose.msra.mxu0 0
        %2701 = vmatprep.subr.bf16.mxu0 0
        %2702 = vmatpush1.bf16.xpose.msra.mxu0 %v2685
        %2703 = vmatprep.subr.bf16.mxu0 0
        %2704 = vmatpush2.bf16.xpose.msra.mxu0 0
        %2705 = vmatprep.subr.bf16.mxu0 0
        %2706 = vmatpush2.bf16.xpose.msra.mxu0 0
        %2707 = vmatprep.subr.bf16.mxu0 0
        %2708 = vmatpush2.bf16.xpose.msra.mxu0 0
        %2709 = vmatprep.subr.bf16.mxu0 0
        %2710 = vmatpush2.bf16.xpose.msra.mxu0 0
        %2711 = vmatprep.subr.bf16.mxu0 0
        %2712 = vmatpush2.bf16.xpose.msra.mxu0 0
        %2713 = vmatprep.subr.bf16.mxu0 0
        %2714 = vmatpush2.bf16.xpose.msra.mxu0 0
        %2715 = vmatprep.subr.bf16.mxu0 0
        %2716 = vmatpush2.bf16.xpose.msra.mxu0 0
        %2717 = vmatprep.subr.bf16.mxu0 0
        %2718 = vmatpush2.bf16.xpose.msra.mxu0 0
        %2719 = vmatprep.mubr.bf16.mxu0 0
        %2720 = vmatmul.mubr.bf16.gmra.mxu0 %v2682
        %v2721 = vpop.f32.mrf.mxu0
        %v2722 = vadd.f32 0.0, %v2721
        %v2723 = vpop.f32.mrf.mxu0
        %v2724 = vpop.f32.mrf.mxu0
        %v2725 = vadd.f32 0.0, %v2724
        %v2726 = vpop.f32.mrf.mxu0
        %2727 = vdwg.mxu0
        %v2730 = vunpack.c.l.b16 %v2659
        %v2731 = vunpack.c.l.b16 %v2660
        %v2732 = vpack.c.b16 %v2731, %v2730
        %v2735 = vunpack.c.l.b16 %v2664
        %v2736 = vunpack.c.l.b16 %v2665
        %v2737 = vpack.c.b16 %v2736, %v2735
        %v2739 = vsel %vm1854, %v2732, 0
        %v2742 = vsel %vm1854, %v2737, 0
        %2744 = vmatprep.subr.bf16.mxu0 0
        %2745 = vmatpush1.bf16.xpose.msra.mxu0 0
        %2746 = vmatprep.subr.bf16.mxu0 0
        %2747 = vmatpush1.bf16.xpose.msra.mxu0 0
        %2748 = vmatprep.subr.bf16.mxu0 0
        %2749 = vmatpush1.bf16.xpose.msra.mxu0 0
        %2750 = vmatprep.subr.bf16.mxu0 0
        %2751 = vmatpush1.bf16.xpose.msra.mxu0 0
        %2752 = vmatprep.subr.bf16.mxu0 0
        %2753 = vmatpush1.bf16.xpose.msra.mxu0 0
        %2754 = vmatprep.subr.bf16.mxu0 0
        %2755 = vmatpush1.bf16.xpose.msra.mxu0 0
        %2756 = vmatprep.subr.bf16.mxu0 0
        %2757 = vmatpush1.bf16.xpose.msra.mxu0 0
        %2758 = vmatprep.subr.bf16.mxu0 0
        %2759 = vmatpush1.bf16.xpose.msra.mxu0 %v2742
        %2760 = vmatprep.subr.bf16.mxu0 0
        %2761 = vmatpush2.bf16.xpose.msra.mxu0 0
        %2762 = vmatprep.subr.bf16.mxu0 0
        %2763 = vmatpush2.bf16.xpose.msra.mxu0 0
        %2764 = vmatprep.subr.bf16.mxu0 0
        %2765 = vmatpush2.bf16.xpose.msra.mxu0 0
        %2766 = vmatprep.subr.bf16.mxu0 0
        %2767 = vmatpush2.bf16.xpose.msra.mxu0 0
        %2768 = vmatprep.subr.bf16.mxu0 0
        %2769 = vmatpush2.bf16.xpose.msra.mxu0 0
        %2770 = vmatprep.subr.bf16.mxu0 0
        %2771 = vmatpush2.bf16.xpose.msra.mxu0 0
        %2772 = vmatprep.subr.bf16.mxu0 0
        %2773 = vmatpush2.bf16.xpose.msra.mxu0 0
        %2774 = vmatprep.subr.bf16.mxu0 0
        %2775 = vmatpush2.bf16.xpose.msra.mxu0 0
        %2776 = vmatprep.mubr.bf16.mxu0 0
        %2777 = vmatmul.mubr.bf16.gmra.mxu0 %v2739
        %v2778 = vpop.f32.mrf.mxu0
        %v2779 = vadd.f32 0.0, %v2778
        %v2780 = vpop.f32.mrf.mxu0
        %v2781 = vpop.f32.mrf.mxu0
        %v2782 = vadd.f32 0.0, %v2781
        %v2783 = vpop.f32.mrf.mxu0
        %2784 = vdwg.mxu0
        %v2785 = vsel %vm1959, %v2722, -inf
        %2786 = vmax.xlane.f32.xlu0 %v2785
        %v2787 = vpop.xlane.xlu0 %2786
        %v2788 = vsel %vm1959, %v2725, -inf
        %2789 = vmax.xlane.f32.xlu0 %v2788
        %v2790 = vpop.xlane.xlu0 %2789
        %v2791 = vsel %vm1959, %v2779, -inf
        %2792 = vmax.xlane.f32.xlu0 %v2791
        %v2793 = vpop.xlane.xlu0 %2792
        %v2794 = vsel %vm1959, %v2782, -inf
        %2795 = vmax.xlane.f32.xlu0 %v2794
        %v2796 = vpop.xlane.xlu0 %2795
        %v2797 = vsub.f32 %v2722, %v2787
        %v2798 = vsub.f32 %v2725, %v2790
        %v2799 = vsub.f32 %v2779, %v2793
        %v2800 = vsub.f32 %v2782, %v2796
        %v2801 = vmul.f32 %v2797, 1.442695
        %v2802 = vpow.pop %v2801
        %v2803 = vmul.f32 %v2798, 1.442695
        %v2804 = vpow.pop %v2803
        %v2805 = vmul.f32 %v2799, 1.442695
        %v2806 = vpow.pop %v2805
        %v2807 = vmul.f32 %v2800, 1.442695
        %v2808 = vpow.pop %v2807
        %v2809 = vsel %vm1959, %v2802, 0.0
        %2810 = vadd.xlane.f32.xlu0 %v2809
        %v2811 = vpop.xlane.xlu0 %2810
        %v2812 = vsel %vm1959, %v2804, 0.0
        %2813 = vadd.xlane.f32.xlu0 %v2812
        %v2814 = vpop.xlane.xlu0 %2813
        %v2815 = vsel %vm1959, %v2806, 0.0
        %2816 = vadd.xlane.f32.xlu0 %v2815
        %v2817 = vpop.xlane.xlu0 %2816
        %v2818 = vsel %vm1959, %v2808, 0.0
        %2819 = vadd.xlane.f32.xlu0 %v2818
        %v2820 = vpop.xlane.xlu0 %2819
        %v2821 = vrcp.pop %v2811
        %v2822 = vrcp.pop %v2814
        %v2823 = vrcp.pop %v2817
        %v2824 = vrcp.pop %v2820
        %v2825 = vmul.f32 %v2802, %v2821
        %v2826 = vmul.f32 %v2804, %v2822
        %v2827 = vmul.f32 %v2806, %v2823
        %v2828 = vmul.f32 %v2808, %v2824
        %v2829 = vpack.c.bf16 %v2826, %v2825
        %v2830 = vpack.c.bf16 %v2828, %v2827
        %v2833 = vunpack.c.l.b16 %v2667
        %v2834 = vunpack.c.l.b16 %v2668
        %v2835 = vpack.c.b16 %v2834, %v2833
        %v2838 = vsel %vm1959, %v2829, 0
        %2840 = vmatprep.subr.bf16.mxu0 0
        %2841 = vmatpush1.bf16.msra.mxu0 0
        %2842 = vmatprep.subr.bf16.mxu0 0
        %2843 = vmatpush1.bf16.msra.mxu0 0
        %2844 = vmatprep.subr.bf16.mxu0 0
        %2845 = vmatpush1.bf16.msra.mxu0 0
        %2846 = vmatprep.subr.bf16.mxu0 0
        %2847 = vmatpush1.bf16.msra.mxu0 0
        %2848 = vmatprep.subr.bf16.mxu0 0
        %2849 = vmatpush1.bf16.msra.mxu0 0
        %2850 = vmatprep.subr.bf16.mxu0 0
        %2851 = vmatpush1.bf16.msra.mxu0 0
        %2852 = vmatprep.subr.bf16.mxu0 0
        %2853 = vmatpush1.bf16.msra.mxu0 0
        %2854 = vmatprep.subr.bf16.mxu0 0
        %2855 = vmatpush1.bf16.msra.mxu0 %v2835
        %2856 = vmatprep.subr.bf16.mxu0 0
        %2857 = vmatpush2.bf16.msra.mxu0 0
        %2858 = vmatprep.subr.bf16.mxu0 0
        %2859 = vmatpush2.bf16.msra.mxu0 0
        %2860 = vmatprep.subr.bf16.mxu0 0
        %2861 = vmatpush2.bf16.msra.mxu0 0
        %2862 = vmatprep.subr.bf16.mxu0 0
        %2863 = vmatpush2.bf16.msra.mxu0 0
        %2864 = vmatprep.subr.bf16.mxu0 0
        %2865 = vmatpush2.bf16.msra.mxu0 0
        %2866 = vmatprep.subr.bf16.mxu0 0
        %2867 = vmatpush2.bf16.msra.mxu0 0
        %2868 = vmatprep.subr.bf16.mxu0 0
        %2869 = vmatpush2.bf16.msra.mxu0 0
        %2870 = vmatprep.subr.bf16.mxu0 0
        %2871 = vmatpush2.bf16.msra.mxu0 0
        %2872 = vmatprep.mubr.bf16.mxu0 0
        %2873 = vmatmul.mubr.bf16.gmra.mxu0 %v2838
        %v2874 = vpop.f32.mrf.mxu0
        %v2875 = vadd.f32 0.0, %v2874
        %v2876 = vpop.f32.mrf.mxu0
        %v2877 = vpop.f32.mrf.mxu0
        %v2878 = vadd.f32 0.0, %v2877
        %v2879 = vpop.f32.mrf.mxu0
        %2880 = vdwg.mxu0
        %v2883 = vunpack.c.l.b16 %v2669
        %v2884 = vunpack.c.l.b16 %v2670
        %v2885 = vpack.c.b16 %v2884, %v2883
        %v2888 = vsel %vm1959, %v2830, 0
        %2890 = vmatprep.subr.bf16.mxu0 0
        %2891 = vmatpush1.bf16.msra.mxu0 0
        %2892 = vmatprep.subr.bf16.mxu0 0
        %2893 = vmatpush1.bf16.msra.mxu0 0
        %2894 = vmatprep.subr.bf16.mxu0 0
        %2895 = vmatpush1.bf16.msra.mxu0 0
        %2896 = vmatprep.subr.bf16.mxu0 0
        %2897 = vmatpush1.bf16.msra.mxu0 0
        %2898 = vmatprep.subr.bf16.mxu0 0
        %2899 = vmatpush1.bf16.msra.mxu0 0
        %2900 = vmatprep.subr.bf16.mxu0 0
        %2901 = vmatpush1.bf16.msra.mxu0 0
        %2902 = vmatprep.subr.bf16.mxu0 0
        %2903 = vmatpush1.bf16.msra.mxu0 0
        %2904 = vmatprep.subr.bf16.mxu0 0
        %2905 = vmatpush1.bf16.msra.mxu0 %v2885
        %2906 = vmatprep.subr.bf16.mxu0 0
        %2907 = vmatpush2.bf16.msra.mxu0 0
        %2908 = vmatprep.subr.bf16.mxu0 0
        %2909 = vmatpush2.bf16.msra.mxu0 0
        %2910 = vmatprep.subr.bf16.mxu0 0
        %2911 = vmatpush2.bf16.msra.mxu0 0
        %2912 = vmatprep.subr.bf16.mxu0 0
        %2913 = vmatpush2.bf16.msra.mxu0 0
        %2914 = vmatprep.subr.bf16.mxu0 0
        %2915 = vmatpush2.bf16.msra.mxu0 0
        %2916 = vmatprep.subr.bf16.mxu0 0
        %2917 = vmatpush2.bf16.msra.mxu0 0
        %2918 = vmatprep.subr.bf16.mxu0 0
        %2919 = vmatpush2.bf16.msra.mxu0 0
        %2920 = vmatprep.subr.bf16.mxu0 0
        %2921 = vmatpush2.bf16.msra.mxu0 0
        %2922 = vmatprep.mubr.bf16.mxu0 0
        %2923 = vmatmul.mubr.bf16.gmra.mxu0 %v2888
        %v2924 = vpop.f32.mrf.mxu0
        %v2925 = vadd.f32 0.0, %v2924
        %v2926 = vpop.f32.mrf.mxu0
        %v2927 = vpop.f32.mrf.mxu0
        %v2928 = vadd.f32 0.0, %v2927
        %v2929 = vpop.f32.mrf.mxu0
        %2930 = vdwg.mxu0
        %2935 = vrot.lane.b32.xlu0 %v2325, 8
        %v2936 = vpop.permute.xlu0 %2935
        %2937 = vrot.lane.b32.xlu0 %v2328, 8
        %v2938 = vpop.permute.xlu0 %2937
        %2939 = vrot.lane.b32.xlu0 %v2375, 8
        %v2940 = vpop.permute.xlu0 %2939
        %2941 = vrot.lane.b32.xlu0 %v2378, 8
        %v2942 = vpop.permute.xlu0 %2941
        %2951 = vrot.lane.b32.xlu0 %v2600, 16
        %v2952 = vpop.permute.xlu0 %2951
        %2953 = vrot.lane.b32.xlu0 %v2603, 16
        %v2954 = vpop.permute.xlu0 %2953
        %2955 = vrot.lane.b32.xlu0 %v2650, 16
        %v2956 = vpop.permute.xlu0 %2955
        %2957 = vrot.lane.b32.xlu0 %v2653, 16
        %v2958 = vpop.permute.xlu0 %2957
        %2967 = vrot.lane.b32.xlu0 %v2875, 24
        %v2968 = vpop.permute.xlu0 %2967
        %2969 = vrot.lane.b32.xlu0 %v2878, 24
        %v2970 = vpop.permute.xlu0 %2969
        %2971 = vrot.lane.b32.xlu0 %v2925, 24
        %v2972 = vpop.permute.xlu0 %2971
        %2973 = vrot.lane.b32.xlu0 %v2928, 24
        %v2974 = vpop.permute.xlu0 %2973
        %v2979 = vsel %vm1854, %v2050, %v2936
        %v2980 = vsel %vm1854, %v2053, %v2938
        %v2981 = vsel %vm1854, %v2100, %v2940
        %v2982 = vsel %vm1854, %v2103, %v2942
        %v2983 = vsel %vm1959, %v2979, %v2952
        %v2984 = vsel %vm1959, %v2980, %v2954
        %v2985 = vsel %vm1959, %v2981, %v2956
        %v2986 = vsel %vm1959, %v2982, %v2958
        %vm2987 = vcmask 195584
        %v2988 = vsel %vm2987, %v2983, %v2968
        %v2989 = vsel %vm2987, %v2984, %v2970
        %v2990 = vsel %vm2987, %v2985, %v2972
        %v2991 = vsel %vm2987, %v2986, %v2974
        %vm2992 = vcmask 261120
        %2993 = vst.msk [vmem:[%s311] sm:$0xff] %vm2992, %v2988
        %2994 = vst.msk [vmem:[%s311 + $0x8] sm:$0xff] %vm2992, %v2989
        %2995 = vst.msk [vmem:[%s311 + $0x10] sm:$0xff] %vm2992, %v2990
        %2996 = vst.msk [vmem:[%s311 + $0x18] sm:$0xff] %vm2992, %v2991
      $region48: #{_lambda_.8} parent=39 // pred_fallthru
        _
      %p2997 = scmp.lt.s32.totalorder %s23, 7
      %s2998 = scalar_select %p2997, %s23, 7
      %s2999 = smul.addr %s2998, 4
      %s3000 = smul.addr %s2999, 8
      %s3001 = scalar_lea.vmem %s6, %s3000
      // Predicated region
      $region49: #{_lambda_.8} parent=39 // pred_check
        %p3002 = pneg %p171
      $region50: #{_lambda_.8} parent=39 // pred_check_branch
        %3004 = sbr.rel (%p3002) target = $region52
      $region51: #{_lambda_.8} parent=39 // pred_region
        _
      $region52: #{_lambda_.8} parent=39 // pred_fallthru
        _
    $region40: #{_lambda_.8} parent=5 // pred_fallthru
      _
    %p3005 = scmp.le.s32.totalorder 2, %s18
    // Predicated region
    $region53: #{_lambda_.8} parent=5 // pred_check
      %p3006 = pneg %p3005
    $region54: #{_lambda_.8} parent=5 // pred_check_branch
      %3008 = sbr.rel (%p3006) target = $region56
    $region55: #{_lambda_.8} parent=5 // pred_region
      %s3009 = ssub.s32 %s18, 2
      // Predicated region
      $region57: #{_lambda_.8} parent=55 // pred_check
        %p3010 = pneg %p177
      $region58: #{_lambda_.8} parent=55 // pred_check_branch
        %3012 = sbr.rel (%p3010) target = $region60
      $region59: #{_lambda_.8} parent=55 // pred_region
        %p3013 = scmp.lt.s32.totalorder %s24, 7
        %s3014 = scalar_select %p3013, %s24, 7
        %s3015 = smul.addr %s3014, 4
        %s3016 = smul.addr %s3015, 8
        %s3017 = scalar_lea.vmem %s6, %s3016
      $region60: #{_lambda_.8} parent=55 // pred_fallthru
        _
    $region56: #{_lambda_.8} parent=5 // pred_fallthru
      _
  $region6: #{_lambda_.8} parent=0 // loop_footer
    %s22 = sadd.s32 1, %s18
  $region7: #{_lambda_.8} parent=0 // loop_footer_branch
    %17 = sbr.rel target = $region3
  $region8: #{_lambda_.8} parent=0 // loop_exit
    _

// kernel: _lambda_.11
$region0: #{_lambda_.11}
  #allocation0 [shape = 'u32[]', space=smem, size = 0x4, offset = 0x4, fixed_abs, tag = 'smem constant byte address 0x4 - core index']
  #allocation1 [shape = 'u32[144,128]{1,0:T(1,128)}', space=vmem, size = 0x12000, scoped, tag = 'internal scratch']
  %s0 = inlined_call_operand.vmem [shape: f32[256,1960], index: 0, kind: input, shape index: {}]
  %s1 = inlined_call_operand.vmem [shape: bf16[1960,32], index: 1, kind: input, shape index: {}]
  %s2 = inlined_call_operand.vmem [shape: f32[1,32], index: 2, kind: input, shape index: {}]
  %s3 = inlined_call_operand.vmem [shape: f32[256,32], index: 3, kind: output, shape index: {}]
  %s4 = sld [smem:[#allocation0]]
  $region45: #{_lambda_.11} parent=0
    _
  %s6 = ssub.s32 1, %s4
  %s7 = scalar_select 0, %s6, %s4
  loop: start=0, step=1, limit=4
  $region2: #{_lambda_.11} parent=0 // loop_pre_header
    _
  $region3: #{_lambda_.11} parent=0 // loop_header
    %s9 = sphi 0, %s13
    %p10 = scmp.ge.s32.totalorder %s9, 4
    %s19 = sphi 0, %s21
    %s22 = sphi 0, %s19
    %s23 = sphi 0, %s22
    %s39 = sphi 0, %s23
    %s43 = sphi 0, %s43
    %s45 = sphi 0, %s43
    %s46 = sphi 0, %s45
    %s60 = sphi 0, %s46
    %s64 = sphi 0, %s64
    %s66 = sphi 0, %s64
    %s67 = sphi 0, %s66
    %s81 = sphi 0, %s67
    %s87 = sphi 0, %s89
    %s90 = sphi 0, %s87
    %s91 = sphi 0, %s90
    %s107 = sphi 0, %s91
  $region4: #{_lambda_.11} parent=0 // loop_header_branch
    %12 = sbr.rel (%p10) target = $region8
  $region5: #{_lambda_.11} parent=0 // loop_body
    %s14 = ssub.s32 %s9, 1
    %s15 = ssub.s32 %s9, 2
    %s16 = sadd.s32 %s9, 1
    %s17 = ssub.s32 %s9, %s16
    %p18 = scmp.eq.s32.totalorder %s17, 0
    %s20 = sadd.s32 %s19, 1
    %s21 = scalar_select %p18, %s19, %s20
    %p24 = pneg %p18
    %p25 = scmp.eq.s32.totalorder %s9, 1
    %p26 = por %p24, %p25
    %p27 = scmp.ne.s32.totalorder %s19, %s22
    %p28 = scmp.eq.s32.totalorder %s9, 0
    %p29 = por %p27, %p28
    %p30 = scmp.ne.s32.totalorder %s19, %s22
    %p31 = scmp.eq.s32.totalorder %s14, 1
    %p32 = por %p30, %p31
    %p33 = scmp.ne.s32.totalorder %s22, %s23
    %p34 = scmp.eq.s32.totalorder %s14, 0
    %p35 = por %p33, %p34
    %p36 = scmp.ne.s32.totalorder %s22, %s23
    %p37 = scmp.eq.s32.totalorder %s15, 1
    %p38 = por %p36, %p37
    %p40 = scmp.ne.s32.totalorder %s23, %s39
    %p41 = scmp.eq.s32.totalorder %s15, 0
    %p42 = por %p40, %p41
    %s44 = sadd.s32 %s43, 1
    %p47 = scmp.eq.s32.totalorder %s9, 1
    %p48 = scmp.ne.s32.totalorder %s43, %s45
    %p49 = scmp.eq.s32.totalorder %s9, 0
    %p50 = por %p48, %p49
    %p51 = scmp.ne.s32.totalorder %s43, %s45
    %p52 = scmp.eq.s32.totalorder %s14, 1
    %p53 = por %p51, %p52
    %p54 = scmp.ne.s32.totalorder %s45, %s46
    %p55 = scmp.eq.s32.totalorder %s14, 0
    %p56 = por %p54, %p55
    %p57 = scmp.ne.s32.totalorder %s45, %s46
    %p58 = scmp.eq.s32.totalorder %s15, 1
    %p59 = por %p57, %p58
    %p61 = scmp.ne.s32.totalorder %s46, %s60
    %p62 = scmp.eq.s32.totalorder %s15, 0
    %p63 = por %p61, %p62
    %s65 = sadd.s32 %s64, 1
    %p68 = scmp.eq.s32.totalorder %s9, 1
    %p69 = scmp.ne.s32.totalorder %s64, %s66
    %p70 = scmp.eq.s32.totalorder %s9, 0
    %p71 = por %p69, %p70
    %p72 = scmp.ne.s32.totalorder %s64, %s66
    %p73 = scmp.eq.s32.totalorder %s14, 1
    %p74 = por %p72, %p73
    %p75 = scmp.ne.s32.totalorder %s66, %s67
    %p76 = scmp.eq.s32.totalorder %s14, 0
    %p77 = por %p75, %p76
    %p78 = scmp.ne.s32.totalorder %s66, %s67
    %p79 = scmp.eq.s32.totalorder %s15, 1
    %p80 = por %p78, %p79
    %p82 = scmp.ne.s32.totalorder %s67, %s81
    %p83 = scmp.eq.s32.totalorder %s15, 0
    %p84 = por %p82, %p83
    %s85 = ssub.s32 %s9, %s16
    %p86 = scmp.eq.s32.totalorder %s85, 0
    %s88 = sadd.s32 %s87, 1
    %s89 = scalar_select %p86, %s87, %s88
    %p92 = pneg %p86
    %p93 = scmp.eq.s32.totalorder %s9, 1
    %p94 = por %p92, %p93
    %p95 = scmp.ne.s32.totalorder %s87, %s90
    %p96 = scmp.eq.s32.totalorder %s9, 0
    %p97 = por %p95, %p96
    %p98 = scmp.ne.s32.totalorder %s87, %s90
    %p99 = scmp.eq.s32.totalorder %s14, 1
    %p100 = por %p98, %p99
    %p101 = scmp.ne.s32.totalorder %s90, %s91
    %p102 = scmp.eq.s32.totalorder %s14, 0
    %p103 = por %p101, %p102
    %p104 = scmp.ne.s32.totalorder %s90, %s91
    %p105 = scmp.eq.s32.totalorder %s15, 1
    %p106 = por %p104, %p105
    %p108 = scmp.ne.s32.totalorder %s91, %s107
    %p109 = scmp.eq.s32.totalorder %s15, 0
    %p110 = por %p108, %p109
    %p111 = scmp.le.s32.totalorder 1, %s9
    %p112 = scmp.lt.s32.totalorder %s9, 3
    %p113 = pnand %p111, %p112
    %p114 = pneg %p113
    // Predicated region
    $region9: #{_lambda_.11} parent=5 // pred_check
      _
    $region10: #{_lambda_.11} parent=5 // pred_check_branch
      %116 = sbr.rel (%p113) target = $region12
    $region11: #{_lambda_.11} parent=5 // pred_region
      %s117 = ssub.s32 %s9, 1
      // Predicated region
      $region13: #{_lambda_.11} parent=11 // pred_check
        %p118 = pneg %p56
      $region14: #{_lambda_.11} parent=11 // pred_check_branch
        %120 = sbr.rel (%p118) target = $region16
      $region15: #{_lambda_.11} parent=11 // pred_region
        _
      $region16: #{_lambda_.11} parent=11 // pred_fallthru
        _
      // Predicated region
      $region17: #{_lambda_.11} parent=11 // pred_check
        %p121 = pneg %p77
      $region18: #{_lambda_.11} parent=11 // pred_check_branch
        %123 = sbr.rel (%p121) target = $region20
      $region19: #{_lambda_.11} parent=11 // pred_region
        _
      $region20: #{_lambda_.11} parent=11 // pred_fallthru
        _
    $region12: #{_lambda_.11} parent=5 // pred_fallthru
      _
    %p124 = scmp.lt.s32.totalorder %s9, 2
    // Predicated region
    $region21: #{_lambda_.11} parent=5 // pred_check
      %p125 = pneg %p124
    $region22: #{_lambda_.11} parent=5 // pred_check_branch
      %127 = sbr.rel (%p125) target = $region24
    $region23: #{_lambda_.11} parent=5 // pred_region
      // Predicated region
      $region25: #{_lambda_.11} parent=23 // pred_check
        %p128 = pneg %p29
      $region26: #{_lambda_.11} parent=23 // pred_check_branch
        %130 = sbr.rel (%p128) target = $region28
      $region27: #{_lambda_.11} parent=23 // pred_region
        %s131 = smul.u32 16, %s9
        %p132 = scmp.lt.s32.totalorder %s131, 31
        %s133 = scalar_select %p132, %s131, 31
        %s134 = smul.addr %s133, 16
        %s135 = smul.addr %s134, 8
        %s136 = scalar_lea.vmem %s0, %s135
        %s137 = smul.u32 16, %s9
      $region28: #{_lambda_.11} parent=23 // pred_fallthru
        _
    $region24: #{_lambda_.11} parent=5 // pred_fallthru
      _
    %p138 = scmp.le.s32.totalorder 1, %s9
    %p139 = scmp.lt.s32.totalorder %s9, 3
    %p140 = pnand %p138, %p139
    %p141 = pneg %p140
    // Predicated region
    $region29: #{_lambda_.11} parent=5 // pred_check
      _
    $region30: #{_lambda_.11} parent=5 // pred_check_branch
      %143 = sbr.rel (%p140) target = $region32
    $region31: #{_lambda_.11} parent=5 // pred_region
      %s144 = ssub.s32 %s9, 1
      %s145 = smul.u32 16, %s14
      %p146 = scmp.lt.s32.totalorder %s145, 31
      %s147 = scalar_select %p146, %s145, 31
      %s148 = smul.addr %s147, 16
      %s149 = smul.addr %s148, 8
      %s150 = scalar_lea.vmem %s0, %s149
      %p151 = pneg %p35
      %p152 = pneg %p32
      %p153 = pneg %p56
      %p154 = pneg %p53
      %p155 = pneg %p77
      %p156 = pneg %p74
      %p157 = pneg %p103
      %p158 = pneg %p100
      %s159 = smul.u32 16, %s14
      %p160 = scmp.lt.s32.totalorder %s159, 31
      %s161 = scalar_select %p160, %s159, 31
      %s162 = smul.addr %s161, 8
      %s163 = scalar_lea.vmem %s3, %s162
      %s164 = smul.u32 16, %s14
      %p165 = scmp.lt.s32.totalorder %s164, 31
      %s166 = scalar_select %p165, %s164, 31
      %s167 = smul.addr %s166, 16
      %s168 = smul.addr %s167, 8
      %s169 = scalar_lea.vmem %s0, %s168
      %s170 = smul.u32 16, %s14
      %s171 = smul.u32 16, %s14
      %p172 = scmp.lt.s32.totalorder %s171, 31
      %s173 = scalar_select %p172, %s171, 31
      %s174 = smul.addr %s173, 8
      %s175 = scalar_lea.vmem %s3, %s174
      %s176 = smul.u32 16, %s14
      %v178 = vld [vmem:[%s169] sm:$0xff]
      %v179 = vld [vmem:[%s169 + $0x8] sm:$0xff]
      %v180 = vld [vmem:[%s169 + $0x10] sm:$0xff]
      %v181 = vld [vmem:[%s169 + $0x18] sm:$0xff]
      %v182 = vld [vmem:[%s169 + $0x20] sm:$0xff]
      %v183 = vld [vmem:[%s169 + $0x28] sm:$0xff]
      %v184 = vld [vmem:[%s169 + $0x30] sm:$0xff]
      %v185 = vld [vmem:[%s169 + $0x38] sm:$0xff]
      %v186 = vld [vmem:[%s169 + $0x40] sm:$0xff]
      %v187 = vld [vmem:[%s169 + $0x48] sm:$0xff]
      %v188 = vld [vmem:[%s169 + $0x50] sm:$0xff]
      %v189 = vld [vmem:[%s169 + $0x58] sm:$0xff]
      %v190 = vld [vmem:[%s169 + $0x60] sm:$0xff]
      %v191 = vld [vmem:[%s169 + $0x68] sm:$0xff]
      %v192 = vld [vmem:[%s169 + $0x70] sm:$0xff]
      %v193 = vld [vmem:[%s169 + $0x78] sm:$0xff]
      %v194 = vld [vmem:[%s169 + $0x80] sm:$0xff]
      %v195 = vld [vmem:[%s169 + $0x88] sm:$0xff]
      %v196 = vld [vmem:[%s169 + $0x90] sm:$0xff]
      %v197 = vld [vmem:[%s169 + $0x98] sm:$0xff]
      %v198 = vld [vmem:[%s169 + $0xa0] sm:$0xff]
      %v199 = vld [vmem:[%s169 + $0xa8] sm:$0xff]
      %v200 = vld [vmem:[%s169 + $0xb0] sm:$0xff]
      %v201 = vld [vmem:[%s169 + $0xb8] sm:$0xff]
      %v202 = vld [vmem:[%s169 + $0xc0] sm:$0xff]
      %v203 = vld [vmem:[%s169 + $0xc8] sm:$0xff]
      %v204 = vld [vmem:[%s169 + $0xd0] sm:$0xff]
      %v205 = vld [vmem:[%s169 + $0xd8] sm:$0xff]
      %v206 = vld [vmem:[%s169 + $0xe0] sm:$0xff]
      %v207 = vld [vmem:[%s169 + $0xe8] sm:$0xff]
      %v208 = vld [vmem:[%s169 + $0xf0] sm:$0xff]
      %v209 = vld [vmem:[%s169 + $0xf8] sm:$0xff]
      %v210 = vld [vmem:[%s169 + $0x100] sm:$0xff]
      %v211 = vld [vmem:[%s169 + $0x108] sm:$0xff]
      %v212 = vld [vmem:[%s169 + $0x110] sm:$0xff]
      %v213 = vld [vmem:[%s169 + $0x118] sm:$0xff]
      %v214 = vld [vmem:[%s169 + $0x120] sm:$0xff]
      %v215 = vld [vmem:[%s169 + $0x128] sm:$0xff]
      %v216 = vld [vmem:[%s169 + $0x130] sm:$0xff]
      %v217 = vld [vmem:[%s169 + $0x138] sm:$0xff]
      %v218 = vld [vmem:[%s169 + $0x140] sm:$0xff]
      %v219 = vld [vmem:[%s169 + $0x148] sm:$0xff]
      %v220 = vld [vmem:[%s169 + $0x150] sm:$0xff]
      %v221 = vld [vmem:[%s169 + $0x158] sm:$0xff]
      %v222 = vld [vmem:[%s169 + $0x160] sm:$0xff]
      %v223 = vld [vmem:[%s169 + $0x168] sm:$0xff]
      %v224 = vld [vmem:[%s169 + $0x170] sm:$0xff]
      %v225 = vld [vmem:[%s169 + $0x178] sm:$0xff]
      %v226 = vld [vmem:[%s169 + $0x180] sm:$0xff]
      %v227 = vld [vmem:[%s169 + $0x188] sm:$0xff]
      %v228 = vld [vmem:[%s169 + $0x190] sm:$0xff]
      %v229 = vld [vmem:[%s169 + $0x198] sm:$0xff]
      %v230 = vld [vmem:[%s169 + $0x1a0] sm:$0xff]
      %v231 = vld [vmem:[%s169 + $0x1a8] sm:$0xff]
      %v232 = vld [vmem:[%s169 + $0x1b0] sm:$0xff]
      %v233 = vld [vmem:[%s169 + $0x1b8] sm:$0xff]
      %v234 = vld [vmem:[%s169 + $0x1c0] sm:$0xff]
      %v235 = vld [vmem:[%s169 + $0x1c8] sm:$0xff]
      %v236 = vld [vmem:[%s169 + $0x1d0] sm:$0xff]
      %v237 = vld [vmem:[%s169 + $0x1d8] sm:$0xff]
      %v238 = vld [vmem:[%s169 + $0x1e0] sm:$0xff]
      %v239 = vld [vmem:[%s169 + $0x1e8] sm:$0xff]
      %v240 = vld [vmem:[%s169 + $0x1f0] sm:$0xff]
      %v241 = vld [vmem:[%s169 + $0x1f8] sm:$0xff]
      %v242 = vld [vmem:[%s169 + $0x200] sm:$0xff]
      %v243 = vld [vmem:[%s169 + $0x208] sm:$0xff]
      %v244 = vld [vmem:[%s169 + $0x210] sm:$0xff]
      %v245 = vld [vmem:[%s169 + $0x218] sm:$0xff]
      %v246 = vld [vmem:[%s169 + $0x220] sm:$0xff]
      %v247 = vld [vmem:[%s169 + $0x228] sm:$0xff]
      %v248 = vld [vmem:[%s169 + $0x230] sm:$0xff]
      %v249 = vld [vmem:[%s169 + $0x238] sm:$0xff]
      %v250 = vld [vmem:[%s169 + $0x240] sm:$0xff]
      %v251 = vld [vmem:[%s169 + $0x248] sm:$0xff]
      %v252 = vld [vmem:[%s169 + $0x250] sm:$0xff]
      %v253 = vld [vmem:[%s169 + $0x258] sm:$0xff]
      %v254 = vld [vmem:[%s169 + $0x260] sm:$0xff]
      %v255 = vld [vmem:[%s169 + $0x268] sm:$0xff]
      %v256 = vld [vmem:[%s169 + $0x270] sm:$0xff]
      %v257 = vld [vmem:[%s169 + $0x278] sm:$0xff]
      %v258 = vld [vmem:[%s169 + $0x280] sm:$0xff]
      %v259 = vld [vmem:[%s169 + $0x288] sm:$0xff]
      %v260 = vld [vmem:[%s169 + $0x290] sm:$0xff]
      %v261 = vld [vmem:[%s169 + $0x298] sm:$0xff]
      %v262 = vld [vmem:[%s169 + $0x2a0] sm:$0xff]
      %v263 = vld [vmem:[%s169 + $0x2a8] sm:$0xff]
      %v264 = vld [vmem:[%s169 + $0x2b0] sm:$0xff]
      %v265 = vld [vmem:[%s169 + $0x2b8] sm:$0xff]
      %v266 = vld [vmem:[%s169 + $0x2c0] sm:$0xff]
      %v267 = vld [vmem:[%s169 + $0x2c8] sm:$0xff]
      %v268 = vld [vmem:[%s169 + $0x2d0] sm:$0xff]
      %v269 = vld [vmem:[%s169 + $0x2d8] sm:$0xff]
      %v270 = vld [vmem:[%s169 + $0x2e0] sm:$0xff]
      %v271 = vld [vmem:[%s169 + $0x2e8] sm:$0xff]
      %v272 = vld [vmem:[%s169 + $0x2f0] sm:$0xff]
      %v273 = vld [vmem:[%s169 + $0x2f8] sm:$0xff]
      %v274 = vld [vmem:[%s169 + $0x300] sm:$0xff]
      %v275 = vld [vmem:[%s169 + $0x308] sm:$0xff]
      %v276 = vld [vmem:[%s169 + $0x310] sm:$0xff]
      %v277 = vld [vmem:[%s169 + $0x318] sm:$0xff]
      %v278 = vld [vmem:[%s169 + $0x320] sm:$0xff]
      %v279 = vld [vmem:[%s169 + $0x328] sm:$0xff]
      %v280 = vld [vmem:[%s169 + $0x330] sm:$0xff]
      %v281 = vld [vmem:[%s169 + $0x338] sm:$0xff]
      %v282 = vld [vmem:[%s169 + $0x340] sm:$0xff]
      %v283 = vld [vmem:[%s169 + $0x348] sm:$0xff]
      %v284 = vld [vmem:[%s169 + $0x350] sm:$0xff]
      %v285 = vld [vmem:[%s169 + $0x358] sm:$0xff]
      %v286 = vld [vmem:[%s169 + $0x360] sm:$0xff]
      %v287 = vld [vmem:[%s169 + $0x368] sm:$0xff]
      %v288 = vld [vmem:[%s169 + $0x370] sm:$0xff]
      %v289 = vld [vmem:[%s169 + $0x378] sm:$0xff]
      %v290 = vld [vmem:[%s169 + $0x380] sm:$0xff]
      %v291 = vld [vmem:[%s169 + $0x388] sm:$0xff]
      %v292 = vld [vmem:[%s169 + $0x390] sm:$0xff]
      %v293 = vld [vmem:[%s169 + $0x398] sm:$0xff]
      %v294 = vld [vmem:[%s169 + $0x3a0] sm:$0xff]
      %v295 = vld [vmem:[%s169 + $0x3a8] sm:$0xff]
      %v296 = vld [vmem:[%s169 + $0x3b0] sm:$0xff]
      %v297 = vld [vmem:[%s169 + $0x3b8] sm:$0xff]
      %v298 = vld [vmem:[%s169 + $0x3c0] sm:$0xff]
      %v299 = vld [vmem:[%s169 + $0x3c8] sm:$0xff]
      %v300 = vld [vmem:[%s169 + $0x3d0] sm:$0xff]
      %v301 = vld [vmem:[%s169 + $0x3d8] sm:$0xff]
      %v302 = vld [vmem:[%s169 + $0x3e0] sm:$0xff]
      %v303 = vld [vmem:[%s169 + $0x3e8] sm:$0xff]
      %v304 = vld [vmem:[%s169 + $0x3f0] sm:$0xff]
      %v305 = vld [vmem:[%s169 + $0x3f8] sm:$0xff]
      %v306 = vld [vmem:[%s169 + $0x400] sm:$0xff]
      %v307 = vld [vmem:[%s169 + $0x408] sm:$0xff]
      %v308 = vld [vmem:[%s169 + $0x410] sm:$0xff]
      %v309 = vld [vmem:[%s169 + $0x418] sm:$0xff]
      %v310 = vld [vmem:[%s169 + $0x420] sm:$0xff]
      %v311 = vld [vmem:[%s169 + $0x428] sm:$0xff]
      %v312 = vld [vmem:[%s169 + $0x430] sm:$0xff]
      %v313 = vld [vmem:[%s169 + $0x438] sm:$0xff]
      %v314 = vld [vmem:[%s169 + $0x440] sm:$0xff]
      %v315 = vld [vmem:[%s169 + $0x448] sm:$0xff]
      %v316 = vld [vmem:[%s169 + $0x450] sm:$0xff]
      %v317 = vld [vmem:[%s169 + $0x458] sm:$0xff]
      %v318 = vld [vmem:[%s169 + $0x460] sm:$0xff]
      %v319 = vld [vmem:[%s169 + $0x468] sm:$0xff]
      %v320 = vld [vmem:[%s169 + $0x470] sm:$0xff]
      %v321 = vld [vmem:[%s169 + $0x478] sm:$0xff]
      %v322 = vld [vmem:[%s169 + $0x480] sm:$0xff]
      %v323 = vld [vmem:[%s169 + $0x488] sm:$0xff]
      %v324 = vld [vmem:[%s169 + $0x490] sm:$0xff]
      %v325 = vld [vmem:[%s169 + $0x498] sm:$0xff]
      %v326 = vld [vmem:[%s169 + $0x4a0] sm:$0xff]
      %v327 = vld [vmem:[%s169 + $0x4a8] sm:$0xff]
      %v328 = vld [vmem:[%s169 + $0x4b0] sm:$0xff]
      %v329 = vld [vmem:[%s169 + $0x4b8] sm:$0xff]
      %v330 = vld [vmem:[%s169 + $0x4c0] sm:$0xff]
      %v331 = vld [vmem:[%s169 + $0x4c8] sm:$0xff]
      %v332 = vld [vmem:[%s169 + $0x4d0] sm:$0xff]
      %v333 = vld [vmem:[%s169 + $0x4d8] sm:$0xff]
      %v334 = vld [vmem:[%s169 + $0x4e0] sm:$0xff]
      %v335 = vld [vmem:[%s169 + $0x4e8] sm:$0xff]
      %v336 = vld [vmem:[%s169 + $0x4f0] sm:$0xff]
      %v337 = vld [vmem:[%s169 + $0x4f8] sm:$0xff]
      %v338 = vld [vmem:[%s169 + $0x500] sm:$0xff]
      %v339 = vld [vmem:[%s169 + $0x508] sm:$0xff]
      %v340 = vld [vmem:[%s169 + $0x510] sm:$0xff]
      %v341 = vld [vmem:[%s169 + $0x518] sm:$0xff]
      %v342 = vld [vmem:[%s169 + $0x520] sm:$0xff]
      %v343 = vld [vmem:[%s169 + $0x528] sm:$0xff]
      %v344 = vld [vmem:[%s169 + $0x530] sm:$0xff]
      %v345 = vld [vmem:[%s169 + $0x538] sm:$0xff]
      %v346 = vld [vmem:[%s169 + $0x540] sm:$0xff]
      %v347 = vld [vmem:[%s169 + $0x548] sm:$0xff]
      %v348 = vld [vmem:[%s169 + $0x550] sm:$0xff]
      %v349 = vld [vmem:[%s169 + $0x558] sm:$0xff]
      %v350 = vld [vmem:[%s169 + $0x560] sm:$0xff]
      %v351 = vld [vmem:[%s169 + $0x568] sm:$0xff]
      %v352 = vld [vmem:[%s169 + $0x570] sm:$0xff]
      %v353 = vld [vmem:[%s169 + $0x578] sm:$0xff]
      %v354 = vld [vmem:[%s169 + $0x580] sm:$0xff]
      %v355 = vld [vmem:[%s169 + $0x588] sm:$0xff]
      %v356 = vld [vmem:[%s169 + $0x590] sm:$0xff]
      %v357 = vld [vmem:[%s169 + $0x598] sm:$0xff]
      %v358 = vld [vmem:[%s169 + $0x5a0] sm:$0xff]
      %v359 = vld [vmem:[%s169 + $0x5a8] sm:$0xff]
      %v360 = vld [vmem:[%s169 + $0x5b0] sm:$0xff]
      %v361 = vld [vmem:[%s169 + $0x5b8] sm:$0xff]
      %v362 = vld [vmem:[%s169 + $0x5c0] sm:$0xff]
      %v363 = vld [vmem:[%s169 + $0x5c8] sm:$0xff]
      %v364 = vld [vmem:[%s169 + $0x5d0] sm:$0xff]
      %v365 = vld [vmem:[%s169 + $0x5d8] sm:$0xff]
      %v366 = vld [vmem:[%s169 + $0x5e0] sm:$0xff]
      %v367 = vld [vmem:[%s169 + $0x5e8] sm:$0xff]
      %v368 = vld [vmem:[%s169 + $0x5f0] sm:$0xff]
      %v369 = vld [vmem:[%s169 + $0x5f8] sm:$0xff]
      %v370 = vld [vmem:[%s169 + $0x600] sm:$0xff]
      %v371 = vld [vmem:[%s169 + $0x608] sm:$0xff]
      %v372 = vld [vmem:[%s169 + $0x610] sm:$0xff]
      %v373 = vld [vmem:[%s169 + $0x618] sm:$0xff]
      %v374 = vld [vmem:[%s169 + $0x620] sm:$0xff]
      %v375 = vld [vmem:[%s169 + $0x628] sm:$0xff]
      %v376 = vld [vmem:[%s169 + $0x630] sm:$0xff]
      %v377 = vld [vmem:[%s169 + $0x638] sm:$0xff]
      %v378 = vld [vmem:[%s169 + $0x640] sm:$0xff]
      %v379 = vld [vmem:[%s169 + $0x648] sm:$0xff]
      %v380 = vld [vmem:[%s169 + $0x650] sm:$0xff]
      %v381 = vld [vmem:[%s169 + $0x658] sm:$0xff]
      %v382 = vld [vmem:[%s169 + $0x660] sm:$0xff]
      %v383 = vld [vmem:[%s169 + $0x668] sm:$0xff]
      %v384 = vld [vmem:[%s169 + $0x670] sm:$0xff]
      %v385 = vld [vmem:[%s169 + $0x678] sm:$0xff]
      %v386 = vld [vmem:[%s169 + $0x680] sm:$0xff]
      %v387 = vld [vmem:[%s169 + $0x688] sm:$0xff]
      %v388 = vld [vmem:[%s169 + $0x690] sm:$0xff]
      %v389 = vld [vmem:[%s169 + $0x698] sm:$0xff]
      %v390 = vld [vmem:[%s169 + $0x6a0] sm:$0xff]
      %v391 = vld [vmem:[%s169 + $0x6a8] sm:$0xff]
      %v392 = vld [vmem:[%s169 + $0x6b0] sm:$0xff]
      %v393 = vld [vmem:[%s169 + $0x6b8] sm:$0xff]
      %v394 = vld [vmem:[%s169 + $0x6c0] sm:$0xff]
      %v395 = vld [vmem:[%s169 + $0x6c8] sm:$0xff]
      %v396 = vld [vmem:[%s169 + $0x6d0] sm:$0xff]
      %v397 = vld [vmem:[%s169 + $0x6d8] sm:$0xff]
      %v398 = vld [vmem:[%s169 + $0x6e0] sm:$0xff]
      %v399 = vld [vmem:[%s169 + $0x6e8] sm:$0xff]
      %v400 = vld [vmem:[%s169 + $0x6f0] sm:$0xff]
      %v401 = vld [vmem:[%s169 + $0x6f8] sm:$0xff]
      %v402 = vld [vmem:[%s169 + $0x700] sm:$0xff]
      %v403 = vld [vmem:[%s169 + $0x708] sm:$0xff]
      %v404 = vld [vmem:[%s169 + $0x710] sm:$0xff]
      %v405 = vld [vmem:[%s169 + $0x718] sm:$0xff]
      %v406 = vld [vmem:[%s169 + $0x720] sm:$0xff]
      %v407 = vld [vmem:[%s169 + $0x728] sm:$0xff]
      %v408 = vld [vmem:[%s169 + $0x730] sm:$0xff]
      %v409 = vld [vmem:[%s169 + $0x738] sm:$0xff]
      %v410 = vld [vmem:[%s169 + $0x740] sm:$0xff]
      %v411 = vld [vmem:[%s169 + $0x748] sm:$0xff]
      %v412 = vld [vmem:[%s169 + $0x750] sm:$0xff]
      %v413 = vld [vmem:[%s169 + $0x758] sm:$0xff]
      %v414 = vld [vmem:[%s169 + $0x760] sm:$0xff]
      %v415 = vld [vmem:[%s169 + $0x768] sm:$0xff]
      %v416 = vld [vmem:[%s169 + $0x770] sm:$0xff]
      %v417 = vld [vmem:[%s169 + $0x778] sm:$0xff]
      %v418 = vld [vmem:[%s169 + $0x780] sm:$0xff]
      %v419 = vld [vmem:[%s169 + $0x788] sm:$0xff]
      %v420 = vld [vmem:[%s169 + $0x790] sm:$0xff]
      %v421 = vld [vmem:[%s169 + $0x798] sm:$0xff]
      %v422 = vld [vmem:[%s169 + $0x7a0] sm:$0xff]
      %v423 = vld [vmem:[%s169 + $0x7a8] sm:$0xff]
      %v424 = vld [vmem:[%s169 + $0x7b0] sm:$0xff]
      %v425 = vld [vmem:[%s169 + $0x7b8] sm:$0xff]
      %v426 = vld [vmem:[%s169 + $0x7c0] sm:$0xff]
      %v427 = vld [vmem:[%s169 + $0x7c8] sm:$0xff]
      %v428 = vld [vmem:[%s169 + $0x7d0] sm:$0xff]
      %v429 = vld [vmem:[%s169 + $0x7d8] sm:$0xff]
      %v430 = vld [vmem:[%s169 + $0x7e0] sm:$0xff]
      %v431 = vld [vmem:[%s169 + $0x7e8] sm:$0xff]
      %v432 = vld [vmem:[%s169 + $0x7f0] sm:$0xff]
      %v433 = vld [vmem:[%s169 + $0x7f8] sm:$0xff]
      %v434 = vmul.f32 %v178, 0.5
      %v435 = vmul.f32 %v179, 0.5
      %v436 = vmul.f32 %v180, 0.5
      %v437 = vmul.f32 %v181, 0.5
      %v438 = vmul.f32 %v182, 0.5
      %v439 = vmul.f32 %v183, 0.5
      %v440 = vmul.f32 %v184, 0.5
      %v441 = vmul.f32 %v185, 0.5
      %v442 = vmul.f32 %v186, 0.5
      %v443 = vmul.f32 %v187, 0.5
      %v444 = vmul.f32 %v188, 0.5
      %v445 = vmul.f32 %v189, 0.5
      %v446 = vmul.f32 %v190, 0.5
      %v447 = vmul.f32 %v191, 0.5
      %v448 = vmul.f32 %v192, 0.5
      %v449 = vmul.f32 %v193, 0.5
      %v450 = vmul.f32 %v194, 0.5
      %v451 = vmul.f32 %v195, 0.5
      %v452 = vmul.f32 %v196, 0.5
      %v453 = vmul.f32 %v197, 0.5
      %v454 = vmul.f32 %v198, 0.5
      %v455 = vmul.f32 %v199, 0.5
      %v456 = vmul.f32 %v200, 0.5
      %v457 = vmul.f32 %v201, 0.5
      %v458 = vmul.f32 %v202, 0.5
      %v459 = vmul.f32 %v203, 0.5
      %v460 = vmul.f32 %v204, 0.5
      %v461 = vmul.f32 %v205, 0.5
      %v462 = vmul.f32 %v206, 0.5
      %v463 = vmul.f32 %v207, 0.5
      %v464 = vmul.f32 %v208, 0.5
      %v465 = vmul.f32 %v209, 0.5
      %v466 = vmul.f32 %v210, 0.5
      %v467 = vmul.f32 %v211, 0.5
      %v468 = vmul.f32 %v212, 0.5
      %v469 = vmul.f32 %v213, 0.5
      %v470 = vmul.f32 %v214, 0.5
      %v471 = vmul.f32 %v215, 0.5
      %v472 = vmul.f32 %v216, 0.5
      %v473 = vmul.f32 %v217, 0.5
      %v474 = vmul.f32 %v218, 0.5
      %v475 = vmul.f32 %v219, 0.5
      %v476 = vmul.f32 %v220, 0.5
      %v477 = vmul.f32 %v221, 0.5
      %v478 = vmul.f32 %v222, 0.5
      %v479 = vmul.f32 %v223, 0.5
      %v480 = vmul.f32 %v224, 0.5
      %v481 = vmul.f32 %v225, 0.5
      %v482 = vmul.f32 %v226, 0.5
      %v483 = vmul.f32 %v227, 0.5
      %v484 = vmul.f32 %v228, 0.5
      %v485 = vmul.f32 %v229, 0.5
      %v486 = vmul.f32 %v230, 0.5
      %v487 = vmul.f32 %v231, 0.5
      %v488 = vmul.f32 %v232, 0.5
      %v489 = vmul.f32 %v233, 0.5
      %v490 = vmul.f32 %v234, 0.5
      %v491 = vmul.f32 %v235, 0.5
      %v492 = vmul.f32 %v236, 0.5
      %v493 = vmul.f32 %v237, 0.5
      %v494 = vmul.f32 %v238, 0.5
      %v495 = vmul.f32 %v239, 0.5
      %v496 = vmul.f32 %v240, 0.5
      %v497 = vmul.f32 %v241, 0.5
      %v498 = vmul.f32 %v242, 0.5
      %v499 = vmul.f32 %v243, 0.5
      %v500 = vmul.f32 %v244, 0.5
      %v501 = vmul.f32 %v245, 0.5
      %v502 = vmul.f32 %v246, 0.5
      %v503 = vmul.f32 %v247, 0.5
      %v504 = vmul.f32 %v248, 0.5
      %v505 = vmul.f32 %v249, 0.5
      %v506 = vmul.f32 %v250, 0.5
      %v507 = vmul.f32 %v251, 0.5
      %v508 = vmul.f32 %v252, 0.5
      %v509 = vmul.f32 %v253, 0.5
      %v510 = vmul.f32 %v254, 0.5
      %v511 = vmul.f32 %v255, 0.5
      %v512 = vmul.f32 %v256, 0.5
      %v513 = vmul.f32 %v257, 0.5
      %v514 = vmul.f32 %v258, 0.5
      %v515 = vmul.f32 %v259, 0.5
      %v516 = vmul.f32 %v260, 0.5
      %v517 = vmul.f32 %v261, 0.5
      %v518 = vmul.f32 %v262, 0.5
      %v519 = vmul.f32 %v263, 0.5
      %v520 = vmul.f32 %v264, 0.5
      %v521 = vmul.f32 %v265, 0.5
      %v522 = vmul.f32 %v266, 0.5
      %v523 = vmul.f32 %v267, 0.5
      %v524 = vmul.f32 %v268, 0.5
      %v525 = vmul.f32 %v269, 0.5
      %v526 = vmul.f32 %v270, 0.5
      %v527 = vmul.f32 %v271, 0.5
      %v528 = vmul.f32 %v272, 0.5
      %v529 = vmul.f32 %v273, 0.5
      %v530 = vmul.f32 %v274, 0.5
      %v531 = vmul.f32 %v275, 0.5
      %v532 = vmul.f32 %v276, 0.5
      %v533 = vmul.f32 %v277, 0.5
      %v534 = vmul.f32 %v278, 0.5
      %v535 = vmul.f32 %v279, 0.5
      %v536 = vmul.f32 %v280, 0.5
      %v537 = vmul.f32 %v281, 0.5
      %v538 = vmul.f32 %v282, 0.5
      %v539 = vmul.f32 %v283, 0.5
      %v540 = vmul.f32 %v284, 0.5
      %v541 = vmul.f32 %v285, 0.5
      %v542 = vmul.f32 %v286, 0.5
      %v543 = vmul.f32 %v287, 0.5
      %v544 = vmul.f32 %v288, 0.5
      %v545 = vmul.f32 %v289, 0.5
      %v546 = vmul.f32 %v290, 0.5
      %v547 = vmul.f32 %v291, 0.5
      %v548 = vmul.f32 %v292, 0.5
      %v549 = vmul.f32 %v293, 0.5
      %v550 = vmul.f32 %v294, 0.5
      %v551 = vmul.f32 %v295, 0.5
      %v552 = vmul.f32 %v296, 0.5
      %v553 = vmul.f32 %v297, 0.5
      %v554 = vmul.f32 %v298, 0.5
      %v555 = vmul.f32 %v299, 0.5
      %v556 = vmul.f32 %v300, 0.5
      %v557 = vmul.f32 %v301, 0.5
      %v558 = vmul.f32 %v302, 0.5
      %v559 = vmul.f32 %v303, 0.5
      %v560 = vmul.f32 %v304, 0.5
      %v561 = vmul.f32 %v305, 0.5
      %v562 = vmul.f32 %v306, 0.5
      %v563 = vmul.f32 %v307, 0.5
      %v564 = vmul.f32 %v308, 0.5
      %v565 = vmul.f32 %v309, 0.5
      %v566 = vmul.f32 %v310, 0.5
      %v567 = vmul.f32 %v311, 0.5
      %v568 = vmul.f32 %v312, 0.5
      %v569 = vmul.f32 %v313, 0.5
      %v570 = vmul.f32 %v314, 0.5
      %v571 = vmul.f32 %v315, 0.5
      %v572 = vmul.f32 %v316, 0.5
      %v573 = vmul.f32 %v317, 0.5
      %v574 = vmul.f32 %v318, 0.5
      %v575 = vmul.f32 %v319, 0.5
      %v576 = vmul.f32 %v320, 0.5
      %v577 = vmul.f32 %v321, 0.5
      %v578 = vmul.f32 %v322, 0.5
      %v579 = vmul.f32 %v323, 0.5
      %v580 = vmul.f32 %v324, 0.5
      %v581 = vmul.f32 %v325, 0.5
      %v582 = vmul.f32 %v326, 0.5
      %v583 = vmul.f32 %v327, 0.5
      %v584 = vmul.f32 %v328, 0.5
      %v585 = vmul.f32 %v329, 0.5
      %v586 = vmul.f32 %v330, 0.5
      %v587 = vmul.f32 %v331, 0.5
      %v588 = vmul.f32 %v332, 0.5
      %v589 = vmul.f32 %v333, 0.5
      %v590 = vmul.f32 %v334, 0.5
      %v591 = vmul.f32 %v335, 0.5
      %v592 = vmul.f32 %v336, 0.5
      %v593 = vmul.f32 %v337, 0.5
      %v594 = vmul.f32 %v338, 0.5
      %v595 = vmul.f32 %v339, 0.5
      %v596 = vmul.f32 %v340, 0.5
      %v597 = vmul.f32 %v341, 0.5
      %v598 = vmul.f32 %v342, 0.5
      %v599 = vmul.f32 %v343, 0.5
      %v600 = vmul.f32 %v344, 0.5
      %v601 = vmul.f32 %v345, 0.5
      %v602 = vmul.f32 %v346, 0.5
      %v603 = vmul.f32 %v347, 0.5
      %v604 = vmul.f32 %v348, 0.5
      %v605 = vmul.f32 %v349, 0.5
      %v606 = vmul.f32 %v350, 0.5
      %v607 = vmul.f32 %v351, 0.5
      %v608 = vmul.f32 %v352, 0.5
      %v609 = vmul.f32 %v353, 0.5
      %v610 = vmul.f32 %v354, 0.5
      %v611 = vmul.f32 %v355, 0.5
      %v612 = vmul.f32 %v356, 0.5
      %v613 = vmul.f32 %v357, 0.5
      %v614 = vmul.f32 %v358, 0.5
      %v615 = vmul.f32 %v359, 0.5
      %v616 = vmul.f32 %v360, 0.5
      %v617 = vmul.f32 %v361, 0.5
      %v618 = vmul.f32 %v362, 0.5
      %v619 = vmul.f32 %v363, 0.5
      %v620 = vmul.f32 %v364, 0.5
      %v621 = vmul.f32 %v365, 0.5
      %v622 = vmul.f32 %v366, 0.5
      %v623 = vmul.f32 %v367, 0.5
      %v624 = vmul.f32 %v368, 0.5
      %v625 = vmul.f32 %v369, 0.5
      %v626 = vmul.f32 %v370, 0.5
      %v627 = vmul.f32 %v371, 0.5
      %v628 = vmul.f32 %v372, 0.5
      %v629 = vmul.f32 %v373, 0.5
      %v630 = vmul.f32 %v374, 0.5
      %v631 = vmul.f32 %v375, 0.5
      %v632 = vmul.f32 %v376, 0.5
      %v633 = vmul.f32 %v377, 0.5
      %v634 = vmul.f32 %v378, 0.5
      %v635 = vmul.f32 %v379, 0.5
      %v636 = vmul.f32 %v380, 0.5
      %v637 = vmul.f32 %v381, 0.5
      %v638 = vmul.f32 %v382, 0.5
      %v639 = vmul.f32 %v383, 0.5
      %v640 = vmul.f32 %v384, 0.5
      %v641 = vmul.f32 %v385, 0.5
      %v642 = vmul.f32 %v386, 0.5
      %v643 = vmul.f32 %v387, 0.5
      %v644 = vmul.f32 %v388, 0.5
      %v645 = vmul.f32 %v389, 0.5
      %v646 = vmul.f32 %v390, 0.5
      %v647 = vmul.f32 %v391, 0.5
      %v648 = vmul.f32 %v392, 0.5
      %v649 = vmul.f32 %v393, 0.5
      %v650 = vmul.f32 %v394, 0.5
      %v651 = vmul.f32 %v395, 0.5
      %v652 = vmul.f32 %v396, 0.5
      %v653 = vmul.f32 %v397, 0.5
      %v654 = vmul.f32 %v398, 0.5
      %v655 = vmul.f32 %v399, 0.5
      %v656 = vmul.f32 %v400, 0.5
      %v657 = vmul.f32 %v401, 0.5
      %v658 = vmul.f32 %v402, 0.5
      %v659 = vmul.f32 %v403, 0.5
      %v660 = vmul.f32 %v404, 0.5
      %v661 = vmul.f32 %v405, 0.5
      %v662 = vmul.f32 %v406, 0.5
      %v663 = vmul.f32 %v407, 0.5
      %v664 = vmul.f32 %v408, 0.5
      %v665 = vmul.f32 %v409, 0.5
      %v666 = vmul.f32 %v410, 0.5
      %v667 = vmul.f32 %v411, 0.5
      %v668 = vmul.f32 %v412, 0.5
      %v669 = vmul.f32 %v413, 0.5
      %v670 = vmul.f32 %v414, 0.5
      %v671 = vmul.f32 %v415, 0.5
      %v672 = vmul.f32 %v416, 0.5
      %v673 = vmul.f32 %v417, 0.5
      %v674 = vmul.f32 %v418, 0.5
      %v675 = vmul.f32 %v419, 0.5
      %v676 = vmul.f32 %v420, 0.5
      %v677 = vmul.f32 %v421, 0.5
      %v678 = vmul.f32 %v422, 0.5
      %v679 = vmul.f32 %v423, 0.5
      %v680 = vmul.f32 %v424, 0.5
      %v681 = vmul.f32 %v425, 0.5
      %v682 = vmul.f32 %v426, 0.5
      %v683 = vmul.f32 %v427, 0.5
      %v684 = vmul.f32 %v428, 0.5
      %v685 = vmul.f32 %v429, 0.5
      %v686 = vmul.f32 %v430, 0.5
      %v687 = vmul.f32 %v431, 0.5
      %v688 = vmul.f32 %v432, 0.5
      %v689 = vmul.f32 %v433, 0.5
      %v690 = vmul.f32 %v178, 0.70710677
      %v691 = vmul.f32 %v179, 0.70710677
      %v692 = vmul.f32 %v180, 0.70710677
      %v693 = vmul.f32 %v181, 0.70710677
      %v694 = vmul.f32 %v182, 0.70710677
      %v695 = vmul.f32 %v183, 0.70710677
      %v696 = vmul.f32 %v184, 0.70710677
      %v697 = vmul.f32 %v185, 0.70710677
      %v698 = vmul.f32 %v186, 0.70710677
      %v699 = vmul.f32 %v187, 0.70710677
      %v700 = vmul.f32 %v188, 0.70710677
      %v701 = vmul.f32 %v189, 0.70710677
      %v702 = vmul.f32 %v190, 0.70710677
      %v703 = vmul.f32 %v191, 0.70710677
      %v704 = vmul.f32 %v192, 0.70710677
      %v705 = vmul.f32 %v193, 0.70710677
      %v706 = vmul.f32 %v194, 0.70710677
      %v707 = vmul.f32 %v195, 0.70710677
      %v708 = vmul.f32 %v196, 0.70710677
      %v709 = vmul.f32 %v197, 0.70710677
      %v710 = vmul.f32 %v198, 0.70710677
      %v711 = vmul.f32 %v199, 0.70710677
      %v712 = vmul.f32 %v200, 0.70710677
      %v713 = vmul.f32 %v201, 0.70710677
      %v714 = vmul.f32 %v202, 0.70710677
      %v715 = vmul.f32 %v203, 0.70710677
      %v716 = vmul.f32 %v204, 0.70710677
      %v717 = vmul.f32 %v205, 0.70710677
      %v718 = vmul.f32 %v206, 0.70710677
      %v719 = vmul.f32 %v207, 0.70710677
      %v720 = vmul.f32 %v208, 0.70710677
      %v721 = vmul.f32 %v209, 0.70710677
      %v722 = vmul.f32 %v210, 0.70710677
      %v723 = vmul.f32 %v211, 0.70710677
      %v724 = vmul.f32 %v212, 0.70710677
      %v725 = vmul.f32 %v213, 0.70710677
      %v726 = vmul.f32 %v214, 0.70710677
      %v727 = vmul.f32 %v215, 0.70710677
      %v728 = vmul.f32 %v216, 0.70710677
      %v729 = vmul.f32 %v217, 0.70710677
      %v730 = vmul.f32 %v218, 0.70710677
      %v731 = vmul.f32 %v219, 0.70710677
      %v732 = vmul.f32 %v220, 0.70710677
      %v733 = vmul.f32 %v221, 0.70710677
      %v734 = vmul.f32 %v222, 0.70710677
      %v735 = vmul.f32 %v223, 0.70710677
      %v736 = vmul.f32 %v224, 0.70710677
      %v737 = vmul.f32 %v225, 0.70710677
      %v738 = vmul.f32 %v226, 0.70710677
      %v739 = vmul.f32 %v227, 0.70710677
      %v740 = vmul.f32 %v228, 0.70710677
      %v741 = vmul.f32 %v229, 0.70710677
      %v742 = vmul.f32 %v230, 0.70710677
      %v743 = vmul.f32 %v231, 0.70710677
      %v744 = vmul.f32 %v232, 0.70710677
      %v745 = vmul.f32 %v233, 0.70710677
      %v746 = vmul.f32 %v234, 0.70710677
      %v747 = vmul.f32 %v235, 0.70710677
      %v748 = vmul.f32 %v236, 0.70710677
      %v749 = vmul.f32 %v237, 0.70710677
      %v750 = vmul.f32 %v238, 0.70710677
      %v751 = vmul.f32 %v239, 0.70710677
      %v752 = vmul.f32 %v240, 0.70710677
      %v753 = vmul.f32 %v241, 0.70710677
      %v754 = vmul.f32 %v242, 0.70710677
      %v755 = vmul.f32 %v243, 0.70710677
      %v756 = vmul.f32 %v244, 0.70710677
      %v757 = vmul.f32 %v245, 0.70710677
      %v758 = vmul.f32 %v246, 0.70710677
      %v759 = vmul.f32 %v247, 0.70710677
      %v760 = vmul.f32 %v248, 0.70710677
      %v761 = vmul.f32 %v249, 0.70710677
      %v762 = vmul.f32 %v250, 0.70710677
      %v763 = vmul.f32 %v251, 0.70710677
      %v764 = vmul.f32 %v252, 0.70710677
      %v765 = vmul.f32 %v253, 0.70710677
      %v766 = vmul.f32 %v254, 0.70710677
      %v767 = vmul.f32 %v255, 0.70710677
      %v768 = vmul.f32 %v256, 0.70710677
      %v769 = vmul.f32 %v257, 0.70710677
      %v770 = vmul.f32 %v258, 0.70710677
      %v771 = vmul.f32 %v259, 0.70710677
      %v772 = vmul.f32 %v260, 0.70710677
      %v773 = vmul.f32 %v261, 0.70710677
      %v774 = vmul.f32 %v262, 0.70710677
      %v775 = vmul.f32 %v263, 0.70710677
      %v776 = vmul.f32 %v264, 0.70710677
      %v777 = vmul.f32 %v265, 0.70710677
      %v778 = vmul.f32 %v266, 0.70710677
      %v779 = vmul.f32 %v267, 0.70710677
      %v780 = vmul.f32 %v268, 0.70710677
      %v781 = vmul.f32 %v269, 0.70710677
      %v782 = vmul.f32 %v270, 0.70710677
      %v783 = vmul.f32 %v271, 0.70710677
      %v784 = vmul.f32 %v272, 0.70710677
      %v785 = vmul.f32 %v273, 0.70710677
      %v786 = vmul.f32 %v274, 0.70710677
      %v787 = vmul.f32 %v275, 0.70710677
      %v788 = vmul.f32 %v276, 0.70710677
      %v789 = vmul.f32 %v277, 0.70710677
      %v790 = vmul.f32 %v278, 0.70710677
      %v791 = vmul.f32 %v279, 0.70710677
      %v792 = vmul.f32 %v280, 0.70710677
      %v793 = vmul.f32 %v281, 0.70710677
      %v794 = vmul.f32 %v282, 0.70710677
      %v795 = vmul.f32 %v283, 0.70710677
      %v796 = vmul.f32 %v284, 0.70710677
      %v797 = vmul.f32 %v285, 0.70710677
      %v798 = vmul.f32 %v286, 0.70710677
      %v799 = vmul.f32 %v287, 0.70710677
      %v800 = vmul.f32 %v288, 0.70710677
      %v801 = vmul.f32 %v289, 0.70710677
      %v802 = vmul.f32 %v290, 0.70710677
      %v803 = vmul.f32 %v291, 0.70710677
      %v804 = vmul.f32 %v292, 0.70710677
      %v805 = vmul.f32 %v293, 0.70710677
      %v806 = vmul.f32 %v294, 0.70710677
      %v807 = vmul.f32 %v295, 0.70710677
      %v808 = vmul.f32 %v296, 0.70710677
      %v809 = vmul.f32 %v297, 0.70710677
      %v810 = vmul.f32 %v298, 0.70710677
      %v811 = vmul.f32 %v299, 0.70710677
      %v812 = vmul.f32 %v300, 0.70710677
      %v813 = vmul.f32 %v301, 0.70710677
      %v814 = vmul.f32 %v302, 0.70710677
      %v815 = vmul.f32 %v303, 0.70710677
      %v816 = vmul.f32 %v304, 0.70710677
      %v817 = vmul.f32 %v305, 0.70710677
      %v818 = vmul.f32 %v306, 0.70710677
      %v819 = vmul.f32 %v307, 0.70710677
      %v820 = vmul.f32 %v308, 0.70710677
      %v821 = vmul.f32 %v309, 0.70710677
      %v822 = vmul.f32 %v310, 0.70710677
      %v823 = vmul.f32 %v311, 0.70710677
      %v824 = vmul.f32 %v312, 0.70710677
      %v825 = vmul.f32 %v313, 0.70710677
      %v826 = vmul.f32 %v314, 0.70710677
      %v827 = vmul.f32 %v315, 0.70710677
      %v828 = vmul.f32 %v316, 0.70710677
      %v829 = vmul.f32 %v317, 0.70710677
      %v830 = vmul.f32 %v318, 0.70710677
      %v831 = vmul.f32 %v319, 0.70710677
      %v832 = vmul.f32 %v320, 0.70710677
      %v833 = vmul.f32 %v321, 0.70710677
      %v834 = vmul.f32 %v322, 0.70710677
      %v835 = vmul.f32 %v323, 0.70710677
      %v836 = vmul.f32 %v324, 0.70710677
      %v837 = vmul.f32 %v325, 0.70710677
      %v838 = vmul.f32 %v326, 0.70710677
      %v839 = vmul.f32 %v327, 0.70710677
      %v840 = vmul.f32 %v328, 0.70710677
      %v841 = vmul.f32 %v329, 0.70710677
      %v842 = vmul.f32 %v330, 0.70710677
      %v843 = vmul.f32 %v331, 0.70710677
      %v844 = vmul.f32 %v332, 0.70710677
      %v845 = vmul.f32 %v333, 0.70710677
      %v846 = vmul.f32 %v334, 0.70710677
      %v847 = vmul.f32 %v335, 0.70710677
      %v848 = vmul.f32 %v336, 0.70710677
      %v849 = vmul.f32 %v337, 0.70710677
      %v850 = vmul.f32 %v338, 0.70710677
      %v851 = vmul.f32 %v339, 0.70710677
      %v852 = vmul.f32 %v340, 0.70710677
      %v853 = vmul.f32 %v341, 0.70710677
      %v854 = vmul.f32 %v342, 0.70710677
      %v855 = vmul.f32 %v343, 0.70710677
      %v856 = vmul.f32 %v344, 0.70710677
      %v857 = vmul.f32 %v345, 0.70710677
      %v858 = vmul.f32 %v346, 0.70710677
      %v859 = vmul.f32 %v347, 0.70710677
      %v860 = vmul.f32 %v348, 0.70710677
      %v861 = vmul.f32 %v349, 0.70710677
      %v862 = vmul.f32 %v350, 0.70710677
      %v863 = vmul.f32 %v351, 0.70710677
      %v864 = vmul.f32 %v352, 0.70710677
      %v865 = vmul.f32 %v353, 0.70710677
      %v866 = vmul.f32 %v354, 0.70710677
      %v867 = vmul.f32 %v355, 0.70710677
      %v868 = vmul.f32 %v356, 0.70710677
      %v869 = vmul.f32 %v357, 0.70710677
      %v870 = vmul.f32 %v358, 0.70710677
      %v871 = vmul.f32 %v359, 0.70710677
      %v872 = vmul.f32 %v360, 0.70710677
      %v873 = vmul.f32 %v361, 0.70710677
      %v874 = vmul.f32 %v362, 0.70710677
      %v875 = vmul.f32 %v363, 0.70710677
      %v876 = vmul.f32 %v364, 0.70710677
      %v877 = vmul.f32 %v365, 0.70710677
      %v878 = vmul.f32 %v366, 0.70710677
      %v879 = vmul.f32 %v367, 0.70710677
      %v880 = vmul.f32 %v368, 0.70710677
      %v881 = vmul.f32 %v369, 0.70710677
      %v882 = vmul.f32 %v370, 0.70710677
      %v883 = vmul.f32 %v371, 0.70710677
      %v884 = vmul.f32 %v372, 0.70710677
      %v885 = vmul.f32 %v373, 0.70710677
      %v886 = vmul.f32 %v374, 0.70710677
      %v887 = vmul.f32 %v375, 0.70710677
      %v888 = vmul.f32 %v376, 0.70710677
      %v889 = vmul.f32 %v377, 0.70710677
      %v890 = vmul.f32 %v378, 0.70710677
      %v891 = vmul.f32 %v379, 0.70710677
      %v892 = vmul.f32 %v380, 0.70710677
      %v893 = vmul.f32 %v381, 0.70710677
      %v894 = vmul.f32 %v382, 0.70710677
      %v895 = vmul.f32 %v383, 0.70710677
      %v896 = vmul.f32 %v384, 0.70710677
      %v897 = vmul.f32 %v385, 0.70710677
      %v898 = vmul.f32 %v386, 0.70710677
      %v899 = vmul.f32 %v387, 0.70710677
      %v900 = vmul.f32 %v388, 0.70710677
      %v901 = vmul.f32 %v389, 0.70710677
      %v902 = vmul.f32 %v390, 0.70710677
      %v903 = vmul.f32 %v391, 0.70710677
      %v904 = vmul.f32 %v392, 0.70710677
      %v905 = vmul.f32 %v393, 0.70710677
      %v906 = vmul.f32 %v394, 0.70710677
      %v907 = vmul.f32 %v395, 0.70710677
      %v908 = vmul.f32 %v396, 0.70710677
      %v909 = vmul.f32 %v397, 0.70710677
      %v910 = vmul.f32 %v398, 0.70710677
      %v911 = vmul.f32 %v399, 0.70710677
      %v912 = vmul.f32 %v400, 0.70710677
      %v913 = vmul.f32 %v401, 0.70710677
      %v914 = vmul.f32 %v402, 0.70710677
      %v915 = vmul.f32 %v403, 0.70710677
      %v916 = vmul.f32 %v404, 0.70710677
      %v917 = vmul.f32 %v405, 0.70710677
      %v918 = vmul.f32 %v406, 0.70710677
      %v919 = vmul.f32 %v407, 0.70710677
      %v920 = vmul.f32 %v408, 0.70710677
      %v921 = vmul.f32 %v409, 0.70710677
      %v922 = vmul.f32 %v410, 0.70710677
      %v923 = vmul.f32 %v411, 0.70710677
      %v924 = vmul.f32 %v412, 0.70710677
      %v925 = vmul.f32 %v413, 0.70710677
      %v926 = vmul.f32 %v414, 0.70710677
      %v927 = vmul.f32 %v415, 0.70710677
      %v928 = vmul.f32 %v416, 0.70710677
      %v929 = vmul.f32 %v417, 0.70710677
      %v930 = vmul.f32 %v418, 0.70710677
      %v931 = vmul.f32 %v419, 0.70710677
      %v932 = vmul.f32 %v420, 0.70710677
      %v933 = vmul.f32 %v421, 0.70710677
      %v934 = vmul.f32 %v422, 0.70710677
      %v935 = vmul.f32 %v423, 0.70710677
      %v936 = vmul.f32 %v424, 0.70710677
      %v937 = vmul.f32 %v425, 0.70710677
      %v938 = vmul.f32 %v426, 0.70710677
      %v939 = vmul.f32 %v427, 0.70710677
      %v940 = vmul.f32 %v428, 0.70710677
      %v941 = vmul.f32 %v429, 0.70710677
      %v942 = vmul.f32 %v430, 0.70710677
      %v943 = vmul.f32 %v431, 0.70710677
      %v944 = vmul.f32 %v432, 0.70710677
      %v945 = vmul.f32 %v433, 0.70710677
      %v946 = verf.f32.pop %v690
      %v947 = verf.f32.pop %v691
      %v948 = verf.f32.pop %v692
      %v949 = verf.f32.pop %v693
      %v950 = verf.f32.pop %v694
      %v951 = verf.f32.pop %v695
      %v952 = verf.f32.pop %v696
      %v953 = verf.f32.pop %v697
      %v954 = verf.f32.pop %v698
      %v955 = verf.f32.pop %v699
      %v956 = verf.f32.pop %v700
      %v957 = verf.f32.pop %v701
      %v958 = verf.f32.pop %v702
      %v959 = verf.f32.pop %v703
      %v960 = verf.f32.pop %v704
      %v961 = verf.f32.pop %v705
      %v962 = verf.f32.pop %v706
      %v963 = verf.f32.pop %v707
      %v964 = verf.f32.pop %v708
      %v965 = verf.f32.pop %v709
      %v966 = verf.f32.pop %v710
      %v967 = verf.f32.pop %v711
      %v968 = verf.f32.pop %v712
      %v969 = verf.f32.pop %v713
      %v970 = verf.f32.pop %v714
      %v971 = verf.f32.pop %v715
      %v972 = verf.f32.pop %v716
      %v973 = verf.f32.pop %v717
      %v974 = verf.f32.pop %v718
      %v975 = verf.f32.pop %v719
      %v976 = verf.f32.pop %v720
      %v977 = verf.f32.pop %v721
      %v978 = verf.f32.pop %v722
      %v979 = verf.f32.pop %v723
      %v980 = verf.f32.pop %v724
      %v981 = verf.f32.pop %v725
      %v982 = verf.f32.pop %v726
      %v983 = verf.f32.pop %v727
      %v984 = verf.f32.pop %v728
      %v985 = verf.f32.pop %v729
      %v986 = verf.f32.pop %v730
      %v987 = verf.f32.pop %v731
      %v988 = verf.f32.pop %v732
      %v989 = verf.f32.pop %v733
      %v990 = verf.f32.pop %v734
      %v991 = verf.f32.pop %v735
      %v992 = verf.f32.pop %v736
      %v993 = verf.f32.pop %v737
      %v994 = verf.f32.pop %v738
      %v995 = verf.f32.pop %v739
      %v996 = verf.f32.pop %v740
      %v997 = verf.f32.pop %v741
      %v998 = verf.f32.pop %v742
      %v999 = verf.f32.pop %v743
      %v1000 = verf.f32.pop %v744
      %v1001 = verf.f32.pop %v745
      %v1002 = verf.f32.pop %v746
      %v1003 = verf.f32.pop %v747
      %v1004 = verf.f32.pop %v748
      %v1005 = verf.f32.pop %v749
      %v1006 = verf.f32.pop %v750
      %v1007 = verf.f32.pop %v751
      %v1008 = verf.f32.pop %v752
      %v1009 = verf.f32.pop %v753
      %v1010 = verf.f32.pop %v754
      %v1011 = verf.f32.pop %v755
      %v1012 = verf.f32.pop %v756
      %v1013 = verf.f32.pop %v757
      %v1014 = verf.f32.pop %v758
      %v1015 = verf.f32.pop %v759
      %v1016 = verf.f32.pop %v760
      %v1017 = verf.f32.pop %v761
      %v1018 = verf.f32.pop %v762
      %v1019 = verf.f32.pop %v763
      %v1020 = verf.f32.pop %v764
      %v1021 = verf.f32.pop %v765
      %v1022 = verf.f32.pop %v766
      %v1023 = verf.f32.pop %v767
      %v1024 = verf.f32.pop %v768
      %v1025 = verf.f32.pop %v769
      %v1026 = verf.f32.pop %v770
      %v1027 = verf.f32.pop %v771
      %v1028 = verf.f32.pop %v772
      %v1029 = verf.f32.pop %v773
      %v1030 = verf.f32.pop %v774
      %v1031 = verf.f32.pop %v775
      %v1032 = verf.f32.pop %v776
      %v1033 = verf.f32.pop %v777
      %v1034 = verf.f32.pop %v778
      %v1035 = verf.f32.pop %v779
      %v1036 = verf.f32.pop %v780
      %v1037 = verf.f32.pop %v781
      %v1038 = verf.f32.pop %v782
      %v1039 = verf.f32.pop %v783
      %v1040 = verf.f32.pop %v784
      %v1041 = verf.f32.pop %v785
      %v1042 = verf.f32.pop %v786
      %v1043 = verf.f32.pop %v787
      %v1044 = verf.f32.pop %v788
      %v1045 = verf.f32.pop %v789
      %v1046 = verf.f32.pop %v790
      %v1047 = verf.f32.pop %v791
      %v1048 = verf.f32.pop %v792
      %v1049 = verf.f32.pop %v793
      %v1050 = verf.f32.pop %v794
      %v1051 = verf.f32.pop %v795
      %v1052 = verf.f32.pop %v796
      %v1053 = verf.f32.pop %v797
      %v1054 = verf.f32.pop %v798
      %v1055 = verf.f32.pop %v799
      %v1056 = verf.f32.pop %v800
      %v1057 = verf.f32.pop %v801
      %v1058 = verf.f32.pop %v802
      %v1059 = verf.f32.pop %v803
      %v1060 = verf.f32.pop %v804
      %v1061 = verf.f32.pop %v805
      %v1062 = verf.f32.pop %v806
      %v1063 = verf.f32.pop %v807
      %v1064 = verf.f32.pop %v808
      %v1065 = verf.f32.pop %v809
      %v1066 = verf.f32.pop %v810
      %v1067 = verf.f32.pop %v811
      %v1068 = verf.f32.pop %v812
      %v1069 = verf.f32.pop %v813
      %v1070 = verf.f32.pop %v814
      %v1071 = verf.f32.pop %v815
      %v1072 = verf.f32.pop %v816
      %v1073 = verf.f32.pop %v817
      %v1074 = verf.f32.pop %v818
      %v1075 = verf.f32.pop %v819
      %v1076 = verf.f32.pop %v820
      %v1077 = verf.f32.pop %v821
      %v1078 = verf.f32.pop %v822
      %v1079 = verf.f32.pop %v823
      %v1080 = verf.f32.pop %v824
      %v1081 = verf.f32.pop %v825
      %v1082 = verf.f32.pop %v826
      %v1083 = verf.f32.pop %v827
      %v1084 = verf.f32.pop %v828
      %v1085 = verf.f32.pop %v829
      %v1086 = verf.f32.pop %v830
      %v1087 = verf.f32.pop %v831
      %v1088 = verf.f32.pop %v832
      %v1089 = verf.f32.pop %v833
      %v1090 = verf.f32.pop %v834
      %v1091 = verf.f32.pop %v835
      %v1092 = verf.f32.pop %v836
      %v1093 = verf.f32.pop %v837
      %v1094 = verf.f32.pop %v838
      %v1095 = verf.f32.pop %v839
      %v1096 = verf.f32.pop %v840
      %v1097 = verf.f32.pop %v841
      %v1098 = verf.f32.pop %v842
      %v1099 = verf.f32.pop %v843
      %v1100 = verf.f32.pop %v844
      %v1101 = verf.f32.pop %v845
      %v1102 = verf.f32.pop %v846
      %v1103 = verf.f32.pop %v847
      %v1104 = verf.f32.pop %v848
      %v1105 = verf.f32.pop %v849
      %v1106 = verf.f32.pop %v850
      %v1107 = verf.f32.pop %v851
      %v1108 = verf.f32.pop %v852
      %v1109 = verf.f32.pop %v853
      %v1110 = verf.f32.pop %v854
      %v1111 = verf.f32.pop %v855
      %v1112 = verf.f32.pop %v856
      %v1113 = verf.f32.pop %v857
      %v1114 = verf.f32.pop %v858
      %v1115 = verf.f32.pop %v859
      %v1116 = verf.f32.pop %v860
      %v1117 = verf.f32.pop %v861
      %v1118 = verf.f32.pop %v862
      %v1119 = verf.f32.pop %v863
      %v1120 = verf.f32.pop %v864
      %v1121 = verf.f32.pop %v865
      %v1122 = verf.f32.pop %v866
      %v1123 = verf.f32.pop %v867
      %v1124 = verf.f32.pop %v868
      %v1125 = verf.f32.pop %v869
      %v1126 = verf.f32.pop %v870
      %v1127 = verf.f32.pop %v871
      %v1128 = verf.f32.pop %v872
      %v1129 = verf.f32.pop %v873
      %v1130 = verf.f32.pop %v874
      %v1131 = verf.f32.pop %v875
      %v1132 = verf.f32.pop %v876
      %v1133 = verf.f32.pop %v877
      %v1134 = verf.f32.pop %v878
      %v1135 = verf.f32.pop %v879
      %v1136 = verf.f32.pop %v880
      %v1137 = verf.f32.pop %v881
      %v1138 = verf.f32.pop %v882
      %v1139 = verf.f32.pop %v883
      %v1140 = verf.f32.pop %v884
      %v1141 = verf.f32.pop %v885
      %v1142 = verf.f32.pop %v886
      %v1143 = verf.f32.pop %v887
      %v1144 = verf.f32.pop %v888
      %v1145 = verf.f32.pop %v889
      %v1146 = verf.f32.pop %v890
      %v1147 = verf.f32.pop %v891
      %v1148 = verf.f32.pop %v892
      %v1149 = verf.f32.pop %v893
      %v1150 = verf.f32.pop %v894
      %v1151 = verf.f32.pop %v895
      %v1152 = verf.f32.pop %v896
      %v1153 = verf.f32.pop %v897
      %v1154 = verf.f32.pop %v898
      %v1155 = verf.f32.pop %v899
      %v1156 = verf.f32.pop %v900
      %v1157 = verf.f32.pop %v901
      %v1158 = verf.f32.pop %v902
      %v1159 = verf.f32.pop %v903
      %v1160 = verf.f32.pop %v904
      %v1161 = verf.f32.pop %v905
      %v1162 = verf.f32.pop %v906
      %v1163 = verf.f32.pop %v907
      %v1164 = verf.f32.pop %v908
      %v1165 = verf.f32.pop %v909
      %v1166 = verf.f32.pop %v910
      %v1167 = verf.f32.pop %v911
      %v1168 = verf.f32.pop %v912
      %v1169 = verf.f32.pop %v913
      %v1170 = verf.f32.pop %v914
      %v1171 = verf.f32.pop %v915
      %v1172 = verf.f32.pop %v916
      %v1173 = verf.f32.pop %v917
      %v1174 = verf.f32.pop %v918
      %v1175 = verf.f32.pop %v919
      %v1176 = verf.f32.pop %v920
      %v1177 = verf.f32.pop %v921
      %v1178 = verf.f32.pop %v922
      %v1179 = verf.f32.pop %v923
      %v1180 = verf.f32.pop %v924
      %v1181 = verf.f32.pop %v925
      %v1182 = verf.f32.pop %v926
      %v1183 = verf.f32.pop %v927
      %v1184 = verf.f32.pop %v928
      %v1185 = verf.f32.pop %v929
      %v1186 = verf.f32.pop %v930
      %v1187 = verf.f32.pop %v931
      %v1188 = verf.f32.pop %v932
      %v1189 = verf.f32.pop %v933
      %v1190 = verf.f32.pop %v934
      %v1191 = verf.f32.pop %v935
      %v1192 = verf.f32.pop %v936
      %v1193 = verf.f32.pop %v937
      %v1194 = verf.f32.pop %v938
      %v1195 = verf.f32.pop %v939
      %v1196 = verf.f32.pop %v940
      %v1197 = verf.f32.pop %v941
      %v1198 = verf.f32.pop %v942
      %v1199 = verf.f32.pop %v943
      %v1200 = verf.f32.pop %v944
      %v1201 = verf.f32.pop %v945
      %v1202 = vadd.f32 %v946, 1.0
      %v1203 = vadd.f32 %v947, 1.0
      %v1204 = vadd.f32 %v948, 1.0
      %v1205 = vadd.f32 %v949, 1.0
      %v1206 = vadd.f32 %v950, 1.0
      %v1207 = vadd.f32 %v951, 1.0
      %v1208 = vadd.f32 %v952, 1.0
      %v1209 = vadd.f32 %v953, 1.0
      %v1210 = vadd.f32 %v954, 1.0
      %v1211 = vadd.f32 %v955, 1.0
      %v1212 = vadd.f32 %v956, 1.0
      %v1213 = vadd.f32 %v957, 1.0
      %v1214 = vadd.f32 %v958, 1.0
      %v1215 = vadd.f32 %v959, 1.0
      %v1216 = vadd.f32 %v960, 1.0
      %v1217 = vadd.f32 %v961, 1.0
      %v1218 = vadd.f32 %v962, 1.0
      %v1219 = vadd.f32 %v963, 1.0
      %v1220 = vadd.f32 %v964, 1.0
      %v1221 = vadd.f32 %v965, 1.0
      %v1222 = vadd.f32 %v966, 1.0
      %v1223 = vadd.f32 %v967, 1.0
      %v1224 = vadd.f32 %v968, 1.0
      %v1225 = vadd.f32 %v969, 1.0
      %v1226 = vadd.f32 %v970, 1.0
      %v1227 = vadd.f32 %v971, 1.0
      %v1228 = vadd.f32 %v972, 1.0
      %v1229 = vadd.f32 %v973, 1.0
      %v1230 = vadd.f32 %v974, 1.0
      %v1231 = vadd.f32 %v975, 1.0
      %v1232 = vadd.f32 %v976, 1.0
      %v1233 = vadd.f32 %v977, 1.0
      %v1234 = vadd.f32 %v978, 1.0
      %v1235 = vadd.f32 %v979, 1.0
      %v1236 = vadd.f32 %v980, 1.0
      %v1237 = vadd.f32 %v981, 1.0
      %v1238 = vadd.f32 %v982, 1.0
      %v1239 = vadd.f32 %v983, 1.0
      %v1240 = vadd.f32 %v984, 1.0
      %v1241 = vadd.f32 %v985, 1.0
      %v1242 = vadd.f32 %v986, 1.0
      %v1243 = vadd.f32 %v987, 1.0
      %v1244 = vadd.f32 %v988, 1.0
      %v1245 = vadd.f32 %v989, 1.0
      %v1246 = vadd.f32 %v990, 1.0
      %v1247 = vadd.f32 %v991, 1.0
      %v1248 = vadd.f32 %v992, 1.0
      %v1249 = vadd.f32 %v993, 1.0
      %v1250 = vadd.f32 %v994, 1.0
      %v1251 = vadd.f32 %v995, 1.0
      %v1252 = vadd.f32 %v996, 1.0
      %v1253 = vadd.f32 %v997, 1.0
      %v1254 = vadd.f32 %v998, 1.0
      %v1255 = vadd.f32 %v999, 1.0
      %v1256 = vadd.f32 %v1000, 1.0
      %v1257 = vadd.f32 %v1001, 1.0
      %v1258 = vadd.f32 %v1002, 1.0
      %v1259 = vadd.f32 %v1003, 1.0
      %v1260 = vadd.f32 %v1004, 1.0
      %v1261 = vadd.f32 %v1005, 1.0
      %v1262 = vadd.f32 %v1006, 1.0
      %v1263 = vadd.f32 %v1007, 1.0
      %v1264 = vadd.f32 %v1008, 1.0
      %v1265 = vadd.f32 %v1009, 1.0
      %v1266 = vadd.f32 %v1010, 1.0
      %v1267 = vadd.f32 %v1011, 1.0
      %v1268 = vadd.f32 %v1012, 1.0
      %v1269 = vadd.f32 %v1013, 1.0
      %v1270 = vadd.f32 %v1014, 1.0
      %v1271 = vadd.f32 %v1015, 1.0
      %v1272 = vadd.f32 %v1016, 1.0
      %v1273 = vadd.f32 %v1017, 1.0
      %v1274 = vadd.f32 %v1018, 1.0
      %v1275 = vadd.f32 %v1019, 1.0
      %v1276 = vadd.f32 %v1020, 1.0
      %v1277 = vadd.f32 %v1021, 1.0
      %v1278 = vadd.f32 %v1022, 1.0
      %v1279 = vadd.f32 %v1023, 1.0
      %v1280 = vadd.f32 %v1024, 1.0
      %v1281 = vadd.f32 %v1025, 1.0
      %v1282 = vadd.f32 %v1026, 1.0
      %v1283 = vadd.f32 %v1027, 1.0
      %v1284 = vadd.f32 %v1028, 1.0
      %v1285 = vadd.f32 %v1029, 1.0
      %v1286 = vadd.f32 %v1030, 1.0
      %v1287 = vadd.f32 %v1031, 1.0
      %v1288 = vadd.f32 %v1032, 1.0
      %v1289 = vadd.f32 %v1033, 1.0
      %v1290 = vadd.f32 %v1034, 1.0
      %v1291 = vadd.f32 %v1035, 1.0
      %v1292 = vadd.f32 %v1036, 1.0
      %v1293 = vadd.f32 %v1037, 1.0
      %v1294 = vadd.f32 %v1038, 1.0
      %v1295 = vadd.f32 %v1039, 1.0
      %v1296 = vadd.f32 %v1040, 1.0
      %v1297 = vadd.f32 %v1041, 1.0
      %v1298 = vadd.f32 %v1042, 1.0
      %v1299 = vadd.f32 %v1043, 1.0
      %v1300 = vadd.f32 %v1044, 1.0
      %v1301 = vadd.f32 %v1045, 1.0
      %v1302 = vadd.f32 %v1046, 1.0
      %v1303 = vadd.f32 %v1047, 1.0
      %v1304 = vadd.f32 %v1048, 1.0
      %v1305 = vadd.f32 %v1049, 1.0
      %v1306 = vadd.f32 %v1050, 1.0
      %v1307 = vadd.f32 %v1051, 1.0
      %v1308 = vadd.f32 %v1052, 1.0
      %v1309 = vadd.f32 %v1053, 1.0
      %v1310 = vadd.f32 %v1054, 1.0
      %v1311 = vadd.f32 %v1055, 1.0
      %v1312 = vadd.f32 %v1056, 1.0
      %v1313 = vadd.f32 %v1057, 1.0
      %v1314 = vadd.f32 %v1058, 1.0
      %v1315 = vadd.f32 %v1059, 1.0
      %v1316 = vadd.f32 %v1060, 1.0
      %v1317 = vadd.f32 %v1061, 1.0
      %v1318 = vadd.f32 %v1062, 1.0
      %v1319 = vadd.f32 %v1063, 1.0
      %v1320 = vadd.f32 %v1064, 1.0
      %v1321 = vadd.f32 %v1065, 1.0
      %v1322 = vadd.f32 %v1066, 1.0
      %v1323 = vadd.f32 %v1067, 1.0
      %v1324 = vadd.f32 %v1068, 1.0
      %v1325 = vadd.f32 %v1069, 1.0
      %v1326 = vadd.f32 %v1070, 1.0
      %v1327 = vadd.f32 %v1071, 1.0
      %v1328 = vadd.f32 %v1072, 1.0
      %v1329 = vadd.f32 %v1073, 1.0
      %v1330 = vadd.f32 %v1074, 1.0
      %v1331 = vadd.f32 %v1075, 1.0
      %v1332 = vadd.f32 %v1076, 1.0
      %v1333 = vadd.f32 %v1077, 1.0
      %v1334 = vadd.f32 %v1078, 1.0
      %v1335 = vadd.f32 %v1079, 1.0
      %v1336 = vadd.f32 %v1080, 1.0
      %v1337 = vadd.f32 %v1081, 1.0
      %v1338 = vadd.f32 %v1082, 1.0
      %v1339 = vadd.f32 %v1083, 1.0
      %v1340 = vadd.f32 %v1084, 1.0
      %v1341 = vadd.f32 %v1085, 1.0
      %v1342 = vadd.f32 %v1086, 1.0
      %v1343 = vadd.f32 %v1087, 1.0
      %v1344 = vadd.f32 %v1088, 1.0
      %v1345 = vadd.f32 %v1089, 1.0
      %v1346 = vadd.f32 %v1090, 1.0
      %v1347 = vadd.f32 %v1091, 1.0
      %v1348 = vadd.f32 %v1092, 1.0
      %v1349 = vadd.f32 %v1093, 1.0
      %v1350 = vadd.f32 %v1094, 1.0
      %v1351 = vadd.f32 %v1095, 1.0
      %v1352 = vadd.f32 %v1096, 1.0
      %v1353 = vadd.f32 %v1097, 1.0
      %v1354 = vadd.f32 %v1098, 1.0
      %v1355 = vadd.f32 %v1099, 1.0
      %v1356 = vadd.f32 %v1100, 1.0
      %v1357 = vadd.f32 %v1101, 1.0
      %v1358 = vadd.f32 %v1102, 1.0
      %v1359 = vadd.f32 %v1103, 1.0
      %v1360 = vadd.f32 %v1104, 1.0
      %v1361 = vadd.f32 %v1105, 1.0
      %v1362 = vadd.f32 %v1106, 1.0
      %v1363 = vadd.f32 %v1107, 1.0
      %v1364 = vadd.f32 %v1108, 1.0
      %v1365 = vadd.f32 %v1109, 1.0
      %v1366 = vadd.f32 %v1110, 1.0
      %v1367 = vadd.f32 %v1111, 1.0
      %v1368 = vadd.f32 %v1112, 1.0
      %v1369 = vadd.f32 %v1113, 1.0
      %v1370 = vadd.f32 %v1114, 1.0
      %v1371 = vadd.f32 %v1115, 1.0
      %v1372 = vadd.f32 %v1116, 1.0
      %v1373 = vadd.f32 %v1117, 1.0
      %v1374 = vadd.f32 %v1118, 1.0
      %v1375 = vadd.f32 %v1119, 1.0
      %v1376 = vadd.f32 %v1120, 1.0
      %v1377 = vadd.f32 %v1121, 1.0
      %v1378 = vadd.f32 %v1122, 1.0
      %v1379 = vadd.f32 %v1123, 1.0
      %v1380 = vadd.f32 %v1124, 1.0
      %v1381 = vadd.f32 %v1125, 1.0
      %v1382 = vadd.f32 %v1126, 1.0
      %v1383 = vadd.f32 %v1127, 1.0
      %v1384 = vadd.f32 %v1128, 1.0
      %v1385 = vadd.f32 %v1129, 1.0
      %v1386 = vadd.f32 %v1130, 1.0
      %v1387 = vadd.f32 %v1131, 1.0
      %v1388 = vadd.f32 %v1132, 1.0
      %v1389 = vadd.f32 %v1133, 1.0
      %v1390 = vadd.f32 %v1134, 1.0
      %v1391 = vadd.f32 %v1135, 1.0
      %v1392 = vadd.f32 %v1136, 1.0
      %v1393 = vadd.f32 %v1137, 1.0
      %v1394 = vadd.f32 %v1138, 1.0
      %v1395 = vadd.f32 %v1139, 1.0
      %v1396 = vadd.f32 %v1140, 1.0
      %v1397 = vadd.f32 %v1141, 1.0
      %v1398 = vadd.f32 %v1142, 1.0
      %v1399 = vadd.f32 %v1143, 1.0
      %v1400 = vadd.f32 %v1144, 1.0
      %v1401 = vadd.f32 %v1145, 1.0
      %v1402 = vadd.f32 %v1146, 1.0
      %v1403 = vadd.f32 %v1147, 1.0
      %v1404 = vadd.f32 %v1148, 1.0
      %v1405 = vadd.f32 %v1149, 1.0
      %v1406 = vadd.f32 %v1150, 1.0
      %v1407 = vadd.f32 %v1151, 1.0
      %v1408 = vadd.f32 %v1152, 1.0
      %v1409 = vadd.f32 %v1153, 1.0
      %v1410 = vadd.f32 %v1154, 1.0
      %v1411 = vadd.f32 %v1155, 1.0
      %v1412 = vadd.f32 %v1156, 1.0
      %v1413 = vadd.f32 %v1157, 1.0
      %v1414 = vadd.f32 %v1158, 1.0
      %v1415 = vadd.f32 %v1159, 1.0
      %v1416 = vadd.f32 %v1160, 1.0
      %v1417 = vadd.f32 %v1161, 1.0
      %v1418 = vadd.f32 %v1162, 1.0
      %v1419 = vadd.f32 %v1163, 1.0
      %v1420 = vadd.f32 %v1164, 1.0
      %v1421 = vadd.f32 %v1165, 1.0
      %v1422 = vadd.f32 %v1166, 1.0
      %v1423 = vadd.f32 %v1167, 1.0
      %v1424 = vadd.f32 %v1168, 1.0
      %v1425 = vadd.f32 %v1169, 1.0
      %v1426 = vadd.f32 %v1170, 1.0
      %v1427 = vadd.f32 %v1171, 1.0
      %v1428 = vadd.f32 %v1172, 1.0
      %v1429 = vadd.f32 %v1173, 1.0
      %v1430 = vadd.f32 %v1174, 1.0
      %v1431 = vadd.f32 %v1175, 1.0
      %v1432 = vadd.f32 %v1176, 1.0
      %v1433 = vadd.f32 %v1177, 1.0
      %v1434 = vadd.f32 %v1178, 1.0
      %v1435 = vadd.f32 %v1179, 1.0
      %v1436 = vadd.f32 %v1180, 1.0
      %v1437 = vadd.f32 %v1181, 1.0
      %v1438 = vadd.f32 %v1182, 1.0
      %v1439 = vadd.f32 %v1183, 1.0
      %v1440 = vadd.f32 %v1184, 1.0
      %v1441 = vadd.f32 %v1185, 1.0
      %v1442 = vadd.f32 %v1186, 1.0
      %v1443 = vadd.f32 %v1187, 1.0
      %v1444 = vadd.f32 %v1188, 1.0
      %v1445 = vadd.f32 %v1189, 1.0
      %v1446 = vadd.f32 %v1190, 1.0
      %v1447 = vadd.f32 %v1191, 1.0
      %v1448 = vadd.f32 %v1192, 1.0
      %v1449 = vadd.f32 %v1193, 1.0
      %v1450 = vadd.f32 %v1194, 1.0
      %v1451 = vadd.f32 %v1195, 1.0
      %v1452 = vadd.f32 %v1196, 1.0
      %v1453 = vadd.f32 %v1197, 1.0
      %v1454 = vadd.f32 %v1198, 1.0
      %v1455 = vadd.f32 %v1199, 1.0
      %v1456 = vadd.f32 %v1200, 1.0
      %v1457 = vadd.f32 %v1201, 1.0
      %v1458 = vmul.f32 %v434, %v1202
      %v1459 = vmul.f32 %v435, %v1203
      %v1460 = vmul.f32 %v436, %v1204
      %v1461 = vmul.f32 %v437, %v1205
      %v1462 = vmul.f32 %v438, %v1206
      %v1463 = vmul.f32 %v439, %v1207
      %v1464 = vmul.f32 %v440, %v1208
      %v1465 = vmul.f32 %v441, %v1209
      %v1466 = vmul.f32 %v442, %v1210
      %v1467 = vmul.f32 %v443, %v1211
      %v1468 = vmul.f32 %v444, %v1212
      %v1469 = vmul.f32 %v445, %v1213
      %v1470 = vmul.f32 %v446, %v1214
      %v1471 = vmul.f32 %v447, %v1215
      %v1472 = vmul.f32 %v448, %v1216
      %v1473 = vmul.f32 %v449, %v1217
      %v1474 = vmul.f32 %v450, %v1218
      %v1475 = vmul.f32 %v451, %v1219
      %v1476 = vmul.f32 %v452, %v1220
      %v1477 = vmul.f32 %v453, %v1221
      %v1478 = vmul.f32 %v454, %v1222
      %v1479 = vmul.f32 %v455, %v1223
      %v1480 = vmul.f32 %v456, %v1224
      %v1481 = vmul.f32 %v457, %v1225
      %v1482 = vmul.f32 %v458, %v1226
      %v1483 = vmul.f32 %v459, %v1227
      %v1484 = vmul.f32 %v460, %v1228
      %v1485 = vmul.f32 %v461, %v1229
      %v1486 = vmul.f32 %v462, %v1230
      %v1487 = vmul.f32 %v463, %v1231
      %v1488 = vmul.f32 %v464, %v1232
      %v1489 = vmul.f32 %v465, %v1233
      %v1490 = vmul.f32 %v466, %v1234
      %v1491 = vmul.f32 %v467, %v1235
      %v1492 = vmul.f32 %v468, %v1236
      %v1493 = vmul.f32 %v469, %v1237
      %v1494 = vmul.f32 %v470, %v1238
      %v1495 = vmul.f32 %v471, %v1239
      %v1496 = vmul.f32 %v472, %v1240
      %v1497 = vmul.f32 %v473, %v1241
      %v1498 = vmul.f32 %v474, %v1242
      %v1499 = vmul.f32 %v475, %v1243
      %v1500 = vmul.f32 %v476, %v1244
      %v1501 = vmul.f32 %v477, %v1245
      %v1502 = vmul.f32 %v478, %v1246
      %v1503 = vmul.f32 %v479, %v1247
      %v1504 = vmul.f32 %v480, %v1248
      %v1505 = vmul.f32 %v481, %v1249
      %v1506 = vmul.f32 %v482, %v1250
      %v1507 = vmul.f32 %v483, %v1251
      %v1508 = vmul.f32 %v484, %v1252
      %v1509 = vmul.f32 %v485, %v1253
      %v1510 = vmul.f32 %v486, %v1254
      %v1511 = vmul.f32 %v487, %v1255
      %v1512 = vmul.f32 %v488, %v1256
      %v1513 = vmul.f32 %v489, %v1257
      %v1514 = vmul.f32 %v490, %v1258
      %v1515 = vmul.f32 %v491, %v1259
      %v1516 = vmul.f32 %v492, %v1260
      %v1517 = vmul.f32 %v493, %v1261
      %v1518 = vmul.f32 %v494, %v1262
      %v1519 = vmul.f32 %v495, %v1263
      %v1520 = vmul.f32 %v496, %v1264
      %v1521 = vmul.f32 %v497, %v1265
      %v1522 = vmul.f32 %v498, %v1266
      %v1523 = vmul.f32 %v499, %v1267
      %v1524 = vmul.f32 %v500, %v1268
      %v1525 = vmul.f32 %v501, %v1269
      %v1526 = vmul.f32 %v502, %v1270
      %v1527 = vmul.f32 %v503, %v1271
      %v1528 = vmul.f32 %v504, %v1272
      %v1529 = vmul.f32 %v505, %v1273
      %v1530 = vmul.f32 %v506, %v1274
      %v1531 = vmul.f32 %v507, %v1275
      %v1532 = vmul.f32 %v508, %v1276
      %v1533 = vmul.f32 %v509, %v1277
      %v1534 = vmul.f32 %v510, %v1278
      %v1535 = vmul.f32 %v511, %v1279
      %v1536 = vmul.f32 %v512, %v1280
      %v1537 = vmul.f32 %v513, %v1281
      %v1538 = vmul.f32 %v514, %v1282
      %v1539 = vmul.f32 %v515, %v1283
      %v1540 = vmul.f32 %v516, %v1284
      %v1541 = vmul.f32 %v517, %v1285
      %v1542 = vmul.f32 %v518, %v1286
      %v1543 = vmul.f32 %v519, %v1287
      %v1544 = vmul.f32 %v520, %v1288
      %v1545 = vmul.f32 %v521, %v1289
      %v1546 = vmul.f32 %v522, %v1290
      %v1547 = vmul.f32 %v523, %v1291
      %v1548 = vmul.f32 %v524, %v1292
      %v1549 = vmul.f32 %v525, %v1293
      %v1550 = vmul.f32 %v526, %v1294
      %v1551 = vmul.f32 %v527, %v1295
      %v1552 = vmul.f32 %v528, %v1296
      %v1553 = vmul.f32 %v529, %v1297
      %v1554 = vmul.f32 %v530, %v1298
      %v1555 = vmul.f32 %v531, %v1299
      %v1556 = vmul.f32 %v532, %v1300
      %v1557 = vmul.f32 %v533, %v1301
      %v1558 = vmul.f32 %v534, %v1302
      %v1559 = vmul.f32 %v535, %v1303
      %v1560 = vmul.f32 %v536, %v1304
      %v1561 = vmul.f32 %v537, %v1305
      %v1562 = vmul.f32 %v538, %v1306
      %v1563 = vmul.f32 %v539, %v1307
      %v1564 = vmul.f32 %v540, %v1308
      %v1565 = vmul.f32 %v541, %v1309
      %v1566 = vmul.f32 %v542, %v1310
      %v1567 = vmul.f32 %v543, %v1311
      %v1568 = vmul.f32 %v544, %v1312
      %v1569 = vmul.f32 %v545, %v1313
      %v1570 = vmul.f32 %v546, %v1314
      %v1571 = vmul.f32 %v547, %v1315
      %v1572 = vmul.f32 %v548, %v1316
      %v1573 = vmul.f32 %v549, %v1317
      %v1574 = vmul.f32 %v550, %v1318
      %v1575 = vmul.f32 %v551, %v1319
      %v1576 = vmul.f32 %v552, %v1320
      %v1577 = vmul.f32 %v553, %v1321
      %v1578 = vmul.f32 %v554, %v1322
      %v1579 = vmul.f32 %v555, %v1323
      %v1580 = vmul.f32 %v556, %v1324
      %v1581 = vmul.f32 %v557, %v1325
      %v1582 = vmul.f32 %v558, %v1326
      %v1583 = vmul.f32 %v559, %v1327
      %v1584 = vmul.f32 %v560, %v1328
      %v1585 = vmul.f32 %v561, %v1329
      %v1586 = vmul.f32 %v562, %v1330
      %v1587 = vmul.f32 %v563, %v1331
      %v1588 = vmul.f32 %v564, %v1332
      %v1589 = vmul.f32 %v565, %v1333
      %v1590 = vmul.f32 %v566, %v1334
      %v1591 = vmul.f32 %v567, %v1335
      %v1592 = vmul.f32 %v568, %v1336
      %v1593 = vmul.f32 %v569, %v1337
      %v1594 = vmul.f32 %v570, %v1338
      %v1595 = vmul.f32 %v571, %v1339
      %v1596 = vmul.f32 %v572, %v1340
      %v1597 = vmul.f32 %v573, %v1341
      %v1598 = vmul.f32 %v574, %v1342
      %v1599 = vmul.f32 %v575, %v1343
      %v1600 = vmul.f32 %v576, %v1344
      %v1601 = vmul.f32 %v577, %v1345
      %v1602 = vmul.f32 %v578, %v1346
      %v1603 = vmul.f32 %v579, %v1347
      %v1604 = vmul.f32 %v580, %v1348
      %v1605 = vmul.f32 %v581, %v1349
      %v1606 = vmul.f32 %v582, %v1350
      %v1607 = vmul.f32 %v583, %v1351
      %v1608 = vmul.f32 %v584, %v1352
      %v1609 = vmul.f32 %v585, %v1353
      %v1610 = vmul.f32 %v586, %v1354
      %v1611 = vmul.f32 %v587, %v1355
      %v1612 = vmul.f32 %v588, %v1356
      %v1613 = vmul.f32 %v589, %v1357
      %v1614 = vmul.f32 %v590, %v1358
      %v1615 = vmul.f32 %v591, %v1359
      %v1616 = vmul.f32 %v592, %v1360
      %v1617 = vmul.f32 %v593, %v1361
      %v1618 = vmul.f32 %v594, %v1362
      %v1619 = vmul.f32 %v595, %v1363
      %v1620 = vmul.f32 %v596, %v1364
      %v1621 = vmul.f32 %v597, %v1365
      %v1622 = vmul.f32 %v598, %v1366
      %v1623 = vmul.f32 %v599, %v1367
      %v1624 = vmul.f32 %v600, %v1368
      %v1625 = vmul.f32 %v601, %v1369
      %v1626 = vmul.f32 %v602, %v1370
      %v1627 = vmul.f32 %v603, %v1371
      %v1628 = vmul.f32 %v604, %v1372
      %v1629 = vmul.f32 %v605, %v1373
      %v1630 = vmul.f32 %v606, %v1374
      %v1631 = vmul.f32 %v607, %v1375
      %v1632 = vmul.f32 %v608, %v1376
      %v1633 = vmul.f32 %v609, %v1377
      %v1634 = vmul.f32 %v610, %v1378
      %v1635 = vmul.f32 %v611, %v1379
      %v1636 = vmul.f32 %v612, %v1380
      %v1637 = vmul.f32 %v613, %v1381
      %v1638 = vmul.f32 %v614, %v1382
      %v1639 = vmul.f32 %v615, %v1383
      %v1640 = vmul.f32 %v616, %v1384
      %v1641 = vmul.f32 %v617, %v1385
      %v1642 = vmul.f32 %v618, %v1386
      %v1643 = vmul.f32 %v619, %v1387
      %v1644 = vmul.f32 %v620, %v1388
      %v1645 = vmul.f32 %v621, %v1389
      %v1646 = vmul.f32 %v622, %v1390
      %v1647 = vmul.f32 %v623, %v1391
      %v1648 = vmul.f32 %v624, %v1392
      %v1649 = vmul.f32 %v625, %v1393
      %v1650 = vmul.f32 %v626, %v1394
      %v1651 = vmul.f32 %v627, %v1395
      %v1652 = vmul.f32 %v628, %v1396
      %v1653 = vmul.f32 %v629, %v1397
      %v1654 = vmul.f32 %v630, %v1398
      %v1655 = vmul.f32 %v631, %v1399
      %v1656 = vmul.f32 %v632, %v1400
      %v1657 = vmul.f32 %v633, %v1401
      %v1658 = vmul.f32 %v634, %v1402
      %v1659 = vmul.f32 %v635, %v1403
      %v1660 = vmul.f32 %v636, %v1404
      %v1661 = vmul.f32 %v637, %v1405
      %v1662 = vmul.f32 %v638, %v1406
      %v1663 = vmul.f32 %v639, %v1407
      %v1664 = vmul.f32 %v640, %v1408
      %v1665 = vmul.f32 %v641, %v1409
      %v1666 = vmul.f32 %v642, %v1410
      %v1667 = vmul.f32 %v643, %v1411
      %v1668 = vmul.f32 %v644, %v1412
      %v1669 = vmul.f32 %v645, %v1413
      %v1670 = vmul.f32 %v646, %v1414
      %v1671 = vmul.f32 %v647, %v1415
      %v1672 = vmul.f32 %v648, %v1416
      %v1673 = vmul.f32 %v649, %v1417
      %v1674 = vmul.f32 %v650, %v1418
      %v1675 = vmul.f32 %v651, %v1419
      %v1676 = vmul.f32 %v652, %v1420
      %v1677 = vmul.f32 %v653, %v1421
      %v1678 = vmul.f32 %v654, %v1422
      %v1679 = vmul.f32 %v655, %v1423
      %v1680 = vmul.f32 %v656, %v1424
      %v1681 = vmul.f32 %v657, %v1425
      %v1682 = vmul.f32 %v658, %v1426
      %v1683 = vmul.f32 %v659, %v1427
      %v1684 = vmul.f32 %v660, %v1428
      %v1685 = vmul.f32 %v661, %v1429
      %v1686 = vmul.f32 %v662, %v1430
      %v1687 = vmul.f32 %v663, %v1431
      %v1688 = vmul.f32 %v664, %v1432
      %v1689 = vmul.f32 %v665, %v1433
      %v1690 = vmul.f32 %v666, %v1434
      %v1691 = vmul.f32 %v667, %v1435
      %v1692 = vmul.f32 %v668, %v1436
      %v1693 = vmul.f32 %v669, %v1437
      %v1694 = vmul.f32 %v670, %v1438
      %v1695 = vmul.f32 %v671, %v1439
      %v1696 = vmul.f32 %v672, %v1440
      %v1697 = vmul.f32 %v673, %v1441
      %v1698 = vmul.f32 %v674, %v1442
      %v1699 = vmul.f32 %v675, %v1443
      %v1700 = vmul.f32 %v676, %v1444
      %v1701 = vmul.f32 %v677, %v1445
      %v1702 = vmul.f32 %v678, %v1446
      %v1703 = vmul.f32 %v679, %v1447
      %v1704 = vmul.f32 %v680, %v1448
      %v1705 = vmul.f32 %v681, %v1449
      %v1706 = vmul.f32 %v682, %v1450
      %v1707 = vmul.f32 %v683, %v1451
      %v1708 = vmul.f32 %v684, %v1452
      %v1709 = vmul.f32 %v685, %v1453
      %v1710 = vmul.f32 %v686, %v1454
      %v1711 = vmul.f32 %v687, %v1455
      %v1712 = vmul.f32 %v688, %v1456
      %v1713 = vmul.f32 %v689, %v1457
      %v1714 = vpack.c.bf16 %v1474, %v1458
      %v1715 = vpack.c.bf16 %v1475, %v1459
      %v1716 = vpack.c.bf16 %v1476, %v1460
      %v1717 = vpack.c.bf16 %v1477, %v1461
      %v1718 = vpack.c.bf16 %v1478, %v1462
      %v1719 = vpack.c.bf16 %v1479, %v1463
      %v1720 = vpack.c.bf16 %v1480, %v1464
      %v1721 = vpack.c.bf16 %v1481, %v1465
      %v1722 = vpack.c.bf16 %v1482, %v1466
      %v1723 = vpack.c.bf16 %v1483, %v1467
      %v1724 = vpack.c.bf16 %v1484, %v1468
      %v1725 = vpack.c.bf16 %v1485, %v1469
      %v1726 = vpack.c.bf16 %v1486, %v1470
      %v1727 = vpack.c.bf16 %v1487, %v1471
      %v1728 = vpack.c.bf16 %v1488, %v1472
      %v1729 = vpack.c.bf16 %v1489, %v1473
      %v1730 = vpack.c.bf16 %v1506, %v1490
      %v1731 = vpack.c.bf16 %v1507, %v1491
      %v1732 = vpack.c.bf16 %v1508, %v1492
      %v1733 = vpack.c.bf16 %v1509, %v1493
      %v1734 = vpack.c.bf16 %v1510, %v1494
      %v1735 = vpack.c.bf16 %v1511, %v1495
      %v1736 = vpack.c.bf16 %v1512, %v1496
      %v1737 = vpack.c.bf16 %v1513, %v1497
      %v1738 = vpack.c.bf16 %v1514, %v1498
      %v1739 = vpack.c.bf16 %v1515, %v1499
      %v1740 = vpack.c.bf16 %v1516, %v1500
      %v1741 = vpack.c.bf16 %v1517, %v1501
      %v1742 = vpack.c.bf16 %v1518, %v1502
      %v1743 = vpack.c.bf16 %v1519, %v1503
      %v1744 = vpack.c.bf16 %v1520, %v1504
      %v1745 = vpack.c.bf16 %v1521, %v1505
      %v1746 = vpack.c.bf16 %v1538, %v1522
      %v1747 = vpack.c.bf16 %v1539, %v1523
      %v1748 = vpack.c.bf16 %v1540, %v1524
      %v1749 = vpack.c.bf16 %v1541, %v1525
      %v1750 = vpack.c.bf16 %v1542, %v1526
      %v1751 = vpack.c.bf16 %v1543, %v1527
      %v1752 = vpack.c.bf16 %v1544, %v1528
      %v1753 = vpack.c.bf16 %v1545, %v1529
      %v1754 = vpack.c.bf16 %v1546, %v1530
      %v1755 = vpack.c.bf16 %v1547, %v1531
      %v1756 = vpack.c.bf16 %v1548, %v1532
      %v1757 = vpack.c.bf16 %v1549, %v1533
      %v1758 = vpack.c.bf16 %v1550, %v1534
      %v1759 = vpack.c.bf16 %v1551, %v1535
      %v1760 = vpack.c.bf16 %v1552, %v1536
      %v1761 = vpack.c.bf16 %v1553, %v1537
      %v1762 = vpack.c.bf16 %v1570, %v1554
      %v1763 = vpack.c.bf16 %v1571, %v1555
      %v1764 = vpack.c.bf16 %v1572, %v1556
      %v1765 = vpack.c.bf16 %v1573, %v1557
      %v1766 = vpack.c.bf16 %v1574, %v1558
      %v1767 = vpack.c.bf16 %v1575, %v1559
      %v1768 = vpack.c.bf16 %v1576, %v1560
      %v1769 = vpack.c.bf16 %v1577, %v1561
      %v1770 = vpack.c.bf16 %v1578, %v1562
      %v1771 = vpack.c.bf16 %v1579, %v1563
      %v1772 = vpack.c.bf16 %v1580, %v1564
      %v1773 = vpack.c.bf16 %v1581, %v1565
      %v1774 = vpack.c.bf16 %v1582, %v1566
      %v1775 = vpack.c.bf16 %v1583, %v1567
      %v1776 = vpack.c.bf16 %v1584, %v1568
      %v1777 = vpack.c.bf16 %v1585, %v1569
      %v1778 = vpack.c.bf16 %v1602, %v1586
      %v1779 = vpack.c.bf16 %v1603, %v1587
      %v1780 = vpack.c.bf16 %v1604, %v1588
      %v1781 = vpack.c.bf16 %v1605, %v1589
      %v1782 = vpack.c.bf16 %v1606, %v1590
      %v1783 = vpack.c.bf16 %v1607, %v1591
      %v1784 = vpack.c.bf16 %v1608, %v1592
      %v1785 = vpack.c.bf16 %v1609, %v1593
      %v1786 = vpack.c.bf16 %v1610, %v1594
      %v1787 = vpack.c.bf16 %v1611, %v1595
      %v1788 = vpack.c.bf16 %v1612, %v1596
      %v1789 = vpack.c.bf16 %v1613, %v1597
      %v1790 = vpack.c.bf16 %v1614, %v1598
      %v1791 = vpack.c.bf16 %v1615, %v1599
      %v1792 = vpack.c.bf16 %v1616, %v1600
      %v1793 = vpack.c.bf16 %v1617, %v1601
      %v1794 = vpack.c.bf16 %v1634, %v1618
      %v1795 = vpack.c.bf16 %v1635, %v1619
      %v1796 = vpack.c.bf16 %v1636, %v1620
      %v1797 = vpack.c.bf16 %v1637, %v1621
      %v1798 = vpack.c.bf16 %v1638, %v1622
      %v1799 = vpack.c.bf16 %v1639, %v1623
      %v1800 = vpack.c.bf16 %v1640, %v1624
      %v1801 = vpack.c.bf16 %v1641, %v1625
      %v1802 = vpack.c.bf16 %v1642, %v1626
      %v1803 = vpack.c.bf16 %v1643, %v1627
      %v1804 = vpack.c.bf16 %v1644, %v1628
      %v1805 = vpack.c.bf16 %v1645, %v1629
      %v1806 = vpack.c.bf16 %v1646, %v1630
      %v1807 = vpack.c.bf16 %v1647, %v1631
      %v1808 = vpack.c.bf16 %v1648, %v1632
      %v1809 = vpack.c.bf16 %v1649, %v1633
      %v1810 = vpack.c.bf16 %v1666, %v1650
      %v1811 = vpack.c.bf16 %v1667, %v1651
      %v1812 = vpack.c.bf16 %v1668, %v1652
      %v1813 = vpack.c.bf16 %v1669, %v1653
      %v1814 = vpack.c.bf16 %v1670, %v1654
      %v1815 = vpack.c.bf16 %v1671, %v1655
      %v1816 = vpack.c.bf16 %v1672, %v1656
      %v1817 = vpack.c.bf16 %v1673, %v1657
      %v1818 = vpack.c.bf16 %v1674, %v1658
      %v1819 = vpack.c.bf16 %v1675, %v1659
      %v1820 = vpack.c.bf16 %v1676, %v1660
      %v1821 = vpack.c.bf16 %v1677, %v1661
      %v1822 = vpack.c.bf16 %v1678, %v1662
      %v1823 = vpack.c.bf16 %v1679, %v1663
      %v1824 = vpack.c.bf16 %v1680, %v1664
      %v1825 = vpack.c.bf16 %v1681, %v1665
      %v1826 = vpack.c.bf16 %v1698, %v1682
      %v1827 = vpack.c.bf16 %v1699, %v1683
      %v1828 = vpack.c.bf16 %v1700, %v1684
      %v1829 = vpack.c.bf16 %v1701, %v1685
      %v1830 = vpack.c.bf16 %v1702, %v1686
      %v1831 = vpack.c.bf16 %v1703, %v1687
      %v1832 = vpack.c.bf16 %v1704, %v1688
      %v1833 = vpack.c.bf16 %v1705, %v1689
      %v1834 = vpack.c.bf16 %v1706, %v1690
      %v1835 = vpack.c.bf16 %v1707, %v1691
      %v1836 = vpack.c.bf16 %v1708, %v1692
      %v1837 = vpack.c.bf16 %v1709, %v1693
      %v1838 = vpack.c.bf16 %v1710, %v1694
      %v1839 = vpack.c.bf16 %v1711, %v1695
      %v1840 = vpack.c.bf16 %v1712, %v1696
      %v1841 = vpack.c.bf16 %v1713, %v1697
      %v1842 = vld [vmem:[%s1] sm:$0xf]
      %v1843 = vld [vmem:[%s1 + $0x4] sm:$0xf]
      %v1844 = vld [vmem:[%s1 + $0x8] sm:$0xf]
      %v1845 = vld [vmem:[%s1 + $0xc] sm:$0xf]
      %v1846 = vld [vmem:[%s1 + $0x10] sm:$0xf]
      %v1847 = vld [vmem:[%s1 + $0x14] sm:$0xf]
      %v1848 = vld [vmem:[%s1 + $0x18] sm:$0xf]
      %v1849 = vld [vmem:[%s1 + $0x1c] sm:$0xf]
      %v1850 = vld [vmem:[%s1 + $0x20] sm:$0xf]
      %v1851 = vld [vmem:[%s1 + $0x24] sm:$0xf]
      %v1852 = vld [vmem:[%s1 + $0x28] sm:$0xf]
      %v1853 = vld [vmem:[%s1 + $0x2c] sm:$0xf]
      %v1854 = vld [vmem:[%s1 + $0x30] sm:$0xf]
      %v1855 = vld [vmem:[%s1 + $0x34] sm:$0xf]
      %v1856 = vld [vmem:[%s1 + $0x38] sm:$0xf]
      %v1857 = vld [vmem:[%s1 + $0x3c] sm:$0xf]
      %v1858 = vld [vmem:[%s1 + $0x40] sm:$0xf]
      %v1859 = vld [vmem:[%s1 + $0x44] sm:$0xf]
      %v1860 = vld [vmem:[%s1 + $0x48] sm:$0xf]
      %v1861 = vld [vmem:[%s1 + $0x4c] sm:$0xf]
      %v1862 = vld [vmem:[%s1 + $0x50] sm:$0xf]
      %v1863 = vld [vmem:[%s1 + $0x54] sm:$0xf]
      %v1864 = vld [vmem:[%s1 + $0x58] sm:$0xf]
      %v1865 = vld [vmem:[%s1 + $0x5c] sm:$0xf]
      %v1866 = vld [vmem:[%s1 + $0x60] sm:$0xf]
      %v1867 = vld [vmem:[%s1 + $0x64] sm:$0xf]
      %v1868 = vld [vmem:[%s1 + $0x68] sm:$0xf]
      %v1869 = vld [vmem:[%s1 + $0x6c] sm:$0xf]
      %v1870 = vld [vmem:[%s1 + $0x70] sm:$0xf]
      %v1871 = vld [vmem:[%s1 + $0x74] sm:$0xf]
      %v1872 = vld [vmem:[%s1 + $0x78] sm:$0xf]
      %v1873 = vld [vmem:[%s1 + $0x7c] sm:$0xf]
      %v1874 = vld [vmem:[%s1 + $0x80] sm:$0xf]
      %v1875 = vld [vmem:[%s1 + $0x84] sm:$0xf]
      %v1876 = vld [vmem:[%s1 + $0x88] sm:$0xf]
      %v1877 = vld [vmem:[%s1 + $0x8c] sm:$0xf]
      %v1878 = vld [vmem:[%s1 + $0x90] sm:$0xf]
      %v1879 = vld [vmem:[%s1 + $0x94] sm:$0xf]
      %v1880 = vld [vmem:[%s1 + $0x98] sm:$0xf]
      %v1881 = vld [vmem:[%s1 + $0x9c] sm:$0xf]
      %v1882 = vld [vmem:[%s1 + $0xa0] sm:$0xf]
      %v1883 = vld [vmem:[%s1 + $0xa4] sm:$0xf]
      %v1884 = vld [vmem:[%s1 + $0xa8] sm:$0xf]
      %v1885 = vld [vmem:[%s1 + $0xac] sm:$0xf]
      %v1886 = vld [vmem:[%s1 + $0xb0] sm:$0xf]
      %v1887 = vld [vmem:[%s1 + $0xb4] sm:$0xf]
      %v1888 = vld [vmem:[%s1 + $0xb8] sm:$0xf]
      %v1889 = vld [vmem:[%s1 + $0xbc] sm:$0xf]
      %v1890 = vld [vmem:[%s1 + $0xc0] sm:$0xf]
      %v1891 = vld [vmem:[%s1 + $0xc4] sm:$0xf]
      %v1892 = vld [vmem:[%s1 + $0xc8] sm:$0xf]
      %v1893 = vld [vmem:[%s1 + $0xcc] sm:$0xf]
      %v1894 = vld [vmem:[%s1 + $0xd0] sm:$0xf]
      %v1895 = vld [vmem:[%s1 + $0xd4] sm:$0xf]
      %v1896 = vld [vmem:[%s1 + $0xd8] sm:$0xf]
      %v1897 = vld [vmem:[%s1 + $0xdc] sm:$0xf]
      %v1898 = vld [vmem:[%s1 + $0xe0] sm:$0xf]
      %v1899 = vld [vmem:[%s1 + $0xe4] sm:$0xf]
      %v1900 = vld [vmem:[%s1 + $0xe8] sm:$0xf]
      %v1901 = vld [vmem:[%s1 + $0xec] sm:$0xf]
      %v1902 = vld [vmem:[%s1 + $0xf0] sm:$0xf]
      %v1903 = vld [vmem:[%s1 + $0xf4] sm:$0xf]
      %v1904 = vld [vmem:[%s1 + $0xf8] sm:$0xf]
      %v1905 = vld [vmem:[%s1 + $0xfc] sm:$0xf]
      %v1906 = vld [vmem:[%s1 + $0x100] sm:$0xf]
      %v1907 = vld [vmem:[%s1 + $0x104] sm:$0xf]
      %v1908 = vld [vmem:[%s1 + $0x108] sm:$0xf]
      %v1909 = vld [vmem:[%s1 + $0x10c] sm:$0xf]
      %v1910 = vld [vmem:[%s1 + $0x110] sm:$0xf]
      %v1911 = vld [vmem:[%s1 + $0x114] sm:$0xf]
      %v1912 = vld [vmem:[%s1 + $0x118] sm:$0xf]
      %v1913 = vld [vmem:[%s1 + $0x11c] sm:$0xf]
      %v1914 = vld [vmem:[%s1 + $0x120] sm:$0xf]
      %v1915 = vld [vmem:[%s1 + $0x124] sm:$0xf]
      %v1916 = vld [vmem:[%s1 + $0x128] sm:$0xf]
      %v1917 = vld [vmem:[%s1 + $0x12c] sm:$0xf]
      %v1918 = vld [vmem:[%s1 + $0x130] sm:$0xf]
      %v1919 = vld [vmem:[%s1 + $0x134] sm:$0xf]
      %v1920 = vld [vmem:[%s1 + $0x138] sm:$0xf]
      %v1921 = vld [vmem:[%s1 + $0x13c] sm:$0xf]
      %v1922 = vld [vmem:[%s1 + $0x140] sm:$0xf]
      %v1923 = vld [vmem:[%s1 + $0x144] sm:$0xf]
      %v1924 = vld [vmem:[%s1 + $0x148] sm:$0xf]
      %v1925 = vld [vmem:[%s1 + $0x14c] sm:$0xf]
      %v1926 = vld [vmem:[%s1 + $0x150] sm:$0xf]
      %v1927 = vld [vmem:[%s1 + $0x154] sm:$0xf]
      %v1928 = vld [vmem:[%s1 + $0x158] sm:$0xf]
      %v1929 = vld [vmem:[%s1 + $0x15c] sm:$0xf]
      %v1930 = vld [vmem:[%s1 + $0x160] sm:$0xf]
      %v1931 = vld [vmem:[%s1 + $0x164] sm:$0xf]
      %v1932 = vld [vmem:[%s1 + $0x168] sm:$0xf]
      %v1933 = vld [vmem:[%s1 + $0x16c] sm:$0xf]
      %v1934 = vld [vmem:[%s1 + $0x170] sm:$0xf]
      %v1935 = vld [vmem:[%s1 + $0x174] sm:$0xf]
      %v1936 = vld [vmem:[%s1 + $0x178] sm:$0xf]
      %v1937 = vld [vmem:[%s1 + $0x17c] sm:$0xf]
      %v1938 = vld [vmem:[%s1 + $0x180] sm:$0xf]
      %v1939 = vld [vmem:[%s1 + $0x184] sm:$0xf]
      %v1940 = vld [vmem:[%s1 + $0x188] sm:$0xf]
      %v1941 = vld [vmem:[%s1 + $0x18c] sm:$0xf]
      %v1942 = vld [vmem:[%s1 + $0x190] sm:$0xf]
      %v1943 = vld [vmem:[%s1 + $0x194] sm:$0xf]
      %v1944 = vld [vmem:[%s1 + $0x198] sm:$0xf]
      %v1945 = vld [vmem:[%s1 + $0x19c] sm:$0xf]
      %v1946 = vld [vmem:[%s1 + $0x1a0] sm:$0xf]
      %v1947 = vld [vmem:[%s1 + $0x1a4] sm:$0xf]
      %v1948 = vld [vmem:[%s1 + $0x1a8] sm:$0xf]
      %v1949 = vld [vmem:[%s1 + $0x1ac] sm:$0xf]
      %v1950 = vld [vmem:[%s1 + $0x1b0] sm:$0xf]
      %v1951 = vld [vmem:[%s1 + $0x1b4] sm:$0xf]
      %v1952 = vld [vmem:[%s1 + $0x1b8] sm:$0xf]
      %v1953 = vld [vmem:[%s1 + $0x1bc] sm:$0xf]
      %v1954 = vld [vmem:[%s1 + $0x1c0] sm:$0xf]
      %v1955 = vld [vmem:[%s1 + $0x1c4] sm:$0xf]
      %v1956 = vld [vmem:[%s1 + $0x1c8] sm:$0xf]
      %v1957 = vld [vmem:[%s1 + $0x1cc] sm:$0xf]
      %v1958 = vld [vmem:[%s1 + $0x1d0] sm:$0xf]
      %v1959 = vld [vmem:[%s1 + $0x1d4] sm:$0xf]
      %v1960 = vld [vmem:[%s1 + $0x1d8] sm:$0xf]
      %v1961 = vld [vmem:[%s1 + $0x1dc] sm:$0xf]
      %v1962 = vld [vmem:[%s1 + $0x1e0] sm:$0xf]
      %v1963 = vld [vmem:[%s1 + $0x1e4] sm:$0xf]
      %v1964 = vld [vmem:[%s1 + $0x1e8] sm:$0xf]
      %v1965 = vld [vmem:[%s1 + $0x1ec] sm:$0xf]
      %v1966 = vld [vmem:[%s1 + $0x1f0] sm:$0xf]
      %v1967 = vld [vmem:[%s1 + $0x1f4] sm:$0xf]
      %v1968 = vld [vmem:[%s1 + $0x1f8] sm:$0xf]
      %v1969 = vld [vmem:[%s1 + $0x1fc] sm:$0xf]
      %v1970 = vld [vmem:[%s1 + $0x200] sm:$0xf]
      %v1971 = vld [vmem:[%s1 + $0x204] sm:$0xf]
      %v1972 = vld [vmem:[%s1 + $0x208] sm:$0xf]
      %v1973 = vld [vmem:[%s1 + $0x20c] sm:$0xf]
      %v1974 = vld [vmem:[%s1 + $0x210] sm:$0xf]
      %v1975 = vld [vmem:[%s1 + $0x214] sm:$0xf]
      %v1976 = vld [vmem:[%s1 + $0x218] sm:$0xf]
      %v1977 = vld [vmem:[%s1 + $0x21c] sm:$0xf]
      %v1978 = vld [vmem:[%s1 + $0x220] sm:$0xf]
      %v1979 = vld [vmem:[%s1 + $0x224] sm:$0xf]
      %v1980 = vld [vmem:[%s1 + $0x228] sm:$0xf]
      %v1981 = vld [vmem:[%s1 + $0x22c] sm:$0xf]
      %v1982 = vld [vmem:[%s1 + $0x230] sm:$0xf]
      %v1983 = vld [vmem:[%s1 + $0x234] sm:$0xf]
      %v1984 = vld [vmem:[%s1 + $0x238] sm:$0xf]
      %v1985 = vld [vmem:[%s1 + $0x23c] sm:$0xf]
      %v1986 = vld [vmem:[%s1 + $0x240] sm:$0xf]
      %v1987 = vld [vmem:[%s1 + $0x244] sm:$0xf]
      %v1988 = vld [vmem:[%s1 + $0x248] sm:$0xf]
      %v1989 = vld [vmem:[%s1 + $0x24c] sm:$0xf]
      %v1990 = vld [vmem:[%s1 + $0x250] sm:$0xf]
      %v1991 = vld [vmem:[%s1 + $0x254] sm:$0xf]
      %v1992 = vld [vmem:[%s1 + $0x258] sm:$0xf]
      %v1993 = vld [vmem:[%s1 + $0x25c] sm:$0xf]
      %v1994 = vld [vmem:[%s1 + $0x260] sm:$0xf]
      %v1995 = vld [vmem:[%s1 + $0x264] sm:$0xf]
      %v1996 = vld [vmem:[%s1 + $0x268] sm:$0xf]
      %v1997 = vld [vmem:[%s1 + $0x26c] sm:$0xf]
      %v1998 = vld [vmem:[%s1 + $0x270] sm:$0xf]
      %v1999 = vld [vmem:[%s1 + $0x274] sm:$0xf]
      %v2000 = vld [vmem:[%s1 + $0x278] sm:$0xf]
      %v2001 = vld [vmem:[%s1 + $0x27c] sm:$0xf]
      %v2002 = vld [vmem:[%s1 + $0x280] sm:$0xf]
      %v2003 = vld [vmem:[%s1 + $0x284] sm:$0xf]
      %v2004 = vld [vmem:[%s1 + $0x288] sm:$0xf]
      %v2005 = vld [vmem:[%s1 + $0x28c] sm:$0xf]
      %v2006 = vld [vmem:[%s1 + $0x290] sm:$0xf]
      %v2007 = vld [vmem:[%s1 + $0x294] sm:$0xf]
      %v2008 = vld [vmem:[%s1 + $0x298] sm:$0xf]
      %v2009 = vld [vmem:[%s1 + $0x29c] sm:$0xf]
      %v2010 = vld [vmem:[%s1 + $0x2a0] sm:$0xf]
      %v2011 = vld [vmem:[%s1 + $0x2a4] sm:$0xf]
      %v2012 = vld [vmem:[%s1 + $0x2a8] sm:$0xf]
      %v2013 = vld [vmem:[%s1 + $0x2ac] sm:$0xf]
      %v2014 = vld [vmem:[%s1 + $0x2b0] sm:$0xf]
      %v2015 = vld [vmem:[%s1 + $0x2b4] sm:$0xf]
      %v2016 = vld [vmem:[%s1 + $0x2b8] sm:$0xf]
      %v2017 = vld [vmem:[%s1 + $0x2bc] sm:$0xf]
      %v2018 = vld [vmem:[%s1 + $0x2c0] sm:$0xf]
      %v2019 = vld [vmem:[%s1 + $0x2c4] sm:$0xf]
      %v2020 = vld [vmem:[%s1 + $0x2c8] sm:$0xf]
      %v2021 = vld [vmem:[%s1 + $0x2cc] sm:$0xf]
      %v2022 = vld [vmem:[%s1 + $0x2d0] sm:$0xf]
      %v2023 = vld [vmem:[%s1 + $0x2d4] sm:$0xf]
      %v2024 = vld [vmem:[%s1 + $0x2d8] sm:$0xf]
      %v2025 = vld [vmem:[%s1 + $0x2dc] sm:$0xf]
      %v2026 = vld [vmem:[%s1 + $0x2e0] sm:$0xf]
      %v2027 = vld [vmem:[%s1 + $0x2e4] sm:$0xf]
      %v2028 = vld [vmem:[%s1 + $0x2e8] sm:$0xf]
      %v2029 = vld [vmem:[%s1 + $0x2ec] sm:$0xf]
      %v2030 = vld [vmem:[%s1 + $0x2f0] sm:$0xf]
      %v2031 = vld [vmem:[%s1 + $0x2f4] sm:$0xf]
      %v2032 = vld [vmem:[%s1 + $0x2f8] sm:$0xf]
      %v2033 = vld [vmem:[%s1 + $0x2fc] sm:$0xf]
      %v2034 = vld [vmem:[%s1 + $0x300] sm:$0xf]
      %v2035 = vld [vmem:[%s1 + $0x304] sm:$0xf]
      %v2036 = vld [vmem:[%s1 + $0x308] sm:$0xf]
      %v2037 = vld [vmem:[%s1 + $0x30c] sm:$0xf]
      %v2038 = vld [vmem:[%s1 + $0x310] sm:$0xf]
      %v2039 = vld [vmem:[%s1 + $0x314] sm:$0xf]
      %v2040 = vld [vmem:[%s1 + $0x318] sm:$0xf]
      %v2041 = vld [vmem:[%s1 + $0x31c] sm:$0xf]
      %v2042 = vld [vmem:[%s1 + $0x320] sm:$0xf]
      %v2043 = vld [vmem:[%s1 + $0x324] sm:$0xf]
      %v2044 = vld [vmem:[%s1 + $0x328] sm:$0xf]
      %v2045 = vld [vmem:[%s1 + $0x32c] sm:$0xf]
      %v2046 = vld [vmem:[%s1 + $0x330] sm:$0xf]
      %v2047 = vld [vmem:[%s1 + $0x334] sm:$0xf]
      %v2048 = vld [vmem:[%s1 + $0x338] sm:$0xf]
      %v2049 = vld [vmem:[%s1 + $0x33c] sm:$0xf]
      %v2050 = vld [vmem:[%s1 + $0x340] sm:$0xf]
      %v2051 = vld [vmem:[%s1 + $0x344] sm:$0xf]
      %v2052 = vld [vmem:[%s1 + $0x348] sm:$0xf]
      %v2053 = vld [vmem:[%s1 + $0x34c] sm:$0xf]
      %v2054 = vld [vmem:[%s1 + $0x350] sm:$0xf]
      %v2055 = vld [vmem:[%s1 + $0x354] sm:$0xf]
      %v2056 = vld [vmem:[%s1 + $0x358] sm:$0xf]
      %v2057 = vld [vmem:[%s1 + $0x35c] sm:$0xf]
      %v2058 = vld [vmem:[%s1 + $0x360] sm:$0xf]
      %v2059 = vld [vmem:[%s1 + $0x364] sm:$0xf]
      %v2060 = vld [vmem:[%s1 + $0x368] sm:$0xf]
      %v2061 = vld [vmem:[%s1 + $0x36c] sm:$0xf]
      %v2062 = vld [vmem:[%s1 + $0x370] sm:$0xf]
      %v2063 = vld [vmem:[%s1 + $0x374] sm:$0xf]
      %v2064 = vld [vmem:[%s1 + $0x378] sm:$0xf]
      %v2065 = vld [vmem:[%s1 + $0x37c] sm:$0xf]
      %v2066 = vld [vmem:[%s1 + $0x380] sm:$0xf]
      %v2067 = vld [vmem:[%s1 + $0x384] sm:$0xf]
      %v2068 = vld [vmem:[%s1 + $0x388] sm:$0xf]
      %v2069 = vld [vmem:[%s1 + $0x38c] sm:$0xf]
      %v2070 = vld [vmem:[%s1 + $0x390] sm:$0xf]
      %v2071 = vld [vmem:[%s1 + $0x394] sm:$0xf]
      %v2072 = vld [vmem:[%s1 + $0x398] sm:$0xf]
      %v2073 = vld [vmem:[%s1 + $0x39c] sm:$0xf]
      %v2074 = vld [vmem:[%s1 + $0x3a0] sm:$0xf]
      %v2075 = vld [vmem:[%s1 + $0x3a4] sm:$0xf]
      %v2076 = vld [vmem:[%s1 + $0x3a8] sm:$0xf]
      %v2077 = vld [vmem:[%s1 + $0x3ac] sm:$0xf]
      %v2078 = vld [vmem:[%s1 + $0x3b0] sm:$0xf]
      %v2079 = vld [vmem:[%s1 + $0x3b4] sm:$0xf]
      %v2080 = vld [vmem:[%s1 + $0x3b8] sm:$0xf]
      %v2081 = vld [vmem:[%s1 + $0x3bc] sm:$0xf]
      %v2082 = vld [vmem:[%s1 + $0x3c0] sm:$0xf]
      %v2083 = vld [vmem:[%s1 + $0x3c4] sm:$0xf]
      %v2084 = vld [vmem:[%s1 + $0x3c8] sm:$0xf]
      %v2085 = vld [vmem:[%s1 + $0x3cc] sm:$0xf]
      %v2086 = vld [vmem:[%s1 + $0x3d0] sm:$0xf]
      %v2087 = vld [vmem:[%s2] sm:$0x1]
      %v2089 = vlaneseq
      %v2090 = vshrl.u32 %v2089, 7
      %v2091 = vsub.s32 0, %v2090
      %v2092 = vrot.slane %v2087, %v2091
      %v2339 = vunpack.c.l.b16 %v1842
      %v2340 = vunpack.c.l.b16 %v1843
      %v2341 = vunpack.c.l.b16 %v1844
      %v2342 = vunpack.c.l.b16 %v1845
      %v2343 = vunpack.c.l.b16 %v1846
      %v2344 = vunpack.c.l.b16 %v1847
      %v2345 = vunpack.c.l.b16 %v1848
      %v2346 = vunpack.c.l.b16 %v1849
      %v2347 = vunpack.c.l.b16 %v1850
      %v2348 = vunpack.c.l.b16 %v1851
      %v2349 = vunpack.c.l.b16 %v1852
      %v2350 = vunpack.c.l.b16 %v1853
      %v2351 = vunpack.c.l.b16 %v1854
      %v2352 = vunpack.c.l.b16 %v1855
      %v2353 = vunpack.c.l.b16 %v1856
      %v2354 = vunpack.c.l.b16 %v1857
      %v2355 = vunpack.c.l.b16 %v1858
      %v2356 = vunpack.c.l.b16 %v1859
      %v2357 = vunpack.c.l.b16 %v1860
      %v2358 = vunpack.c.l.b16 %v1861
      %v2359 = vunpack.c.l.b16 %v1862
      %v2360 = vunpack.c.l.b16 %v1863
      %v2361 = vunpack.c.l.b16 %v1864
      %v2362 = vunpack.c.l.b16 %v1865
      %v2363 = vunpack.c.l.b16 %v1866
      %v2364 = vunpack.c.l.b16 %v1867
      %v2365 = vunpack.c.l.b16 %v1868
      %v2366 = vunpack.c.l.b16 %v1869
      %v2367 = vunpack.c.l.b16 %v1870
      %v2368 = vunpack.c.l.b16 %v1871
      %v2369 = vunpack.c.l.b16 %v1872
      %v2370 = vunpack.c.l.b16 %v1873
      %v2371 = vunpack.c.l.b16 %v1874
      %v2372 = vunpack.c.l.b16 %v1875
      %v2373 = vunpack.c.l.b16 %v1876
      %v2374 = vunpack.c.l.b16 %v1877
      %v2375 = vunpack.c.l.b16 %v1878
      %v2376 = vunpack.c.l.b16 %v1879
      %v2377 = vunpack.c.l.b16 %v1880
      %v2378 = vunpack.c.l.b16 %v1881
      %v2379 = vunpack.c.l.b16 %v1882
      %v2380 = vunpack.c.l.b16 %v1883
      %v2381 = vunpack.c.l.b16 %v1884
      %v2382 = vunpack.c.l.b16 %v1885
      %v2383 = vunpack.c.l.b16 %v1886
      %v2384 = vunpack.c.l.b16 %v1887
      %v2385 = vunpack.c.l.b16 %v1888
      %v2386 = vunpack.c.l.b16 %v1889
      %v2387 = vunpack.c.l.b16 %v1890
      %v2388 = vunpack.c.l.b16 %v1891
      %v2389 = vunpack.c.l.b16 %v1892
      %v2390 = vunpack.c.l.b16 %v1893
      %v2391 = vunpack.c.l.b16 %v1894
      %v2392 = vunpack.c.l.b16 %v1895
      %v2393 = vunpack.c.l.b16 %v1896
      %v2394 = vunpack.c.l.b16 %v1897
      %v2395 = vunpack.c.l.b16 %v1898
      %v2396 = vunpack.c.l.b16 %v1899
      %v2397 = vunpack.c.l.b16 %v1900
      %v2398 = vunpack.c.l.b16 %v1901
      %v2399 = vunpack.c.l.b16 %v1902
      %v2400 = vunpack.c.l.b16 %v1903
      %v2401 = vunpack.c.l.b16 %v1904
      %v2402 = vunpack.c.l.b16 %v1905
      %v2403 = vunpack.c.l.b16 %v1906
      %v2404 = vunpack.c.l.b16 %v1907
      %v2405 = vunpack.c.l.b16 %v1908
      %v2406 = vunpack.c.l.b16 %v1909
      %v2407 = vunpack.c.l.b16 %v1910
      %v2408 = vunpack.c.l.b16 %v1911
      %v2409 = vunpack.c.l.b16 %v1912
      %v2410 = vunpack.c.l.b16 %v1913
      %v2411 = vunpack.c.l.b16 %v1914
      %v2412 = vunpack.c.l.b16 %v1915
      %v2413 = vunpack.c.l.b16 %v1916
      %v2414 = vunpack.c.l.b16 %v1917
      %v2415 = vunpack.c.l.b16 %v1918
      %v2416 = vunpack.c.l.b16 %v1919
      %v2417 = vunpack.c.l.b16 %v1920
      %v2418 = vunpack.c.l.b16 %v1921
      %v2419 = vunpack.c.l.b16 %v1922
      %v2420 = vunpack.c.l.b16 %v1923
      %v2421 = vunpack.c.l.b16 %v1924
      %v2422 = vunpack.c.l.b16 %v1925
      %v2423 = vunpack.c.l.b16 %v1926
      %v2424 = vunpack.c.l.b16 %v1927
      %v2425 = vunpack.c.l.b16 %v1928
      %v2426 = vunpack.c.l.b16 %v1929
      %v2427 = vunpack.c.l.b16 %v1930
      %v2428 = vunpack.c.l.b16 %v1931
      %v2429 = vunpack.c.l.b16 %v1932
      %v2430 = vunpack.c.l.b16 %v1933
      %v2431 = vunpack.c.l.b16 %v1934
      %v2432 = vunpack.c.l.b16 %v1935
      %v2433 = vunpack.c.l.b16 %v1936
      %v2434 = vunpack.c.l.b16 %v1937
      %v2435 = vunpack.c.l.b16 %v1938
      %v2436 = vunpack.c.l.b16 %v1939
      %v2437 = vunpack.c.l.b16 %v1940
      %v2438 = vunpack.c.l.b16 %v1941
      %v2439 = vunpack.c.l.b16 %v1942
      %v2440 = vunpack.c.l.b16 %v1943
      %v2441 = vunpack.c.l.b16 %v1944
      %v2442 = vunpack.c.l.b16 %v1945
      %v2443 = vunpack.c.l.b16 %v1946
      %v2444 = vunpack.c.l.b16 %v1947
      %v2445 = vunpack.c.l.b16 %v1948
      %v2446 = vunpack.c.l.b16 %v1949
      %v2447 = vunpack.c.l.b16 %v1950
      %v2448 = vunpack.c.l.b16 %v1951
      %v2449 = vunpack.c.l.b16 %v1952
      %v2450 = vunpack.c.l.b16 %v1953
      %v2451 = vunpack.c.l.b16 %v1954
      %v2452 = vunpack.c.l.b16 %v1955
      %v2453 = vunpack.c.l.b16 %v1956
      %v2454 = vunpack.c.l.b16 %v1957
      %v2455 = vunpack.c.l.b16 %v1958
      %v2456 = vunpack.c.l.b16 %v1959
      %v2457 = vunpack.c.l.b16 %v1960
      %v2458 = vunpack.c.l.b16 %v1961
      %v2459 = vunpack.c.l.b16 %v1962
      %v2460 = vunpack.c.l.b16 %v1963
      %v2461 = vunpack.c.l.b16 %v1964
      %v2462 = vunpack.c.l.b16 %v1965
      %v2463 = vunpack.c.l.b16 %v1966
      %v2464 = vunpack.c.l.b16 %v1967
      %v2465 = vunpack.c.l.b16 %v1968
      %v2466 = vunpack.c.l.b16 %v1969
      %v2467 = vunpack.c.l.b16 %v1970
      %v2468 = vunpack.c.l.b16 %v1971
      %v2469 = vunpack.c.l.b16 %v1972
      %v2470 = vunpack.c.l.b16 %v1973
      %v2471 = vunpack.c.l.b16 %v1974
      %v2472 = vunpack.c.l.b16 %v1975
      %v2473 = vunpack.c.l.b16 %v1976
      %v2474 = vunpack.c.l.b16 %v1977
      %v2475 = vunpack.c.l.b16 %v1978
      %v2476 = vunpack.c.l.b16 %v1979
      %v2477 = vunpack.c.l.b16 %v1980
      %v2478 = vunpack.c.l.b16 %v1981
      %v2479 = vunpack.c.l.b16 %v1982
      %v2480 = vunpack.c.l.b16 %v1983
      %v2481 = vunpack.c.l.b16 %v1984
      %v2482 = vunpack.c.l.b16 %v1985
      %v2483 = vunpack.c.l.b16 %v1986
      %v2484 = vunpack.c.l.b16 %v1987
      %v2485 = vunpack.c.l.b16 %v1988
      %v2486 = vunpack.c.l.b16 %v1989
      %v2487 = vunpack.c.l.b16 %v1990
      %v2488 = vunpack.c.l.b16 %v1991
      %v2489 = vunpack.c.l.b16 %v1992
      %v2490 = vunpack.c.l.b16 %v1993
      %v2491 = vunpack.c.l.b16 %v1994
      %v2492 = vunpack.c.l.b16 %v1995
      %v2493 = vunpack.c.l.b16 %v1996
      %v2494 = vunpack.c.l.b16 %v1997
      %v2495 = vunpack.c.l.b16 %v1998
      %v2496 = vunpack.c.l.b16 %v1999
      %v2497 = vunpack.c.l.b16 %v2000
      %v2498 = vunpack.c.l.b16 %v2001
      %v2499 = vunpack.c.l.b16 %v2002
      %v2500 = vunpack.c.l.b16 %v2003
      %v2501 = vunpack.c.l.b16 %v2004
      %v2502 = vunpack.c.l.b16 %v2005
      %v2503 = vunpack.c.l.b16 %v2006
      %v2504 = vunpack.c.l.b16 %v2007
      %v2505 = vunpack.c.l.b16 %v2008
      %v2506 = vunpack.c.l.b16 %v2009
      %v2507 = vunpack.c.l.b16 %v2010
      %v2508 = vunpack.c.l.b16 %v2011
      %v2509 = vunpack.c.l.b16 %v2012
      %v2510 = vunpack.c.l.b16 %v2013
      %v2511 = vunpack.c.l.b16 %v2014
      %v2512 = vunpack.c.l.b16 %v2015
      %v2513 = vunpack.c.l.b16 %v2016
      %v2514 = vunpack.c.l.b16 %v2017
      %v2515 = vunpack.c.l.b16 %v2018
      %v2516 = vunpack.c.l.b16 %v2019
      %v2517 = vunpack.c.l.b16 %v2020
      %v2518 = vunpack.c.l.b16 %v2021
      %v2519 = vunpack.c.l.b16 %v2022
      %v2520 = vunpack.c.l.b16 %v2023
      %v2521 = vunpack.c.l.b16 %v2024
      %v2522 = vunpack.c.l.b16 %v2025
      %v2523 = vunpack.c.l.b16 %v2026
      %v2524 = vunpack.c.l.b16 %v2027
      %v2525 = vunpack.c.l.b16 %v2028
      %v2526 = vunpack.c.l.b16 %v2029
      %v2527 = vunpack.c.l.b16 %v2030
      %v2528 = vunpack.c.l.b16 %v2031
      %v2529 = vunpack.c.l.b16 %v2032
      %v2530 = vunpack.c.l.b16 %v2033
      %v2531 = vunpack.c.l.b16 %v2034
      %v2532 = vunpack.c.l.b16 %v2035
      %v2533 = vunpack.c.l.b16 %v2036
      %v2534 = vunpack.c.l.b16 %v2037
      %v2535 = vunpack.c.l.b16 %v2038
      %v2536 = vunpack.c.l.b16 %v2039
      %v2537 = vunpack.c.l.b16 %v2040
      %v2538 = vunpack.c.l.b16 %v2041
      %v2539 = vunpack.c.l.b16 %v2042
      %v2540 = vunpack.c.l.b16 %v2043
      %v2541 = vunpack.c.l.b16 %v2044
      %v2542 = vunpack.c.l.b16 %v2045
      %v2543 = vunpack.c.l.b16 %v2046
      %v2544 = vunpack.c.l.b16 %v2047
      %v2545 = vunpack.c.l.b16 %v2048
      %v2546 = vunpack.c.l.b16 %v2049
      %v2547 = vunpack.c.l.b16 %v2050
      %v2548 = vunpack.c.l.b16 %v2051
      %v2549 = vunpack.c.l.b16 %v2052
      %v2550 = vunpack.c.l.b16 %v2053
      %v2551 = vunpack.c.l.b16 %v2054
      %v2552 = vunpack.c.l.b16 %v2055
      %v2553 = vunpack.c.l.b16 %v2056
      %v2554 = vunpack.c.l.b16 %v2057
      %v2555 = vunpack.c.l.b16 %v2058
      %v2556 = vunpack.c.l.b16 %v2059
      %v2557 = vunpack.c.l.b16 %v2060
      %v2558 = vunpack.c.l.b16 %v2061
      %v2559 = vunpack.c.l.b16 %v2062
      %v2560 = vunpack.c.l.b16 %v2063
      %v2561 = vunpack.c.l.b16 %v2064
      %v2562 = vunpack.c.l.b16 %v2065
      %v2563 = vunpack.c.l.b16 %v2066
      %v2564 = vunpack.c.l.b16 %v2067
      %v2565 = vunpack.c.l.b16 %v2068
      %v2566 = vunpack.c.l.b16 %v2069
      %v2567 = vunpack.c.l.b16 %v2070
      %v2568 = vunpack.c.l.b16 %v2071
      %v2569 = vunpack.c.l.b16 %v2072
      %v2570 = vunpack.c.l.b16 %v2073
      %v2571 = vunpack.c.l.b16 %v2074
      %v2572 = vunpack.c.l.b16 %v2075
      %v2573 = vunpack.c.l.b16 %v2076
      %v2574 = vunpack.c.l.b16 %v2077
      %v2575 = vunpack.c.l.b16 %v2078
      %v2576 = vunpack.c.l.b16 %v2079
      %v2577 = vunpack.c.l.b16 %v2080
      %v2578 = vunpack.c.l.b16 %v2081
      %v2579 = vunpack.c.l.b16 %v2082
      %v2580 = vunpack.c.l.b16 %v2083
      %v2581 = vunpack.c.l.b16 %v2084
      %v2582 = vunpack.c.l.b16 %v2085
      %v2583 = vunpack.c.l.b16 %v2086
      %v2584 = vpack.c.b16 %v2340, %v2339
      %v2585 = vpack.c.b16 %v2342, %v2341
      %v2586 = vpack.c.b16 %v2344, %v2343
      %v2587 = vpack.c.b16 %v2346, %v2345
      %v2588 = vpack.c.b16 %v2348, %v2347
      %v2589 = vpack.c.b16 %v2350, %v2349
      %v2590 = vpack.c.b16 %v2352, %v2351
      %v2591 = vpack.c.b16 %v2354, %v2353
      %v2592 = vpack.c.b16 %v2356, %v2355
      %v2593 = vpack.c.b16 %v2358, %v2357
      %v2594 = vpack.c.b16 %v2360, %v2359
      %v2595 = vpack.c.b16 %v2362, %v2361
      %v2596 = vpack.c.b16 %v2364, %v2363
      %v2597 = vpack.c.b16 %v2366, %v2365
      %v2598 = vpack.c.b16 %v2368, %v2367
      %v2599 = vpack.c.b16 %v2370, %v2369
      %v2600 = vpack.c.b16 %v2372, %v2371
      %v2601 = vpack.c.b16 %v2374, %v2373
      %v2602 = vpack.c.b16 %v2376, %v2375
      %v2603 = vpack.c.b16 %v2378, %v2377
      %v2604 = vpack.c.b16 %v2380, %v2379
      %v2605 = vpack.c.b16 %v2382, %v2381
      %v2606 = vpack.c.b16 %v2384, %v2383
      %v2607 = vpack.c.b16 %v2386, %v2385
      %v2608 = vpack.c.b16 %v2388, %v2387
      %v2609 = vpack.c.b16 %v2390, %v2389
      %v2610 = vpack.c.b16 %v2392, %v2391
      %v2611 = vpack.c.b16 %v2394, %v2393
      %v2612 = vpack.c.b16 %v2396, %v2395
      %v2613 = vpack.c.b16 %v2398, %v2397
      %v2614 = vpack.c.b16 %v2400, %v2399
      %v2615 = vpack.c.b16 %v2402, %v2401
      %v2616 = vpack.c.b16 %v2404, %v2403
      %v2617 = vpack.c.b16 %v2406, %v2405
      %v2618 = vpack.c.b16 %v2408, %v2407
      %v2619 = vpack.c.b16 %v2410, %v2409
      %v2620 = vpack.c.b16 %v2412, %v2411
      %v2621 = vpack.c.b16 %v2414, %v2413
      %v2622 = vpack.c.b16 %v2416, %v2415
      %v2623 = vpack.c.b16 %v2418, %v2417
      %v2624 = vpack.c.b16 %v2420, %v2419
      %v2625 = vpack.c.b16 %v2422, %v2421
      %v2626 = vpack.c.b16 %v2424, %v2423
      %v2627 = vpack.c.b16 %v2426, %v2425
      %v2628 = vpack.c.b16 %v2428, %v2427
      %v2629 = vpack.c.b16 %v2430, %v2429
      %v2630 = vpack.c.b16 %v2432, %v2431
      %v2631 = vpack.c.b16 %v2434, %v2433
      %v2632 = vpack.c.b16 %v2436, %v2435
      %v2633 = vpack.c.b16 %v2438, %v2437
      %v2634 = vpack.c.b16 %v2440, %v2439
      %v2635 = vpack.c.b16 %v2442, %v2441
      %v2636 = vpack.c.b16 %v2444, %v2443
      %v2637 = vpack.c.b16 %v2446, %v2445
      %v2638 = vpack.c.b16 %v2448, %v2447
      %v2639 = vpack.c.b16 %v2450, %v2449
      %v2640 = vpack.c.b16 %v2452, %v2451
      %v2641 = vpack.c.b16 %v2454, %v2453
      %v2642 = vpack.c.b16 %v2456, %v2455
      %v2643 = vpack.c.b16 %v2458, %v2457
      %v2644 = vpack.c.b16 %v2460, %v2459
      %v2645 = vpack.c.b16 %v2462, %v2461
      %v2646 = vpack.c.b16 %v2464, %v2463
      %v2647 = vpack.c.b16 %v2466, %v2465
      %v2648 = vpack.c.b16 %v2468, %v2467
      %v2649 = vpack.c.b16 %v2470, %v2469
      %v2650 = vpack.c.b16 %v2472, %v2471
      %v2651 = vpack.c.b16 %v2474, %v2473
      %v2652 = vpack.c.b16 %v2476, %v2475
      %v2653 = vpack.c.b16 %v2478, %v2477
      %v2654 = vpack.c.b16 %v2480, %v2479
      %v2655 = vpack.c.b16 %v2482, %v2481
      %v2656 = vpack.c.b16 %v2484, %v2483
      %v2657 = vpack.c.b16 %v2486, %v2485
      %v2658 = vpack.c.b16 %v2488, %v2487
      %v2659 = vpack.c.b16 %v2490, %v2489
      %v2660 = vpack.c.b16 %v2492, %v2491
      %v2661 = vpack.c.b16 %v2494, %v2493
      %v2662 = vpack.c.b16 %v2496, %v2495
      %v2663 = vpack.c.b16 %v2498, %v2497
      %v2664 = vpack.c.b16 %v2500, %v2499
      %v2665 = vpack.c.b16 %v2502, %v2501
      %v2666 = vpack.c.b16 %v2504, %v2503
      %v2667 = vpack.c.b16 %v2506, %v2505
      %v2668 = vpack.c.b16 %v2508, %v2507
      %v2669 = vpack.c.b16 %v2510, %v2509
      %v2670 = vpack.c.b16 %v2512, %v2511
      %v2671 = vpack.c.b16 %v2514, %v2513
      %v2672 = vpack.c.b16 %v2516, %v2515
      %v2673 = vpack.c.b16 %v2518, %v2517
      %v2674 = vpack.c.b16 %v2520, %v2519
      %v2675 = vpack.c.b16 %v2522, %v2521
      %v2676 = vpack.c.b16 %v2524, %v2523
      %v2677 = vpack.c.b16 %v2526, %v2525
      %v2678 = vpack.c.b16 %v2528, %v2527
      %v2679 = vpack.c.b16 %v2530, %v2529
      %v2680 = vpack.c.b16 %v2532, %v2531
      %v2681 = vpack.c.b16 %v2534, %v2533
      %v2682 = vpack.c.b16 %v2536, %v2535
      %v2683 = vpack.c.b16 %v2538, %v2537
      %v2684 = vpack.c.b16 %v2540, %v2539
      %v2685 = vpack.c.b16 %v2542, %v2541
      %v2686 = vpack.c.b16 %v2544, %v2543
      %v2687 = vpack.c.b16 %v2546, %v2545
      %v2688 = vpack.c.b16 %v2548, %v2547
      %v2689 = vpack.c.b16 %v2550, %v2549
      %v2690 = vpack.c.b16 %v2552, %v2551
      %v2691 = vpack.c.b16 %v2554, %v2553
      %v2692 = vpack.c.b16 %v2556, %v2555
      %v2693 = vpack.c.b16 %v2558, %v2557
      %v2694 = vpack.c.b16 %v2560, %v2559
      %v2695 = vpack.c.b16 %v2562, %v2561
      %v2696 = vpack.c.b16 %v2564, %v2563
      %v2697 = vpack.c.b16 %v2566, %v2565
      %v2698 = vpack.c.b16 %v2568, %v2567
      %v2699 = vpack.c.b16 %v2570, %v2569
      %v2700 = vpack.c.b16 %v2572, %v2571
      %v2701 = vpack.c.b16 %v2574, %v2573
      %v2702 = vpack.c.b16 %v2576, %v2575
      %v2703 = vpack.c.b16 %v2578, %v2577
      %v2704 = vpack.c.b16 %v2580, %v2579
      %v2705 = vpack.c.b16 %v2582, %v2581
      %v2706 = vpack.c.b16 %v2583, %v2583
      %vm2829 = vcmask 326656
      %v2831 = vsel %vm2829, %v1729, 0
      %v2834 = vsel %vm2829, %v1745, 0
      %v2837 = vsel %vm2829, %v1761, 0
      %v2840 = vsel %vm2829, %v1777, 0
      %v2843 = vsel %vm2829, %v1793, 0
      %v2846 = vsel %vm2829, %v1809, 0
      %v2849 = vsel %vm2829, %v1825, 0
      %v2852 = vsel %vm2829, %v1841, 0
      %vm2854 = vcmask 1043456
      %v2856 = vsel %vm2854, %v2706, 0
      %2858 = vmatprep.subr.bf16.mxu0 0
      %2859 = vmatpush1.bf16.msra.mxu0 %v2591
      %2860 = vmatprep.subr.bf16.mxu0 0
      %2861 = vmatpush1.bf16.msra.mxu0 %v2590
      %2862 = vmatprep.subr.bf16.mxu0 0
      %2863 = vmatpush1.bf16.msra.mxu0 %v2589
      %2864 = vmatprep.subr.bf16.mxu0 0
      %2865 = vmatpush1.bf16.msra.mxu0 %v2588
      %2866 = vmatprep.subr.bf16.mxu0 0
      %2867 = vmatpush1.bf16.msra.mxu0 %v2587
      %2868 = vmatprep.subr.bf16.mxu0 0
      %2869 = vmatpush1.bf16.msra.mxu0 %v2586
      %2870 = vmatprep.subr.bf16.mxu0 0
      %2871 = vmatpush1.bf16.msra.mxu0 %v2585
      %2872 = vmatprep.subr.bf16.mxu0 0
      %2873 = vmatpush1.bf16.msra.mxu0 %v2584
      %2874 = vmatprep.subr.bf16.mxu0 0
      %2875 = vmatpush2.bf16.msra.mxu0 %v2599
      %2876 = vmatprep.subr.bf16.mxu0 0
      %2877 = vmatpush2.bf16.msra.mxu0 %v2598
      %2878 = vmatprep.subr.bf16.mxu0 0
      %2879 = vmatpush2.bf16.msra.mxu0 %v2597
      %2880 = vmatprep.subr.bf16.mxu0 0
      %2881 = vmatpush2.bf16.msra.mxu0 %v2596
      %2882 = vmatprep.subr.bf16.mxu0 0
      %2883 = vmatpush2.bf16.msra.mxu0 %v2595
      %2884 = vmatprep.subr.bf16.mxu0 0
      %2885 = vmatpush2.bf16.msra.mxu0 %v2594
      %2886 = vmatprep.subr.bf16.mxu0 0
      %2887 = vmatpush2.bf16.msra.mxu0 %v2593
      %2888 = vmatprep.subr.bf16.mxu0 0
      %2889 = vmatpush2.bf16.msra.mxu0 %v2592
      %2890 = vmatprep.mubr.bf16.mxu0 %v1715
      %2891 = vmatmul.mubr.bf16.gmra.mxu0 %v1714
      %v2892 = vpop.f32.mrf.mxu0
      %v2893 = vadd.f32 %v2092, %v2892
      %v2894 = vpop.f32.mrf.mxu0
      %v2895 = vpop.f32.mrf.mxu0
      %v2896 = vadd.f32 %v2092, %v2895
      %v2897 = vpop.f32.mrf.mxu0
      %2898 = vmatprep.mubr.bf16.mxu0 %v1731
      %2899 = vmatmul.mubr.bf16.gmra.mxu0 %v1730
      %v2900 = vpop.f32.mrf.mxu0
      %v2901 = vadd.f32 %v2092, %v2900
      %v2902 = vpop.f32.mrf.mxu0
      %v2903 = vpop.f32.mrf.mxu0
      %v2904 = vadd.f32 %v2092, %v2903
      %v2905 = vpop.f32.mrf.mxu0
      %2906 = vmatprep.mubr.bf16.mxu0 %v1747
      %2907 = vmatmul.mubr.bf16.gmra.mxu0 %v1746
      %v2908 = vpop.f32.mrf.mxu0
      %v2909 = vadd.f32 %v2092, %v2908
      %v2910 = vpop.f32.mrf.mxu0
      %v2911 = vpop.f32.mrf.mxu0
      %v2912 = vadd.f32 %v2092, %v2911
      %v2913 = vpop.f32.mrf.mxu0
      %2914 = vmatprep.mubr.bf16.mxu0 %v1763
      %2915 = vmatmul.mubr.bf16.gmra.mxu0 %v1762
      %v2916 = vpop.f32.mrf.mxu0
      %v2917 = vadd.f32 %v2092, %v2916
      %v2918 = vpop.f32.mrf.mxu0
      %v2919 = vpop.f32.mrf.mxu0
      %v2920 = vadd.f32 %v2092, %v2919
      %v2921 = vpop.f32.mrf.mxu0
      %2922 = vmatprep.mubr.bf16.mxu0 %v1779
      %2923 = vmatmul.mubr.bf16.gmra.mxu0 %v1778
      %v2924 = vpop.f32.mrf.mxu0
      %v2925 = vadd.f32 %v2092, %v2924
      %v2926 = vpop.f32.mrf.mxu0
      %v2927 = vpop.f32.mrf.mxu0
      %v2928 = vadd.f32 %v2092, %v2927
      %v2929 = vpop.f32.mrf.mxu0
      %2930 = vmatprep.mubr.bf16.mxu0 %v1795
      %2931 = vmatmul.mubr.bf16.gmra.mxu0 %v1794
      %v2932 = vpop.f32.mrf.mxu0
      %v2933 = vadd.f32 %v2092, %v2932
      %v2934 = vpop.f32.mrf.mxu0
      %v2935 = vpop.f32.mrf.mxu0
      %v2936 = vadd.f32 %v2092, %v2935
      %v2937 = vpop.f32.mrf.mxu0
      %2938 = vmatprep.mubr.bf16.mxu0 %v1811
      %2939 = vmatmul.mubr.bf16.gmra.mxu0 %v1810
      %v2940 = vpop.f32.mrf.mxu0
      %v2941 = vadd.f32 %v2092, %v2940
      %v2942 = vpop.f32.mrf.mxu0
      %v2943 = vpop.f32.mrf.mxu0
      %v2944 = vadd.f32 %v2092, %v2943
      %v2945 = vpop.f32.mrf.mxu0
      %2946 = vmatprep.mubr.bf16.mxu0 %v1827
      %2947 = vmatmul.mubr.bf16.gmra.mxu0 %v1826
      %v2948 = vpop.f32.mrf.mxu0
      %v2949 = vadd.f32 %v2092, %v2948
      %v2950 = vpop.f32.mrf.mxu0
      %v2951 = vpop.f32.mrf.mxu0
      %v2952 = vadd.f32 %v2092, %v2951
      %v2953 = vpop.f32.mrf.mxu0
      %2954 = vdwg.mxu0
      %2955 = vmatprep.subr.bf16.mxu0 0
      %2956 = vmatpush1.bf16.msra.mxu0 %v2607
      %2957 = vmatprep.subr.bf16.mxu0 0
      %2958 = vmatpush1.bf16.msra.mxu0 %v2606
      %2959 = vmatprep.subr.bf16.mxu0 0
      %2960 = vmatpush1.bf16.msra.mxu0 %v2605
      %2961 = vmatprep.subr.bf16.mxu0 0
      %2962 = vmatpush1.bf16.msra.mxu0 %v2604
      %2963 = vmatprep.subr.bf16.mxu0 0
      %2964 = vmatpush1.bf16.msra.mxu0 %v2603
      %2965 = vmatprep.subr.bf16.mxu0 0
      %2966 = vmatpush1.bf16.msra.mxu0 %v2602
      %2967 = vmatprep.subr.bf16.mxu0 0
      %2968 = vmatpush1.bf16.msra.mxu0 %v2601
      %2969 = vmatprep.subr.bf16.mxu0 0
      %2970 = vmatpush1.bf16.msra.mxu0 %v2600
      %2971 = vmatprep.subr.bf16.mxu0 0
      %2972 = vmatpush2.bf16.msra.mxu0 %v2615
      %2973 = vmatprep.subr.bf16.mxu0 0
      %2974 = vmatpush2.bf16.msra.mxu0 %v2614
      %2975 = vmatprep.subr.bf16.mxu0 0
      %2976 = vmatpush2.bf16.msra.mxu0 %v2613
      %2977 = vmatprep.subr.bf16.mxu0 0
      %2978 = vmatpush2.bf16.msra.mxu0 %v2612
      %2979 = vmatprep.subr.bf16.mxu0 0
      %2980 = vmatpush2.bf16.msra.mxu0 %v2611
      %2981 = vmatprep.subr.bf16.mxu0 0
      %2982 = vmatpush2.bf16.msra.mxu0 %v2610
      %2983 = vmatprep.subr.bf16.mxu0 0
      %2984 = vmatpush2.bf16.msra.mxu0 %v2609
      %2985 = vmatprep.subr.bf16.mxu0 0
      %2986 = vmatpush2.bf16.msra.mxu0 %v2608
      %2987 = vmatprep.mubr.bf16.mxu0 %v1717
      %2988 = vmatmul.mubr.bf16.gmra.mxu0 %v1716
      %v2989 = vpop.f32.mrf.mxu0
      %v2990 = vadd.f32 %v2893, %v2989
      %v2991 = vpop.f32.mrf.mxu0
      %v2992 = vpop.f32.mrf.mxu0
      %v2993 = vadd.f32 %v2896, %v2992
      %v2994 = vpop.f32.mrf.mxu0
      %2995 = vmatprep.mubr.bf16.mxu0 %v1733
      %2996 = vmatmul.mubr.bf16.gmra.mxu0 %v1732
      %v2997 = vpop.f32.mrf.mxu0
      %v2998 = vadd.f32 %v2901, %v2997
      %v2999 = vpop.f32.mrf.mxu0
      %v3000 = vpop.f32.mrf.mxu0
      %v3001 = vadd.f32 %v2904, %v3000
      %v3002 = vpop.f32.mrf.mxu0
      %3003 = vmatprep.mubr.bf16.mxu0 %v1749
      %3004 = vmatmul.mubr.bf16.gmra.mxu0 %v1748
      %v3005 = vpop.f32.mrf.mxu0
      %v3006 = vadd.f32 %v2909, %v3005
      %v3007 = vpop.f32.mrf.mxu0
      %v3008 = vpop.f32.mrf.mxu0
      %v3009 = vadd.f32 %v2912, %v3008
      %v3010 = vpop.f32.mrf.mxu0
      %3011 = vmatprep.mubr.bf16.mxu0 %v1765
      %3012 = vmatmul.mubr.bf16.gmra.mxu0 %v1764
      %v3013 = vpop.f32.mrf.mxu0
      %v3014 = vadd.f32 %v2917, %v3013
      %v3015 = vpop.f32.mrf.mxu0
      %v3016 = vpop.f32.mrf.mxu0
      %v3017 = vadd.f32 %v2920, %v3016
      %v3018 = vpop.f32.mrf.mxu0
      %3019 = vmatprep.mubr.bf16.mxu0 %v1781
      %3020 = vmatmul.mubr.bf16.gmra.mxu0 %v1780
      %v3021 = vpop.f32.mrf.mxu0
      %v3022 = vadd.f32 %v2925, %v3021
      %v3023 = vpop.f32.mrf.mxu0
      %v3024 = vpop.f32.mrf.mxu0
      %v3025 = vadd.f32 %v2928, %v3024
      %v3026 = vpop.f32.mrf.mxu0
      %3027 = vmatprep.mubr.bf16.mxu0 %v1797
      %3028 = vmatmul.mubr.bf16.gmra.mxu0 %v1796
      %v3029 = vpop.f32.mrf.mxu0
      %v3030 = vadd.f32 %v2933, %v3029
      %v3031 = vpop.f32.mrf.mxu0
      %v3032 = vpop.f32.mrf.mxu0
      %v3033 = vadd.f32 %v2936, %v3032
      %v3034 = vpop.f32.mrf.mxu0
      %3035 = vmatprep.mubr.bf16.mxu0 %v1813
      %3036 = vmatmul.mubr.bf16.gmra.mxu0 %v1812
      %v3037 = vpop.f32.mrf.mxu0
      %v3038 = vadd.f32 %v2941, %v3037
      %v3039 = vpop.f32.mrf.mxu0
      %v3040 = vpop.f32.mrf.mxu0
      %v3041 = vadd.f32 %v2944, %v3040
      %v3042 = vpop.f32.mrf.mxu0
      %3043 = vmatprep.mubr.bf16.mxu0 %v1829
      %3044 = vmatmul.mubr.bf16.gmra.mxu0 %v1828
      %v3045 = vpop.f32.mrf.mxu0
      %v3046 = vadd.f32 %v2949, %v3045
      %v3047 = vpop.f32.mrf.mxu0
      %v3048 = vpop.f32.mrf.mxu0
      %v3049 = vadd.f32 %v2952, %v3048
      %v3050 = vpop.f32.mrf.mxu0
      %3051 = vdwg.mxu0
      %3052 = vmatprep.subr.bf16.mxu0 0
      %3053 = vmatpush1.bf16.msra.mxu0 %v2623
      %3054 = vmatprep.subr.bf16.mxu0 0
      %3055 = vmatpush1.bf16.msra.mxu0 %v2622
      %3056 = vmatprep.subr.bf16.mxu0 0
      %3057 = vmatpush1.bf16.msra.mxu0 %v2621
      %3058 = vmatprep.subr.bf16.mxu0 0
      %3059 = vmatpush1.bf16.msra.mxu0 %v2620
      %3060 = vmatprep.subr.bf16.mxu0 0
      %3061 = vmatpush1.bf16.msra.mxu0 %v2619
      %3062 = vmatprep.subr.bf16.mxu0 0
      %3063 = vmatpush1.bf16.msra.mxu0 %v2618
      %3064 = vmatprep.subr.bf16.mxu0 0
      %3065 = vmatpush1.bf16.msra.mxu0 %v2617
      %3066 = vmatprep.subr.bf16.mxu0 0
      %3067 = vmatpush1.bf16.msra.mxu0 %v2616
      %3068 = vmatprep.subr.bf16.mxu0 0
      %3069 = vmatpush2.bf16.msra.mxu0 %v2631
      %3070 = vmatprep.subr.bf16.mxu0 0
      %3071 = vmatpush2.bf16.msra.mxu0 %v2630
      %3072 = vmatprep.subr.bf16.mxu0 0
      %3073 = vmatpush2.bf16.msra.mxu0 %v2629
      %3074 = vmatprep.subr.bf16.mxu0 0
      %3075 = vmatpush2.bf16.msra.mxu0 %v2628
      %3076 = vmatprep.subr.bf16.mxu0 0
      %3077 = vmatpush2.bf16.msra.mxu0 %v2627
      %3078 = vmatprep.subr.bf16.mxu0 0
      %3079 = vmatpush2.bf16.msra.mxu0 %v2626
      %3080 = vmatprep.subr.bf16.mxu0 0
      %3081 = vmatpush2.bf16.msra.mxu0 %v2625
      %3082 = vmatprep.subr.bf16.mxu0 0
      %3083 = vmatpush2.bf16.msra.mxu0 %v2624
      %3084 = vmatprep.mubr.bf16.mxu0 %v1719
      %3085 = vmatmul.mubr.bf16.gmra.mxu0 %v1718
      %v3086 = vpop.f32.mrf.mxu0
      %v3087 = vadd.f32 %v2990, %v3086
      %v3088 = vpop.f32.mrf.mxu0
      %v3089 = vpop.f32.mrf.mxu0
      %v3090 = vadd.f32 %v2993, %v3089
      %v3091 = vpop.f32.mrf.mxu0
      %3092 = vmatprep.mubr.bf16.mxu0 %v1735
      %3093 = vmatmul.mubr.bf16.gmra.mxu0 %v1734
      %v3094 = vpop.f32.mrf.mxu0
      %v3095 = vadd.f32 %v2998, %v3094
      %v3096 = vpop.f32.mrf.mxu0
      %v3097 = vpop.f32.mrf.mxu0
      %v3098 = vadd.f32 %v3001, %v3097
      %v3099 = vpop.f32.mrf.mxu0
      %3100 = vmatprep.mubr.bf16.mxu0 %v1751
      %3101 = vmatmul.mubr.bf16.gmra.mxu0 %v1750
      %v3102 = vpop.f32.mrf.mxu0
      %v3103 = vadd.f32 %v3006, %v3102
      %v3104 = vpop.f32.mrf.mxu0
      %v3105 = vpop.f32.mrf.mxu0
      %v3106 = vadd.f32 %v3009, %v3105
      %v3107 = vpop.f32.mrf.mxu0
      %3108 = vmatprep.mubr.bf16.mxu0 %v1767
      %3109 = vmatmul.mubr.bf16.gmra.mxu0 %v1766
      %v3110 = vpop.f32.mrf.mxu0
      %v3111 = vadd.f32 %v3014, %v3110
      %v3112 = vpop.f32.mrf.mxu0
      %v3113 = vpop.f32.mrf.mxu0
      %v3114 = vadd.f32 %v3017, %v3113
      %v3115 = vpop.f32.mrf.mxu0
      %3116 = vmatprep.mubr.bf16.mxu0 %v1783
      %3117 = vmatmul.mubr.bf16.gmra.mxu0 %v1782
      %v3118 = vpop.f32.mrf.mxu0
      %v3119 = vadd.f32 %v3022, %v3118
      %v3120 = vpop.f32.mrf.mxu0
      %v3121 = vpop.f32.mrf.mxu0
      %v3122 = vadd.f32 %v3025, %v3121
      %v3123 = vpop.f32.mrf.mxu0
      %3124 = vmatprep.mubr.bf16.mxu0 %v1799
      %3125 = vmatmul.mubr.bf16.gmra.mxu0 %v1798
      %v3126 = vpop.f32.mrf.mxu0
      %v3127 = vadd.f32 %v3030, %v3126
      %v3128 = vpop.f32.mrf.mxu0
      %v3129 = vpop.f32.mrf.mxu0
      %v3130 = vadd.f32 %v3033, %v3129
      %v3131 = vpop.f32.mrf.mxu0
      %3132 = vmatprep.mubr.bf16.mxu0 %v1815
      %3133 = vmatmul.mubr.bf16.gmra.mxu0 %v1814
      %v3134 = vpop.f32.mrf.mxu0
      %v3135 = vadd.f32 %v3038, %v3134
      %v3136 = vpop.f32.mrf.mxu0
      %v3137 = vpop.f32.mrf.mxu0
      %v3138 = vadd.f32 %v3041, %v3137
      %v3139 = vpop.f32.mrf.mxu0
      %3140 = vmatprep.mubr.bf16.mxu0 %v1831
      %3141 = vmatmul.mubr.bf16.gmra.mxu0 %v1830
      %v3142 = vpop.f32.mrf.mxu0
      %v3143 = vadd.f32 %v3046, %v3142
      %v3144 = vpop.f32.mrf.mxu0
      %v3145 = vpop.f32.mrf.mxu0
      %v3146 = vadd.f32 %v3049, %v3145
      %v3147 = vpop.f32.mrf.mxu0
      %3148 = vdwg.mxu0
      %3149 = vmatprep.subr.bf16.mxu0 0
      %3150 = vmatpush1.bf16.msra.mxu0 %v2639
      %3151 = vmatprep.subr.bf16.mxu0 0
      %3152 = vmatpush1.bf16.msra.mxu0 %v2638
      %3153 = vmatprep.subr.bf16.mxu0 0
      %3154 = vmatpush1.bf16.msra.mxu0 %v2637
      %3155 = vmatprep.subr.bf16.mxu0 0
      %3156 = vmatpush1.bf16.msra.mxu0 %v2636
      %3157 = vmatprep.subr.bf16.mxu0 0
      %3158 = vmatpush1.bf16.msra.mxu0 %v2635
      %3159 = vmatprep.subr.bf16.mxu0 0
      %3160 = vmatpush1.bf16.msra.mxu0 %v2634
      %3161 = vmatprep.subr.bf16.mxu0 0
      %3162 = vmatpush1.bf16.msra.mxu0 %v2633
      %3163 = vmatprep.subr.bf16.mxu0 0
      %3164 = vmatpush1.bf16.msra.mxu0 %v2632
      %3165 = vmatprep.subr.bf16.mxu0 0
      %3166 = vmatpush2.bf16.msra.mxu0 %v2647
      %3167 = vmatprep.subr.bf16.mxu0 0
      %3168 = vmatpush2.bf16.msra.mxu0 %v2646
      %3169 = vmatprep.subr.bf16.mxu0 0
      %3170 = vmatpush2.bf16.msra.mxu0 %v2645
      %3171 = vmatprep.subr.bf16.mxu0 0
      %3172 = vmatpush2.bf16.msra.mxu0 %v2644
      %3173 = vmatprep.subr.bf16.mxu0 0
      %3174 = vmatpush2.bf16.msra.mxu0 %v2643
      %3175 = vmatprep.subr.bf16.mxu0 0
      %3176 = vmatpush2.bf16.msra.mxu0 %v2642
      %3177 = vmatprep.subr.bf16.mxu0 0
      %3178 = vmatpush2.bf16.msra.mxu0 %v2641
      %3179 = vmatprep.subr.bf16.mxu0 0
      %3180 = vmatpush2.bf16.msra.mxu0 %v2640
      %3181 = vmatprep.mubr.bf16.mxu0 %v1721
      %3182 = vmatmul.mubr.bf16.gmra.mxu0 %v1720
      %v3183 = vpop.f32.mrf.mxu0
      %v3184 = vadd.f32 %v3087, %v3183
      %v3185 = vpop.f32.mrf.mxu0
      %v3186 = vpop.f32.mrf.mxu0
      %v3187 = vadd.f32 %v3090, %v3186
      %v3188 = vpop.f32.mrf.mxu0
      %3189 = vmatprep.mubr.bf16.mxu0 %v1737
      %3190 = vmatmul.mubr.bf16.gmra.mxu0 %v1736
      %v3191 = vpop.f32.mrf.mxu0
      %v3192 = vadd.f32 %v3095, %v3191
      %v3193 = vpop.f32.mrf.mxu0
      %v3194 = vpop.f32.mrf.mxu0
      %v3195 = vadd.f32 %v3098, %v3194
      %v3196 = vpop.f32.mrf.mxu0
      %3197 = vmatprep.mubr.bf16.mxu0 %v1753
      %3198 = vmatmul.mubr.bf16.gmra.mxu0 %v1752
      %v3199 = vpop.f32.mrf.mxu0
      %v3200 = vadd.f32 %v3103, %v3199
      %v3201 = vpop.f32.mrf.mxu0
      %v3202 = vpop.f32.mrf.mxu0
      %v3203 = vadd.f32 %v3106, %v3202
      %v3204 = vpop.f32.mrf.mxu0
      %3205 = vmatprep.mubr.bf16.mxu0 %v1769
      %3206 = vmatmul.mubr.bf16.gmra.mxu0 %v1768
      %v3207 = vpop.f32.mrf.mxu0
      %v3208 = vadd.f32 %v3111, %v3207
      %v3209 = vpop.f32.mrf.mxu0
      %v3210 = vpop.f32.mrf.mxu0
      %v3211 = vadd.f32 %v3114, %v3210
      %v3212 = vpop.f32.mrf.mxu0
      %3213 = vmatprep.mubr.bf16.mxu0 %v1785
      %3214 = vmatmul.mubr.bf16.gmra.mxu0 %v1784
      %v3215 = vpop.f32.mrf.mxu0
      %v3216 = vadd.f32 %v3119, %v3215
      %v3217 = vpop.f32.mrf.mxu0
      %v3218 = vpop.f32.mrf.mxu0
      %v3219 = vadd.f32 %v3122, %v3218
      %v3220 = vpop.f32.mrf.mxu0
      %3221 = vmatprep.mubr.bf16.mxu0 %v1801
      %3222 = vmatmul.mubr.bf16.gmra.mxu0 %v1800
      %v3223 = vpop.f32.mrf.mxu0
      %v3224 = vadd.f32 %v3127, %v3223
      %v3225 = vpop.f32.mrf.mxu0
      %v3226 = vpop.f32.mrf.mxu0
      %v3227 = vadd.f32 %v3130, %v3226
      %v3228 = vpop.f32.mrf.mxu0
      %3229 = vmatprep.mubr.bf16.mxu0 %v1817
      %3230 = vmatmul.mubr.bf16.gmra.mxu0 %v1816
      %v3231 = vpop.f32.mrf.mxu0
      %v3232 = vadd.f32 %v3135, %v3231
      %v3233 = vpop.f32.mrf.mxu0
      %v3234 = vpop.f32.mrf.mxu0
      %v3235 = vadd.f32 %v3138, %v3234
      %v3236 = vpop.f32.mrf.mxu0
      %3237 = vmatprep.mubr.bf16.mxu0 %v1833
      %3238 = vmatmul.mubr.bf16.gmra.mxu0 %v1832
      %v3239 = vpop.f32.mrf.mxu0
      %v3240 = vadd.f32 %v3143, %v3239
      %v3241 = vpop.f32.mrf.mxu0
      %v3242 = vpop.f32.mrf.mxu0
      %v3243 = vadd.f32 %v3146, %v3242
      %v3244 = vpop.f32.mrf.mxu0
      %3245 = vdwg.mxu0
      %3246 = vmatprep.subr.bf16.mxu0 0
      %3247 = vmatpush1.bf16.msra.mxu0 %v2655
      %3248 = vmatprep.subr.bf16.mxu0 0
      %3249 = vmatpush1.bf16.msra.mxu0 %v2654
      %3250 = vmatprep.subr.bf16.mxu0 0
      %3251 = vmatpush1.bf16.msra.mxu0 %v2653
      %3252 = vmatprep.subr.bf16.mxu0 0
      %3253 = vmatpush1.bf16.msra.mxu0 %v2652
      %3254 = vmatprep.subr.bf16.mxu0 0
      %3255 = vmatpush1.bf16.msra.mxu0 %v2651
      %3256 = vmatprep.subr.bf16.mxu0 0
      %3257 = vmatpush1.bf16.msra.mxu0 %v2650
      %3258 = vmatprep.subr.bf16.mxu0 0
      %3259 = vmatpush1.bf16.msra.mxu0 %v2649
      %3260 = vmatprep.subr.bf16.mxu0 0
      %3261 = vmatpush1.bf16.msra.mxu0 %v2648
      %3262 = vmatprep.subr.bf16.mxu0 0
      %3263 = vmatpush2.bf16.msra.mxu0 %v2663
      %3264 = vmatprep.subr.bf16.mxu0 0
      %3265 = vmatpush2.bf16.msra.mxu0 %v2662
      %3266 = vmatprep.subr.bf16.mxu0 0
      %3267 = vmatpush2.bf16.msra.mxu0 %v2661
      %3268 = vmatprep.subr.bf16.mxu0 0
      %3269 = vmatpush2.bf16.msra.mxu0 %v2660
      %3270 = vmatprep.subr.bf16.mxu0 0
      %3271 = vmatpush2.bf16.msra.mxu0 %v2659
      %3272 = vmatprep.subr.bf16.mxu0 0
      %3273 = vmatpush2.bf16.msra.mxu0 %v2658
      %3274 = vmatprep.subr.bf16.mxu0 0
      %3275 = vmatpush2.bf16.msra.mxu0 %v2657
      %3276 = vmatprep.subr.bf16.mxu0 0
      %3277 = vmatpush2.bf16.msra.mxu0 %v2656
      %3278 = vmatprep.mubr.bf16.mxu0 %v1723
      %3279 = vmatmul.mubr.bf16.gmra.mxu0 %v1722
      %v3280 = vpop.f32.mrf.mxu0
      %v3281 = vadd.f32 %v3184, %v3280
      %v3282 = vpop.f32.mrf.mxu0
      %v3283 = vpop.f32.mrf.mxu0
      %v3284 = vadd.f32 %v3187, %v3283
      %v3285 = vpop.f32.mrf.mxu0
      %3286 = vmatprep.mubr.bf16.mxu0 %v1739
      %3287 = vmatmul.mubr.bf16.gmra.mxu0 %v1738
      %v3288 = vpop.f32.mrf.mxu0
      %v3289 = vadd.f32 %v3192, %v3288
      %v3290 = vpop.f32.mrf.mxu0
      %v3291 = vpop.f32.mrf.mxu0
      %v3292 = vadd.f32 %v3195, %v3291
      %v3293 = vpop.f32.mrf.mxu0
      %3294 = vmatprep.mubr.bf16.mxu0 %v1755
      %3295 = vmatmul.mubr.bf16.gmra.mxu0 %v1754
      %v3296 = vpop.f32.mrf.mxu0
      %v3297 = vadd.f32 %v3200, %v3296
      %v3298 = vpop.f32.mrf.mxu0
      %v3299 = vpop.f32.mrf.mxu0
      %v3300 = vadd.f32 %v3203, %v3299
      %v3301 = vpop.f32.mrf.mxu0
      %3302 = vmatprep.mubr.bf16.mxu0 %v1771
      %3303 = vmatmul.mubr.bf16.gmra.mxu0 %v1770
      %v3304 = vpop.f32.mrf.mxu0
      %v3305 = vadd.f32 %v3208, %v3304
      %v3306 = vpop.f32.mrf.mxu0
      %v3307 = vpop.f32.mrf.mxu0
      %v3308 = vadd.f32 %v3211, %v3307
      %v3309 = vpop.f32.mrf.mxu0
      %3310 = vmatprep.mubr.bf16.mxu0 %v1787
      %3311 = vmatmul.mubr.bf16.gmra.mxu0 %v1786
      %v3312 = vpop.f32.mrf.mxu0
      %v3313 = vadd.f32 %v3216, %v3312
      %v3314 = vpop.f32.mrf.mxu0
      %v3315 = vpop.f32.mrf.mxu0
      %v3316 = vadd.f32 %v3219, %v3315
      %v3317 = vpop.f32.mrf.mxu0
      %3318 = vmatprep.mubr.bf16.mxu0 %v1803
      %3319 = vmatmul.mubr.bf16.gmra.mxu0 %v1802
      %v3320 = vpop.f32.mrf.mxu0
      %v3321 = vadd.f32 %v3224, %v3320
      %v3322 = vpop.f32.mrf.mxu0
      %v3323 = vpop.f32.mrf.mxu0
      %v3324 = vadd.f32 %v3227, %v3323
      %v3325 = vpop.f32.mrf.mxu0
      %3326 = vmatprep.mubr.bf16.mxu0 %v1819
      %3327 = vmatmul.mubr.bf16.gmra.mxu0 %v1818
      %v3328 = vpop.f32.mrf.mxu0
      %v3329 = vadd.f32 %v3232, %v3328
      %v3330 = vpop.f32.mrf.mxu0
      %v3331 = vpop.f32.mrf.mxu0
      %v3332 = vadd.f32 %v3235, %v3331
      %v3333 = vpop.f32.mrf.mxu0
      %3334 = vmatprep.mubr.bf16.mxu0 %v1835
      %3335 = vmatmul.mubr.bf16.gmra.mxu0 %v1834
      %v3336 = vpop.f32.mrf.mxu0
      %v3337 = vadd.f32 %v3240, %v3336
      %v3338 = vpop.f32.mrf.mxu0
      %v3339 = vpop.f32.mrf.mxu0
      %v3340 = vadd.f32 %v3243, %v3339
      %v3341 = vpop.f32.mrf.mxu0
      %3342 = vdwg.mxu0
      %3343 = vmatprep.subr.bf16.mxu0 0
      %3344 = vmatpush1.bf16.msra.mxu0 %v2671
      %3345 = vmatprep.subr.bf16.mxu0 0
      %3346 = vmatpush1.bf16.msra.mxu0 %v2670
      %3347 = vmatprep.subr.bf16.mxu0 0
      %3348 = vmatpush1.bf16.msra.mxu0 %v2669
      %3349 = vmatprep.subr.bf16.mxu0 0
      %3350 = vmatpush1.bf16.msra.mxu0 %v2668
      %3351 = vmatprep.subr.bf16.mxu0 0
      %3352 = vmatpush1.bf16.msra.mxu0 %v2667
      %3353 = vmatprep.subr.bf16.mxu0 0
      %3354 = vmatpush1.bf16.msra.mxu0 %v2666
      %3355 = vmatprep.subr.bf16.mxu0 0
      %3356 = vmatpush1.bf16.msra.mxu0 %v2665
      %3357 = vmatprep.subr.bf16.mxu0 0
      %3358 = vmatpush1.bf16.msra.mxu0 %v2664
      %3359 = vmatprep.subr.bf16.mxu0 0
      %3360 = vmatpush2.bf16.msra.mxu0 %v2679
      %3361 = vmatprep.subr.bf16.mxu0 0
      %3362 = vmatpush2.bf16.msra.mxu0 %v2678
      %3363 = vmatprep.subr.bf16.mxu0 0
      %3364 = vmatpush2.bf16.msra.mxu0 %v2677
      %3365 = vmatprep.subr.bf16.mxu0 0
      %3366 = vmatpush2.bf16.msra.mxu0 %v2676
      %3367 = vmatprep.subr.bf16.mxu0 0
      %3368 = vmatpush2.bf16.msra.mxu0 %v2675
      %3369 = vmatprep.subr.bf16.mxu0 0
      %3370 = vmatpush2.bf16.msra.mxu0 %v2674
      %3371 = vmatprep.subr.bf16.mxu0 0
      %3372 = vmatpush2.bf16.msra.mxu0 %v2673
      %3373 = vmatprep.subr.bf16.mxu0 0
      %3374 = vmatpush2.bf16.msra.mxu0 %v2672
      %3375 = vmatprep.mubr.bf16.mxu0 %v1725
      %3376 = vmatmul.mubr.bf16.gmra.mxu0 %v1724
      %v3377 = vpop.f32.mrf.mxu0
      %v3378 = vadd.f32 %v3281, %v3377
      %v3379 = vpop.f32.mrf.mxu0
      %v3380 = vpop.f32.mrf.mxu0
      %v3381 = vadd.f32 %v3284, %v3380
      %v3382 = vpop.f32.mrf.mxu0
      %3383 = vmatprep.mubr.bf16.mxu0 %v1741
      %3384 = vmatmul.mubr.bf16.gmra.mxu0 %v1740
      %v3385 = vpop.f32.mrf.mxu0
      %v3386 = vadd.f32 %v3289, %v3385
      %v3387 = vpop.f32.mrf.mxu0
      %v3388 = vpop.f32.mrf.mxu0
      %v3389 = vadd.f32 %v3292, %v3388
      %v3390 = vpop.f32.mrf.mxu0
      %3391 = vmatprep.mubr.bf16.mxu0 %v1757
      %3392 = vmatmul.mubr.bf16.gmra.mxu0 %v1756
      %v3393 = vpop.f32.mrf.mxu0
      %v3394 = vadd.f32 %v3297, %v3393
      %v3395 = vpop.f32.mrf.mxu0
      %v3396 = vpop.f32.mrf.mxu0
      %v3397 = vadd.f32 %v3300, %v3396
      %v3398 = vpop.f32.mrf.mxu0
      %3399 = vmatprep.mubr.bf16.mxu0 %v1773
      %3400 = vmatmul.mubr.bf16.gmra.mxu0 %v1772
      %v3401 = vpop.f32.mrf.mxu0
      %v3402 = vadd.f32 %v3305, %v3401
      %v3403 = vpop.f32.mrf.mxu0
      %v3404 = vpop.f32.mrf.mxu0
      %v3405 = vadd.f32 %v3308, %v3404
      %v3406 = vpop.f32.mrf.mxu0
      %3407 = vmatprep.mubr.bf16.mxu0 %v1789
      %3408 = vmatmul.mubr.bf16.gmra.mxu0 %v1788
      %v3409 = vpop.f32.mrf.mxu0
      %v3410 = vadd.f32 %v3313, %v3409
      %v3411 = vpop.f32.mrf.mxu0
      %v3412 = vpop.f32.mrf.mxu0
      %v3413 = vadd.f32 %v3316, %v3412
      %v3414 = vpop.f32.mrf.mxu0
      %3415 = vmatprep.mubr.bf16.mxu0 %v1805
      %3416 = vmatmul.mubr.bf16.gmra.mxu0 %v1804
      %v3417 = vpop.f32.mrf.mxu0
      %v3418 = vadd.f32 %v3321, %v3417
      %v3419 = vpop.f32.mrf.mxu0
      %v3420 = vpop.f32.mrf.mxu0
      %v3421 = vadd.f32 %v3324, %v3420
      %v3422 = vpop.f32.mrf.mxu0
      %3423 = vmatprep.mubr.bf16.mxu0 %v1821
      %3424 = vmatmul.mubr.bf16.gmra.mxu0 %v1820
      %v3425 = vpop.f32.mrf.mxu0
      %v3426 = vadd.f32 %v3329, %v3425
      %v3427 = vpop.f32.mrf.mxu0
      %v3428 = vpop.f32.mrf.mxu0
      %v3429 = vadd.f32 %v3332, %v3428
      %v3430 = vpop.f32.mrf.mxu0
      %3431 = vmatprep.mubr.bf16.mxu0 %v1837
      %3432 = vmatmul.mubr.bf16.gmra.mxu0 %v1836
      %v3433 = vpop.f32.mrf.mxu0
      %v3434 = vadd.f32 %v3337, %v3433
      %v3435 = vpop.f32.mrf.mxu0
      %v3436 = vpop.f32.mrf.mxu0
      %v3437 = vadd.f32 %v3340, %v3436
      %v3438 = vpop.f32.mrf.mxu0
      %3439 = vdwg.mxu0
      %3440 = vmatprep.subr.bf16.mxu0 0
      %3441 = vmatpush1.bf16.msra.mxu0 %v2687
      %3442 = vmatprep.subr.bf16.mxu0 0
      %3443 = vmatpush1.bf16.msra.mxu0 %v2686
      %3444 = vmatprep.subr.bf16.mxu0 0
      %3445 = vmatpush1.bf16.msra.mxu0 %v2685
      %3446 = vmatprep.subr.bf16.mxu0 0
      %3447 = vmatpush1.bf16.msra.mxu0 %v2684
      %3448 = vmatprep.subr.bf16.mxu0 0
      %3449 = vmatpush1.bf16.msra.mxu0 %v2683
      %3450 = vmatprep.subr.bf16.mxu0 0
      %3451 = vmatpush1.bf16.msra.mxu0 %v2682
      %3452 = vmatprep.subr.bf16.mxu0 0
      %3453 = vmatpush1.bf16.msra.mxu0 %v2681
      %3454 = vmatprep.subr.bf16.mxu0 0
      %3455 = vmatpush1.bf16.msra.mxu0 %v2680
      %3456 = vmatprep.subr.bf16.mxu0 0
      %3457 = vmatpush2.bf16.msra.mxu0 %v2695
      %3458 = vmatprep.subr.bf16.mxu0 0
      %3459 = vmatpush2.bf16.msra.mxu0 %v2694
      %3460 = vmatprep.subr.bf16.mxu0 0
      %3461 = vmatpush2.bf16.msra.mxu0 %v2693
      %3462 = vmatprep.subr.bf16.mxu0 0
      %3463 = vmatpush2.bf16.msra.mxu0 %v2692
      %3464 = vmatprep.subr.bf16.mxu0 0
      %3465 = vmatpush2.bf16.msra.mxu0 %v2691
      %3466 = vmatprep.subr.bf16.mxu0 0
      %3467 = vmatpush2.bf16.msra.mxu0 %v2690
      %3468 = vmatprep.subr.bf16.mxu0 0
      %3469 = vmatpush2.bf16.msra.mxu0 %v2689
      %3470 = vmatprep.subr.bf16.mxu0 0
      %3471 = vmatpush2.bf16.msra.mxu0 %v2688
      %3472 = vmatprep.mubr.bf16.mxu0 %v1727
      %3473 = vmatmul.mubr.bf16.gmra.mxu0 %v1726
      %v3474 = vpop.f32.mrf.mxu0
      %v3475 = vadd.f32 %v3378, %v3474
      %v3476 = vpop.f32.mrf.mxu0
      %v3477 = vpop.f32.mrf.mxu0
      %v3478 = vadd.f32 %v3381, %v3477
      %v3479 = vpop.f32.mrf.mxu0
      %3480 = vmatprep.mubr.bf16.mxu0 %v1743
      %3481 = vmatmul.mubr.bf16.gmra.mxu0 %v1742
      %v3482 = vpop.f32.mrf.mxu0
      %v3483 = vadd.f32 %v3386, %v3482
      %v3484 = vpop.f32.mrf.mxu0
      %v3485 = vpop.f32.mrf.mxu0
      %v3486 = vadd.f32 %v3389, %v3485
      %v3487 = vpop.f32.mrf.mxu0
      %3488 = vmatprep.mubr.bf16.mxu0 %v1759
      %3489 = vmatmul.mubr.bf16.gmra.mxu0 %v1758
      %v3490 = vpop.f32.mrf.mxu0
      %v3491 = vadd.f32 %v3394, %v3490
      %v3492 = vpop.f32.mrf.mxu0
      %v3493 = vpop.f32.mrf.mxu0
      %v3494 = vadd.f32 %v3397, %v3493
      %v3495 = vpop.f32.mrf.mxu0
      %3496 = vmatprep.mubr.bf16.mxu0 %v1775
      %3497 = vmatmul.mubr.bf16.gmra.mxu0 %v1774
      %v3498 = vpop.f32.mrf.mxu0
      %v3499 = vadd.f32 %v3402, %v3498
      %v3500 = vpop.f32.mrf.mxu0
      %v3501 = vpop.f32.mrf.mxu0
      %v3502 = vadd.f32 %v3405, %v3501
      %v3503 = vpop.f32.mrf.mxu0
      %3504 = vmatprep.mubr.bf16.mxu0 %v1791
      %3505 = vmatmul.mubr.bf16.gmra.mxu0 %v1790
      %v3506 = vpop.f32.mrf.mxu0
      %v3507 = vadd.f32 %v3410, %v3506
      %v3508 = vpop.f32.mrf.mxu0
      %v3509 = vpop.f32.mrf.mxu0
      %v3510 = vadd.f32 %v3413, %v3509
      %v3511 = vpop.f32.mrf.mxu0
      %3512 = vmatprep.mubr.bf16.mxu0 %v1807
      %3513 = vmatmul.mubr.bf16.gmra.mxu0 %v1806
      %v3514 = vpop.f32.mrf.mxu0
      %v3515 = vadd.f32 %v3418, %v3514
      %v3516 = vpop.f32.mrf.mxu0
      %v3517 = vpop.f32.mrf.mxu0
      %v3518 = vadd.f32 %v3421, %v3517
      %v3519 = vpop.f32.mrf.mxu0
      %3520 = vmatprep.mubr.bf16.mxu0 %v1823
      %3521 = vmatmul.mubr.bf16.gmra.mxu0 %v1822
      %v3522 = vpop.f32.mrf.mxu0
      %v3523 = vadd.f32 %v3426, %v3522
      %v3524 = vpop.f32.mrf.mxu0
      %v3525 = vpop.f32.mrf.mxu0
      %v3526 = vadd.f32 %v3429, %v3525
      %v3527 = vpop.f32.mrf.mxu0
      %3528 = vmatprep.mubr.bf16.mxu0 %v1839
      %3529 = vmatmul.mubr.bf16.gmra.mxu0 %v1838
      %v3530 = vpop.f32.mrf.mxu0
      %v3531 = vadd.f32 %v3434, %v3530
      %v3532 = vpop.f32.mrf.mxu0
      %v3533 = vpop.f32.mrf.mxu0
      %v3534 = vadd.f32 %v3437, %v3533
      %v3535 = vpop.f32.mrf.mxu0
      %3536 = vdwg.mxu0
      %3537 = vmatprep.subr.bf16.mxu0 0
      %3538 = vmatpush1.bf16.msra.mxu0 %v2703
      %3539 = vmatprep.subr.bf16.mxu0 0
      %3540 = vmatpush1.bf16.msra.mxu0 %v2702
      %3541 = vmatprep.subr.bf16.mxu0 0
      %3542 = vmatpush1.bf16.msra.mxu0 %v2701
      %3543 = vmatprep.subr.bf16.mxu0 0
      %3544 = vmatpush1.bf16.msra.mxu0 %v2700
      %3545 = vmatprep.subr.bf16.mxu0 0
      %3546 = vmatpush1.bf16.msra.mxu0 %v2699
      %3547 = vmatprep.subr.bf16.mxu0 0
      %3548 = vmatpush1.bf16.msra.mxu0 %v2698
      %3549 = vmatprep.subr.bf16.mxu0 0
      %3550 = vmatpush1.bf16.msra.mxu0 %v2697
      %3551 = vmatprep.subr.bf16.mxu0 0
      %3552 = vmatpush1.bf16.msra.mxu0 %v2696
      %3553 = vmatprep.subr.bf16.mxu0 0
      %3554 = vmatpush2.bf16.msra.mxu0 0
      %3555 = vmatprep.subr.bf16.mxu0 0
      %3556 = vmatpush2.bf16.msra.mxu0 0
      %3557 = vmatprep.subr.bf16.mxu0 0
      %3558 = vmatpush2.bf16.msra.mxu0 0
      %3559 = vmatprep.subr.bf16.mxu0 0
      %3560 = vmatpush2.bf16.msra.mxu0 0
      %3561 = vmatprep.subr.bf16.mxu0 0
      %3562 = vmatpush2.bf16.msra.mxu0 0
      %3563 = vmatprep.subr.bf16.mxu0 0
      %3564 = vmatpush2.bf16.msra.mxu0 %v2856
      %3565 = vmatprep.subr.bf16.mxu0 0
      %3566 = vmatpush2.bf16.msra.mxu0 %v2705
      %3567 = vmatprep.subr.bf16.mxu0 0
      %3568 = vmatpush2.bf16.msra.mxu0 %v2704
      %3569 = vmatprep.mubr.bf16.mxu0 %v2831
      %3570 = vmatmul.mubr.bf16.gmra.mxu0 %v1728
      %v3571 = vpop.f32.mrf.mxu0
      %v3572 = vadd.f32 %v3475, %v3571
      %v3573 = vpop.f32.mrf.mxu0
      %v3574 = vpop.f32.mrf.mxu0
      %v3575 = vadd.f32 %v3478, %v3574
      %v3576 = vpop.f32.mrf.mxu0
      %3577 = vmatprep.mubr.bf16.mxu0 %v2834
      %3578 = vmatmul.mubr.bf16.gmra.mxu0 %v1744
      %v3579 = vpop.f32.mrf.mxu0
      %v3580 = vadd.f32 %v3483, %v3579
      %v3581 = vpop.f32.mrf.mxu0
      %v3582 = vpop.f32.mrf.mxu0
      %v3583 = vadd.f32 %v3486, %v3582
      %v3584 = vpop.f32.mrf.mxu0
      %3585 = vmatprep.mubr.bf16.mxu0 %v2837
      %3586 = vmatmul.mubr.bf16.gmra.mxu0 %v1760
      %v3587 = vpop.f32.mrf.mxu0
      %v3588 = vadd.f32 %v3491, %v3587
      %v3589 = vpop.f32.mrf.mxu0
      %v3590 = vpop.f32.mrf.mxu0
      %v3591 = vadd.f32 %v3494, %v3590
      %v3592 = vpop.f32.mrf.mxu0
      %3593 = vmatprep.mubr.bf16.mxu0 %v2840
      %3594 = vmatmul.mubr.bf16.gmra.mxu0 %v1776
      %v3595 = vpop.f32.mrf.mxu0
      %v3596 = vadd.f32 %v3499, %v3595
      %v3597 = vpop.f32.mrf.mxu0
      %v3598 = vpop.f32.mrf.mxu0
      %v3599 = vadd.f32 %v3502, %v3598
      %v3600 = vpop.f32.mrf.mxu0
      %3601 = vmatprep.mubr.bf16.mxu0 %v2843
      %3602 = vmatmul.mubr.bf16.gmra.mxu0 %v1792
      %v3603 = vpop.f32.mrf.mxu0
      %v3604 = vadd.f32 %v3507, %v3603
      %v3605 = vpop.f32.mrf.mxu0
      %v3606 = vpop.f32.mrf.mxu0
      %v3607 = vadd.f32 %v3510, %v3606
      %v3608 = vpop.f32.mrf.mxu0
      %3609 = vmatprep.mubr.bf16.mxu0 %v2846
      %3610 = vmatmul.mubr.bf16.gmra.mxu0 %v1808
      %v3611 = vpop.f32.mrf.mxu0
      %v3612 = vadd.f32 %v3515, %v3611
      %v3613 = vpop.f32.mrf.mxu0
      %v3614 = vpop.f32.mrf.mxu0
      %v3615 = vadd.f32 %v3518, %v3614
      %v3616 = vpop.f32.mrf.mxu0
      %3617 = vmatprep.mubr.bf16.mxu0 %v2849
      %3618 = vmatmul.mubr.bf16.gmra.mxu0 %v1824
      %v3619 = vpop.f32.mrf.mxu0
      %v3620 = vadd.f32 %v3523, %v3619
      %v3621 = vpop.f32.mrf.mxu0
      %v3622 = vpop.f32.mrf.mxu0
      %v3623 = vadd.f32 %v3526, %v3622
      %v3624 = vpop.f32.mrf.mxu0
      %3625 = vmatprep.mubr.bf16.mxu0 %v2852
      %3626 = vmatmul.mubr.bf16.gmra.mxu0 %v1840
      %v3627 = vpop.f32.mrf.mxu0
      %v3628 = vadd.f32 %v3531, %v3627
      %v3629 = vpop.f32.mrf.mxu0
      %v3630 = vpop.f32.mrf.mxu0
      %v3631 = vadd.f32 %v3534, %v3630
      %v3632 = vpop.f32.mrf.mxu0
      %3633 = vdwg.mxu0
      %vm3634 = vcmask 261120
      %3635 = vst.msk [vmem:[%s175] sm:$0xff] %vm3634, %v3572
      %3636 = vst.msk [vmem:[%s175 + $0x8] sm:$0xff] %vm3634, %v3575
      %3637 = vst.msk [vmem:[%s175 + $0x10] sm:$0xff] %vm3634, %v3580
      %3638 = vst.msk [vmem:[%s175 + $0x18] sm:$0xff] %vm3634, %v3583
      %3639 = vst.msk [vmem:[%s175 + $0x20] sm:$0xff] %vm3634, %v3588
      %3640 = vst.msk [vmem:[%s175 + $0x28] sm:$0xff] %vm3634, %v3591
      %3641 = vst.msk [vmem:[%s175 + $0x30] sm:$0xff] %vm3634, %v3596
      %3642 = vst.msk [vmem:[%s175 + $0x38] sm:$0xff] %vm3634, %v3599
      %3643 = vst.msk [vmem:[%s175 + $0x40] sm:$0xff] %vm3634, %v3604
      %3644 = vst.msk [vmem:[%s175 + $0x48] sm:$0xff] %vm3634, %v3607
      %3645 = vst.msk [vmem:[%s175 + $0x50] sm:$0xff] %vm3634, %v3612
      %3646 = vst.msk [vmem:[%s175 + $0x58] sm:$0xff] %vm3634, %v3615
      %3647 = vst.msk [vmem:[%s175 + $0x60] sm:$0xff] %vm3634, %v3620
      %3648 = vst.msk [vmem:[%s175 + $0x68] sm:$0xff] %vm3634, %v3623
      %3649 = vst.msk [vmem:[%s175 + $0x70] sm:$0xff] %vm3634, %v3628
      %3650 = vst.msk [vmem:[%s175 + $0x78] sm:$0xff] %vm3634, %v3631
      %s3651 = smul.u32 16, %s14
      %p3652 = scmp.lt.s32.totalorder %s3651, 31
      %s3653 = scalar_select %p3652, %s3651, 31
      %s3654 = smul.addr %s3653, 8
      %s3655 = scalar_lea.vmem %s3, %s3654
      // Predicated region
      $region33: #{_lambda_.11} parent=31 // pred_check
        %p3656 = pneg %p100
      $region34: #{_lambda_.11} parent=31 // pred_check_branch
        %3658 = sbr.rel (%p3656) target = $region36
      $region35: #{_lambda_.11} parent=31 // pred_region
        %s3659 = smul.u32 16, %s14
      $region36: #{_lambda_.11} parent=31 // pred_fallthru
        _
    $region32: #{_lambda_.11} parent=5 // pred_fallthru
      _
    %p3660 = scmp.le.s32.totalorder 2, %s9
    // Predicated region
    $region37: #{_lambda_.11} parent=5 // pred_check
      %p3661 = pneg %p3660
    $region38: #{_lambda_.11} parent=5 // pred_check_branch
      %3663 = sbr.rel (%p3661) target = $region40
    $region39: #{_lambda_.11} parent=5 // pred_region
      %s3664 = ssub.s32 %s9, 2
      // Predicated region
      $region41: #{_lambda_.11} parent=39 // pred_check
        %p3665 = pneg %p106
      $region42: #{_lambda_.11} parent=39 // pred_check_branch
        %3667 = sbr.rel (%p3665) target = $region44
      $region43: #{_lambda_.11} parent=39 // pred_region
        %s3668 = smul.u32 16, %s15
        %p3669 = scmp.lt.s32.totalorder %s3668, 31
        %s3670 = scalar_select %p3669, %s3668, 31
        %s3671 = smul.addr %s3670, 8
        %s3672 = scalar_lea.vmem %s3, %s3671
      $region44: #{_lambda_.11} parent=39 // pred_fallthru
        _
    $region40: #{_lambda_.11} parent=5 // pred_fallthru
      _
  $region6: #{_lambda_.11} parent=0 // loop_footer
    %s13 = sadd.s32 1, %s9
  $region7: #{_lambda_.11} parent=0 // loop_footer_branch
    %8 = sbr.rel target = $region3
  $region8: #{_lambda_.11} parent=0 // loop_exit
    _

</llo_original>
